<compile_context>
chip_gen: v5e
topology: v5e:2x2
jax: 0.10.0
libtpu: 0.0.40
codegen_flags: <defaults>
</compile_context>

<pallas_src>
import functools

import numpy as np
import jax
import jax.numpy as jnp
from jax.experimental import pallas as pl
from jax.experimental.pallas import tpu as pltpu

NC = 3      # output channels (fixed in the PyTorch file)
NGF = 16    # opt.ngf  (small, deterministic choice)
NZ = 32     # opt.nz   (small, deterministic choice)
EPS = 1e-5  # PyTorch InstanceNorm2d default eps

C1, C2, C3 = NGF * 4, NGF * 2, NGF      # 64, 32, 16
H1, H2, H3 = 4, 8, 16                   # spatial size of layer-2/3/4 *inputs*
# flattened padded buffers: (H+2)*(W+2) + 2 extra zeros (keeps shifted tap reads in-bounds)
F2 = (H1 + 2) * (H1 + 2) + 2            # 38
F3 = (H2 + 2) * (H2 + 2) + 2            # 102
F4 = (H3 + 2) * (H3 + 2) + 2            # 326
# per-phase GEMM lane length for a single batch item (H rows of W+2 columns)
L2 = H1 * (H1 + 2)                      # 24
L3 = H2 * (H2 + 2)                      # 80
L4 = H3 * (H3 + 2)                      # 288


# ----------------------------------------------------------------------------
# The single fused kernel
# ----------------------------------------------------------------------------
def _generator_kernel(z_ref, w1_ref, g1_ref, b1_ref,
                      w2_ref, g2_ref, b2_ref, m2_ref, mt2_ref, s23_ref,
                      w3_ref, g3_ref, b3_ref, m3_ref, mt3_ref, s34_ref,
                      w4_ref,
                      out_ref,
                      buf2, buf3, buf4, *, batch):
    f32 = jnp.float32
    bf16 = jnp.bfloat16

    # ---------------- Layer 1: ConvT(nz, C1, 4, 1, 0) on 1x1 input ------------
    # out1[n, c, hy, hx] = sum_ci z[n, ci] * w1[ci, c, hy, hx]
    # -> one (C1, NZ) @ (NZ, N) matmul per spatial position, all batch items at once.
    buf2[...] = jnp.zeros_like(buf2)
    z = z_ref[...].astype(bf16)                                    # (NZ, N)
    cols = [jnp.dot(w1_ref[hw], z, preferred_element_type=f32)     # (C1, N)
            for hw in range(16)]
    s1 = cols[0]
    s2 = cols[0] * cols[0]
    for c in cols[1:]:
        s1 = s1 + c
        s2 = s2 + c * c
    mean1 = s1 * (1.0 / 16.0)
    var1 = s2 * (1.0 / 16.0) - mean1 * mean1                       # biased, like PyTorch
    scale1 = jax.lax.rsqrt(var1 + EPS) * g1_ref[...]               # (C1, N)
    shift1 = b1_ref[...] - mean1 * scale1
    for hw in range(16):
        hy, hx = hw // 4, hw % 4
        y = jnp.maximum(cols[hw] * scale1 + shift1, 0.0)           # (C1, N)
        p = (1 + hy) * (H1 + 2) + (1 + hx)                         # padded flat position
        for n in range(batch):
            buf2[:, pl.ds(n * F2 + p, 1)] = y[:, n:n + 1]

    # -------- Layers 2 & 3: 4-phase ConvT(s=2,p=1) + InstanceNorm + ReLU -------
    def up_block(src, w_ref, g_ref, b_ref, m_ref, mt_ref, s_ref, dst, H, W, F):
        L = H * (W + 2)
        nwin = (batch - 1) * F + L                  # window covering all batch segments
        gam = g_ref[...]                            # (Cout, 1)
        bet = b_ref[...]
        msk = m_ref[...]                            # (nwin, N) valid-column selector
        mskT = mt_ref[...]                          # (N, nwin)
        inv_cnt = 1.0 / (4.0 * H * W)
        phases = []
        tot = None
        tot_sq = None
        for a in (0, 1):
            for b in (0, 1):
                acc = None
                for ty in (0, 1):
                    for tx in (0, 1):
                        off = (a + ty) * (W + 2) + (b + tx)
                        x_tap = src[:, pl.ds(off, nwin)].astype(bf16)    # (Cin, nwin)
                        wt = w_ref[((a * 2 + b) * 2 + ty) * 2 + tx]      # (Cout, Cin)
                        t = jnp.dot(wt, x_tap, preferred_element_type=f32)
                        acc = t if acc is None else acc + t
                phases.append(acc)                  # (Cout, nwin)
                # per-batch masked sums via MXU (junk / cross-batch lanes excluded)
                ps = jnp.dot(acc, msk, preferred_element_type=f32)       # (Cout, N)
                pq = jnp.dot(acc * acc, msk, preferred_element_type=f32)
                tot = ps if tot is None else tot + ps
                tot_sq = pq if tot_sq is None else tot_sq + pq
        mean = tot * inv_cnt
        var = tot_sq * inv_cnt - mean * mean
        sc = jax.lax.rsqrt(var + EPS) * gam                              # (Cout, N)
        sh = bet - mean * sc
        # broadcast per-(c, n) affine to every valid lane; junk lanes -> 0
        sc_cols = jnp.dot(sc, mskT, preferred_element_type=f32)          # (Cout, nwin)
        sh_cols = jnp.dot(sh, mskT, preferred_element_type=f32)
        flat = None
        for idx in range(4):                        # idx = a*2 + b
            y = jnp.maximum(phases[idx] * sc_cols + sh_cols, 0.0)
            # scatter phase (a,b) into the next layer's padded flat buffer (MXU)
            contrib = jnp.dot(y.astype(bf16), s_ref[idx],
                              preferred_element_type=f32)
            flat = contrib if flat is None else flat + contrib
        dst[...] = flat                             # (Cout, N*F_next), zero border incl.

    up_block(buf2, w2_ref, g2_ref, b2_ref, m2_ref, mt2_ref, s23_ref, buf3, H1, H1, F2)
    up_block(buf3, w3_ref, g3_ref, b3_ref, m3_ref, mt3_ref, s34_ref, buf4, H2, H2, F3)

    # ---------------- Layer 4: 4-phase ConvT(s=2,p=1) + Tanh -------------------
    W = H3
    nwin4 = (batch - 1) * F4 + L4
    for a in (0, 1):
        for b in (0, 1):
            acc = None
            for ty in (0, 1):
                for tx in (0, 1):
                    off = (a + ty) * (W + 2) + (b + tx)
                    x_tap = buf4[:, pl.ds(off, nwin4)].astype(bf16)      # (C3, nwin4)
                    wt = w4_ref[((a * 2 + b) * 2 + ty) * 2 + tx]         # (3, C3)
                    t = jnp.dot(wt, x_tap, preferred_element_type=f32)
                    acc = t if acc is None else acc + t
            out_ref[a * 2 + b] = jnp.tanh(acc)                           # (3, nwin4)


# ----------------------------------------------------------------------------
# Parameter / constant packing (done once, outside the hot path)
# ----------------------------------------------------------------------------
def _valid_mask(H, W, F, n_b):
    """(nwin, N) selector: 1 iff window column j is a valid (non-junk) column of
    batch item n.  nwin = (N-1)*F + H*(W+2)."""
    nwin = (n_b - 1) * F + H * (W + 2)
    M = np.zeros((nwin, n_b), np.float32)
    for n in range(n_b):
        for m in range(H):
            for l in range(W):
                M[n * F + m * (W + 2) + l, n] = 1.0
    return jnp.asarray(M)


def _scatter_matrix(H, W, F, F_next, n_b):
    """(4, nwin, N*F_next) 0/1 matrices mapping each phase's batch-concatenated window
    GEMM output into the next layer's batch-concatenated padded flat buffer."""
    nwin = (n_b - 1) * F + H * (W + 2)
    Wo = 2 * W
    S = np.zeros((4, nwin, n_b * F_next), np.float32)
    for a in (0, 1):
        for b in (0, 1):
            for n in range(n_b):
                for m in range(H):
                    for l in range(W):
                        j = n * F + m * (W + 2) + l
                        f = n * F_next + (1 + 2 * m + a) * (Wo + 2) + (1 + 2 * l + b)
                        S[a * 2 + b, j, f] = 1.0
    return jnp.asarray(S, dtype=jnp.bfloat16)


def _tap_pack(w):
    """w: (Cin, Cout, 4, 4) torch ConvTranspose2d layout -> (16, Cout, Cin) bf16.
    Tap (a, b, ty, tx) uses kernel element (3-a-2ty, 3-b-2tx)."""
    mats = []
    for a in (0, 1):
        for b in (0, 1):
            for ty in (0, 1):
                for tx in (0, 1):
                    mats.append(jnp.transpose(w[:, :, 3 - a - 2 * ty, 3 - b - 2 * tx]))
    return jnp.stack(mats, axis=0).astype(jnp.bfloat16)


def pack_params(p, batch):
    w1p = jnp.stack([jnp.transpose(p["w1"][:, :, hy, hx])
                     for hy in range(4) for hx in range(4)],
                    axis=0).astype(jnp.bfloat16)                   # (16, C1, NZ)
    col = lambda v: v.reshape(-1, 1).astype(jnp.float32)
    m2 = _valid_mask(H1, H1, F2, batch)
    m3 = _valid_mask(H2, H2, F3, batch)
    return dict(
        w1p=w1p,
        w2p=_tap_pack(p["w2"]),
        w3p=_tap_pack(p["w3"]),
        w4p=_tap_pack(p["w4"]),
        g1=col(p["g1"]), b1=col(p["b1"]),
        g2=col(p["g2"]), b2=col(p["b2"]),
        g3=col(p["g3"]), b3=col(p["b3"]),
        m2=m2, mt2=jnp.transpose(m2),
        m3=m3, mt3=jnp.transpose(m3),
        S23=_scatter_matrix(H1, H1, F2, F3, batch),
        S34=_scatter_matrix(H2, H2, F3, F4, batch),
    )


# ----------------------------------------------------------------------------
# Forward pass: ONE pallas_call + tiny output de-interleave
# ----------------------------------------------------------------------------
def generator_forward(z, pk):
    n = z.shape[0]
    assert pk["m2"].shape[1] == n, "params were packed for a different batch size"
    zc = jnp.transpose(z.reshape(n, NZ)).astype(jnp.float32)       # (NZ, N)
    nwin4 = (n - 1) * F4 + L4
    vmem = pl.BlockSpec(memory_space=pltpu.MemorySpace.VMEM)
    kern = functools.partial(_generator_kernel, batch=n)
    out = pl.pallas_call(
        kern,
        out_shape=jax.ShapeDtypeStruct((4, NC, nwin4), jnp.float32),
        in_specs=[vmem] * 17,
        out_specs=vmem,
        scratch_shapes=[
            pltpu.VMEM((C1, n * F2), jnp.float32),
            pltpu.VMEM((C2, n * F3), jnp.float32),
            pltpu.VMEM((C3, n * F4), jnp.float32),
        ],
    )(zc, pk["w1p"], pk["g1"], pk["b1"],
      pk["w2p"], pk["g2"], pk["b2"], pk["m2"], pk["mt2"], pk["S23"],
      pk["w3p"], pk["g3"], pk["b3"], pk["m3"], pk["mt3"], pk["S34"],
      pk["w4p"])
    # de-interleave: window column n*F4 + m*(H3+2) + l  ->  pixel (2m+a, 2l+b) of item n
    segs = [out[:, :, i * F4:i * F4 + L4] for i in range(n)]       # each (4, NC, L4)
    out = jnp.stack(segs, axis=0)                                  # (n, 4, NC, L4)
    out = out.reshape(n, 2, 2, NC, H3, H3 + 2)[..., :H3]           # (n, a, b, c, m, l)
    out = jnp.transpose(out, (0, 3, 4, 1, 5, 2)).reshape(n, NC, 2 * H3, 2 * H3)
    return out.reshape(-1, 3, 32, 32)


# ----------------------------------------------------------------------------
# Pure-JAX reference (for an in-script sanity check)
# ----------------------------------------------------------------------------
def _convT_ref(x, w):  # x: (N,Cin,H,W), w: (Cin,Cout,4,4); stride 2, pad 1
    w_conv = jnp.transpose(w, (1, 0, 2, 3))[:, :, ::-1, ::-1]      # (Cout,Cin,4,4)
    return jax.lax.conv_general_dilated(
        x, w_conv, window_strides=(1, 1), padding=[(2, 2), (2, 2)],
        lhs_dilation=(2, 2), dimension_numbers=("NCHW", "OIHW", "NCHW"),
        precision=jax.lax.Precision.HIGHEST)


def _inorm_relu_ref(x, g, b):
    mean = jnp.mean(x, axis=(2, 3), keepdims=True)
    var = jnp.mean((x - mean) ** 2, axis=(2, 3), keepdims=True)
    y = (x - mean) * jax.lax.rsqrt(var + EPS)
    y = y * g.reshape(1, -1, 1, 1) + b.reshape(1, -1, 1, 1)
    return jnp.maximum(y, 0.0)


def generator_reference(z, p):
    n = z.shape[0]
    x = jnp.einsum("nc,cohw->nohw", z.reshape(n, NZ), p["w1"],
                   precision=jax.lax.Precision.HIGHEST)
    x = _inorm_relu_ref(x, p["g1"], p["b1"])
    x = _inorm_relu_ref(_convT_ref(x, p["w2"]), p["g2"], p["b2"])
    x = _inorm_relu_ref(_convT_ref(x, p["w3"]), p["g3"], p["b3"])
    x = jnp.tanh(_convT_ref(x, p["w4"]))
    return x.reshape(-1, 3, 32, 32)


def init_params(key):
    ks = jax.random.split(key, 10)
    return {
        # ConvTranspose2d weights: (in_channels, out_channels, kH, kW)
        "w1": 0.05 * jax.random.normal(ks[0], (NZ, C1, 4, 4), jnp.float32),
        "w2": 0.05 * jax.random.normal(ks[1], (C1, C2, 4, 4), jnp.float32),
        "w3": 0.05 * jax.random.normal(ks[2], (C2, C3, 4, 4), jnp.float32),
        "w4": 0.05 * jax.random.normal(ks[3], (C3, NC, 4, 4), jnp.float32),
        # InstanceNorm2d affine params
        "g1": 1.0 + 0.1 * jax.random.normal(ks[4], (C1,), jnp.float32),
        "b1": 0.1 * jax.random.normal(ks[5], (C1,), jnp.float32),
        "g2": 1.0 + 0.1 * jax.random.normal(ks[6], (C2,), jnp.float32),
        "b2": 0.1 * jax.random.normal(ks[7], (C2,), jnp.float32),
        "g3": 1.0 + 0.1 * jax.random.normal(ks[8], (C3,), jnp.float32),
        "b3": 0.1 * jax.random.normal(ks[9], (C3,), jnp.float32),
    }


if __name__ == "__main__":
    key = jax.random.PRNGKey(0)
    k_z, k_p = jax.random.split(key)

    batch = 2
    z = jax.random.normal(k_z, (batch, NZ, 1, 1), jnp.float32)   # latent input, NCHW
    params = init_params(k_p)
    packed = pack_params(params, batch)                          # one-time packing

    fwd = jax.jit(generator_forward)
    out = jax.block_until_ready(fwd(z, packed))

    assert out.shape == (batch, 3, 32, 32), out.shape
    assert bool(jnp.all(jnp.isfinite(out)))
    assert bool(jnp.all(jnp.abs(out) <= 1.0 + 1e-6))             # tanh range

    # cross-check against a pure-JAX f32 reference (loose tol: bf16 MXU operands)
    ref = jax.block_until_ready(jax.jit(generator_reference)(z, params))
    err = float(jnp.max(jnp.abs(out - ref)))
    assert err < 0.15, err

    print("KERNEL_OK")
</pallas_src>

<mosaic_0001>
module attributes {stable_mosaic.version = 11 : i64} {
  func.func @_generator_kernel(%arg0: memref<32x2xf32, #tpu.memory_space<vmem>>, %arg1: memref<16x64x32xbf16, #tpu.memory_space<vmem>>, %arg2: memref<64x1xf32, #tpu.memory_space<vmem>>, %arg3: memref<64x1xf32, #tpu.memory_space<vmem>>, %arg4: memref<16x32x64xbf16, #tpu.memory_space<vmem>>, %arg5: memref<32x1xf32, #tpu.memory_space<vmem>>, %arg6: memref<32x1xf32, #tpu.memory_space<vmem>>, %arg7: memref<62x2xf32, #tpu.memory_space<vmem>>, %arg8: memref<2x62xf32, #tpu.memory_space<vmem>>, %arg9: memref<4x62x204xbf16, #tpu.memory_space<vmem>>, %arg10: memref<16x16x32xbf16, #tpu.memory_space<vmem>>, %arg11: memref<16x1xf32, #tpu.memory_space<vmem>>, %arg12: memref<16x1xf32, #tpu.memory_space<vmem>>, %arg13: memref<182x2xf32, #tpu.memory_space<vmem>>, %arg14: memref<2x182xf32, #tpu.memory_space<vmem>>, %arg15: memref<4x182x652xbf16, #tpu.memory_space<vmem>>, %arg16: memref<16x3x16xbf16, #tpu.memory_space<vmem>>, %arg17: memref<4x3x614xf32, #tpu.memory_space<vmem>>, %arg18: memref<64x76xf32, #tpu.memory_space<vmem>>, %arg19: memref<32x204xf32, #tpu.memory_space<vmem>>, %arg20: memref<16x652xf32, #tpu.memory_space<vmem>>) attributes {dimension_semantics = [], scalar_prefetch = 0 : i64, scratch_operands = 3 : i64, tpu.core_type = #tpu.core_type<tc>} {
    %cst = arith.constant 0.000000e+00 : f32
    %0 = vector.broadcast %cst : f32 to vector<64x76xf32>
    %c0 = arith.constant 0 : index
    %c0_0 = arith.constant 0 : index
    %1 = vector.load %arg18[%c0, %c0_0] : memref<64x76xf32, #tpu.memory_space<vmem>>, vector<64x76xf32>
    tpu.vector_store %arg18[%c0, %c0_0], %0 {strides = array<i32>} : memref<64x76xf32, #tpu.memory_space<vmem>>, vector<64x76xf32>,
    %c0_1 = arith.constant 0 : index
    %c0_2 = arith.constant 0 : index
    %2 = vector.load %arg0[%c0_1, %c0_2] : memref<32x2xf32, #tpu.memory_space<vmem>>, vector<32x2xf32>
    %3 = arith.truncf %2 : vector<32x2xf32> to vector<32x2xbf16>
    %c0_3 = arith.constant 0 : index
    %c0_4 = arith.constant 0 : index
    %c0_5 = arith.constant 0 : index
    %4 = vector.load %arg1[%c0_3, %c0_4, %c0_5] : memref<16x64x32xbf16, #tpu.memory_space<vmem>>, vector<1x64x32xbf16>
    %5 = vector.shape_cast %4 : vector<1x64x32xbf16> to vector<64x32xbf16>
    %cst_6 = arith.constant dense<0.000000e+00> : vector<64x2xf32>
    %6 = tpu.matmul %5, %3, %cst_6 {dimension_numbers = #tpu.dot_dimension_numbers<[1], [0], [0], [1], [0, 0, 1, 1], [], []>} : vector<64x32xbf16>, vector<32x2xbf16>, vector<64x2xf32> -> vector<64x2xf32>
    %c1 = arith.constant 1 : index
    %c0_7 = arith.constant 0 : index
    %c0_8 = arith.constant 0 : index
    %7 = vector.load %arg1[%c1, %c0_7, %c0_8] : memref<16x64x32xbf16, #tpu.memory_space<vmem>>, vector<1x64x32xbf16>
    %8 = vector.shape_cast %7 : vector<1x64x32xbf16> to vector<64x32xbf16>
    %cst_9 = arith.constant dense<0.000000e+00> : vector<64x2xf32>
    %9 = tpu.matmul %8, %3, %cst_9 {dimension_numbers = #tpu.dot_dimension_numbers<[1], [0], [0], [1], [0, 0, 1, 1], [], []>} : vector<64x32xbf16>, vector<32x2xbf16>, vector<64x2xf32> -> vector<64x2xf32>
    %c2 = arith.constant 2 : index
    %c0_10 = arith.constant 0 : index
    %c0_11 = arith.constant 0 : index
    %10 = vector.load %arg1[%c2, %c0_10, %c0_11] : memref<16x64x32xbf16, #tpu.memory_space<vmem>>, vector<1x64x32xbf16>
    %11 = vector.shape_cast %10 : vector<1x64x32xbf16> to vector<64x32xbf16>
    %cst_12 = arith.constant dense<0.000000e+00> : vector<64x2xf32>
    %12 = tpu.matmul %11, %3, %cst_12 {dimension_numbers = #tpu.dot_dimension_numbers<[1], [0], [0], [1], [0, 0, 1, 1], [], []>} : vector<64x32xbf16>, vector<32x2xbf16>, vector<64x2xf32> -> vector<64x2xf32>
    %c3 = arith.constant 3 : index
    %c0_13 = arith.constant 0 : index
    %c0_14 = arith.constant 0 : index
    %13 = vector.load %arg1[%c3, %c0_13, %c0_14] : memref<16x64x32xbf16, #tpu.memory_space<vmem>>, vector<1x64x32xbf16>
    %14 = vector.shape_cast %13 : vector<1x64x32xbf16> to vector<64x32xbf16>
    %cst_15 = arith.constant dense<0.000000e+00> : vector<64x2xf32>
    %15 = tpu.matmul %14, %3, %cst_15 {dimension_numbers = #tpu.dot_dimension_numbers<[1], [0], [0], [1], [0, 0, 1, 1], [], []>} : vector<64x32xbf16>, vector<32x2xbf16>, vector<64x2xf32> -> vector<64x2xf32>
    %c4 = arith.constant 4 : index
    %c0_16 = arith.constant 0 : index
    %c0_17 = arith.constant 0 : index
    %16 = vector.load %arg1[%c4, %c0_16, %c0_17] : memref<16x64x32xbf16, #tpu.memory_space<vmem>>, vector<1x64x32xbf16>
    %17 = vector.shape_cast %16 : vector<1x64x32xbf16> to vector<64x32xbf16>
    %cst_18 = arith.constant dense<0.000000e+00> : vector<64x2xf32>
    %18 = tpu.matmul %17, %3, %cst_18 {dimension_numbers = #tpu.dot_dimension_numbers<[1], [0], [0], [1], [0, 0, 1, 1], [], []>} : vector<64x32xbf16>, vector<32x2xbf16>, vector<64x2xf32> -> vector<64x2xf32>
    %c5 = arith.constant 5 : index
    %c0_19 = arith.constant 0 : index
    %c0_20 = arith.constant 0 : index
    %19 = vector.load %arg1[%c5, %c0_19, %c0_20] : memref<16x64x32xbf16, #tpu.memory_space<vmem>>, vector<1x64x32xbf16>
    %20 = vector.shape_cast %19 : vector<1x64x32xbf16> to vector<64x32xbf16>
    %cst_21 = arith.constant dense<0.000000e+00> : vector<64x2xf32>
    %21 = tpu.matmul %20, %3, %cst_21 {dimension_numbers = #tpu.dot_dimension_numbers<[1], [0], [0], [1], [0, 0, 1, 1], [], []>} : vector<64x32xbf16>, vector<32x2xbf16>, vector<64x2xf32> -> vector<64x2xf32>
    %c6 = arith.constant 6 : index
    %c0_22 = arith.constant 0 : index
    %c0_23 = arith.constant 0 : index
    %22 = vector.load %arg1[%c6, %c0_22, %c0_23] : memref<16x64x32xbf16, #tpu.memory_space<vmem>>, vector<1x64x32xbf16>
    %23 = vector.shape_cast %22 : vector<1x64x32xbf16> to vector<64x32xbf16>
    %cst_24 = arith.constant dense<0.000000e+00> : vector<64x2xf32>
    %24 = tpu.matmul %23, %3, %cst_24 {dimension_numbers = #tpu.dot_dimension_numbers<[1], [0], [0], [1], [0, 0, 1, 1], [], []>} : vector<64x32xbf16>, vector<32x2xbf16>, vector<64x2xf32> -> vector<64x2xf32>
    %c7 = arith.constant 7 : index
    %c0_25 = arith.constant 0 : index
    %c0_26 = arith.constant 0 : index
    %25 = vector.load %arg1[%c7, %c0_25, %c0_26] : memref<16x64x32xbf16, #tpu.memory_space<vmem>>, vector<1x64x32xbf16>
    %26 = vector.shape_cast %25 : vector<1x64x32xbf16> to vector<64x32xbf16>
    %cst_27 = arith.constant dense<0.000000e+00> : vector<64x2xf32>
    %27 = tpu.matmul %26, %3, %cst_27 {dimension_numbers = #tpu.dot_dimension_numbers<[1], [0], [0], [1], [0, 0, 1, 1], [], []>} : vector<64x32xbf16>, vector<32x2xbf16>, vector<64x2xf32> -> vector<64x2xf32>
    %c8 = arith.constant 8 : index
    %c0_28 = arith.constant 0 : index
    %c0_29 = arith.constant 0 : index
    %28 = vector.load %arg1[%c8, %c0_28, %c0_29] : memref<16x64x32xbf16, #tpu.memory_space<vmem>>, vector<1x64x32xbf16>
    %29 = vector.shape_cast %28 : vector<1x64x32xbf16> to vector<64x32xbf16>
    %cst_30 = arith.constant dense<0.000000e+00> : vector<64x2xf32>
    %30 = tpu.matmul %29, %3, %cst_30 {dimension_numbers = #tpu.dot_dimension_numbers<[1], [0], [0], [1], [0, 0, 1, 1], [], []>} : vector<64x32xbf16>, vector<32x2xbf16>, vector<64x2xf32> -> vector<64x2xf32>
    %c9 = arith.constant 9 : index
    %c0_31 = arith.constant 0 : index
    %c0_32 = arith.constant 0 : index
    %31 = vector.load %arg1[%c9, %c0_31, %c0_32] : memref<16x64x32xbf16, #tpu.memory_space<vmem>>, vector<1x64x32xbf16>
    %32 = vector.shape_cast %31 : vector<1x64x32xbf16> to vector<64x32xbf16>
    %cst_33 = arith.constant dense<0.000000e+00> : vector<64x2xf32>
    %33 = tpu.matmul %32, %3, %cst_33 {dimension_numbers = #tpu.dot_dimension_numbers<[1], [0], [0], [1], [0, 0, 1, 1], [], []>} : vector<64x32xbf16>, vector<32x2xbf16>, vector<64x2xf32> -> vector<64x2xf32>
    %c10 = arith.constant 10 : index
    %c0_34 = arith.constant 0 : index
    %c0_35 = arith.constant 0 : index
    %34 = vector.load %arg1[%c10, %c0_34, %c0_35] : memref<16x64x32xbf16, #tpu.memory_space<vmem>>, vector<1x64x32xbf16>
    %35 = vector.shape_cast %34 : vector<1x64x32xbf16> to vector<64x32xbf16>
    %cst_36 = arith.constant dense<0.000000e+00> : vector<64x2xf32>
    %36 = tpu.matmul %35, %3, %cst_36 {dimension_numbers = #tpu.dot_dimension_numbers<[1], [0], [0], [1], [0, 0, 1, 1], [], []>} : vector<64x32xbf16>, vector<32x2xbf16>, vector<64x2xf32> -> vector<64x2xf32>
    %c11 = arith.constant 11 : index
    %c0_37 = arith.constant 0 : index
    %c0_38 = arith.constant 0 : index
    %37 = vector.load %arg1[%c11, %c0_37, %c0_38] : memref<16x64x32xbf16, #tpu.memory_space<vmem>>, vector<1x64x32xbf16>
    %38 = vector.shape_cast %37 : vector<1x64x32xbf16> to vector<64x32xbf16>
    %cst_39 = arith.constant dense<0.000000e+00> : vector<64x2xf32>
    %39 = tpu.matmul %38, %3, %cst_39 {dimension_numbers = #tpu.dot_dimension_numbers<[1], [0], [0], [1], [0, 0, 1, 1], [], []>} : vector<64x32xbf16>, vector<32x2xbf16>, vector<64x2xf32> -> vector<64x2xf32>
    %c12 = arith.constant 12 : index
    %c0_40 = arith.constant 0 : index
    %c0_41 = arith.constant 0 : index
    %40 = vector.load %arg1[%c12, %c0_40, %c0_41] : memref<16x64x32xbf16, #tpu.memory_space<vmem>>, vector<1x64x32xbf16>
    %41 = vector.shape_cast %40 : vector<1x64x32xbf16> to vector<64x32xbf16>
    %cst_42 = arith.constant dense<0.000000e+00> : vector<64x2xf32>
    %42 = tpu.matmul %41, %3, %cst_42 {dimension_numbers = #tpu.dot_dimension_numbers<[1], [0], [0], [1], [0, 0, 1, 1], [], []>} : vector<64x32xbf16>, vector<32x2xbf16>, vector<64x2xf32> -> vector<64x2xf32>
    %c13 = arith.constant 13 : index
    %c0_43 = arith.constant 0 : index
    %c0_44 = arith.constant 0 : index
    %43 = vector.load %arg1[%c13, %c0_43, %c0_44] : memref<16x64x32xbf16, #tpu.memory_space<vmem>>, vector<1x64x32xbf16>
    %44 = vector.shape_cast %43 : vector<1x64x32xbf16> to vector<64x32xbf16>
    %cst_45 = arith.constant dense<0.000000e+00> : vector<64x2xf32>
    %45 = tpu.matmul %44, %3, %cst_45 {dimension_numbers = #tpu.dot_dimension_numbers<[1], [0], [0], [1], [0, 0, 1, 1], [], []>} : vector<64x32xbf16>, vector<32x2xbf16>, vector<64x2xf32> -> vector<64x2xf32>
    %c14 = arith.constant 14 : index
    %c0_46 = arith.constant 0 : index
    %c0_47 = arith.constant 0 : index
    %46 = vector.load %arg1[%c14, %c0_46, %c0_47] : memref<16x64x32xbf16, #tpu.memory_space<vmem>>, vector<1x64x32xbf16>
    %47 = vector.shape_cast %46 : vector<1x64x32xbf16> to vector<64x32xbf16>
    %cst_48 = arith.constant dense<0.000000e+00> : vector<64x2xf32>
    %48 = tpu.matmul %47, %3, %cst_48 {dimension_numbers = #tpu.dot_dimension_numbers<[1], [0], [0], [1], [0, 0, 1, 1], [], []>} : vector<64x32xbf16>, vector<32x2xbf16>, vector<64x2xf32> -> vector<64x2xf32>
    %c15 = arith.constant 15 : index
    %c0_49 = arith.constant 0 : index
    %c0_50 = arith.constant 0 : index
    %49 = vector.load %arg1[%c15, %c0_49, %c0_50] : memref<16x64x32xbf16, #tpu.memory_space<vmem>>, vector<1x64x32xbf16>
    %50 = vector.shape_cast %49 : vector<1x64x32xbf16> to vector<64x32xbf16>
    %cst_51 = arith.constant dense<0.000000e+00> : vector<64x2xf32>
    %51 = tpu.matmul %50, %3, %cst_51 {dimension_numbers = #tpu.dot_dimension_numbers<[1], [0], [0], [1], [0, 0, 1, 1], [], []>} : vector<64x32xbf16>, vector<32x2xbf16>, vector<64x2xf32> -> vector<64x2xf32>
    %52 = arith.mulf %6, %6 : vector<64x2xf32>
    %53 = arith.addf %6, %9 : vector<64x2xf32>
    %54 = arith.mulf %9, %9 : vector<64x2xf32>
    %55 = arith.addf %52, %54 : vector<64x2xf32>
    %56 = arith.addf %53, %12 : vector<64x2xf32>
    %57 = arith.mulf %12, %12 : vector<64x2xf32>
    %58 = arith.addf %55, %57 : vector<64x2xf32>
    %59 = arith.addf %56, %15 : vector<64x2xf32>
    %60 = arith.mulf %15, %15 : vector<64x2xf32>
    %61 = arith.addf %58, %60 : vector<64x2xf32>
    %62 = arith.addf %59, %18 : vector<64x2xf32>
    %63 = arith.mulf %18, %18 : vector<64x2xf32>
    %64 = arith.addf %61, %63 : vector<64x2xf32>
    %65 = arith.addf %62, %21 : vector<64x2xf32>
    %66 = arith.mulf %21, %21 : vector<64x2xf32>
    %67 = arith.addf %64, %66 : vector<64x2xf32>
    %68 = arith.addf %65, %24 : vector<64x2xf32>
    %69 = arith.mulf %24, %24 : vector<64x2xf32>
    %70 = arith.addf %67, %69 : vector<64x2xf32>
    %71 = arith.addf %68, %27 : vector<64x2xf32>
    %72 = arith.mulf %27, %27 : vector<64x2xf32>
    %73 = arith.addf %70, %72 : vector<64x2xf32>
    %74 = arith.addf %71, %30 : vector<64x2xf32>
    %75 = arith.mulf %30, %30 : vector<64x2xf32>
    %76 = arith.addf %73, %75 : vector<64x2xf32>
    %77 = arith.addf %74, %33 : vector<64x2xf32>
    %78 = arith.mulf %33, %33 : vector<64x2xf32>
    %79 = arith.addf %76, %78 : vector<64x2xf32>
    %80 = arith.addf %77, %36 : vector<64x2xf32>
    %81 = arith.mulf %36, %36 : vector<64x2xf32>
    %82 = arith.addf %79, %81 : vector<64x2xf32>
    %83 = arith.addf %80, %39 : vector<64x2xf32>
    %84 = arith.mulf %39, %39 : vector<64x2xf32>
    %85 = arith.addf %82, %84 : vector<64x2xf32>
    %86 = arith.addf %83, %42 : vector<64x2xf32>
    %87 = arith.mulf %42, %42 : vector<64x2xf32>
    %88 = arith.addf %85, %87 : vector<64x2xf32>
    %89 = arith.addf %86, %45 : vector<64x2xf32>
    %90 = arith.mulf %45, %45 : vector<64x2xf32>
    %91 = arith.addf %88, %90 : vector<64x2xf32>
    %92 = arith.addf %89, %48 : vector<64x2xf32>
    %93 = arith.mulf %48, %48 : vector<64x2xf32>
    %94 = arith.addf %91, %93 : vector<64x2xf32>
    %95 = arith.addf %92, %51 : vector<64x2xf32>
    %96 = arith.mulf %51, %51 : vector<64x2xf32>
    %97 = arith.addf %94, %96 : vector<64x2xf32>
    %cst_52 = arith.constant 6.250000e-02 : f32
    %98 = vector.broadcast %cst_52 : f32 to vector<64x2xf32>
    %99 = arith.mulf %95, %98 : vector<64x2xf32>
    %cst_53 = arith.constant 6.250000e-02 : f32
    %100 = vector.broadcast %cst_53 : f32 to vector<64x2xf32>
    %101 = arith.mulf %97, %100 : vector<64x2xf32>
    %102 = arith.mulf %99, %99 : vector<64x2xf32>
    %103 = arith.subf %101, %102 : vector<64x2xf32>
    %cst_54 = arith.constant 9.99999974E-6 : f32
    %104 = vector.broadcast %cst_54 : f32 to vector<64x2xf32>
    %105 = arith.addf %103, %104 : vector<64x2xf32>
    %106 = math.rsqrt %105 : vector<64x2xf32>
    %c0_55 = arith.constant 0 : index
    %c0_56 = arith.constant 0 : index
    %107 = vector.load %arg2[%c0_55, %c0_56] : memref<64x1xf32, #tpu.memory_space<vmem>>, vector<64x1xf32>
    %108 = vector.broadcast %107 : vector<64x1xf32> to vector<64x2xf32>
    %109 = arith.mulf %106, %108 : vector<64x2xf32>
    %c0_57 = arith.constant 0 : index
    %c0_58 = arith.constant 0 : index
    %110 = vector.load %arg3[%c0_57, %c0_58] : memref<64x1xf32, #tpu.memory_space<vmem>>, vector<64x1xf32>
    %111 = arith.mulf %99, %109 : vector<64x2xf32>
    %112 = vector.broadcast %110 : vector<64x1xf32> to vector<64x2xf32>
    %113 = arith.subf %112, %111 : vector<64x2xf32>
    %114 = arith.mulf %6, %109 : vector<64x2xf32>
    %115 = arith.addf %114, %113 : vector<64x2xf32>
    %cst_59 = arith.constant 0.000000e+00 : f32
    %116 = vector.broadcast %cst_59 : f32 to vector<64x2xf32>
    %117 = arith.maximumf %115, %116 : vector<64x2xf32>
    %118 = vector.extract_strided_slice %117 {offsets = [0, 0], sizes = [64, 1], strides = [1, 1]} : vector<64x2xf32> to vector<64x1xf32>
    %c0_60 = arith.constant 0 : index
    %c7_61 = arith.constant 7 : index
    %119 = vector.load %arg18[%c0_60, %c7_61] : memref<64x76xf32, #tpu.memory_space<vmem>>, vector<64x1xf32>
    tpu.vector_store %arg18[%c0_60, %c7_61], %118 {strides = array<i32>} : memref<64x76xf32, #tpu.memory_space<vmem>>, vector<64x1xf32>,
    %120 = vector.extract_strided_slice %117 {offsets = [0, 1], sizes = [64, 1], strides = [1, 1]} : vector<64x2xf32> to vector<64x1xf32>
    %c0_62 = arith.constant 0 : index
    %c45 = arith.constant 45 : index
    %121 = vector.load %arg18[%c0_62, %c45] : memref<64x76xf32, #tpu.memory_space<vmem>>, vector<64x1xf32>
    tpu.vector_store %arg18[%c0_62, %c45], %120 {strides = array<i32>} : memref<64x76xf32, #tpu.memory_space<vmem>>, vector<64x1xf32>,
    %122 = arith.mulf %9, %109 : vector<64x2xf32>
    %123 = arith.addf %122, %113 : vector<64x2xf32>
    %cst_63 = arith.constant 0.000000e+00 : f32
    %124 = vector.broadcast %cst_63 : f32 to vector<64x2xf32>
    %125 = arith.maximumf %123, %124 : vector<64x2xf32>
    %126 = vector.extract_strided_slice %125 {offsets = [0, 0], sizes = [64, 1], strides = [1, 1]} : vector<64x2xf32> to vector<64x1xf32>
    %c0_64 = arith.constant 0 : index
    %c8_65 = arith.constant 8 : index
    %127 = vector.load %arg18[%c0_64, %c8_65] : memref<64x76xf32, #tpu.memory_space<vmem>>, vector<64x1xf32>
    tpu.vector_store %arg18[%c0_64, %c8_65], %126 {strides = array<i32>} : memref<64x76xf32, #tpu.memory_space<vmem>>, vector<64x1xf32>,
    %128 = vector.extract_strided_slice %125 {offsets = [0, 1], sizes = [64, 1], strides = [1, 1]} : vector<64x2xf32> to vector<64x1xf32>
    %c0_66 = arith.constant 0 : index
    %c46 = arith.constant 46 : index
    %129 = vector.load %arg18[%c0_66, %c46] : memref<64x76xf32, #tpu.memory_space<vmem>>, vector<64x1xf32>
    tpu.vector_store %arg18[%c0_66, %c46], %128 {strides = array<i32>} : memref<64x76xf32, #tpu.memory_space<vmem>>, vector<64x1xf32>,
    %130 = arith.mulf %12, %109 : vector<64x2xf32>
    %131 = arith.addf %130, %113 : vector<64x2xf32>
    %cst_67 = arith.constant 0.000000e+00 : f32
    %132 = vector.broadcast %cst_67 : f32 to vector<64x2xf32>
    %133 = arith.maximumf %131, %132 : vector<64x2xf32>
    %134 = vector.extract_strided_slice %133 {offsets = [0, 0], sizes = [64, 1], strides = [1, 1]} : vector<64x2xf32> to vector<64x1xf32>
    %c0_68 = arith.constant 0 : index
    %c9_69 = arith.constant 9 : index
    %135 = vector.load %arg18[%c0_68, %c9_69] : memref<64x76xf32, #tpu.memory_space<vmem>>, vector<64x1xf32>
    tpu.vector_store %arg18[%c0_68, %c9_69], %134 {strides = array<i32>} : memref<64x76xf32, #tpu.memory_space<vmem>>, vector<64x1xf32>,
    %136 = vector.extract_strided_slice %133 {offsets = [0, 1], sizes = [64, 1], strides = [1, 1]} : vector<64x2xf32> to vector<64x1xf32>
    %c0_70 = arith.constant 0 : index
    %c47 = arith.constant 47 : index
    %137 = vector.load %arg18[%c0_70, %c47] : memref<64x76xf32, #tpu.memory_space<vmem>>, vector<64x1xf32>
    tpu.vector_store %arg18[%c0_70, %c47], %136 {strides = array<i32>} : memref<64x76xf32, #tpu.memory_space<vmem>>, vector<64x1xf32>,
    %138 = arith.mulf %15, %109 : vector<64x2xf32>
    %139 = arith.addf %138, %113 : vector<64x2xf32>
    %cst_71 = arith.constant 0.000000e+00 : f32
    %140 = vector.broadcast %cst_71 : f32 to vector<64x2xf32>
    %141 = arith.maximumf %139, %140 : vector<64x2xf32>
    %142 = vector.extract_strided_slice %141 {offsets = [0, 0], sizes = [64, 1], strides = [1, 1]} : vector<64x2xf32> to vector<64x1xf32>
    %c0_72 = arith.constant 0 : index
    %c10_73 = arith.constant 10 : index
    %143 = vector.load %arg18[%c0_72, %c10_73] : memref<64x76xf32, #tpu.memory_space<vmem>>, vector<64x1xf32>
    tpu.vector_store %arg18[%c0_72, %c10_73], %142 {strides = array<i32>} : memref<64x76xf32, #tpu.memory_space<vmem>>, vector<64x1xf32>,
    %144 = vector.extract_strided_slice %141 {offsets = [0, 1], sizes = [64, 1], strides = [1, 1]} : vector<64x2xf32> to vector<64x1xf32>
    %c0_74 = arith.constant 0 : index
    %c48 = arith.constant 48 : index
    %145 = vector.load %arg18[%c0_74, %c48] : memref<64x76xf32, #tpu.memory_space<vmem>>, vector<64x1xf32>
    tpu.vector_store %arg18[%c0_74, %c48], %144 {strides = array<i32>} : memref<64x76xf32, #tpu.memory_space<vmem>>, vector<64x1xf32>,
    %146 = arith.mulf %18, %109 : vector<64x2xf32>
    %147 = arith.addf %146, %113 : vector<64x2xf32>
    %cst_75 = arith.constant 0.000000e+00 : f32
    %148 = vector.broadcast %cst_75 : f32 to vector<64x2xf32>
    %149 = arith.maximumf %147, %148 : vector<64x2xf32>
    %150 = vector.extract_strided_slice %149 {offsets = [0, 0], sizes = [64, 1], strides = [1, 1]} : vector<64x2xf32> to vector<64x1xf32>
    %c0_76 = arith.constant 0 : index
    %c13_77 = arith.constant 13 : index
    %151 = vector.load %arg18[%c0_76, %c13_77] : memref<64x76xf32, #tpu.memory_space<vmem>>, vector<64x1xf32>
    tpu.vector_store %arg18[%c0_76, %c13_77], %150 {strides = array<i32>} : memref<64x76xf32, #tpu.memory_space<vmem>>, vector<64x1xf32>,
    %152 = vector.extract_strided_slice %149 {offsets = [0, 1], sizes = [64, 1], strides = [1, 1]} : vector<64x2xf32> to vector<64x1xf32>
    %c0_78 = arith.constant 0 : index
    %c51 = arith.constant 51 : index
    %153 = vector.load %arg18[%c0_78, %c51] : memref<64x76xf32, #tpu.memory_space<vmem>>, vector<64x1xf32>
    tpu.vector_store %arg18[%c0_78, %c51], %152 {strides = array<i32>} : memref<64x76xf32, #tpu.memory_space<vmem>>, vector<64x1xf32>,
    %154 = arith.mulf %21, %109 : vector<64x2xf32>
    %155 = arith.addf %154, %113 : vector<64x2xf32>
    %cst_79 = arith.constant 0.000000e+00 : f32
    %156 = vector.broadcast %cst_79 : f32 to vector<64x2xf32>
    %157 = arith.maximumf %155, %156 : vector<64x2xf32>
    %158 = vector.extract_strided_slice %157 {offsets = [0, 0], sizes = [64, 1], strides = [1, 1]} : vector<64x2xf32> to vector<64x1xf32>
    %c0_80 = arith.constant 0 : index
    %c14_81 = arith.constant 14 : index
    %159 = vector.load %arg18[%c0_80, %c14_81] : memref<64x76xf32, #tpu.memory_space<vmem>>, vector<64x1xf32>
    tpu.vector_store %arg18[%c0_80, %c14_81], %158 {strides = array<i32>} : memref<64x76xf32, #tpu.memory_space<vmem>>, vector<64x1xf32>,
    %160 = vector.extract_strided_slice %157 {offsets = [0, 1], sizes = [64, 1], strides = [1, 1]} : vector<64x2xf32> to vector<64x1xf32>
    %c0_82 = arith.constant 0 : index
    %c52 = arith.constant 52 : index
    %161 = vector.load %arg18[%c0_82, %c52] : memref<64x76xf32, #tpu.memory_space<vmem>>, vector<64x1xf32>
    tpu.vector_store %arg18[%c0_82, %c52], %160 {strides = array<i32>} : memref<64x76xf32, #tpu.memory_space<vmem>>, vector<64x1xf32>,
    %162 = arith.mulf %24, %109 : vector<64x2xf32>
    %163 = arith.addf %162, %113 : vector<64x2xf32>
    %cst_83 = arith.constant 0.000000e+00 : f32
    %164 = vector.broadcast %cst_83 : f32 to vector<64x2xf32>
    %165 = arith.maximumf %163, %164 : vector<64x2xf32>
    %166 = vector.extract_strided_slice %165 {offsets = [0, 0], sizes = [64, 1], strides = [1, 1]} : vector<64x2xf32> to vector<64x1xf32>
    %c0_84 = arith.constant 0 : index
    %c15_85 = arith.constant 15 : index
    %167 = vector.load %arg18[%c0_84, %c15_85] : memref<64x76xf32, #tpu.memory_space<vmem>>, vector<64x1xf32>
    tpu.vector_store %arg18[%c0_84, %c15_85], %166 {strides = array<i32>} : memref<64x76xf32, #tpu.memory_space<vmem>>, vector<64x1xf32>,
    %168 = vector.extract_strided_slice %165 {offsets = [0, 1], sizes = [64, 1], strides = [1, 1]} : vector<64x2xf32> to vector<64x1xf32>
    %c0_86 = arith.constant 0 : index
    %c53 = arith.constant 53 : index
    %169 = vector.load %arg18[%c0_86, %c53] : memref<64x76xf32, #tpu.memory_space<vmem>>, vector<64x1xf32>
    tpu.vector_store %arg18[%c0_86, %c53], %168 {strides = array<i32>} : memref<64x76xf32, #tpu.memory_space<vmem>>, vector<64x1xf32>,
    %170 = arith.mulf %27, %109 : vector<64x2xf32>
    %171 = arith.addf %170, %113 : vector<64x2xf32>
    %cst_87 = arith.constant 0.000000e+00 : f32
    %172 = vector.broadcast %cst_87 : f32 to vector<64x2xf32>
    %173 = arith.maximumf %171, %172 : vector<64x2xf32>
    %174 = vector.extract_strided_slice %173 {offsets = [0, 0], sizes = [64, 1], strides = [1, 1]} : vector<64x2xf32> to vector<64x1xf32>
    %c0_88 = arith.constant 0 : index
    %c16 = arith.constant 16 : index
    %175 = vector.load %arg18[%c0_88, %c16] : memref<64x76xf32, #tpu.memory_space<vmem>>, vector<64x1xf32>
    tpu.vector_store %arg18[%c0_88, %c16], %174 {strides = array<i32>} : memref<64x76xf32, #tpu.memory_space<vmem>>, vector<64x1xf32>,
    %176 = vector.extract_strided_slice %173 {offsets = [0, 1], sizes = [64, 1], strides = [1, 1]} : vector<64x2xf32> to vector<64x1xf32>
    %c0_89 = arith.constant 0 : index
    %c54 = arith.constant 54 : index
    %177 = vector.load %arg18[%c0_89, %c54] : memref<64x76xf32, #tpu.memory_space<vmem>>, vector<64x1xf32>
    tpu.vector_store %arg18[%c0_89, %c54], %176 {strides = array<i32>} : memref<64x76xf32, #tpu.memory_space<vmem>>, vector<64x1xf32>,
    %178 = arith.mulf %30, %109 : vector<64x2xf32>
    %179 = arith.addf %178, %113 : vector<64x2xf32>
    %cst_90 = arith.constant 0.000000e+00 : f32
    %180 = vector.broadcast %cst_90 : f32 to vector<64x2xf32>
    %181 = arith.maximumf %179, %180 : vector<64x2xf32>
    %182 = vector.extract_strided_slice %181 {offsets = [0, 0], sizes = [64, 1], strides = [1, 1]} : vector<64x2xf32> to vector<64x1xf32>
    %c0_91 = arith.constant 0 : index
    %c19 = arith.constant 19 : index
    %183 = vector.load %arg18[%c0_91, %c19] : memref<64x76xf32, #tpu.memory_space<vmem>>, vector<64x1xf32>
    tpu.vector_store %arg18[%c0_91, %c19], %182 {strides = array<i32>} : memref<64x76xf32, #tpu.memory_space<vmem>>, vector<64x1xf32>,
    %184 = vector.extract_strided_slice %181 {offsets = [0, 1], sizes = [64, 1], strides = [1, 1]} : vector<64x2xf32> to vector<64x1xf32>
    %c0_92 = arith.constant 0 : index
    %c57 = arith.constant 57 : index
    %185 = vector.load %arg18[%c0_92, %c57] : memref<64x76xf32, #tpu.memory_space<vmem>>, vector<64x1xf32>
    tpu.vector_store %arg18[%c0_92, %c57], %184 {strides = array<i32>} : memref<64x76xf32, #tpu.memory_space<vmem>>, vector<64x1xf32>,
    %186 = arith.mulf %33, %109 : vector<64x2xf32>
    %187 = arith.addf %186, %113 : vector<64x2xf32>
    %cst_93 = arith.constant 0.000000e+00 : f32
    %188 = vector.broadcast %cst_93 : f32 to vector<64x2xf32>
    %189 = arith.maximumf %187, %188 : vector<64x2xf32>
    %190 = vector.extract_strided_slice %189 {offsets = [0, 0], sizes = [64, 1], strides = [1, 1]} : vector<64x2xf32> to vector<64x1xf32>
    %c0_94 = arith.constant 0 : index
    %c20 = arith.constant 20 : index
    %191 = vector.load %arg18[%c0_94, %c20] : memref<64x76xf32, #tpu.memory_space<vmem>>, vector<64x1xf32>
    tpu.vector_store %arg18[%c0_94, %c20], %190 {strides = array<i32>} : memref<64x76xf32, #tpu.memory_space<vmem>>, vector<64x1xf32>,
    %192 = vector.extract_strided_slice %189 {offsets = [0, 1], sizes = [64, 1], strides = [1, 1]} : vector<64x2xf32> to vector<64x1xf32>
    %c0_95 = arith.constant 0 : index
    %c58 = arith.constant 58 : index
    %193 = vector.load %arg18[%c0_95, %c58] : memref<64x76xf32, #tpu.memory_space<vmem>>, vector<64x1xf32>
    tpu.vector_store %arg18[%c0_95, %c58], %192 {strides = array<i32>} : memref<64x76xf32, #tpu.memory_space<vmem>>, vector<64x1xf32>,
    %194 = arith.mulf %36, %109 : vector<64x2xf32>
    %195 = arith.addf %194, %113 : vector<64x2xf32>
    %cst_96 = arith.constant 0.000000e+00 : f32
    %196 = vector.broadcast %cst_96 : f32 to vector<64x2xf32>
    %197 = arith.maximumf %195, %196 : vector<64x2xf32>
    %198 = vector.extract_strided_slice %197 {offsets = [0, 0], sizes = [64, 1], strides = [1, 1]} : vector<64x2xf32> to vector<64x1xf32>
    %c0_97 = arith.constant 0 : index
    %c21 = arith.constant 21 : index
    %199 = vector.load %arg18[%c0_97, %c21] : memref<64x76xf32, #tpu.memory_space<vmem>>, vector<64x1xf32>
    tpu.vector_store %arg18[%c0_97, %c21], %198 {strides = array<i32>} : memref<64x76xf32, #tpu.memory_space<vmem>>, vector<64x1xf32>,
    %200 = vector.extract_strided_slice %197 {offsets = [0, 1], sizes = [64, 1], strides = [1, 1]} : vector<64x2xf32> to vector<64x1xf32>
    %c0_98 = arith.constant 0 : index
    %c59 = arith.constant 59 : index
    %201 = vector.load %arg18[%c0_98, %c59] : memref<64x76xf32, #tpu.memory_space<vmem>>, vector<64x1xf32>
    tpu.vector_store %arg18[%c0_98, %c59], %200 {strides = array<i32>} : memref<64x76xf32, #tpu.memory_space<vmem>>, vector<64x1xf32>,
    %202 = arith.mulf %39, %109 : vector<64x2xf32>
    %203 = arith.addf %202, %113 : vector<64x2xf32>
    %cst_99 = arith.constant 0.000000e+00 : f32
    %204 = vector.broadcast %cst_99 : f32 to vector<64x2xf32>
    %205 = arith.maximumf %203, %204 : vector<64x2xf32>
    %206 = vector.extract_strided_slice %205 {offsets = [0, 0], sizes = [64, 1], strides = [1, 1]} : vector<64x2xf32> to vector<64x1xf32>
    %c0_100 = arith.constant 0 : index
    %c22 = arith.constant 22 : index
    %207 = vector.load %arg18[%c0_100, %c22] : memref<64x76xf32, #tpu.memory_space<vmem>>, vector<64x1xf32>
    tpu.vector_store %arg18[%c0_100, %c22], %206 {strides = array<i32>} : memref<64x76xf32, #tpu.memory_space<vmem>>, vector<64x1xf32>,
    %208 = vector.extract_strided_slice %205 {offsets = [0, 1], sizes = [64, 1], strides = [1, 1]} : vector<64x2xf32> to vector<64x1xf32>
    %c0_101 = arith.constant 0 : index
    %c60 = arith.constant 60 : index
    %209 = vector.load %arg18[%c0_101, %c60] : memref<64x76xf32, #tpu.memory_space<vmem>>, vector<64x1xf32>
    tpu.vector_store %arg18[%c0_101, %c60], %208 {strides = array<i32>} : memref<64x76xf32, #tpu.memory_space<vmem>>, vector<64x1xf32>,
    %210 = arith.mulf %42, %109 : vector<64x2xf32>
    %211 = arith.addf %210, %113 : vector<64x2xf32>
    %cst_102 = arith.constant 0.000000e+00 : f32
    %212 = vector.broadcast %cst_102 : f32 to vector<64x2xf32>
    %213 = arith.maximumf %211, %212 : vector<64x2xf32>
    %214 = vector.extract_strided_slice %213 {offsets = [0, 0], sizes = [64, 1], strides = [1, 1]} : vector<64x2xf32> to vector<64x1xf32>
    %c0_103 = arith.constant 0 : index
    %c25 = arith.constant 25 : index
    %215 = vector.load %arg18[%c0_103, %c25] : memref<64x76xf32, #tpu.memory_space<vmem>>, vector<64x1xf32>
    tpu.vector_store %arg18[%c0_103, %c25], %214 {strides = array<i32>} : memref<64x76xf32, #tpu.memory_space<vmem>>, vector<64x1xf32>,
    %216 = vector.extract_strided_slice %213 {offsets = [0, 1], sizes = [64, 1], strides = [1, 1]} : vector<64x2xf32> to vector<64x1xf32>
    %c0_104 = arith.constant 0 : index
    %c63 = arith.constant 63 : index
    %217 = vector.load %arg18[%c0_104, %c63] : memref<64x76xf32, #tpu.memory_space<vmem>>, vector<64x1xf32>
    tpu.vector_store %arg18[%c0_104, %c63], %216 {strides = array<i32>} : memref<64x76xf32, #tpu.memory_space<vmem>>, vector<64x1xf32>,
    %218 = arith.mulf %45, %109 : vector<64x2xf32>
    %219 = arith.addf %218, %113 : vector<64x2xf32>
    %cst_105 = arith.constant 0.000000e+00 : f32
    %220 = vector.broadcast %cst_105 : f32 to vector<64x2xf32>
    %221 = arith.maximumf %219, %220 : vector<64x2xf32>
    %222 = vector.extract_strided_slice %221 {offsets = [0, 0], sizes = [64, 1], strides = [1, 1]} : vector<64x2xf32> to vector<64x1xf32>
    %c0_106 = arith.constant 0 : index
    %c26 = arith.constant 26 : index
    %223 = vector.load %arg18[%c0_106, %c26] : memref<64x76xf32, #tpu.memory_space<vmem>>, vector<64x1xf32>
    tpu.vector_store %arg18[%c0_106, %c26], %222 {strides = array<i32>} : memref<64x76xf32, #tpu.memory_space<vmem>>, vector<64x1xf32>,
    %224 = vector.extract_strided_slice %221 {offsets = [0, 1], sizes = [64, 1], strides = [1, 1]} : vector<64x2xf32> to vector<64x1xf32>
    %c0_107 = arith.constant 0 : index
    %c64 = arith.constant 64 : index
    %225 = vector.load %arg18[%c0_107, %c64] : memref<64x76xf32, #tpu.memory_space<vmem>>, vector<64x1xf32>
    tpu.vector_store %arg18[%c0_107, %c64], %224 {strides = array<i32>} : memref<64x76xf32, #tpu.memory_space<vmem>>, vector<64x1xf32>,
    %226 = arith.mulf %48, %109 : vector<64x2xf32>
    %227 = arith.addf %226, %113 : vector<64x2xf32>
    %cst_108 = arith.constant 0.000000e+00 : f32
    %228 = vector.broadcast %cst_108 : f32 to vector<64x2xf32>
    %229 = arith.maximumf %227, %228 : vector<64x2xf32>
    %230 = vector.extract_strided_slice %229 {offsets = [0, 0], sizes = [64, 1], strides = [1, 1]} : vector<64x2xf32> to vector<64x1xf32>
    %c0_109 = arith.constant 0 : index
    %c27 = arith.constant 27 : index
    %231 = vector.load %arg18[%c0_109, %c27] : memref<64x76xf32, #tpu.memory_space<vmem>>, vector<64x1xf32>
    tpu.vector_store %arg18[%c0_109, %c27], %230 {strides = array<i32>} : memref<64x76xf32, #tpu.memory_space<vmem>>, vector<64x1xf32>,
    %232 = vector.extract_strided_slice %229 {offsets = [0, 1], sizes = [64, 1], strides = [1, 1]} : vector<64x2xf32> to vector<64x1xf32>
    %c0_110 = arith.constant 0 : index
    %c65 = arith.constant 65 : index
    %233 = vector.load %arg18[%c0_110, %c65] : memref<64x76xf32, #tpu.memory_space<vmem>>, vector<64x1xf32>
    tpu.vector_store %arg18[%c0_110, %c65], %232 {strides = array<i32>} : memref<64x76xf32, #tpu.memory_space<vmem>>, vector<64x1xf32>,
    %234 = arith.mulf %51, %109 : vector<64x2xf32>
    %235 = arith.addf %234, %113 : vector<64x2xf32>
    %cst_111 = arith.constant 0.000000e+00 : f32
    %236 = vector.broadcast %cst_111 : f32 to vector<64x2xf32>
    %237 = arith.maximumf %235, %236 : vector<64x2xf32>
    %238 = vector.extract_strided_slice %237 {offsets = [0, 0], sizes = [64, 1], strides = [1, 1]} : vector<64x2xf32> to vector<64x1xf32>
    %c0_112 = arith.constant 0 : index
    %c28 = arith.constant 28 : index
    %239 = vector.load %arg18[%c0_112, %c28] : memref<64x76xf32, #tpu.memory_space<vmem>>, vector<64x1xf32>
    tpu.vector_store %arg18[%c0_112, %c28], %238 {strides = array<i32>} : memref<64x76xf32, #tpu.memory_space<vmem>>, vector<64x1xf32>,
    %240 = vector.extract_strided_slice %237 {offsets = [0, 1], sizes = [64, 1], strides = [1, 1]} : vector<64x2xf32> to vector<64x1xf32>
    %c0_113 = arith.constant 0 : index
    %c66 = arith.constant 66 : index
    %241 = vector.load %arg18[%c0_113, %c66] : memref<64x76xf32, #tpu.memory_space<vmem>>, vector<64x1xf32>
    tpu.vector_store %arg18[%c0_113, %c66], %240 {strides = array<i32>} : memref<64x76xf32, #tpu.memory_space<vmem>>, vector<64x1xf32>,
    %c0_114 = arith.constant 0 : index
    %c0_115 = arith.constant 0 : index
    %242 = vector.load %arg5[%c0_114, %c0_115] : memref<32x1xf32, #tpu.memory_space<vmem>>, vector<32x1xf32>
    %c0_116 = arith.constant 0 : index
    %c0_117 = arith.constant 0 : index
    %243 = vector.load %arg6[%c0_116, %c0_117] : memref<32x1xf32, #tpu.memory_space<vmem>>, vector<32x1xf32>
    %c0_118 = arith.constant 0 : index
    %c0_119 = arith.constant 0 : index
    %244 = vector.load %arg7[%c0_118, %c0_119] : memref<62x2xf32, #tpu.memory_space<vmem>>, vector<62x2xf32>
    %c0_120 = arith.constant 0 : index
    %c0_121 = arith.constant 0 : index
    %245 = vector.load %arg8[%c0_120, %c0_121] : memref<2x62xf32, #tpu.memory_space<vmem>>, vector<2x62xf32>
    %c0_122 = arith.constant 0 : index
    %c0_123 = arith.constant 0 : index
    %246 = vector.load %arg18[%c0_122, %c0_123] : memref<64x76xf32, #tpu.memory_space<vmem>>, vector<64x62xf32>
    %247 = arith.truncf %246 : vector<64x62xf32> to vector<64x62xbf16>
    %c0_124 = arith.constant 0 : index
    %c0_125 = arith.constant 0 : index
    %c0_126 = arith.constant 0 : index
    %248 = vector.load %arg4[%c0_124, %c0_125, %c0_126] : memref<16x32x64xbf16, #tpu.memory_space<vmem>>, vector<1x32x64xbf16>
    %249 = vector.shape_cast %248 : vector<1x32x64xbf16> to vector<32x64xbf16>
    %cst_127 = arith.constant dense<0.000000e+00> : vector<32x62xf32>
    %250 = tpu.matmul %249, %247, %cst_127 {dimension_numbers = #tpu.dot_dimension_numbers<[1], [0], [0], [1], [0, 0, 1, 1], [], []>} : vector<32x64xbf16>, vector<64x62xbf16>, vector<32x62xf32> -> vector<32x62xf32>
    %c0_128 = arith.constant 0 : index
    %c1_129 = arith.constant 1 : index
    %251 = vector.load %arg18[%c0_128, %c1_129] : memref<64x76xf32, #tpu.memory_space<vmem>>, vector<64x62xf32>
    %252 = arith.truncf %251 : vector<64x62xf32> to vector<64x62xbf16>
    %c1_130 = arith.constant 1 : index
    %c0_131 = arith.constant 0 : index
    %c0_132 = arith.constant 0 : index
    %253 = vector.load %arg4[%c1_130, %c0_131, %c0_132] : memref<16x32x64xbf16, #tpu.memory_space<vmem>>, vector<1x32x64xbf16>
    %254 = vector.shape_cast %253 : vector<1x32x64xbf16> to vector<32x64xbf16>
    %cst_133 = arith.constant dense<0.000000e+00> : vector<32x62xf32>
    %255 = tpu.matmul %254, %252, %cst_133 {dimension_numbers = #tpu.dot_dimension_numbers<[1], [0], [0], [1], [0, 0, 1, 1], [], []>} : vector<32x64xbf16>, vector<64x62xbf16>, vector<32x62xf32> -> vector<32x62xf32>
    %256 = arith.addf %250, %255 : vector<32x62xf32>
    %c0_134 = arith.constant 0 : index
    %c6_135 = arith.constant 6 : index
    %257 = vector.load %arg18[%c0_134, %c6_135] : memref<64x76xf32, #tpu.memory_space<vmem>>, vector<64x62xf32>
    %258 = arith.truncf %257 : vector<64x62xf32> to vector<64x62xbf16>
    %c2_136 = arith.constant 2 : index
    %c0_137 = arith.constant 0 : index
    %c0_138 = arith.constant 0 : index
    %259 = vector.load %arg4[%c2_136, %c0_137, %c0_138] : memref<16x32x64xbf16, #tpu.memory_space<vmem>>, vector<1x32x64xbf16>
    %260 = vector.shape_cast %259 : vector<1x32x64xbf16> to vector<32x64xbf16>
    %cst_139 = arith.constant dense<0.000000e+00> : vector<32x62xf32>
    %261 = tpu.matmul %260, %258, %cst_139 {dimension_numbers = #tpu.dot_dimension_numbers<[1], [0], [0], [1], [0, 0, 1, 1], [], []>} : vector<32x64xbf16>, vector<64x62xbf16>, vector<32x62xf32> -> vector<32x62xf32>
    %262 = arith.addf %256, %261 : vector<32x62xf32>
    %c0_140 = arith.constant 0 : index
    %c7_141 = arith.constant 7 : index
    %263 = vector.load %arg18[%c0_140, %c7_141] : memref<64x76xf32, #tpu.memory_space<vmem>>, vector<64x62xf32>
    %264 = arith.truncf %263 : vector<64x62xf32> to vector<64x62xbf16>
    %c3_142 = arith.constant 3 : index
    %c0_143 = arith.constant 0 : index
    %c0_144 = arith.constant 0 : index
    %265 = vector.load %arg4[%c3_142, %c0_143, %c0_144] : memref<16x32x64xbf16, #tpu.memory_space<vmem>>, vector<1x32x64xbf16>
    %266 = vector.shape_cast %265 : vector<1x32x64xbf16> to vector<32x64xbf16>
    %cst_145 = arith.constant dense<0.000000e+00> : vector<32x62xf32>
    %267 = tpu.matmul %266, %264, %cst_145 {dimension_numbers = #tpu.dot_dimension_numbers<[1], [0], [0], [1], [0, 0, 1, 1], [], []>} : vector<32x64xbf16>, vector<64x62xbf16>, vector<32x62xf32> -> vector<32x62xf32>
    %268 = arith.addf %262, %267 : vector<32x62xf32>
    %cst_146 = arith.constant dense<0.000000e+00> : vector<32x2xf32>
    %269 = tpu.matmul %268, %244, %cst_146 {dimension_numbers = #tpu.dot_dimension_numbers<[1], [0], [0], [1], [0, 0, 1, 1], [], []>} : vector<32x62xf32>, vector<62x2xf32>, vector<32x2xf32> -> vector<32x2xf32>
    %270 = arith.mulf %268, %268 : vector<32x62xf32>
    %cst_147 = arith.constant dense<0.000000e+00> : vector<32x2xf32>
    %271 = tpu.matmul %270, %244, %cst_147 {dimension_numbers = #tpu.dot_dimension_numbers<[1], [0], [0], [1], [0, 0, 1, 1], [], []>} : vector<32x62xf32>, vector<62x2xf32>, vector<32x2xf32> -> vector<32x2xf32>
    %c0_148 = arith.constant 0 : index
    %c1_149 = arith.constant 1 : index
    %272 = vector.load %arg18[%c0_148, %c1_149] : memref<64x76xf32, #tpu.memory_space<vmem>>, vector<64x62xf32>
    %273 = arith.truncf %272 : vector<64x62xf32> to vector<64x62xbf16>
    %c4_150 = arith.constant 4 : index
    %c0_151 = arith.constant 0 : index
    %c0_152 = arith.constant 0 : index
    %274 = vector.load %arg4[%c4_150, %c0_151, %c0_152] : memref<16x32x64xbf16, #tpu.memory_space<vmem>>, vector<1x32x64xbf16>
    %275 = vector.shape_cast %274 : vector<1x32x64xbf16> to vector<32x64xbf16>
    %cst_153 = arith.constant dense<0.000000e+00> : vector<32x62xf32>
    %276 = tpu.matmul %275, %273, %cst_153 {dimension_numbers = #tpu.dot_dimension_numbers<[1], [0], [0], [1], [0, 0, 1, 1], [], []>} : vector<32x64xbf16>, vector<64x62xbf16>, vector<32x62xf32> -> vector<32x62xf32>
    %c0_154 = arith.constant 0 : index
    %c2_155 = arith.constant 2 : index
    %277 = vector.load %arg18[%c0_154, %c2_155] : memref<64x76xf32, #tpu.memory_space<vmem>>, vector<64x62xf32>
    %278 = arith.truncf %277 : vector<64x62xf32> to vector<64x62xbf16>
    %c5_156 = arith.constant 5 : index
    %c0_157 = arith.constant 0 : index
    %c0_158 = arith.constant 0 : index
    %279 = vector.load %arg4[%c5_156, %c0_157, %c0_158] : memref<16x32x64xbf16, #tpu.memory_space<vmem>>, vector<1x32x64xbf16>
    %280 = vector.shape_cast %279 : vector<1x32x64xbf16> to vector<32x64xbf16>
    %cst_159 = arith.constant dense<0.000000e+00> : vector<32x62xf32>
    %281 = tpu.matmul %280, %278, %cst_159 {dimension_numbers = #tpu.dot_dimension_numbers<[1], [0], [0], [1], [0, 0, 1, 1], [], []>} : vector<32x64xbf16>, vector<64x62xbf16>, vector<32x62xf32> -> vector<32x62xf32>
    %282 = arith.addf %276, %281 : vector<32x62xf32>
    %c0_160 = arith.constant 0 : index
    %c7_161 = arith.constant 7 : index
    %283 = vector.load %arg18[%c0_160, %c7_161] : memref<64x76xf32, #tpu.memory_space<vmem>>, vector<64x62xf32>
    %284 = arith.truncf %283 : vector<64x62xf32> to vector<64x62xbf16>
    %c6_162 = arith.constant 6 : index
    %c0_163 = arith.constant 0 : index
    %c0_164 = arith.constant 0 : index
    %285 = vector.load %arg4[%c6_162, %c0_163, %c0_164] : memref<16x32x64xbf16, #tpu.memory_space<vmem>>, vector<1x32x64xbf16>
    %286 = vector.shape_cast %285 : vector<1x32x64xbf16> to vector<32x64xbf16>
    %cst_165 = arith.constant dense<0.000000e+00> : vector<32x62xf32>
    %287 = tpu.matmul %286, %284, %cst_165 {dimension_numbers = #tpu.dot_dimension_numbers<[1], [0], [0], [1], [0, 0, 1, 1], [], []>} : vector<32x64xbf16>, vector<64x62xbf16>, vector<32x62xf32> -> vector<32x62xf32>
    %288 = arith.addf %282, %287 : vector<32x62xf32>
    %c0_166 = arith.constant 0 : index
    %c8_167 = arith.constant 8 : index
    %289 = vector.load %arg18[%c0_166, %c8_167] : memref<64x76xf32, #tpu.memory_space<vmem>>, vector<64x62xf32>
    %290 = arith.truncf %289 : vector<64x62xf32> to vector<64x62xbf16>
    %c7_168 = arith.constant 7 : index
    %c0_169 = arith.constant 0 : index
    %c0_170 = arith.constant 0 : index
    %291 = vector.load %arg4[%c7_168, %c0_169, %c0_170] : memref<16x32x64xbf16, #tpu.memory_space<vmem>>, vector<1x32x64xbf16>
    %292 = vector.shape_cast %291 : vector<1x32x64xbf16> to vector<32x64xbf16>
    %cst_171 = arith.constant dense<0.000000e+00> : vector<32x62xf32>
    %293 = tpu.matmul %292, %290, %cst_171 {dimension_numbers = #tpu.dot_dimension_numbers<[1], [0], [0], [1], [0, 0, 1, 1], [], []>} : vector<32x64xbf16>, vector<64x62xbf16>, vector<32x62xf32> -> vector<32x62xf32>
    %294 = arith.addf %288, %293 : vector<32x62xf32>
    %cst_172 = arith.constant dense<0.000000e+00> : vector<32x2xf32>
    %295 = tpu.matmul %294, %244, %cst_172 {dimension_numbers = #tpu.dot_dimension_numbers<[1], [0], [0], [1], [0, 0, 1, 1], [], []>} : vector<32x62xf32>, vector<62x2xf32>, vector<32x2xf32> -> vector<32x2xf32>
    %296 = arith.mulf %294, %294 : vector<32x62xf32>
    %cst_173 = arith.constant dense<0.000000e+00> : vector<32x2xf32>
    %297 = tpu.matmul %296, %244, %cst_173 {dimension_numbers = #tpu.dot_dimension_numbers<[1], [0], [0], [1], [0, 0, 1, 1], [], []>} : vector<32x62xf32>, vector<62x2xf32>, vector<32x2xf32> -> vector<32x2xf32>
    %298 = arith.addf %269, %295 : vector<32x2xf32>
    %299 = arith.addf %271, %297 : vector<32x2xf32>
    %c0_174 = arith.constant 0 : index
    %c6_175 = arith.constant 6 : index
    %300 = vector.load %arg18[%c0_174, %c6_175] : memref<64x76xf32, #tpu.memory_space<vmem>>, vector<64x62xf32>
    %301 = arith.truncf %300 : vector<64x62xf32> to vector<64x62xbf16>
    %c8_176 = arith.constant 8 : index
    %c0_177 = arith.constant 0 : index
    %c0_178 = arith.constant 0 : index
    %302 = vector.load %arg4[%c8_176, %c0_177, %c0_178] : memref<16x32x64xbf16, #tpu.memory_space<vmem>>, vector<1x32x64xbf16>
    %303 = vector.shape_cast %302 : vector<1x32x64xbf16> to vector<32x64xbf16>
    %cst_179 = arith.constant dense<0.000000e+00> : vector<32x62xf32>
    %304 = tpu.matmul %303, %301, %cst_179 {dimension_numbers = #tpu.dot_dimension_numbers<[1], [0], [0], [1], [0, 0, 1, 1], [], []>} : vector<32x64xbf16>, vector<64x62xbf16>, vector<32x62xf32> -> vector<32x62xf32>
    %c0_180 = arith.constant 0 : index
    %c7_181 = arith.constant 7 : index
    %305 = vector.load %arg18[%c0_180, %c7_181] : memref<64x76xf32, #tpu.memory_space<vmem>>, vector<64x62xf32>
    %306 = arith.truncf %305 : vector<64x62xf32> to vector<64x62xbf16>
    %c9_182 = arith.constant 9 : index
    %c0_183 = arith.constant 0 : index
    %c0_184 = arith.constant 0 : index
    %307 = vector.load %arg4[%c9_182, %c0_183, %c0_184] : memref<16x32x64xbf16, #tpu.memory_space<vmem>>, vector<1x32x64xbf16>
    %308 = vector.shape_cast %307 : vector<1x32x64xbf16> to vector<32x64xbf16>
    %cst_185 = arith.constant dense<0.000000e+00> : vector<32x62xf32>
    %309 = tpu.matmul %308, %306, %cst_185 {dimension_numbers = #tpu.dot_dimension_numbers<[1], [0], [0], [1], [0, 0, 1, 1], [], []>} : vector<32x64xbf16>, vector<64x62xbf16>, vector<32x62xf32> -> vector<32x62xf32>
    %310 = arith.addf %304, %309 : vector<32x62xf32>
    %c0_186 = arith.constant 0 : index
    %c12_187 = arith.constant 12 : index
    %311 = vector.load %arg18[%c0_186, %c12_187] : memref<64x76xf32, #tpu.memory_space<vmem>>, vector<64x62xf32>
    %312 = arith.truncf %311 : vector<64x62xf32> to vector<64x62xbf16>
    %c10_188 = arith.constant 10 : index
    %c0_189 = arith.constant 0 : index
    %c0_190 = arith.constant 0 : index
    %313 = vector.load %arg4[%c10_188, %c0_189, %c0_190] : memref<16x32x64xbf16, #tpu.memory_space<vmem>>, vector<1x32x64xbf16>
    %314 = vector.shape_cast %313 : vector<1x32x64xbf16> to vector<32x64xbf16>
    %cst_191 = arith.constant dense<0.000000e+00> : vector<32x62xf32>
    %315 = tpu.matmul %314, %312, %cst_191 {dimension_numbers = #tpu.dot_dimension_numbers<[1], [0], [0], [1], [0, 0, 1, 1], [], []>} : vector<32x64xbf16>, vector<64x62xbf16>, vector<32x62xf32> -> vector<32x62xf32>
    %316 = arith.addf %310, %315 : vector<32x62xf32>
    %c0_192 = arith.constant 0 : index
    %c13_193 = arith.constant 13 : index
    %317 = vector.load %arg18[%c0_192, %c13_193] : memref<64x76xf32, #tpu.memory_space<vmem>>, vector<64x62xf32>
    %318 = arith.truncf %317 : vector<64x62xf32> to vector<64x62xbf16>
    %c11_194 = arith.constant 11 : index
    %c0_195 = arith.constant 0 : index
    %c0_196 = arith.constant 0 : index
    %319 = vector.load %arg4[%c11_194, %c0_195, %c0_196] : memref<16x32x64xbf16, #tpu.memory_space<vmem>>, vector<1x32x64xbf16>
    %320 = vector.shape_cast %319 : vector<1x32x64xbf16> to vector<32x64xbf16>
    %cst_197 = arith.constant dense<0.000000e+00> : vector<32x62xf32>
    %321 = tpu.matmul %320, %318, %cst_197 {dimension_numbers = #tpu.dot_dimension_numbers<[1], [0], [0], [1], [0, 0, 1, 1], [], []>} : vector<32x64xbf16>, vector<64x62xbf16>, vector<32x62xf32> -> vector<32x62xf32>
    %322 = arith.addf %316, %321 : vector<32x62xf32>
    %cst_198 = arith.constant dense<0.000000e+00> : vector<32x2xf32>
    %323 = tpu.matmul %322, %244, %cst_198 {dimension_numbers = #tpu.dot_dimension_numbers<[1], [0], [0], [1], [0, 0, 1, 1], [], []>} : vector<32x62xf32>, vector<62x2xf32>, vector<32x2xf32> -> vector<32x2xf32>
    %324 = arith.mulf %322, %322 : vector<32x62xf32>
    %cst_199 = arith.constant dense<0.000000e+00> : vector<32x2xf32>
    %325 = tpu.matmul %324, %244, %cst_199 {dimension_numbers = #tpu.dot_dimension_numbers<[1], [0], [0], [1], [0, 0, 1, 1], [], []>} : vector<32x62xf32>, vector<62x2xf32>, vector<32x2xf32> -> vector<32x2xf32>
    %326 = arith.addf %298, %323 : vector<32x2xf32>
    %327 = arith.addf %299, %325 : vector<32x2xf32>
    %c0_200 = arith.constant 0 : index
    %c7_201 = arith.constant 7 : index
    %328 = vector.load %arg18[%c0_200, %c7_201] : memref<64x76xf32, #tpu.memory_space<vmem>>, vector<64x62xf32>
    %329 = arith.truncf %328 : vector<64x62xf32> to vector<64x62xbf16>
    %c12_202 = arith.constant 12 : index
    %c0_203 = arith.constant 0 : index
    %c0_204 = arith.constant 0 : index
    %330 = vector.load %arg4[%c12_202, %c0_203, %c0_204] : memref<16x32x64xbf16, #tpu.memory_space<vmem>>, vector<1x32x64xbf16>
    %331 = vector.shape_cast %330 : vector<1x32x64xbf16> to vector<32x64xbf16>
    %cst_205 = arith.constant dense<0.000000e+00> : vector<32x62xf32>
    %332 = tpu.matmul %331, %329, %cst_205 {dimension_numbers = #tpu.dot_dimension_numbers<[1], [0], [0], [1], [0, 0, 1, 1], [], []>} : vector<32x64xbf16>, vector<64x62xbf16>, vector<32x62xf32> -> vector<32x62xf32>
    %c0_206 = arith.constant 0 : index
    %c8_207 = arith.constant 8 : index
    %333 = vector.load %arg18[%c0_206, %c8_207] : memref<64x76xf32, #tpu.memory_space<vmem>>, vector<64x62xf32>
    %334 = arith.truncf %333 : vector<64x62xf32> to vector<64x62xbf16>
    %c13_208 = arith.constant 13 : index
    %c0_209 = arith.constant 0 : index
    %c0_210 = arith.constant 0 : index
    %335 = vector.load %arg4[%c13_208, %c0_209, %c0_210] : memref<16x32x64xbf16, #tpu.memory_space<vmem>>, vector<1x32x64xbf16>
    %336 = vector.shape_cast %335 : vector<1x32x64xbf16> to vector<32x64xbf16>
    %cst_211 = arith.constant dense<0.000000e+00> : vector<32x62xf32>
    %337 = tpu.matmul %336, %334, %cst_211 {dimension_numbers = #tpu.dot_dimension_numbers<[1], [0], [0], [1], [0, 0, 1, 1], [], []>} : vector<32x64xbf16>, vector<64x62xbf16>, vector<32x62xf32> -> vector<32x62xf32>
    %338 = arith.addf %332, %337 : vector<32x62xf32>
    %c0_212 = arith.constant 0 : index
    %c13_213 = arith.constant 13 : index
    %339 = vector.load %arg18[%c0_212, %c13_213] : memref<64x76xf32, #tpu.memory_space<vmem>>, vector<64x62xf32>
    %340 = arith.truncf %339 : vector<64x62xf32> to vector<64x62xbf16>
    %c14_214 = arith.constant 14 : index
    %c0_215 = arith.constant 0 : index
    %c0_216 = arith.constant 0 : index
    %341 = vector.load %arg4[%c14_214, %c0_215, %c0_216] : memref<16x32x64xbf16, #tpu.memory_space<vmem>>, vector<1x32x64xbf16>
    %342 = vector.shape_cast %341 : vector<1x32x64xbf16> to vector<32x64xbf16>
    %cst_217 = arith.constant dense<0.000000e+00> : vector<32x62xf32>
    %343 = tpu.matmul %342, %340, %cst_217 {dimension_numbers = #tpu.dot_dimension_numbers<[1], [0], [0], [1], [0, 0, 1, 1], [], []>} : vector<32x64xbf16>, vector<64x62xbf16>, vector<32x62xf32> -> vector<32x62xf32>
    %344 = arith.addf %338, %343 : vector<32x62xf32>
    %c0_218 = arith.constant 0 : index
    %c14_219 = arith.constant 14 : index
    %345 = vector.load %arg18[%c0_218, %c14_219] : memref<64x76xf32, #tpu.memory_space<vmem>>, vector<64x62xf32>
    %346 = arith.truncf %345 : vector<64x62xf32> to vector<64x62xbf16>
    %c15_220 = arith.constant 15 : index
    %c0_221 = arith.constant 0 : index
    %c0_222 = arith.constant 0 : index
    %347 = vector.load %arg4[%c15_220, %c0_221, %c0_222] : memref<16x32x64xbf16, #tpu.memory_space<vmem>>, vector<1x32x64xbf16>
    %348 = vector.shape_cast %347 : vector<1x32x64xbf16> to vector<32x64xbf16>
    %cst_223 = arith.constant dense<0.000000e+00> : vector<32x62xf32>
    %349 = tpu.matmul %348, %346, %cst_223 {dimension_numbers = #tpu.dot_dimension_numbers<[1], [0], [0], [1], [0, 0, 1, 1], [], []>} : vector<32x64xbf16>, vector<64x62xbf16>, vector<32x62xf32> -> vector<32x62xf32>
    %350 = arith.addf %344, %349 : vector<32x62xf32>
    %cst_224 = arith.constant dense<0.000000e+00> : vector<32x2xf32>
    %351 = tpu.matmul %350, %244, %cst_224 {dimension_numbers = #tpu.dot_dimension_numbers<[1], [0], [0], [1], [0, 0, 1, 1], [], []>} : vector<32x62xf32>, vector<62x2xf32>, vector<32x2xf32> -> vector<32x2xf32>
    %352 = arith.mulf %350, %350 : vector<32x62xf32>
    %cst_225 = arith.constant dense<0.000000e+00> : vector<32x2xf32>
    %353 = tpu.matmul %352, %244, %cst_225 {dimension_numbers = #tpu.dot_dimension_numbers<[1], [0], [0], [1], [0, 0, 1, 1], [], []>} : vector<32x62xf32>, vector<62x2xf32>, vector<32x2xf32> -> vector<32x2xf32>
    %354 = arith.addf %326, %351 : vector<32x2xf32>
    %355 = arith.addf %327, %353 : vector<32x2xf32>
    %cst_226 = arith.constant 1.562500e-02 : f32
    %356 = vector.broadcast %cst_226 : f32 to vector<32x2xf32>
    %357 = arith.mulf %354, %356 : vector<32x2xf32>
    %cst_227 = arith.constant 1.562500e-02 : f32
    %358 = vector.broadcast %cst_227 : f32 to vector<32x2xf32>
    %359 = arith.mulf %355, %358 : vector<32x2xf32>
    %360 = arith.mulf %357, %357 : vector<32x2xf32>
    %361 = arith.subf %359, %360 : vector<32x2xf32>
    %cst_228 = arith.constant 9.99999974E-6 : f32
    %362 = vector.broadcast %cst_228 : f32 to vector<32x2xf32>
    %363 = arith.addf %361, %362 : vector<32x2xf32>
    %364 = math.rsqrt %363 : vector<32x2xf32>
    %365 = vector.broadcast %242 : vector<32x1xf32> to vector<32x2xf32>
    %366 = arith.mulf %364, %365 : vector<32x2xf32>
    %367 = arith.mulf %357, %366 : vector<32x2xf32>
    %368 = vector.broadcast %243 : vector<32x1xf32> to vector<32x2xf32>
    %369 = arith.subf %368, %367 : vector<32x2xf32>
    %cst_229 = arith.constant dense<0.000000e+00> : vector<32x62xf32>
    %370 = tpu.matmul %366, %245, %cst_229 {dimension_numbers = #tpu.dot_dimension_numbers<[1], [0], [0], [1], [0, 0, 1, 1], [], []>} : vector<32x2xf32>, vector<2x62xf32>, vector<32x62xf32> -> vector<32x62xf32>
    %cst_230 = arith.constant dense<0.000000e+00> : vector<32x62xf32>
    %371 = tpu.matmul %369, %245, %cst_230 {dimension_numbers = #tpu.dot_dimension_numbers<[1], [0], [0], [1], [0, 0, 1, 1], [], []>} : vector<32x2xf32>, vector<2x62xf32>, vector<32x62xf32> -> vector<32x62xf32>
    %372 = arith.mulf %268, %370 : vector<32x62xf32>
    %373 = arith.addf %372, %371 : vector<32x62xf32>
    %cst_231 = arith.constant 0.000000e+00 : f32
    %374 = vector.broadcast %cst_231 : f32 to vector<32x62xf32>
    %375 = arith.maximumf %373, %374 : vector<32x62xf32>
    %376 = arith.truncf %375 : vector<32x62xf32> to vector<32x62xbf16>
    %c0_232 = arith.constant 0 : index
    %c0_233 = arith.constant 0 : index
    %c0_234 = arith.constant 0 : index
    %377 = vector.load %arg9[%c0_232, %c0_233, %c0_234] : memref<4x62x204xbf16, #tpu.memory_space<vmem>>, vector<1x62x204xbf16>
    %378 = vector.shape_cast %377 : vector<1x62x204xbf16> to vector<62x204xbf16>
    %cst_235 = arith.constant dense<0.000000e+00> : vector<32x204xf32>
    %379 = tpu.matmul %376, %378, %cst_235 {dimension_numbers = #tpu.dot_dimension_numbers<[1], [0], [0], [1], [0, 0, 1, 1], [], []>} : vector<32x62xbf16>, vector<62x204xbf16>, vector<32x204xf32> -> vector<32x204xf32>
    %380 = arith.mulf %294, %370 : vector<32x62xf32>
    %381 = arith.addf %380, %371 : vector<32x62xf32>
    %cst_236 = arith.constant 0.000000e+00 : f32
    %382 = vector.broadcast %cst_236 : f32 to vector<32x62xf32>
    %383 = arith.maximumf %381, %382 : vector<32x62xf32>
    %384 = arith.truncf %383 : vector<32x62xf32> to vector<32x62xbf16>
    %c1_237 = arith.constant 1 : index
    %c0_238 = arith.constant 0 : index
    %c0_239 = arith.constant 0 : index
    %385 = vector.load %arg9[%c1_237, %c0_238, %c0_239] : memref<4x62x204xbf16, #tpu.memory_space<vmem>>, vector<1x62x204xbf16>
    %386 = vector.shape_cast %385 : vector<1x62x204xbf16> to vector<62x204xbf16>
    %cst_240 = arith.constant dense<0.000000e+00> : vector<32x204xf32>
    %387 = tpu.matmul %384, %386, %cst_240 {dimension_numbers = #tpu.dot_dimension_numbers<[1], [0], [0], [1], [0, 0, 1, 1], [], []>} : vector<32x62xbf16>, vector<62x204xbf16>, vector<32x204xf32> -> vector<32x204xf32>
    %388 = arith.addf %379, %387 : vector<32x204xf32>
    %389 = arith.mulf %322, %370 : vector<32x62xf32>
    %390 = arith.addf %389, %371 : vector<32x62xf32>
    %cst_241 = arith.constant 0.000000e+00 : f32
    %391 = vector.broadcast %cst_241 : f32 to vector<32x62xf32>
    %392 = arith.maximumf %390, %391 : vector<32x62xf32>
    %393 = arith.truncf %392 : vector<32x62xf32> to vector<32x62xbf16>
    %c2_242 = arith.constant 2 : index
    %c0_243 = arith.constant 0 : index
    %c0_244 = arith.constant 0 : index
    %394 = vector.load %arg9[%c2_242, %c0_243, %c0_244] : memref<4x62x204xbf16, #tpu.memory_space<vmem>>, vector<1x62x204xbf16>
    %395 = vector.shape_cast %394 : vector<1x62x204xbf16> to vector<62x204xbf16>
    %cst_245 = arith.constant dense<0.000000e+00> : vector<32x204xf32>
    %396 = tpu.matmul %393, %395, %cst_245 {dimension_numbers = #tpu.dot_dimension_numbers<[1], [0], [0], [1], [0, 0, 1, 1], [], []>} : vector<32x62xbf16>, vector<62x204xbf16>, vector<32x204xf32> -> vector<32x204xf32>
    %397 = arith.addf %388, %396 : vector<32x204xf32>
    %398 = arith.mulf %350, %370 : vector<32x62xf32>
    %399 = arith.addf %398, %371 : vector<32x62xf32>
    %cst_246 = arith.constant 0.000000e+00 : f32
    %400 = vector.broadcast %cst_246 : f32 to vector<32x62xf32>
    %401 = arith.maximumf %399, %400 : vector<32x62xf32>
    %402 = arith.truncf %401 : vector<32x62xf32> to vector<32x62xbf16>
    %c3_247 = arith.constant 3 : index
    %c0_248 = arith.constant 0 : index
    %c0_249 = arith.constant 0 : index
    %403 = vector.load %arg9[%c3_247, %c0_248, %c0_249] : memref<4x62x204xbf16, #tpu.memory_space<vmem>>, vector<1x62x204xbf16>
    %404 = vector.shape_cast %403 : vector<1x62x204xbf16> to vector<62x204xbf16>
    %cst_250 = arith.constant dense<0.000000e+00> : vector<32x204xf32>
    %405 = tpu.matmul %402, %404, %cst_250 {dimension_numbers = #tpu.dot_dimension_numbers<[1], [0], [0], [1], [0, 0, 1, 1], [], []>} : vector<32x62xbf16>, vector<62x204xbf16>, vector<32x204xf32> -> vector<32x204xf32>
    %406 = arith.addf %397, %405 : vector<32x204xf32>
    %c0_251 = arith.constant 0 : index
    %c0_252 = arith.constant 0 : index
    %407 = vector.load %arg19[%c0_251, %c0_252] : memref<32x204xf32, #tpu.memory_space<vmem>>, vector<32x204xf32>
    tpu.vector_store %arg19[%c0_251, %c0_252], %406 {strides = array<i32>} : memref<32x204xf32, #tpu.memory_space<vmem>>, vector<32x204xf32>,
    %c0_253 = arith.constant 0 : index
    %c0_254 = arith.constant 0 : index
    %408 = vector.load %arg11[%c0_253, %c0_254] : memref<16x1xf32, #tpu.memory_space<vmem>>, vector<16x1xf32>
    %c0_255 = arith.constant 0 : index
    %c0_256 = arith.constant 0 : index
    %409 = vector.load %arg12[%c0_255, %c0_256] : memref<16x1xf32, #tpu.memory_space<vmem>>, vector<16x1xf32>
    %c0_257 = arith.constant 0 : index
    %c0_258 = arith.constant 0 : index
    %410 = vector.load %arg13[%c0_257, %c0_258] : memref<182x2xf32, #tpu.memory_space<vmem>>, vector<182x2xf32>
    %c0_259 = arith.constant 0 : index
    %c0_260 = arith.constant 0 : index
    %411 = vector.load %arg14[%c0_259, %c0_260] : memref<2x182xf32, #tpu.memory_space<vmem>>, vector<2x182xf32>
    %c0_261 = arith.constant 0 : index
    %c0_262 = arith.constant 0 : index
    %412 = vector.load %arg19[%c0_261, %c0_262] : memref<32x204xf32, #tpu.memory_space<vmem>>, vector<32x182xf32>
    %413 = arith.truncf %412 : vector<32x182xf32> to vector<32x182xbf16>
    %c0_263 = arith.constant 0 : index
    %c0_264 = arith.constant 0 : index
    %c0_265 = arith.constant 0 : index
    %414 = vector.load %arg10[%c0_263, %c0_264, %c0_265] : memref<16x16x32xbf16, #tpu.memory_space<vmem>>, vector<1x16x32xbf16>
    %415 = vector.shape_cast %414 : vector<1x16x32xbf16> to vector<16x32xbf16>
    %cst_266 = arith.constant dense<0.000000e+00> : vector<16x182xf32>
    %416 = tpu.matmul %415, %413, %cst_266 {dimension_numbers = #tpu.dot_dimension_numbers<[1], [0], [0], [1], [0, 0, 1, 1], [], []>} : vector<16x32xbf16>, vector<32x182xbf16>, vector<16x182xf32> -> vector<16x182xf32>
    %c0_267 = arith.constant 0 : index
    %c1_268 = arith.constant 1 : index
    %417 = vector.load %arg19[%c0_267, %c1_268] : memref<32x204xf32, #tpu.memory_space<vmem>>, vector<32x182xf32>
    %418 = arith.truncf %417 : vector<32x182xf32> to vector<32x182xbf16>
    %c1_269 = arith.constant 1 : index
    %c0_270 = arith.constant 0 : index
    %c0_271 = arith.constant 0 : index
    %419 = vector.load %arg10[%c1_269, %c0_270, %c0_271] : memref<16x16x32xbf16, #tpu.memory_space<vmem>>, vector<1x16x32xbf16>
    %420 = vector.shape_cast %419 : vector<1x16x32xbf16> to vector<16x32xbf16>
    %cst_272 = arith.constant dense<0.000000e+00> : vector<16x182xf32>
    %421 = tpu.matmul %420, %418, %cst_272 {dimension_numbers = #tpu.dot_dimension_numbers<[1], [0], [0], [1], [0, 0, 1, 1], [], []>} : vector<16x32xbf16>, vector<32x182xbf16>, vector<16x182xf32> -> vector<16x182xf32>
    %422 = arith.addf %416, %421 : vector<16x182xf32>
    %c0_273 = arith.constant 0 : index
    %c10_274 = arith.constant 10 : index
    %423 = vector.load %arg19[%c0_273, %c10_274] : memref<32x204xf32, #tpu.memory_space<vmem>>, vector<32x182xf32>
    %424 = arith.truncf %423 : vector<32x182xf32> to vector<32x182xbf16>
    %c2_275 = arith.constant 2 : index
    %c0_276 = arith.constant 0 : index
    %c0_277 = arith.constant 0 : index
    %425 = vector.load %arg10[%c2_275, %c0_276, %c0_277] : memref<16x16x32xbf16, #tpu.memory_space<vmem>>, vector<1x16x32xbf16>
    %426 = vector.shape_cast %425 : vector<1x16x32xbf16> to vector<16x32xbf16>
    %cst_278 = arith.constant dense<0.000000e+00> : vector<16x182xf32>
    %427 = tpu.matmul %426, %424, %cst_278 {dimension_numbers = #tpu.dot_dimension_numbers<[1], [0], [0], [1], [0, 0, 1, 1], [], []>} : vector<16x32xbf16>, vector<32x182xbf16>, vector<16x182xf32> -> vector<16x182xf32>
    %428 = arith.addf %422, %427 : vector<16x182xf32>
    %c0_279 = arith.constant 0 : index
    %c11_280 = arith.constant 11 : index
    %429 = vector.load %arg19[%c0_279, %c11_280] : memref<32x204xf32, #tpu.memory_space<vmem>>, vector<32x182xf32>
    %430 = arith.truncf %429 : vector<32x182xf32> to vector<32x182xbf16>
    %c3_281 = arith.constant 3 : index
    %c0_282 = arith.constant 0 : index
    %c0_283 = arith.constant 0 : index
    %431 = vector.load %arg10[%c3_281, %c0_282, %c0_283] : memref<16x16x32xbf16, #tpu.memory_space<vmem>>, vector<1x16x32xbf16>
    %432 = vector.shape_cast %431 : vector<1x16x32xbf16> to vector<16x32xbf16>
    %cst_284 = arith.constant dense<0.000000e+00> : vector<16x182xf32>
    %433 = tpu.matmul %432, %430, %cst_284 {dimension_numbers = #tpu.dot_dimension_numbers<[1], [0], [0], [1], [0, 0, 1, 1], [], []>} : vector<16x32xbf16>, vector<32x182xbf16>, vector<16x182xf32> -> vector<16x182xf32>
    %434 = arith.addf %428, %433 : vector<16x182xf32>
    %cst_285 = arith.constant dense<0.000000e+00> : vector<16x2xf32>
    %435 = tpu.matmul %434, %410, %cst_285 {dimension_numbers = #tpu.dot_dimension_numbers<[1], [0], [0], [1], [0, 0, 1, 1], [], []>} : vector<16x182xf32>, vector<182x2xf32>, vector<16x2xf32> -> vector<16x2xf32>
    %436 = arith.mulf %434, %434 : vector<16x182xf32>
    %cst_286 = arith.constant dense<0.000000e+00> : vector<16x2xf32>
    %437 = tpu.matmul %436, %410, %cst_286 {dimension_numbers = #tpu.dot_dimension_numbers<[1], [0], [0], [1], [0, 0, 1, 1], [], []>} : vector<16x182xf32>, vector<182x2xf32>, vector<16x2xf32> -> vector<16x2xf32>
    %c0_287 = arith.constant 0 : index
    %c1_288 = arith.constant 1 : index
    %438 = vector.load %arg19[%c0_287, %c1_288] : memref<32x204xf32, #tpu.memory_space<vmem>>, vector<32x182xf32>
    %439 = arith.truncf %438 : vector<32x182xf32> to vector<32x182xbf16>
    %c4_289 = arith.constant 4 : index
    %c0_290 = arith.constant 0 : index
    %c0_291 = arith.constant 0 : index
    %440 = vector.load %arg10[%c4_289, %c0_290, %c0_291] : memref<16x16x32xbf16, #tpu.memory_space<vmem>>, vector<1x16x32xbf16>
    %441 = vector.shape_cast %440 : vector<1x16x32xbf16> to vector<16x32xbf16>
    %cst_292 = arith.constant dense<0.000000e+00> : vector<16x182xf32>
    %442 = tpu.matmul %441, %439, %cst_292 {dimension_numbers = #tpu.dot_dimension_numbers<[1], [0], [0], [1], [0, 0, 1, 1], [], []>} : vector<16x32xbf16>, vector<32x182xbf16>, vector<16x182xf32> -> vector<16x182xf32>
    %c0_293 = arith.constant 0 : index
    %c2_294 = arith.constant 2 : index
    %443 = vector.load %arg19[%c0_293, %c2_294] : memref<32x204xf32, #tpu.memory_space<vmem>>, vector<32x182xf32>
    %444 = arith.truncf %443 : vector<32x182xf32> to vector<32x182xbf16>
    %c5_295 = arith.constant 5 : index
    %c0_296 = arith.constant 0 : index
    %c0_297 = arith.constant 0 : index
    %445 = vector.load %arg10[%c5_295, %c0_296, %c0_297] : memref<16x16x32xbf16, #tpu.memory_space<vmem>>, vector<1x16x32xbf16>
    %446 = vector.shape_cast %445 : vector<1x16x32xbf16> to vector<16x32xbf16>
    %cst_298 = arith.constant dense<0.000000e+00> : vector<16x182xf32>
    %447 = tpu.matmul %446, %444, %cst_298 {dimension_numbers = #tpu.dot_dimension_numbers<[1], [0], [0], [1], [0, 0, 1, 1], [], []>} : vector<16x32xbf16>, vector<32x182xbf16>, vector<16x182xf32> -> vector<16x182xf32>
    %448 = arith.addf %442, %447 : vector<16x182xf32>
    %c0_299 = arith.constant 0 : index
    %c11_300 = arith.constant 11 : index
    %449 = vector.load %arg19[%c0_299, %c11_300] : memref<32x204xf32, #tpu.memory_space<vmem>>, vector<32x182xf32>
    %450 = arith.truncf %449 : vector<32x182xf32> to vector<32x182xbf16>
    %c6_301 = arith.constant 6 : index
    %c0_302 = arith.constant 0 : index
    %c0_303 = arith.constant 0 : index
    %451 = vector.load %arg10[%c6_301, %c0_302, %c0_303] : memref<16x16x32xbf16, #tpu.memory_space<vmem>>, vector<1x16x32xbf16>
    %452 = vector.shape_cast %451 : vector<1x16x32xbf16> to vector<16x32xbf16>
    %cst_304 = arith.constant dense<0.000000e+00> : vector<16x182xf32>
    %453 = tpu.matmul %452, %450, %cst_304 {dimension_numbers = #tpu.dot_dimension_numbers<[1], [0], [0], [1], [0, 0, 1, 1], [], []>} : vector<16x32xbf16>, vector<32x182xbf16>, vector<16x182xf32> -> vector<16x182xf32>
    %454 = arith.addf %448, %453 : vector<16x182xf32>
    %c0_305 = arith.constant 0 : index
    %c12_306 = arith.constant 12 : index
    %455 = vector.load %arg19[%c0_305, %c12_306] : memref<32x204xf32, #tpu.memory_space<vmem>>, vector<32x182xf32>
    %456 = arith.truncf %455 : vector<32x182xf32> to vector<32x182xbf16>
    %c7_307 = arith.constant 7 : index
    %c0_308 = arith.constant 0 : index
    %c0_309 = arith.constant 0 : index
    %457 = vector.load %arg10[%c7_307, %c0_308, %c0_309] : memref<16x16x32xbf16, #tpu.memory_space<vmem>>, vector<1x16x32xbf16>
    %458 = vector.shape_cast %457 : vector<1x16x32xbf16> to vector<16x32xbf16>
    %cst_310 = arith.constant dense<0.000000e+00> : vector<16x182xf32>
    %459 = tpu.matmul %458, %456, %cst_310 {dimension_numbers = #tpu.dot_dimension_numbers<[1], [0], [0], [1], [0, 0, 1, 1], [], []>} : vector<16x32xbf16>, vector<32x182xbf16>, vector<16x182xf32> -> vector<16x182xf32>
    %460 = arith.addf %454, %459 : vector<16x182xf32>
    %cst_311 = arith.constant dense<0.000000e+00> : vector<16x2xf32>
    %461 = tpu.matmul %460, %410, %cst_311 {dimension_numbers = #tpu.dot_dimension_numbers<[1], [0], [0], [1], [0, 0, 1, 1], [], []>} : vector<16x182xf32>, vector<182x2xf32>, vector<16x2xf32> -> vector<16x2xf32>
    %462 = arith.mulf %460, %460 : vector<16x182xf32>
    %cst_312 = arith.constant dense<0.000000e+00> : vector<16x2xf32>
    %463 = tpu.matmul %462, %410, %cst_312 {dimension_numbers = #tpu.dot_dimension_numbers<[1], [0], [0], [1], [0, 0, 1, 1], [], []>} : vector<16x182xf32>, vector<182x2xf32>, vector<16x2xf32> -> vector<16x2xf32>
    %464 = arith.addf %435, %461 : vector<16x2xf32>
    %465 = arith.addf %437, %463 : vector<16x2xf32>
    %c0_313 = arith.constant 0 : index
    %c10_314 = arith.constant 10 : index
    %466 = vector.load %arg19[%c0_313, %c10_314] : memref<32x204xf32, #tpu.memory_space<vmem>>, vector<32x182xf32>
    %467 = arith.truncf %466 : vector<32x182xf32> to vector<32x182xbf16>
    %c8_315 = arith.constant 8 : index
    %c0_316 = arith.constant 0 : index
    %c0_317 = arith.constant 0 : index
    %468 = vector.load %arg10[%c8_315, %c0_316, %c0_317] : memref<16x16x32xbf16, #tpu.memory_space<vmem>>, vector<1x16x32xbf16>
    %469 = vector.shape_cast %468 : vector<1x16x32xbf16> to vector<16x32xbf16>
    %cst_318 = arith.constant dense<0.000000e+00> : vector<16x182xf32>
    %470 = tpu.matmul %469, %467, %cst_318 {dimension_numbers = #tpu.dot_dimension_numbers<[1], [0], [0], [1], [0, 0, 1, 1], [], []>} : vector<16x32xbf16>, vector<32x182xbf16>, vector<16x182xf32> -> vector<16x182xf32>
    %c0_319 = arith.constant 0 : index
    %c11_320 = arith.constant 11 : index
    %471 = vector.load %arg19[%c0_319, %c11_320] : memref<32x204xf32, #tpu.memory_space<vmem>>, vector<32x182xf32>
    %472 = arith.truncf %471 : vector<32x182xf32> to vector<32x182xbf16>
    %c9_321 = arith.constant 9 : index
    %c0_322 = arith.constant 0 : index
    %c0_323 = arith.constant 0 : index
    %473 = vector.load %arg10[%c9_321, %c0_322, %c0_323] : memref<16x16x32xbf16, #tpu.memory_space<vmem>>, vector<1x16x32xbf16>
    %474 = vector.shape_cast %473 : vector<1x16x32xbf16> to vector<16x32xbf16>
    %cst_324 = arith.constant dense<0.000000e+00> : vector<16x182xf32>
    %475 = tpu.matmul %474, %472, %cst_324 {dimension_numbers = #tpu.dot_dimension_numbers<[1], [0], [0], [1], [0, 0, 1, 1], [], []>} : vector<16x32xbf16>, vector<32x182xbf16>, vector<16x182xf32> -> vector<16x182xf32>
    %476 = arith.addf %470, %475 : vector<16x182xf32>
    %c0_325 = arith.constant 0 : index
    %c20_326 = arith.constant 20 : index
    %477 = vector.load %arg19[%c0_325, %c20_326] : memref<32x204xf32, #tpu.memory_space<vmem>>, vector<32x182xf32>
    %478 = arith.truncf %477 : vector<32x182xf32> to vector<32x182xbf16>
    %c10_327 = arith.constant 10 : index
    %c0_328 = arith.constant 0 : index
    %c0_329 = arith.constant 0 : index
    %479 = vector.load %arg10[%c10_327, %c0_328, %c0_329] : memref<16x16x32xbf16, #tpu.memory_space<vmem>>, vector<1x16x32xbf16>
    %480 = vector.shape_cast %479 : vector<1x16x32xbf16> to vector<16x32xbf16>
    %cst_330 = arith.constant dense<0.000000e+00> : vector<16x182xf32>
    %481 = tpu.matmul %480, %478, %cst_330 {dimension_numbers = #tpu.dot_dimension_numbers<[1], [0], [0], [1], [0, 0, 1, 1], [], []>} : vector<16x32xbf16>, vector<32x182xbf16>, vector<16x182xf32> -> vector<16x182xf32>
    %482 = arith.addf %476, %481 : vector<16x182xf32>
    %c0_331 = arith.constant 0 : index
    %c21_332 = arith.constant 21 : index
    %483 = vector.load %arg19[%c0_331, %c21_332] : memref<32x204xf32, #tpu.memory_space<vmem>>, vector<32x182xf32>
    %484 = arith.truncf %483 : vector<32x182xf32> to vector<32x182xbf16>
    %c11_333 = arith.constant 11 : index
    %c0_334 = arith.constant 0 : index
    %c0_335 = arith.constant 0 : index
    %485 = vector.load %arg10[%c11_333, %c0_334, %c0_335] : memref<16x16x32xbf16, #tpu.memory_space<vmem>>, vector<1x16x32xbf16>
    %486 = vector.shape_cast %485 : vector<1x16x32xbf16> to vector<16x32xbf16>
    %cst_336 = arith.constant dense<0.000000e+00> : vector<16x182xf32>
    %487 = tpu.matmul %486, %484, %cst_336 {dimension_numbers = #tpu.dot_dimension_numbers<[1], [0], [0], [1], [0, 0, 1, 1], [], []>} : vector<16x32xbf16>, vector<32x182xbf16>, vector<16x182xf32> -> vector<16x182xf32>
    %488 = arith.addf %482, %487 : vector<16x182xf32>
    %cst_337 = arith.constant dense<0.000000e+00> : vector<16x2xf32>
    %489 = tpu.matmul %488, %410, %cst_337 {dimension_numbers = #tpu.dot_dimension_numbers<[1], [0], [0], [1], [0, 0, 1, 1], [], []>} : vector<16x182xf32>, vector<182x2xf32>, vector<16x2xf32> -> vector<16x2xf32>
    %490 = arith.mulf %488, %488 : vector<16x182xf32>
    %cst_338 = arith.constant dense<0.000000e+00> : vector<16x2xf32>
    %491 = tpu.matmul %490, %410, %cst_338 {dimension_numbers = #tpu.dot_dimension_numbers<[1], [0], [0], [1], [0, 0, 1, 1], [], []>} : vector<16x182xf32>, vector<182x2xf32>, vector<16x2xf32> -> vector<16x2xf32>
    %492 = arith.addf %464, %489 : vector<16x2xf32>
    %493 = arith.addf %465, %491 : vector<16x2xf32>
    %c0_339 = arith.constant 0 : index
    %c11_340 = arith.constant 11 : index
    %494 = vector.load %arg19[%c0_339, %c11_340] : memref<32x204xf32, #tpu.memory_space<vmem>>, vector<32x182xf32>
    %495 = arith.truncf %494 : vector<32x182xf32> to vector<32x182xbf16>
    %c12_341 = arith.constant 12 : index
    %c0_342 = arith.constant 0 : index
    %c0_343 = arith.constant 0 : index
    %496 = vector.load %arg10[%c12_341, %c0_342, %c0_343] : memref<16x16x32xbf16, #tpu.memory_space<vmem>>, vector<1x16x32xbf16>
    %497 = vector.shape_cast %496 : vector<1x16x32xbf16> to vector<16x32xbf16>
    %cst_344 = arith.constant dense<0.000000e+00> : vector<16x182xf32>
    %498 = tpu.matmul %497, %495, %cst_344 {dimension_numbers = #tpu.dot_dimension_numbers<[1], [0], [0], [1], [0, 0, 1, 1], [], []>} : vector<16x32xbf16>, vector<32x182xbf16>, vector<16x182xf32> -> vector<16x182xf32>
    %c0_345 = arith.constant 0 : index
    %c12_346 = arith.constant 12 : index
    %499 = vector.load %arg19[%c0_345, %c12_346] : memref<32x204xf32, #tpu.memory_space<vmem>>, vector<32x182xf32>
    %500 = arith.truncf %499 : vector<32x182xf32> to vector<32x182xbf16>
    %c13_347 = arith.constant 13 : index
    %c0_348 = arith.constant 0 : index
    %c0_349 = arith.constant 0 : index
    %501 = vector.load %arg10[%c13_347, %c0_348, %c0_349] : memref<16x16x32xbf16, #tpu.memory_space<vmem>>, vector<1x16x32xbf16>
    %502 = vector.shape_cast %501 : vector<1x16x32xbf16> to vector<16x32xbf16>
    %cst_350 = arith.constant dense<0.000000e+00> : vector<16x182xf32>
    %503 = tpu.matmul %502, %500, %cst_350 {dimension_numbers = #tpu.dot_dimension_numbers<[1], [0], [0], [1], [0, 0, 1, 1], [], []>} : vector<16x32xbf16>, vector<32x182xbf16>, vector<16x182xf32> -> vector<16x182xf32>
    %504 = arith.addf %498, %503 : vector<16x182xf32>
    %c0_351 = arith.constant 0 : index
    %c21_352 = arith.constant 21 : index
    %505 = vector.load %arg19[%c0_351, %c21_352] : memref<32x204xf32, #tpu.memory_space<vmem>>, vector<32x182xf32>
    %506 = arith.truncf %505 : vector<32x182xf32> to vector<32x182xbf16>
    %c14_353 = arith.constant 14 : index
    %c0_354 = arith.constant 0 : index
    %c0_355 = arith.constant 0 : index
    %507 = vector.load %arg10[%c14_353, %c0_354, %c0_355] : memref<16x16x32xbf16, #tpu.memory_space<vmem>>, vector<1x16x32xbf16>
    %508 = vector.shape_cast %507 : vector<1x16x32xbf16> to vector<16x32xbf16>
    %cst_356 = arith.constant dense<0.000000e+00> : vector<16x182xf32>
    %509 = tpu.matmul %508, %506, %cst_356 {dimension_numbers = #tpu.dot_dimension_numbers<[1], [0], [0], [1], [0, 0, 1, 1], [], []>} : vector<16x32xbf16>, vector<32x182xbf16>, vector<16x182xf32> -> vector<16x182xf32>
    %510 = arith.addf %504, %509 : vector<16x182xf32>
    %c0_357 = arith.constant 0 : index
    %c22_358 = arith.constant 22 : index
    %511 = vector.load %arg19[%c0_357, %c22_358] : memref<32x204xf32, #tpu.memory_space<vmem>>, vector<32x182xf32>
    %512 = arith.truncf %511 : vector<32x182xf32> to vector<32x182xbf16>
    %c15_359 = arith.constant 15 : index
    %c0_360 = arith.constant 0 : index
    %c0_361 = arith.constant 0 : index
    %513 = vector.load %arg10[%c15_359, %c0_360, %c0_361] : memref<16x16x32xbf16, #tpu.memory_space<vmem>>, vector<1x16x32xbf16>
    %514 = vector.shape_cast %513 : vector<1x16x32xbf16> to vector<16x32xbf16>
    %cst_362 = arith.constant dense<0.000000e+00> : vector<16x182xf32>
    %515 = tpu.matmul %514, %512, %cst_362 {dimension_numbers = #tpu.dot_dimension_numbers<[1], [0], [0], [1], [0, 0, 1, 1], [], []>} : vector<16x32xbf16>, vector<32x182xbf16>, vector<16x182xf32> -> vector<16x182xf32>
    %516 = arith.addf %510, %515 : vector<16x182xf32>
    %cst_363 = arith.constant dense<0.000000e+00> : vector<16x2xf32>
    %517 = tpu.matmul %516, %410, %cst_363 {dimension_numbers = #tpu.dot_dimension_numbers<[1], [0], [0], [1], [0, 0, 1, 1], [], []>} : vector<16x182xf32>, vector<182x2xf32>, vector<16x2xf32> -> vector<16x2xf32>
    %518 = arith.mulf %516, %516 : vector<16x182xf32>
    %cst_364 = arith.constant dense<0.000000e+00> : vector<16x2xf32>
    %519 = tpu.matmul %518, %410, %cst_364 {dimension_numbers = #tpu.dot_dimension_numbers<[1], [0], [0], [1], [0, 0, 1, 1], [], []>} : vector<16x182xf32>, vector<182x2xf32>, vector<16x2xf32> -> vector<16x2xf32>
    %520 = arith.addf %492, %517 : vector<16x2xf32>
    %521 = arith.addf %493, %519 : vector<16x2xf32>
    %cst_365 = arith.constant 3.906250e-03 : f32
    %522 = vector.broadcast %cst_365 : f32 to vector<16x2xf32>
    %523 = arith.mulf %520, %522 : vector<16x2xf32>
    %cst_366 = arith.constant 3.906250e-03 : f32
    %524 = vector.broadcast %cst_366 : f32 to vector<16x2xf32>
    %525 = arith.mulf %521, %524 : vector<16x2xf32>
    %526 = arith.mulf %523, %523 : vector<16x2xf32>
    %527 = arith.subf %525, %526 : vector<16x2xf32>
    %cst_367 = arith.constant 9.99999974E-6 : f32
    %528 = vector.broadcast %cst_367 : f32 to vector<16x2xf32>
    %529 = arith.addf %527, %528 : vector<16x2xf32>
    %530 = math.rsqrt %529 : vector<16x2xf32>
    %531 = vector.broadcast %408 : vector<16x1xf32> to vector<16x2xf32>
    %532 = arith.mulf %530, %531 : vector<16x2xf32>
    %533 = arith.mulf %523, %532 : vector<16x2xf32>
    %534 = vector.broadcast %409 : vector<16x1xf32> to vector<16x2xf32>
    %535 = arith.subf %534, %533 : vector<16x2xf32>
    %cst_368 = arith.constant dense<0.000000e+00> : vector<16x182xf32>
    %536 = tpu.matmul %532, %411, %cst_368 {dimension_numbers = #tpu.dot_dimension_numbers<[1], [0], [0], [1], [0, 0, 1, 1], [], []>} : vector<16x2xf32>, vector<2x182xf32>, vector<16x182xf32> -> vector<16x182xf32>
    %cst_369 = arith.constant dense<0.000000e+00> : vector<16x182xf32>
    %537 = tpu.matmul %535, %411, %cst_369 {dimension_numbers = #tpu.dot_dimension_numbers<[1], [0], [0], [1], [0, 0, 1, 1], [], []>} : vector<16x2xf32>, vector<2x182xf32>, vector<16x182xf32> -> vector<16x182xf32>
    %538 = arith.mulf %434, %536 : vector<16x182xf32>
    %539 = arith.addf %538, %537 : vector<16x182xf32>
    %cst_370 = arith.constant 0.000000e+00 : f32
    %540 = vector.broadcast %cst_370 : f32 to vector<16x182xf32>
    %541 = arith.maximumf %539, %540 : vector<16x182xf32>
    %542 = arith.truncf %541 : vector<16x182xf32> to vector<16x182xbf16>
    %c0_371 = arith.constant 0 : index
    %c0_372 = arith.constant 0 : index
    %c0_373 = arith.constant 0 : index
    %543 = vector.load %arg15[%c0_371, %c0_372, %c0_373] : memref<4x182x652xbf16, #tpu.memory_space<vmem>>, vector<1x182x652xbf16>
    %544 = vector.shape_cast %543 : vector<1x182x652xbf16> to vector<182x652xbf16>
    %cst_374 = arith.constant dense<0.000000e+00> : vector<16x652xf32>
    %545 = tpu.matmul %542, %544, %cst_374 {dimension_numbers = #tpu.dot_dimension_numbers<[1], [0], [0], [1], [0, 0, 1, 1], [], []>} : vector<16x182xbf16>, vector<182x652xbf16>, vector<16x652xf32> -> vector<16x652xf32>
    %546 = arith.mulf %460, %536 : vector<16x182xf32>
    %547 = arith.addf %546, %537 : vector<16x182xf32>
    %cst_375 = arith.constant 0.000000e+00 : f32
    %548 = vector.broadcast %cst_375 : f32 to vector<16x182xf32>
    %549 = arith.maximumf %547, %548 : vector<16x182xf32>
    %550 = arith.truncf %549 : vector<16x182xf32> to vector<16x182xbf16>
    %c1_376 = arith.constant 1 : index
    %c0_377 = arith.constant 0 : index
    %c0_378 = arith.constant 0 : index
    %551 = vector.load %arg15[%c1_376, %c0_377, %c0_378] : memref<4x182x652xbf16, #tpu.memory_space<vmem>>, vector<1x182x652xbf16>
    %552 = vector.shape_cast %551 : vector<1x182x652xbf16> to vector<182x652xbf16>
    %cst_379 = arith.constant dense<0.000000e+00> : vector<16x652xf32>
    %553 = tpu.matmul %550, %552, %cst_379 {dimension_numbers = #tpu.dot_dimension_numbers<[1], [0], [0], [1], [0, 0, 1, 1], [], []>} : vector<16x182xbf16>, vector<182x652xbf16>, vector<16x652xf32> -> vector<16x652xf32>
    %554 = arith.addf %545, %553 : vector<16x652xf32>
    %555 = arith.mulf %488, %536 : vector<16x182xf32>
    %556 = arith.addf %555, %537 : vector<16x182xf32>
    %cst_380 = arith.constant 0.000000e+00 : f32
    %557 = vector.broadcast %cst_380 : f32 to vector<16x182xf32>
    %558 = arith.maximumf %556, %557 : vector<16x182xf32>
    %559 = arith.truncf %558 : vector<16x182xf32> to vector<16x182xbf16>
    %c2_381 = arith.constant 2 : index
    %c0_382 = arith.constant 0 : index
    %c0_383 = arith.constant 0 : index
    %560 = vector.load %arg15[%c2_381, %c0_382, %c0_383] : memref<4x182x652xbf16, #tpu.memory_space<vmem>>, vector<1x182x652xbf16>
    %561 = vector.shape_cast %560 : vector<1x182x652xbf16> to vector<182x652xbf16>
    %cst_384 = arith.constant dense<0.000000e+00> : vector<16x652xf32>
    %562 = tpu.matmul %559, %561, %cst_384 {dimension_numbers = #tpu.dot_dimension_numbers<[1], [0], [0], [1], [0, 0, 1, 1], [], []>} : vector<16x182xbf16>, vector<182x652xbf16>, vector<16x652xf32> -> vector<16x652xf32>
    %563 = arith.addf %554, %562 : vector<16x652xf32>
    %564 = arith.mulf %516, %536 : vector<16x182xf32>
    %565 = arith.addf %564, %537 : vector<16x182xf32>
    %cst_385 = arith.constant 0.000000e+00 : f32
    %566 = vector.broadcast %cst_385 : f32 to vector<16x182xf32>
    %567 = arith.maximumf %565, %566 : vector<16x182xf32>
    %568 = arith.truncf %567 : vector<16x182xf32> to vector<16x182xbf16>
    %c3_386 = arith.constant 3 : index
    %c0_387 = arith.constant 0 : index
    %c0_388 = arith.constant 0 : index
    %569 = vector.load %arg15[%c3_386, %c0_387, %c0_388] : memref<4x182x652xbf16, #tpu.memory_space<vmem>>, vector<1x182x652xbf16>
    %570 = vector.shape_cast %569 : vector<1x182x652xbf16> to vector<182x652xbf16>
    %cst_389 = arith.constant dense<0.000000e+00> : vector<16x652xf32>
    %571 = tpu.matmul %568, %570, %cst_389 {dimension_numbers = #tpu.dot_dimension_numbers<[1], [0], [0], [1], [0, 0, 1, 1], [], []>} : vector<16x182xbf16>, vector<182x652xbf16>, vector<16x652xf32> -> vector<16x652xf32>
    %572 = arith.addf %563, %571 : vector<16x652xf32>
    %c0_390 = arith.constant 0 : index
    %c0_391 = arith.constant 0 : index
    %573 = vector.load %arg20[%c0_390, %c0_391] : memref<16x652xf32, #tpu.memory_space<vmem>>, vector<16x652xf32>
    tpu.vector_store %arg20[%c0_390, %c0_391], %572 {strides = array<i32>} : memref<16x652xf32, #tpu.memory_space<vmem>>, vector<16x652xf32>,
    %c0_392 = arith.constant 0 : index
    %c0_393 = arith.constant 0 : index
    %574 = vector.load %arg20[%c0_392, %c0_393] : memref<16x652xf32, #tpu.memory_space<vmem>>, vector<16x614xf32>
    %575 = arith.truncf %574 : vector<16x614xf32> to vector<16x614xbf16>
    %c0_394 = arith.constant 0 : index
    %c0_395 = arith.constant 0 : index
    %c0_396 = arith.constant 0 : index
    %576 = vector.load %arg16[%c0_394, %c0_395, %c0_396] : memref<16x3x16xbf16, #tpu.memory_space<vmem>>, vector<1x3x16xbf16>
    %577 = vector.shape_cast %576 : vector<1x3x16xbf16> to vector<3x16xbf16>
    %cst_397 = arith.constant dense<0.000000e+00> : vector<3x614xf32>
    %578 = tpu.matmul %577, %575, %cst_397 {dimension_numbers = #tpu.dot_dimension_numbers<[1], [0], [0], [1], [0, 0, 1, 1], [], []>} : vector<3x16xbf16>, vector<16x614xbf16>, vector<3x614xf32> -> vector<3x614xf32>
    %c0_398 = arith.constant 0 : index
    %c1_399 = arith.constant 1 : index
    %579 = vector.load %arg20[%c0_398, %c1_399] : memref<16x652xf32, #tpu.memory_space<vmem>>, vector<16x614xf32>
    %580 = arith.truncf %579 : vector<16x614xf32> to vector<16x614xbf16>
    %c1_400 = arith.constant 1 : index
    %c0_401 = arith.constant 0 : index
    %c0_402 = arith.constant 0 : index
    %581 = vector.load %arg16[%c1_400, %c0_401, %c0_402] : memref<16x3x16xbf16, #tpu.memory_space<vmem>>, vector<1x3x16xbf16>
    %582 = vector.shape_cast %581 : vector<1x3x16xbf16> to vector<3x16xbf16>
    %cst_403 = arith.constant dense<0.000000e+00> : vector<3x614xf32>
    %583 = tpu.matmul %582, %580, %cst_403 {dimension_numbers = #tpu.dot_dimension_numbers<[1], [0], [0], [1], [0, 0, 1, 1], [], []>} : vector<3x16xbf16>, vector<16x614xbf16>, vector<3x614xf32> -> vector<3x614xf32>
    %584 = arith.addf %578, %583 : vector<3x614xf32>
    %c0_404 = arith.constant 0 : index
    %c18 = arith.constant 18 : index
    %585 = vector.load %arg20[%c0_404, %c18] : memref<16x652xf32, #tpu.memory_space<vmem>>, vector<16x614xf32>
    %586 = arith.truncf %585 : vector<16x614xf32> to vector<16x614xbf16>
    %c2_405 = arith.constant 2 : index
    %c0_406 = arith.constant 0 : index
    %c0_407 = arith.constant 0 : index
    %587 = vector.load %arg16[%c2_405, %c0_406, %c0_407] : memref<16x3x16xbf16, #tpu.memory_space<vmem>>, vector<1x3x16xbf16>
    %588 = vector.shape_cast %587 : vector<1x3x16xbf16> to vector<3x16xbf16>
    %cst_408 = arith.constant dense<0.000000e+00> : vector<3x614xf32>
    %589 = tpu.matmul %588, %586, %cst_408 {dimension_numbers = #tpu.dot_dimension_numbers<[1], [0], [0], [1], [0, 0, 1, 1], [], []>} : vector<3x16xbf16>, vector<16x614xbf16>, vector<3x614xf32> -> vector<3x614xf32>
    %590 = arith.addf %584, %589 : vector<3x614xf32>
    %c0_409 = arith.constant 0 : index
    %c19_410 = arith.constant 19 : index
    %591 = vector.load %arg20[%c0_409, %c19_410] : memref<16x652xf32, #tpu.memory_space<vmem>>, vector<16x614xf32>
    %592 = arith.truncf %591 : vector<16x614xf32> to vector<16x614xbf16>
    %c3_411 = arith.constant 3 : index
    %c0_412 = arith.constant 0 : index
    %c0_413 = arith.constant 0 : index
    %593 = vector.load %arg16[%c3_411, %c0_412, %c0_413] : memref<16x3x16xbf16, #tpu.memory_space<vmem>>, vector<1x3x16xbf16>
    %594 = vector.shape_cast %593 : vector<1x3x16xbf16> to vector<3x16xbf16>
    %cst_414 = arith.constant dense<0.000000e+00> : vector<3x614xf32>
    %595 = tpu.matmul %594, %592, %cst_414 {dimension_numbers = #tpu.dot_dimension_numbers<[1], [0], [0], [1], [0, 0, 1, 1], [], []>} : vector<3x16xbf16>, vector<16x614xbf16>, vector<3x614xf32> -> vector<3x614xf32>
    %596 = arith.addf %590, %595 : vector<3x614xf32>
    %597 = math.tanh %596 : vector<3x614xf32>
    %c0_415 = arith.constant 0 : index
    %c0_416 = arith.constant 0 : index
    %c0_417 = arith.constant 0 : index
    %598 = vector.load %arg17[%c0_415, %c0_416, %c0_417] : memref<4x3x614xf32, #tpu.memory_space<vmem>>, vector<1x3x614xf32>
    %599 = vector.shape_cast %598 : vector<1x3x614xf32> to vector<3x614xf32>
    %600 = vector.shape_cast %597 : vector<3x614xf32> to vector<1x3x614xf32>
    tpu.vector_store %arg17[%c0_415, %c0_416, %c0_417], %600 {strides = array<i32>} : memref<4x3x614xf32, #tpu.memory_space<vmem>>, vector<1x3x614xf32>,
    %c0_418 = arith.constant 0 : index
    %c1_419 = arith.constant 1 : index
    %601 = vector.load %arg20[%c0_418, %c1_419] : memref<16x652xf32, #tpu.memory_space<vmem>>, vector<16x614xf32>
    %602 = arith.truncf %601 : vector<16x614xf32> to vector<16x614xbf16>
    %c4_420 = arith.constant 4 : index
    %c0_421 = arith.constant 0 : index
    %c0_422 = arith.constant 0 : index
    %603 = vector.load %arg16[%c4_420, %c0_421, %c0_422] : memref<16x3x16xbf16, #tpu.memory_space<vmem>>, vector<1x3x16xbf16>
    %604 = vector.shape_cast %603 : vector<1x3x16xbf16> to vector<3x16xbf16>
    %cst_423 = arith.constant dense<0.000000e+00> : vector<3x614xf32>
    %605 = tpu.matmul %604, %602, %cst_423 {dimension_numbers = #tpu.dot_dimension_numbers<[1], [0], [0], [1], [0, 0, 1, 1], [], []>} : vector<3x16xbf16>, vector<16x614xbf16>, vector<3x614xf32> -> vector<3x614xf32>
    %c0_424 = arith.constant 0 : index
    %c2_425 = arith.constant 2 : index
    %606 = vector.load %arg20[%c0_424, %c2_425] : memref<16x652xf32, #tpu.memory_space<vmem>>, vector<16x614xf32>
    %607 = arith.truncf %606 : vector<16x614xf32> to vector<16x614xbf16>
    %c5_426 = arith.constant 5 : index
    %c0_427 = arith.constant 0 : index
    %c0_428 = arith.constant 0 : index
    %608 = vector.load %arg16[%c5_426, %c0_427, %c0_428] : memref<16x3x16xbf16, #tpu.memory_space<vmem>>, vector<1x3x16xbf16>
    %609 = vector.shape_cast %608 : vector<1x3x16xbf16> to vector<3x16xbf16>
    %cst_429 = arith.constant dense<0.000000e+00> : vector<3x614xf32>
    %610 = tpu.matmul %609, %607, %cst_429 {dimension_numbers = #tpu.dot_dimension_numbers<[1], [0], [0], [1], [0, 0, 1, 1], [], []>} : vector<3x16xbf16>, vector<16x614xbf16>, vector<3x614xf32> -> vector<3x614xf32>
    %611 = arith.addf %605, %610 : vector<3x614xf32>
    %c0_430 = arith.constant 0 : index
    %c19_431 = arith.constant 19 : index
    %612 = vector.load %arg20[%c0_430, %c19_431] : memref<16x652xf32, #tpu.memory_space<vmem>>, vector<16x614xf32>
    %613 = arith.truncf %612 : vector<16x614xf32> to vector<16x614xbf16>
    %c6_432 = arith.constant 6 : index
    %c0_433 = arith.constant 0 : index
    %c0_434 = arith.constant 0 : index
    %614 = vector.load %arg16[%c6_432, %c0_433, %c0_434] : memref<16x3x16xbf16, #tpu.memory_space<vmem>>, vector<1x3x16xbf16>
    %615 = vector.shape_cast %614 : vector<1x3x16xbf16> to vector<3x16xbf16>
    %cst_435 = arith.constant dense<0.000000e+00> : vector<3x614xf32>
    %616 = tpu.matmul %615, %613, %cst_435 {dimension_numbers = #tpu.dot_dimension_numbers<[1], [0], [0], [1], [0, 0, 1, 1], [], []>} : vector<3x16xbf16>, vector<16x614xbf16>, vector<3x614xf32> -> vector<3x614xf32>
    %617 = arith.addf %611, %616 : vector<3x614xf32>
    %c0_436 = arith.constant 0 : index
    %c20_437 = arith.constant 20 : index
    %618 = vector.load %arg20[%c0_436, %c20_437] : memref<16x652xf32, #tpu.memory_space<vmem>>, vector<16x614xf32>
    %619 = arith.truncf %618 : vector<16x614xf32> to vector<16x614xbf16>
    %c7_438 = arith.constant 7 : index
    %c0_439 = arith.constant 0 : index
    %c0_440 = arith.constant 0 : index
    %620 = vector.load %arg16[%c7_438, %c0_439, %c0_440] : memref<16x3x16xbf16, #tpu.memory_space<vmem>>, vector<1x3x16xbf16>
    %621 = vector.shape_cast %620 : vector<1x3x16xbf16> to vector<3x16xbf16>
    %cst_441 = arith.constant dense<0.000000e+00> : vector<3x614xf32>
    %622 = tpu.matmul %621, %619, %cst_441 {dimension_numbers = #tpu.dot_dimension_numbers<[1], [0], [0], [1], [0, 0, 1, 1], [], []>} : vector<3x16xbf16>, vector<16x614xbf16>, vector<3x614xf32> -> vector<3x614xf32>
    %623 = arith.addf %617, %622 : vector<3x614xf32>
    %624 = math.tanh %623 : vector<3x614xf32>
    %c1_442 = arith.constant 1 : index
    %c0_443 = arith.constant 0 : index
    %c0_444 = arith.constant 0 : index
    %625 = vector.load %arg17[%c1_442, %c0_443, %c0_444] : memref<4x3x614xf32, #tpu.memory_space<vmem>>, vector<1x3x614xf32>
    %626 = vector.shape_cast %625 : vector<1x3x614xf32> to vector<3x614xf32>
    %627 = vector.shape_cast %624 : vector<3x614xf32> to vector<1x3x614xf32>
    tpu.vector_store %arg17[%c1_442, %c0_443, %c0_444], %627 {strides = array<i32>} : memref<4x3x614xf32, #tpu.memory_space<vmem>>, vector<1x3x614xf32>,
    %c0_445 = arith.constant 0 : index
    %c18_446 = arith.constant 18 : index
    %628 = vector.load %arg20[%c0_445, %c18_446] : memref<16x652xf32, #tpu.memory_space<vmem>>, vector<16x614xf32>
    %629 = arith.truncf %628 : vector<16x614xf32> to vector<16x614xbf16>
    %c8_447 = arith.constant 8 : index
    %c0_448 = arith.constant 0 : index
    %c0_449 = arith.constant 0 : index
    %630 = vector.load %arg16[%c8_447, %c0_448, %c0_449] : memref<16x3x16xbf16, #tpu.memory_space<vmem>>, vector<1x3x16xbf16>
    %631 = vector.shape_cast %630 : vector<1x3x16xbf16> to vector<3x16xbf16>
    %cst_450 = arith.constant dense<0.000000e+00> : vector<3x614xf32>
    %632 = tpu.matmul %631, %629, %cst_450 {dimension_numbers = #tpu.dot_dimension_numbers<[1], [0], [0], [1], [0, 0, 1, 1], [], []>} : vector<3x16xbf16>, vector<16x614xbf16>, vector<3x614xf32> -> vector<3x614xf32>
    %c0_451 = arith.constant 0 : index
    %c19_452 = arith.constant 19 : index
    %633 = vector.load %arg20[%c0_451, %c19_452] : memref<16x652xf32, #tpu.memory_space<vmem>>, vector<16x614xf32>
    %634 = arith.truncf %633 : vector<16x614xf32> to vector<16x614xbf16>
    %c9_453 = arith.constant 9 : index
    %c0_454 = arith.constant 0 : index
    %c0_455 = arith.constant 0 : index
    %635 = vector.load %arg16[%c9_453, %c0_454, %c0_455] : memref<16x3x16xbf16, #tpu.memory_space<vmem>>, vector<1x3x16xbf16>
    %636 = vector.shape_cast %635 : vector<1x3x16xbf16> to vector<3x16xbf16>
    %cst_456 = arith.constant dense<0.000000e+00> : vector<3x614xf32>
    %637 = tpu.matmul %636, %634, %cst_456 {dimension_numbers = #tpu.dot_dimension_numbers<[1], [0], [0], [1], [0, 0, 1, 1], [], []>} : vector<3x16xbf16>, vector<16x614xbf16>, vector<3x614xf32> -> vector<3x614xf32>
    %638 = arith.addf %632, %637 : vector<3x614xf32>
    %c0_457 = arith.constant 0 : index
    %c36 = arith.constant 36 : index
    %639 = vector.load %arg20[%c0_457, %c36] : memref<16x652xf32, #tpu.memory_space<vmem>>, vector<16x614xf32>
    %640 = arith.truncf %639 : vector<16x614xf32> to vector<16x614xbf16>
    %c10_458 = arith.constant 10 : index
    %c0_459 = arith.constant 0 : index
    %c0_460 = arith.constant 0 : index
    %641 = vector.load %arg16[%c10_458, %c0_459, %c0_460] : memref<16x3x16xbf16, #tpu.memory_space<vmem>>, vector<1x3x16xbf16>
    %642 = vector.shape_cast %641 : vector<1x3x16xbf16> to vector<3x16xbf16>
    %cst_461 = arith.constant dense<0.000000e+00> : vector<3x614xf32>
    %643 = tpu.matmul %642, %640, %cst_461 {dimension_numbers = #tpu.dot_dimension_numbers<[1], [0], [0], [1], [0, 0, 1, 1], [], []>} : vector<3x16xbf16>, vector<16x614xbf16>, vector<3x614xf32> -> vector<3x614xf32>
    %644 = arith.addf %638, %643 : vector<3x614xf32>
    %c0_462 = arith.constant 0 : index
    %c37 = arith.constant 37 : index
    %645 = vector.load %arg20[%c0_462, %c37] : memref<16x652xf32, #tpu.memory_space<vmem>>, vector<16x614xf32>
    %646 = arith.truncf %645 : vector<16x614xf32> to vector<16x614xbf16>
    %c11_463 = arith.constant 11 : index
    %c0_464 = arith.constant 0 : index
    %c0_465 = arith.constant 0 : index
    %647 = vector.load %arg16[%c11_463, %c0_464, %c0_465] : memref<16x3x16xbf16, #tpu.memory_space<vmem>>, vector<1x3x16xbf16>
    %648 = vector.shape_cast %647 : vector<1x3x16xbf16> to vector<3x16xbf16>
    %cst_466 = arith.constant dense<0.000000e+00> : vector<3x614xf32>
    %649 = tpu.matmul %648, %646, %cst_466 {dimension_numbers = #tpu.dot_dimension_numbers<[1], [0], [0], [1], [0, 0, 1, 1], [], []>} : vector<3x16xbf16>, vector<16x614xbf16>, vector<3x614xf32> -> vector<3x614xf32>
    %650 = arith.addf %644, %649 : vector<3x614xf32>
    %651 = math.tanh %650 : vector<3x614xf32>
    %c2_467 = arith.constant 2 : index
    %c0_468 = arith.constant 0 : index
    %c0_469 = arith.constant 0 : index
    %652 = vector.load %arg17[%c2_467, %c0_468, %c0_469] : memref<4x3x614xf32, #tpu.memory_space<vmem>>, vector<1x3x614xf32>
    %653 = vector.shape_cast %652 : vector<1x3x614xf32> to vector<3x614xf32>
    %654 = vector.shape_cast %651 : vector<3x614xf32> to vector<1x3x614xf32>
    tpu.vector_store %arg17[%c2_467, %c0_468, %c0_469], %654 {strides = array<i32>} : memref<4x3x614xf32, #tpu.memory_space<vmem>>, vector<1x3x614xf32>,
    %c0_470 = arith.constant 0 : index
    %c19_471 = arith.constant 19 : index
    %655 = vector.load %arg20[%c0_470, %c19_471] : memref<16x652xf32, #tpu.memory_space<vmem>>, vector<16x614xf32>
    %656 = arith.truncf %655 : vector<16x614xf32> to vector<16x614xbf16>
    %c12_472 = arith.constant 12 : index
    %c0_473 = arith.constant 0 : index
    %c0_474 = arith.constant 0 : index
    %657 = vector.load %arg16[%c12_472, %c0_473, %c0_474] : memref<16x3x16xbf16, #tpu.memory_space<vmem>>, vector<1x3x16xbf16>
    %658 = vector.shape_cast %657 : vector<1x3x16xbf16> to vector<3x16xbf16>
    %cst_475 = arith.constant dense<0.000000e+00> : vector<3x614xf32>
    %659 = tpu.matmul %658, %656, %cst_475 {dimension_numbers = #tpu.dot_dimension_numbers<[1], [0], [0], [1], [0, 0, 1, 1], [], []>} : vector<3x16xbf16>, vector<16x614xbf16>, vector<3x614xf32> -> vector<3x614xf32>
    %c0_476 = arith.constant 0 : index
    %c20_477 = arith.constant 20 : index
    %660 = vector.load %arg20[%c0_476, %c20_477] : memref<16x652xf32, #tpu.memory_space<vmem>>, vector<16x614xf32>
    %661 = arith.truncf %660 : vector<16x614xf32> to vector<16x614xbf16>
    %c13_478 = arith.constant 13 : index
    %c0_479 = arith.constant 0 : index
    %c0_480 = arith.constant 0 : index
    %662 = vector.load %arg16[%c13_478, %c0_479, %c0_480] : memref<16x3x16xbf16, #tpu.memory_space<vmem>>, vector<1x3x16xbf16>
    %663 = vector.shape_cast %662 : vector<1x3x16xbf16> to vector<3x16xbf16>
    %cst_481 = arith.constant dense<0.000000e+00> : vector<3x614xf32>
    %664 = tpu.matmul %663, %661, %cst_481 {dimension_numbers = #tpu.dot_dimension_numbers<[1], [0], [0], [1], [0, 0, 1, 1], [], []>} : vector<3x16xbf16>, vector<16x614xbf16>, vector<3x614xf32> -> vector<3x614xf32>
    %665 = arith.addf %659, %664 : vector<3x614xf32>
    %c0_482 = arith.constant 0 : index
    %c37_483 = arith.constant 37 : index
    %666 = vector.load %arg20[%c0_482, %c37_483] : memref<16x652xf32, #tpu.memory_space<vmem>>, vector<16x614xf32>
    %667 = arith.truncf %666 : vector<16x614xf32> to vector<16x614xbf16>
    %c14_484 = arith.constant 14 : index
    %c0_485 = arith.constant 0 : index
    %c0_486 = arith.constant 0 : index
    %668 = vector.load %arg16[%c14_484, %c0_485, %c0_486] : memref<16x3x16xbf16, #tpu.memory_space<vmem>>, vector<1x3x16xbf16>
    %669 = vector.shape_cast %668 : vector<1x3x16xbf16> to vector<3x16xbf16>
    %cst_487 = arith.constant dense<0.000000e+00> : vector<3x614xf32>
    %670 = tpu.matmul %669, %667, %cst_487 {dimension_numbers = #tpu.dot_dimension_numbers<[1], [0], [0], [1], [0, 0, 1, 1], [], []>} : vector<3x16xbf16>, vector<16x614xbf16>, vector<3x614xf32> -> vector<3x614xf32>
    %671 = arith.addf %665, %670 : vector<3x614xf32>
    %c0_488 = arith.constant 0 : index
    %c38 = arith.constant 38 : index
    %672 = vector.load %arg20[%c0_488, %c38] : memref<16x652xf32, #tpu.memory_space<vmem>>, vector<16x614xf32>
    %673 = arith.truncf %672 : vector<16x614xf32> to vector<16x614xbf16>
    %c15_489 = arith.constant 15 : index
    %c0_490 = arith.constant 0 : index
    %c0_491 = arith.constant 0 : index
    %674 = vector.load %arg16[%c15_489, %c0_490, %c0_491] : memref<16x3x16xbf16, #tpu.memory_space<vmem>>, vector<1x3x16xbf16>
    %675 = vector.shape_cast %674 : vector<1x3x16xbf16> to vector<3x16xbf16>
    %cst_492 = arith.constant dense<0.000000e+00> : vector<3x614xf32>
    %676 = tpu.matmul %675, %673, %cst_492 {dimension_numbers = #tpu.dot_dimension_numbers<[1], [0], [0], [1], [0, 0, 1, 1], [], []>} : vector<3x16xbf16>, vector<16x614xbf16>, vector<3x614xf32> -> vector<3x614xf32>
    %677 = arith.addf %671, %676 : vector<3x614xf32>
    %678 = math.tanh %677 : vector<3x614xf32>
    %c3_493 = arith.constant 3 : index
    %c0_494 = arith.constant 0 : index
    %c0_495 = arith.constant 0 : index
    %679 = vector.load %arg17[%c3_493, %c0_494, %c0_495] : memref<4x3x614xf32, #tpu.memory_space<vmem>>, vector<1x3x614xf32>
    %680 = vector.shape_cast %679 : vector<1x3x614xf32> to vector<3x614xf32>
    %681 = vector.shape_cast %678 : vector<3x614xf32> to vector<1x3x614xf32>
    tpu.vector_store %arg17[%c3_493, %c0_494, %c0_495], %681 {strides = array<i32>} : memref<4x3x614xf32, #tpu.memory_space<vmem>>, vector<1x3x614xf32>,
    return
  }
}

</mosaic_0001>

<llo_original>
// kernel: generator_forward.1
$region0: #{generator_forward.1}
  #allocation0 [shape = 'u32[]', space=smem, size = 0x4, offset = 0x4, fixed_abs, tag = 'smem constant byte address 0x4 - core index']
  #allocation1 [shape = 'u32[72,128]{1,0:T(1,128)}', space=vmem, size = 0x9000, scoped, tag = 'internal scratch']
  #allocation2 [shape = 'f32[64,76]{1,0:T(8,128)}', space=vmem, size = 0x8000, scoped, tag = 'scratch operand']
  #allocation3 [shape = 'f32[32,204]{1,0:T(8,128)}', space=vmem, size = 0x8000, scoped, tag = 'scratch operand']
  #allocation4 [shape = 'f32[16,652]{1,0:T(8,128)}', space=vmem, size = 0xc000, scoped, tag = 'scratch operand']
  %s0 = inlined_call_operand.vmem [shape: f32[32,2], index: 0, kind: input, shape index: {}]
  %s1 = inlined_call_operand.vmem [shape: bf16[16,64,32], index: 1, kind: input, shape index: {}]
  %s2 = inlined_call_operand.vmem [shape: f32[64,1], index: 2, kind: input, shape index: {}]
  %s3 = inlined_call_operand.vmem [shape: f32[64,1], index: 3, kind: input, shape index: {}]
  %s4 = inlined_call_operand.vmem [shape: bf16[16,32,64], index: 4, kind: input, shape index: {}]
  %s5 = inlined_call_operand.vmem [shape: f32[32,1], index: 5, kind: input, shape index: {}]
  %s6 = inlined_call_operand.vmem [shape: f32[32,1], index: 6, kind: input, shape index: {}]
  %s7 = inlined_call_operand.vmem [shape: f32[62,2], index: 7, kind: input, shape index: {}]
  %s8 = inlined_call_operand.vmem [shape: f32[2,62], index: 8, kind: input, shape index: {}]
  %s9 = inlined_call_operand.vmem [shape: bf16[4,62,204], index: 9, kind: input, shape index: {}]
  %s10 = inlined_call_operand.vmem [shape: bf16[16,16,32], index: 10, kind: input, shape index: {}]
  %s11 = inlined_call_operand.vmem [shape: f32[16,1], index: 11, kind: input, shape index: {}]
  %s12 = inlined_call_operand.vmem [shape: f32[16,1], index: 12, kind: input, shape index: {}]
  %s13 = inlined_call_operand.vmem [shape: f32[182,2], index: 13, kind: input, shape index: {}]
  %s14 = inlined_call_operand.vmem [shape: f32[2,182], index: 14, kind: input, shape index: {}]
  %s15 = inlined_call_operand.vmem [shape: bf16[4,182,652], index: 15, kind: input, shape index: {}]
  %s16 = inlined_call_operand.vmem [shape: bf16[16,3,16], index: 16, kind: input, shape index: {}]
  %s17 = inlined_call_operand.vmem [shape: f32[4,3,614], index: 17, kind: output, shape index: {}]
  %s18 = sld [smem:[#allocation0]]
  $region78: #{generator_forward.1} parent=0
    _
  %s20 = ssub.s32 1, %s18
  %s21 = scalar_select 0, %s20, %s18
  // Predicated region
  $region2: #{generator_forward.1} parent=0 // pred_check
    _
  $region3: #{generator_forward.1} parent=0 // pred_check_branch
    %23 = sbr.rel (0) target = $region5
  $region4: #{generator_forward.1} parent=0 // pred_region
    _
  $region5: #{generator_forward.1} parent=0 // pred_fallthru
    _
  // Predicated region
  $region6: #{generator_forward.1} parent=0 // pred_check
    _
  $region7: #{generator_forward.1} parent=0 // pred_check_branch
    %25 = sbr.rel (0) target = $region9
  $region8: #{generator_forward.1} parent=0 // pred_region
    _
  $region9: #{generator_forward.1} parent=0 // pred_fallthru
    _
  // Predicated region
  $region10: #{generator_forward.1} parent=0 // pred_check
    _
  $region11: #{generator_forward.1} parent=0 // pred_check_branch
    %27 = sbr.rel (0) target = $region13
  $region12: #{generator_forward.1} parent=0 // pred_region
    _
  $region13: #{generator_forward.1} parent=0 // pred_fallthru
    _
  // Predicated region
  $region14: #{generator_forward.1} parent=0 // pred_check
    _
  $region15: #{generator_forward.1} parent=0 // pred_check_branch
    %29 = sbr.rel (0) target = $region17
  $region16: #{generator_forward.1} parent=0 // pred_region
    _
  $region17: #{generator_forward.1} parent=0 // pred_fallthru
    _
  // Predicated region
  $region18: #{generator_forward.1} parent=0 // pred_check
    _
  $region19: #{generator_forward.1} parent=0 // pred_check_branch
    %31 = sbr.rel (0) target = $region21
  $region20: #{generator_forward.1} parent=0 // pred_region
    _
  $region21: #{generator_forward.1} parent=0 // pred_fallthru
    _
  // Predicated region
  $region22: #{generator_forward.1} parent=0 // pred_check
    _
  $region23: #{generator_forward.1} parent=0 // pred_check_branch
    %33 = sbr.rel (0) target = $region25
  $region24: #{generator_forward.1} parent=0 // pred_region
    _
  $region25: #{generator_forward.1} parent=0 // pred_fallthru
    _
  // Predicated region
  $region26: #{generator_forward.1} parent=0 // pred_check
    _
  $region27: #{generator_forward.1} parent=0 // pred_check_branch
    %35 = sbr.rel (0) target = $region29
  $region28: #{generator_forward.1} parent=0 // pred_region
    _
  $region29: #{generator_forward.1} parent=0 // pred_fallthru
    _
  // Predicated region
  $region30: #{generator_forward.1} parent=0 // pred_check
    _
  $region31: #{generator_forward.1} parent=0 // pred_check_branch
    %37 = sbr.rel (0) target = $region33
  $region32: #{generator_forward.1} parent=0 // pred_region
    _
  $region33: #{generator_forward.1} parent=0 // pred_fallthru
    _
  // Predicated region
  $region34: #{generator_forward.1} parent=0 // pred_check
    _
  $region35: #{generator_forward.1} parent=0 // pred_check_branch
    %39 = sbr.rel (0) target = $region37
  $region36: #{generator_forward.1} parent=0 // pred_region
    _
  $region37: #{generator_forward.1} parent=0 // pred_fallthru
    _
  // Predicated region
  $region38: #{generator_forward.1} parent=0 // pred_check
    _
  $region39: #{generator_forward.1} parent=0 // pred_check_branch
    %41 = sbr.rel (0) target = $region41
  $region40: #{generator_forward.1} parent=0 // pred_region
    _
  $region41: #{generator_forward.1} parent=0 // pred_fallthru
    _
  // Predicated region
  $region42: #{generator_forward.1} parent=0 // pred_check
    _
  $region43: #{generator_forward.1} parent=0 // pred_check_branch
    %43 = sbr.rel (0) target = $region45
  $region44: #{generator_forward.1} parent=0 // pred_region
    _
  $region45: #{generator_forward.1} parent=0 // pred_fallthru
    _
  // Predicated region
  $region46: #{generator_forward.1} parent=0 // pred_check
    _
  $region47: #{generator_forward.1} parent=0 // pred_check_branch
    %45 = sbr.rel (0) target = $region49
  $region48: #{generator_forward.1} parent=0 // pred_region
    _
  $region49: #{generator_forward.1} parent=0 // pred_fallthru
    _
  // Predicated region
  $region50: #{generator_forward.1} parent=0 // pred_check
    _
  $region51: #{generator_forward.1} parent=0 // pred_check_branch
    %47 = sbr.rel (0) target = $region53
  $region52: #{generator_forward.1} parent=0 // pred_region
    _
  $region53: #{generator_forward.1} parent=0 // pred_fallthru
    _
  // Predicated region
  $region54: #{generator_forward.1} parent=0 // pred_check
    _
  $region55: #{generator_forward.1} parent=0 // pred_check_branch
    %49 = sbr.rel (0) target = $region57
  $region56: #{generator_forward.1} parent=0 // pred_region
    _
  $region57: #{generator_forward.1} parent=0 // pred_fallthru
    _
  // Predicated region
  $region58: #{generator_forward.1} parent=0 // pred_check
    _
  $region59: #{generator_forward.1} parent=0 // pred_check_branch
    %51 = sbr.rel (0) target = $region61
  $region60: #{generator_forward.1} parent=0 // pred_region
    _
  $region61: #{generator_forward.1} parent=0 // pred_fallthru
    _
  // Predicated region
  $region62: #{generator_forward.1} parent=0 // pred_check
    _
  $region63: #{generator_forward.1} parent=0 // pred_check_branch
    %53 = sbr.rel (0) target = $region65
  $region64: #{generator_forward.1} parent=0 // pred_region
    _
  $region65: #{generator_forward.1} parent=0 // pred_fallthru
    _
  // Predicated region
  $region66: #{generator_forward.1} parent=0 // pred_check
    _
  $region67: #{generator_forward.1} parent=0 // pred_check_branch
    %55 = sbr.rel (0) target = $region69
  $region68: #{generator_forward.1} parent=0 // pred_region
    _
  $region69: #{generator_forward.1} parent=0 // pred_fallthru
    _
  %vm57 = vcmask 621568
  %58 = vst.msk [vmem:[#allocation2] sm:$0xff] %vm57, 0.0
  %59 = vst.msk [vmem:[#allocation2 + $0x8] sm:$0xff] %vm57, 0.0
  %60 = vst.msk [vmem:[#allocation2 + $0x10] sm:$0xff] %vm57, 0.0
  %61 = vst.msk [vmem:[#allocation2 + $0x18] sm:$0xff] %vm57, 0.0
  %62 = vst.msk [vmem:[#allocation2 + $0x20] sm:$0xff] %vm57, 0.0
  %63 = vst.msk [vmem:[#allocation2 + $0x28] sm:$0xff] %vm57, 0.0
  %64 = vst.msk [vmem:[#allocation2 + $0x30] sm:$0xff] %vm57, 0.0
  %65 = vst.msk [vmem:[#allocation2 + $0x38] sm:$0xff] %vm57, 0.0
  %v66 = vld [vmem:[%s0] sm:$0xff]
  %v67 = vld [vmem:[%s0 + $0x8] sm:$0xff]
  %v68 = vld [vmem:[%s0 + $0x10] sm:$0xff]
  %v69 = vld [vmem:[%s0 + $0x18] sm:$0xff]
  %v70 = vpack.c.bf16 %v67, %v66
  %v71 = vpack.c.bf16 %v69, %v68
  %v72 = vld [vmem:[%s1] sm:$0xf]
  %v73 = vld [vmem:[%s1 + $0x4] sm:$0xf]
  %v74 = vld [vmem:[%s1 + $0x8] sm:$0xf]
  %v75 = vld [vmem:[%s1 + $0xc] sm:$0xf]
  %v76 = vld [vmem:[%s1 + $0x10] sm:$0xf]
  %v77 = vld [vmem:[%s1 + $0x14] sm:$0xf]
  %v78 = vld [vmem:[%s1 + $0x18] sm:$0xf]
  %v79 = vld [vmem:[%s1 + $0x1c] sm:$0xf]
  %v88 = vunpack.c.l.b16 %v72
  %v89 = vunpack.c.l.b16 %v73
  %v90 = vunpack.c.l.b16 %v74
  %v91 = vunpack.c.l.b16 %v75
  %v92 = vunpack.c.l.b16 %v76
  %v93 = vunpack.c.l.b16 %v77
  %v94 = vunpack.c.l.b16 %v78
  %v95 = vunpack.c.l.b16 %v79
  %v96 = vpack.c.b16 %v89, %v88
  %v97 = vpack.c.b16 %v91, %v90
  %v98 = vpack.c.b16 %v93, %v92
  %v99 = vpack.c.b16 %v95, %v94
  %vm100 = vcmask 261120
  %v102 = vsel %vm100, %v96, 0
  %v105 = vsel %vm100, %v97, 0
  %v108 = vsel %vm100, %v98, 0
  %v111 = vsel %vm100, %v99, 0
  %113 = vmatpush.bf16.msra.mxu0 0
  %114 = vmatpush.bf16.msra.mxu0 0
  %115 = vmatpush.bf16.msra.mxu0 0
  %116 = vmatpush.bf16.msra.mxu0 0
  %117 = vmatpush.bf16.msra.mxu0 0
  %118 = vmatpush.bf16.msra.mxu0 0
  %119 = vmatpush.bf16.msra.mxu0 %v71
  %120 = vmatpush.bf16.msra.mxu0 %v70
  %121 = vmatmul.bf16.gmra.mxu0 %v102
  %v122 = vpop.f32.mrf.mxu0
  %v123 = vadd.f32 0.0, %v122
  %v124 = vpop.f32.mrf.mxu0
  %v125 = vadd.f32 0.0, %v124
  %126 = vmatmul.bf16.gmra.mxu0 %v105
  %v127 = vpop.f32.mrf.mxu0
  %v128 = vadd.f32 0.0, %v127
  %v129 = vpop.f32.mrf.mxu0
  %v130 = vadd.f32 0.0, %v129
  %131 = vmatmul.bf16.gmra.mxu0 %v108
  %v132 = vpop.f32.mrf.mxu0
  %v133 = vadd.f32 0.0, %v132
  %v134 = vpop.f32.mrf.mxu0
  %v135 = vadd.f32 0.0, %v134
  %136 = vmatmul.bf16.gmra.mxu0 %v111
  %v137 = vpop.f32.mrf.mxu0
  %v138 = vadd.f32 0.0, %v137
  %v139 = vpop.f32.mrf.mxu0
  %v140 = vadd.f32 0.0, %v139
  %141 = vdwg.mxu0
  %s142 = scalar_lea.vmem %s1, 32
  %v143 = vld [vmem:[%s142] sm:$0xf]
  %v144 = vld [vmem:[%s142 + $0x4] sm:$0xf]
  %v145 = vld [vmem:[%s142 + $0x8] sm:$0xf]
  %v146 = vld [vmem:[%s142 + $0xc] sm:$0xf]
  %v147 = vld [vmem:[%s142 + $0x10] sm:$0xf]
  %v148 = vld [vmem:[%s142 + $0x14] sm:$0xf]
  %v149 = vld [vmem:[%s142 + $0x18] sm:$0xf]
  %v150 = vld [vmem:[%s142 + $0x1c] sm:$0xf]
  %v159 = vunpack.c.l.b16 %v143
  %v160 = vunpack.c.l.b16 %v144
  %v161 = vunpack.c.l.b16 %v145
  %v162 = vunpack.c.l.b16 %v146
  %v163 = vunpack.c.l.b16 %v147
  %v164 = vunpack.c.l.b16 %v148
  %v165 = vunpack.c.l.b16 %v149
  %v166 = vunpack.c.l.b16 %v150
  %v167 = vpack.c.b16 %v160, %v159
  %v168 = vpack.c.b16 %v162, %v161
  %v169 = vpack.c.b16 %v164, %v163
  %v170 = vpack.c.b16 %v166, %v165
  %v172 = vsel %vm100, %v167, 0
  %v175 = vsel %vm100, %v168, 0
  %v178 = vsel %vm100, %v169, 0
  %v181 = vsel %vm100, %v170, 0
  %183 = vmatpush.bf16.msra.mxu0 0
  %184 = vmatpush.bf16.msra.mxu0 0
  %185 = vmatpush.bf16.msra.mxu0 0
  %186 = vmatpush.bf16.msra.mxu0 0
  %187 = vmatpush.bf16.msra.mxu0 0
  %188 = vmatpush.bf16.msra.mxu0 0
  %189 = vmatpush.bf16.msra.mxu0 %v71
  %190 = vmatpush.bf16.msra.mxu0 %v70
  %191 = vmatmul.bf16.gmra.mxu0 %v172
  %v192 = vpop.f32.mrf.mxu0
  %v193 = vadd.f32 0.0, %v192
  %v194 = vpop.f32.mrf.mxu0
  %v195 = vadd.f32 0.0, %v194
  %196 = vmatmul.bf16.gmra.mxu0 %v175
  %v197 = vpop.f32.mrf.mxu0
  %v198 = vadd.f32 0.0, %v197
  %v199 = vpop.f32.mrf.mxu0
  %v200 = vadd.f32 0.0, %v199
  %201 = vmatmul.bf16.gmra.mxu0 %v178
  %v202 = vpop.f32.mrf.mxu0
  %v203 = vadd.f32 0.0, %v202
  %v204 = vpop.f32.mrf.mxu0
  %v205 = vadd.f32 0.0, %v204
  %206 = vmatmul.bf16.gmra.mxu0 %v181
  %v207 = vpop.f32.mrf.mxu0
  %v208 = vadd.f32 0.0, %v207
  %v209 = vpop.f32.mrf.mxu0
  %v210 = vadd.f32 0.0, %v209
  %211 = vdwg.mxu0
  %s212 = scalar_lea.vmem %s1, 64
  %v213 = vld [vmem:[%s212] sm:$0xf]
  %v214 = vld [vmem:[%s212 + $0x4] sm:$0xf]
  %v215 = vld [vmem:[%s212 + $0x8] sm:$0xf]
  %v216 = vld [vmem:[%s212 + $0xc] sm:$0xf]
  %v217 = vld [vmem:[%s212 + $0x10] sm:$0xf]
  %v218 = vld [vmem:[%s212 + $0x14] sm:$0xf]
  %v219 = vld [vmem:[%s212 + $0x18] sm:$0xf]
  %v220 = vld [vmem:[%s212 + $0x1c] sm:$0xf]
  %v229 = vunpack.c.l.b16 %v213
  %v230 = vunpack.c.l.b16 %v214
  %v231 = vunpack.c.l.b16 %v215
  %v232 = vunpack.c.l.b16 %v216
  %v233 = vunpack.c.l.b16 %v217
  %v234 = vunpack.c.l.b16 %v218
  %v235 = vunpack.c.l.b16 %v219
  %v236 = vunpack.c.l.b16 %v220
  %v237 = vpack.c.b16 %v230, %v229
  %v238 = vpack.c.b16 %v232, %v231
  %v239 = vpack.c.b16 %v234, %v233
  %v240 = vpack.c.b16 %v236, %v235
  %v242 = vsel %vm100, %v237, 0
  %v245 = vsel %vm100, %v238, 0
  %v248 = vsel %vm100, %v239, 0
  %v251 = vsel %vm100, %v240, 0
  %253 = vmatpush.bf16.msra.mxu0 0
  %254 = vmatpush.bf16.msra.mxu0 0
  %255 = vmatpush.bf16.msra.mxu0 0
  %256 = vmatpush.bf16.msra.mxu0 0
  %257 = vmatpush.bf16.msra.mxu0 0
  %258 = vmatpush.bf16.msra.mxu0 0
  %259 = vmatpush.bf16.msra.mxu0 %v71
  %260 = vmatpush.bf16.msra.mxu0 %v70
  %261 = vmatmul.bf16.gmra.mxu0 %v242
  %v262 = vpop.f32.mrf.mxu0
  %v263 = vadd.f32 0.0, %v262
  %v264 = vpop.f32.mrf.mxu0
  %v265 = vadd.f32 0.0, %v264
  %266 = vmatmul.bf16.gmra.mxu0 %v245
  %v267 = vpop.f32.mrf.mxu0
  %v268 = vadd.f32 0.0, %v267
  %v269 = vpop.f32.mrf.mxu0
  %v270 = vadd.f32 0.0, %v269
  %271 = vmatmul.bf16.gmra.mxu0 %v248
  %v272 = vpop.f32.mrf.mxu0
  %v273 = vadd.f32 0.0, %v272
  %v274 = vpop.f32.mrf.mxu0
  %v275 = vadd.f32 0.0, %v274
  %276 = vmatmul.bf16.gmra.mxu0 %v251
  %v277 = vpop.f32.mrf.mxu0
  %v278 = vadd.f32 0.0, %v277
  %v279 = vpop.f32.mrf.mxu0
  %v280 = vadd.f32 0.0, %v279
  %281 = vdwg.mxu0
  %s282 = scalar_lea.vmem %s1, 96
  %v283 = vld [vmem:[%s282] sm:$0xf]
  %v284 = vld [vmem:[%s282 + $0x4] sm:$0xf]
  %v285 = vld [vmem:[%s282 + $0x8] sm:$0xf]
  %v286 = vld [vmem:[%s282 + $0xc] sm:$0xf]
  %v287 = vld [vmem:[%s282 + $0x10] sm:$0xf]
  %v288 = vld [vmem:[%s282 + $0x14] sm:$0xf]
  %v289 = vld [vmem:[%s282 + $0x18] sm:$0xf]
  %v290 = vld [vmem:[%s282 + $0x1c] sm:$0xf]
  %v299 = vunpack.c.l.b16 %v283
  %v300 = vunpack.c.l.b16 %v284
  %v301 = vunpack.c.l.b16 %v285
  %v302 = vunpack.c.l.b16 %v286
  %v303 = vunpack.c.l.b16 %v287
  %v304 = vunpack.c.l.b16 %v288
  %v305 = vunpack.c.l.b16 %v289
  %v306 = vunpack.c.l.b16 %v290
  %v307 = vpack.c.b16 %v300, %v299
  %v308 = vpack.c.b16 %v302, %v301
  %v309 = vpack.c.b16 %v304, %v303
  %v310 = vpack.c.b16 %v306, %v305
  %v312 = vsel %vm100, %v307, 0
  %v315 = vsel %vm100, %v308, 0
  %v318 = vsel %vm100, %v309, 0
  %v321 = vsel %vm100, %v310, 0
  %323 = vmatpush.bf16.msra.mxu0 0
  %324 = vmatpush.bf16.msra.mxu0 0
  %325 = vmatpush.bf16.msra.mxu0 0
  %326 = vmatpush.bf16.msra.mxu0 0
  %327 = vmatpush.bf16.msra.mxu0 0
  %328 = vmatpush.bf16.msra.mxu0 0
  %329 = vmatpush.bf16.msra.mxu0 %v71
  %330 = vmatpush.bf16.msra.mxu0 %v70
  %331 = vmatmul.bf16.gmra.mxu0 %v312
  %v332 = vpop.f32.mrf.mxu0
  %v333 = vadd.f32 0.0, %v332
  %v334 = vpop.f32.mrf.mxu0
  %v335 = vadd.f32 0.0, %v334
  %336 = vmatmul.bf16.gmra.mxu0 %v315
  %v337 = vpop.f32.mrf.mxu0
  %v338 = vadd.f32 0.0, %v337
  %v339 = vpop.f32.mrf.mxu0
  %v340 = vadd.f32 0.0, %v339
  %341 = vmatmul.bf16.gmra.mxu0 %v318
  %v342 = vpop.f32.mrf.mxu0
  %v343 = vadd.f32 0.0, %v342
  %v344 = vpop.f32.mrf.mxu0
  %v345 = vadd.f32 0.0, %v344
  %346 = vmatmul.bf16.gmra.mxu0 %v321
  %v347 = vpop.f32.mrf.mxu0
  %v348 = vadd.f32 0.0, %v347
  %v349 = vpop.f32.mrf.mxu0
  %v350 = vadd.f32 0.0, %v349
  %351 = vdwg.mxu0
  %s352 = scalar_lea.vmem %s1, 128
  %v353 = vld [vmem:[%s352] sm:$0xf]
  %v354 = vld [vmem:[%s352 + $0x4] sm:$0xf]
  %v355 = vld [vmem:[%s352 + $0x8] sm:$0xf]
  %v356 = vld [vmem:[%s352 + $0xc] sm:$0xf]
  %v357 = vld [vmem:[%s352 + $0x10] sm:$0xf]
  %v358 = vld [vmem:[%s352 + $0x14] sm:$0xf]
  %v359 = vld [vmem:[%s352 + $0x18] sm:$0xf]
  %v360 = vld [vmem:[%s352 + $0x1c] sm:$0xf]
  %v369 = vunpack.c.l.b16 %v353
  %v370 = vunpack.c.l.b16 %v354
  %v371 = vunpack.c.l.b16 %v355
  %v372 = vunpack.c.l.b16 %v356
  %v373 = vunpack.c.l.b16 %v357
  %v374 = vunpack.c.l.b16 %v358
  %v375 = vunpack.c.l.b16 %v359
  %v376 = vunpack.c.l.b16 %v360
  %v377 = vpack.c.b16 %v370, %v369
  %v378 = vpack.c.b16 %v372, %v371
  %v379 = vpack.c.b16 %v374, %v373
  %v380 = vpack.c.b16 %v376, %v375
  %v382 = vsel %vm100, %v377, 0
  %v385 = vsel %vm100, %v378, 0
  %v388 = vsel %vm100, %v379, 0
  %v391 = vsel %vm100, %v380, 0
  %393 = vmatpush.bf16.msra.mxu0 0
  %394 = vmatpush.bf16.msra.mxu0 0
  %395 = vmatpush.bf16.msra.mxu0 0
  %396 = vmatpush.bf16.msra.mxu0 0
  %397 = vmatpush.bf16.msra.mxu0 0
  %398 = vmatpush.bf16.msra.mxu0 0
  %399 = vmatpush.bf16.msra.mxu0 %v71
  %400 = vmatpush.bf16.msra.mxu0 %v70
  %401 = vmatmul.bf16.gmra.mxu0 %v382
  %v402 = vpop.f32.mrf.mxu0
  %v403 = vadd.f32 0.0, %v402
  %v404 = vpop.f32.mrf.mxu0
  %v405 = vadd.f32 0.0, %v404
  %406 = vmatmul.bf16.gmra.mxu0 %v385
  %v407 = vpop.f32.mrf.mxu0
  %v408 = vadd.f32 0.0, %v407
  %v409 = vpop.f32.mrf.mxu0
  %v410 = vadd.f32 0.0, %v409
  %411 = vmatmul.bf16.gmra.mxu0 %v388
  %v412 = vpop.f32.mrf.mxu0
  %v413 = vadd.f32 0.0, %v412
  %v414 = vpop.f32.mrf.mxu0
  %v415 = vadd.f32 0.0, %v414
  %416 = vmatmul.bf16.gmra.mxu0 %v391
  %v417 = vpop.f32.mrf.mxu0
  %v418 = vadd.f32 0.0, %v417
  %v419 = vpop.f32.mrf.mxu0
  %v420 = vadd.f32 0.0, %v419
  %421 = vdwg.mxu0
  %s422 = scalar_lea.vmem %s1, 160
  %v423 = vld [vmem:[%s422] sm:$0xf]
  %v424 = vld [vmem:[%s422 + $0x4] sm:$0xf]
  %v425 = vld [vmem:[%s422 + $0x8] sm:$0xf]
  %v426 = vld [vmem:[%s422 + $0xc] sm:$0xf]
  %v427 = vld [vmem:[%s422 + $0x10] sm:$0xf]
  %v428 = vld [vmem:[%s422 + $0x14] sm:$0xf]
  %v429 = vld [vmem:[%s422 + $0x18] sm:$0xf]
  %v430 = vld [vmem:[%s422 + $0x1c] sm:$0xf]
  %v439 = vunpack.c.l.b16 %v423
  %v440 = vunpack.c.l.b16 %v424
  %v441 = vunpack.c.l.b16 %v425
  %v442 = vunpack.c.l.b16 %v426
  %v443 = vunpack.c.l.b16 %v427
  %v444 = vunpack.c.l.b16 %v428
  %v445 = vunpack.c.l.b16 %v429
  %v446 = vunpack.c.l.b16 %v430
  %v447 = vpack.c.b16 %v440, %v439
  %v448 = vpack.c.b16 %v442, %v441
  %v449 = vpack.c.b16 %v444, %v443
  %v450 = vpack.c.b16 %v446, %v445
  %v452 = vsel %vm100, %v447, 0
  %v455 = vsel %vm100, %v448, 0
  %v458 = vsel %vm100, %v449, 0
  %v461 = vsel %vm100, %v450, 0
  %463 = vmatpush.bf16.msra.mxu0 0
  %464 = vmatpush.bf16.msra.mxu0 0
  %465 = vmatpush.bf16.msra.mxu0 0
  %466 = vmatpush.bf16.msra.mxu0 0
  %467 = vmatpush.bf16.msra.mxu0 0
  %468 = vmatpush.bf16.msra.mxu0 0
  %469 = vmatpush.bf16.msra.mxu0 %v71
  %470 = vmatpush.bf16.msra.mxu0 %v70
  %471 = vmatmul.bf16.gmra.mxu0 %v452
  %v472 = vpop.f32.mrf.mxu0
  %v473 = vadd.f32 0.0, %v472
  %v474 = vpop.f32.mrf.mxu0
  %v475 = vadd.f32 0.0, %v474
  %476 = vmatmul.bf16.gmra.mxu0 %v455
  %v477 = vpop.f32.mrf.mxu0
  %v478 = vadd.f32 0.0, %v477
  %v479 = vpop.f32.mrf.mxu0
  %v480 = vadd.f32 0.0, %v479
  %481 = vmatmul.bf16.gmra.mxu0 %v458
  %v482 = vpop.f32.mrf.mxu0
  %v483 = vadd.f32 0.0, %v482
  %v484 = vpop.f32.mrf.mxu0
  %v485 = vadd.f32 0.0, %v484
  %486 = vmatmul.bf16.gmra.mxu0 %v461
  %v487 = vpop.f32.mrf.mxu0
  %v488 = vadd.f32 0.0, %v487
  %v489 = vpop.f32.mrf.mxu0
  %v490 = vadd.f32 0.0, %v489
  %491 = vdwg.mxu0
  %s492 = scalar_lea.vmem %s1, 192
  %v493 = vld [vmem:[%s492] sm:$0xf]
  %v494 = vld [vmem:[%s492 + $0x4] sm:$0xf]
  %v495 = vld [vmem:[%s492 + $0x8] sm:$0xf]
  %v496 = vld [vmem:[%s492 + $0xc] sm:$0xf]
  %v497 = vld [vmem:[%s492 + $0x10] sm:$0xf]
  %v498 = vld [vmem:[%s492 + $0x14] sm:$0xf]
  %v499 = vld [vmem:[%s492 + $0x18] sm:$0xf]
  %v500 = vld [vmem:[%s492 + $0x1c] sm:$0xf]
  %v509 = vunpack.c.l.b16 %v493
  %v510 = vunpack.c.l.b16 %v494
  %v511 = vunpack.c.l.b16 %v495
  %v512 = vunpack.c.l.b16 %v496
  %v513 = vunpack.c.l.b16 %v497
  %v514 = vunpack.c.l.b16 %v498
  %v515 = vunpack.c.l.b16 %v499
  %v516 = vunpack.c.l.b16 %v500
  %v517 = vpack.c.b16 %v510, %v509
  %v518 = vpack.c.b16 %v512, %v511
  %v519 = vpack.c.b16 %v514, %v513
  %v520 = vpack.c.b16 %v516, %v515
  %v522 = vsel %vm100, %v517, 0
  %v525 = vsel %vm100, %v518, 0
  %v528 = vsel %vm100, %v519, 0
  %v531 = vsel %vm100, %v520, 0
  %533 = vmatpush.bf16.msra.mxu0 0
  %534 = vmatpush.bf16.msra.mxu0 0
  %535 = vmatpush.bf16.msra.mxu0 0
  %536 = vmatpush.bf16.msra.mxu0 0
  %537 = vmatpush.bf16.msra.mxu0 0
  %538 = vmatpush.bf16.msra.mxu0 0
  %539 = vmatpush.bf16.msra.mxu0 %v71
  %540 = vmatpush.bf16.msra.mxu0 %v70
  %541 = vmatmul.bf16.gmra.mxu0 %v522
  %v542 = vpop.f32.mrf.mxu0
  %v543 = vadd.f32 0.0, %v542
  %v544 = vpop.f32.mrf.mxu0
  %v545 = vadd.f32 0.0, %v544
  %546 = vmatmul.bf16.gmra.mxu0 %v525
  %v547 = vpop.f32.mrf.mxu0
  %v548 = vadd.f32 0.0, %v547
  %v549 = vpop.f32.mrf.mxu0
  %v550 = vadd.f32 0.0, %v549
  %551 = vmatmul.bf16.gmra.mxu0 %v528
  %v552 = vpop.f32.mrf.mxu0
  %v553 = vadd.f32 0.0, %v552
  %v554 = vpop.f32.mrf.mxu0
  %v555 = vadd.f32 0.0, %v554
  %556 = vmatmul.bf16.gmra.mxu0 %v531
  %v557 = vpop.f32.mrf.mxu0
  %v558 = vadd.f32 0.0, %v557
  %v559 = vpop.f32.mrf.mxu0
  %v560 = vadd.f32 0.0, %v559
  %561 = vdwg.mxu0
  %s562 = scalar_lea.vmem %s1, 224
  %v563 = vld [vmem:[%s562] sm:$0xf]
  %v564 = vld [vmem:[%s562 + $0x4] sm:$0xf]
  %v565 = vld [vmem:[%s562 + $0x8] sm:$0xf]
  %v566 = vld [vmem:[%s562 + $0xc] sm:$0xf]
  %v567 = vld [vmem:[%s562 + $0x10] sm:$0xf]
  %v568 = vld [vmem:[%s562 + $0x14] sm:$0xf]
  %v569 = vld [vmem:[%s562 + $0x18] sm:$0xf]
  %v570 = vld [vmem:[%s562 + $0x1c] sm:$0xf]
  %v579 = vunpack.c.l.b16 %v563
  %v580 = vunpack.c.l.b16 %v564
  %v581 = vunpack.c.l.b16 %v565
  %v582 = vunpack.c.l.b16 %v566
  %v583 = vunpack.c.l.b16 %v567
  %v584 = vunpack.c.l.b16 %v568
  %v585 = vunpack.c.l.b16 %v569
  %v586 = vunpack.c.l.b16 %v570
  %v587 = vpack.c.b16 %v580, %v579
  %v588 = vpack.c.b16 %v582, %v581
  %v589 = vpack.c.b16 %v584, %v583
  %v590 = vpack.c.b16 %v586, %v585
  %v592 = vsel %vm100, %v587, 0
  %v595 = vsel %vm100, %v588, 0
  %v598 = vsel %vm100, %v589, 0
  %v601 = vsel %vm100, %v590, 0
  %603 = vmatpush.bf16.msra.mxu0 0
  %604 = vmatpush.bf16.msra.mxu0 0
  %605 = vmatpush.bf16.msra.mxu0 0
  %606 = vmatpush.bf16.msra.mxu0 0
  %607 = vmatpush.bf16.msra.mxu0 0
  %608 = vmatpush.bf16.msra.mxu0 0
  %609 = vmatpush.bf16.msra.mxu0 %v71
  %610 = vmatpush.bf16.msra.mxu0 %v70
  %611 = vmatmul.bf16.gmra.mxu0 %v592
  %v612 = vpop.f32.mrf.mxu0
  %v613 = vadd.f32 0.0, %v612
  %v614 = vpop.f32.mrf.mxu0
  %v615 = vadd.f32 0.0, %v614
  %616 = vmatmul.bf16.gmra.mxu0 %v595
  %v617 = vpop.f32.mrf.mxu0
  %v618 = vadd.f32 0.0, %v617
  %v619 = vpop.f32.mrf.mxu0
  %v620 = vadd.f32 0.0, %v619
  %621 = vmatmul.bf16.gmra.mxu0 %v598
  %v622 = vpop.f32.mrf.mxu0
  %v623 = vadd.f32 0.0, %v622
  %v624 = vpop.f32.mrf.mxu0
  %v625 = vadd.f32 0.0, %v624
  %626 = vmatmul.bf16.gmra.mxu0 %v601
  %v627 = vpop.f32.mrf.mxu0
  %v628 = vadd.f32 0.0, %v627
  %v629 = vpop.f32.mrf.mxu0
  %v630 = vadd.f32 0.0, %v629
  %631 = vdwg.mxu0
  %s632 = scalar_lea.vmem %s1, 256
  %v633 = vld [vmem:[%s632] sm:$0xf]
  %v634 = vld [vmem:[%s632 + $0x4] sm:$0xf]
  %v635 = vld [vmem:[%s632 + $0x8] sm:$0xf]
  %v636 = vld [vmem:[%s632 + $0xc] sm:$0xf]
  %v637 = vld [vmem:[%s632 + $0x10] sm:$0xf]
  %v638 = vld [vmem:[%s632 + $0x14] sm:$0xf]
  %v639 = vld [vmem:[%s632 + $0x18] sm:$0xf]
  %v640 = vld [vmem:[%s632 + $0x1c] sm:$0xf]
  %v649 = vunpack.c.l.b16 %v633
  %v650 = vunpack.c.l.b16 %v634
  %v651 = vunpack.c.l.b16 %v635
  %v652 = vunpack.c.l.b16 %v636
  %v653 = vunpack.c.l.b16 %v637
  %v654 = vunpack.c.l.b16 %v638
  %v655 = vunpack.c.l.b16 %v639
  %v656 = vunpack.c.l.b16 %v640
  %v657 = vpack.c.b16 %v650, %v649
  %v658 = vpack.c.b16 %v652, %v651
  %v659 = vpack.c.b16 %v654, %v653
  %v660 = vpack.c.b16 %v656, %v655
  %v662 = vsel %vm100, %v657, 0
  %v665 = vsel %vm100, %v658, 0
  %v668 = vsel %vm100, %v659, 0
  %v671 = vsel %vm100, %v660, 0
  %673 = vmatpush.bf16.msra.mxu0 0
  %674 = vmatpush.bf16.msra.mxu0 0
  %675 = vmatpush.bf16.msra.mxu0 0
  %676 = vmatpush.bf16.msra.mxu0 0
  %677 = vmatpush.bf16.msra.mxu0 0
  %678 = vmatpush.bf16.msra.mxu0 0
  %679 = vmatpush.bf16.msra.mxu0 %v71
  %680 = vmatpush.bf16.msra.mxu0 %v70
  %681 = vmatmul.bf16.gmra.mxu0 %v662
  %v682 = vpop.f32.mrf.mxu0
  %v683 = vadd.f32 0.0, %v682
  %v684 = vpop.f32.mrf.mxu0
  %v685 = vadd.f32 0.0, %v684
  %686 = vmatmul.bf16.gmra.mxu0 %v665
  %v687 = vpop.f32.mrf.mxu0
  %v688 = vadd.f32 0.0, %v687
  %v689 = vpop.f32.mrf.mxu0
  %v690 = vadd.f32 0.0, %v689
  %691 = vmatmul.bf16.gmra.mxu0 %v668
  %v692 = vpop.f32.mrf.mxu0
  %v693 = vadd.f32 0.0, %v692
  %v694 = vpop.f32.mrf.mxu0
  %v695 = vadd.f32 0.0, %v694
  %696 = vmatmul.bf16.gmra.mxu0 %v671
  %v697 = vpop.f32.mrf.mxu0
  %v698 = vadd.f32 0.0, %v697
  %v699 = vpop.f32.mrf.mxu0
  %v700 = vadd.f32 0.0, %v699
  %701 = vdwg.mxu0
  %s702 = scalar_lea.vmem %s1, 288
  %v703 = vld [vmem:[%s702] sm:$0xf]
  %v704 = vld [vmem:[%s702 + $0x4] sm:$0xf]
  %v705 = vld [vmem:[%s702 + $0x8] sm:$0xf]
  %v706 = vld [vmem:[%s702 + $0xc] sm:$0xf]
  %v707 = vld [vmem:[%s702 + $0x10] sm:$0xf]
  %v708 = vld [vmem:[%s702 + $0x14] sm:$0xf]
  %v709 = vld [vmem:[%s702 + $0x18] sm:$0xf]
  %v710 = vld [vmem:[%s702 + $0x1c] sm:$0xf]
  %v719 = vunpack.c.l.b16 %v703
  %v720 = vunpack.c.l.b16 %v704
  %v721 = vunpack.c.l.b16 %v705
  %v722 = vunpack.c.l.b16 %v706
  %v723 = vunpack.c.l.b16 %v707
  %v724 = vunpack.c.l.b16 %v708
  %v725 = vunpack.c.l.b16 %v709
  %v726 = vunpack.c.l.b16 %v710
  %v727 = vpack.c.b16 %v720, %v719
  %v728 = vpack.c.b16 %v722, %v721
  %v729 = vpack.c.b16 %v724, %v723
  %v730 = vpack.c.b16 %v726, %v725
  %v732 = vsel %vm100, %v727, 0
  %v735 = vsel %vm100, %v728, 0
  %v738 = vsel %vm100, %v729, 0
  %v741 = vsel %vm100, %v730, 0
  %743 = vmatpush.bf16.msra.mxu0 0
  %744 = vmatpush.bf16.msra.mxu0 0
  %745 = vmatpush.bf16.msra.mxu0 0
  %746 = vmatpush.bf16.msra.mxu0 0
  %747 = vmatpush.bf16.msra.mxu0 0
  %748 = vmatpush.bf16.msra.mxu0 0
  %749 = vmatpush.bf16.msra.mxu0 %v71
  %750 = vmatpush.bf16.msra.mxu0 %v70
  %751 = vmatmul.bf16.gmra.mxu0 %v732
  %v752 = vpop.f32.mrf.mxu0
  %v753 = vadd.f32 0.0, %v752
  %v754 = vpop.f32.mrf.mxu0
  %v755 = vadd.f32 0.0, %v754
  %756 = vmatmul.bf16.gmra.mxu0 %v735
  %v757 = vpop.f32.mrf.mxu0
  %v758 = vadd.f32 0.0, %v757
  %v759 = vpop.f32.mrf.mxu0
  %v760 = vadd.f32 0.0, %v759
  %761 = vmatmul.bf16.gmra.mxu0 %v738
  %v762 = vpop.f32.mrf.mxu0
  %v763 = vadd.f32 0.0, %v762
  %v764 = vpop.f32.mrf.mxu0
  %v765 = vadd.f32 0.0, %v764
  %766 = vmatmul.bf16.gmra.mxu0 %v741
  %v767 = vpop.f32.mrf.mxu0
  %v768 = vadd.f32 0.0, %v767
  %v769 = vpop.f32.mrf.mxu0
  %v770 = vadd.f32 0.0, %v769
  %771 = vdwg.mxu0
  %s772 = scalar_lea.vmem %s1, 320
  %v773 = vld [vmem:[%s772] sm:$0xf]
  %v774 = vld [vmem:[%s772 + $0x4] sm:$0xf]
  %v775 = vld [vmem:[%s772 + $0x8] sm:$0xf]
  %v776 = vld [vmem:[%s772 + $0xc] sm:$0xf]
  %v777 = vld [vmem:[%s772 + $0x10] sm:$0xf]
  %v778 = vld [vmem:[%s772 + $0x14] sm:$0xf]
  %v779 = vld [vmem:[%s772 + $0x18] sm:$0xf]
  %v780 = vld [vmem:[%s772 + $0x1c] sm:$0xf]
  %v789 = vunpack.c.l.b16 %v773
  %v790 = vunpack.c.l.b16 %v774
  %v791 = vunpack.c.l.b16 %v775
  %v792 = vunpack.c.l.b16 %v776
  %v793 = vunpack.c.l.b16 %v777
  %v794 = vunpack.c.l.b16 %v778
  %v795 = vunpack.c.l.b16 %v779
  %v796 = vunpack.c.l.b16 %v780
  %v797 = vpack.c.b16 %v790, %v789
  %v798 = vpack.c.b16 %v792, %v791
  %v799 = vpack.c.b16 %v794, %v793
  %v800 = vpack.c.b16 %v796, %v795
  %v802 = vsel %vm100, %v797, 0
  %v805 = vsel %vm100, %v798, 0
  %v808 = vsel %vm100, %v799, 0
  %v811 = vsel %vm100, %v800, 0
  %813 = vmatpush.bf16.msra.mxu0 0
  %814 = vmatpush.bf16.msra.mxu0 0
  %815 = vmatpush.bf16.msra.mxu0 0
  %816 = vmatpush.bf16.msra.mxu0 0
  %817 = vmatpush.bf16.msra.mxu0 0
  %818 = vmatpush.bf16.msra.mxu0 0
  %819 = vmatpush.bf16.msra.mxu0 %v71
  %820 = vmatpush.bf16.msra.mxu0 %v70
  %821 = vmatmul.bf16.gmra.mxu0 %v802
  %v822 = vpop.f32.mrf.mxu0
  %v823 = vadd.f32 0.0, %v822
  %v824 = vpop.f32.mrf.mxu0
  %v825 = vadd.f32 0.0, %v824
  %826 = vmatmul.bf16.gmra.mxu0 %v805
  %v827 = vpop.f32.mrf.mxu0
  %v828 = vadd.f32 0.0, %v827
  %v829 = vpop.f32.mrf.mxu0
  %v830 = vadd.f32 0.0, %v829
  %831 = vmatmul.bf16.gmra.mxu0 %v808
  %v832 = vpop.f32.mrf.mxu0
  %v833 = vadd.f32 0.0, %v832
  %v834 = vpop.f32.mrf.mxu0
  %v835 = vadd.f32 0.0, %v834
  %836 = vmatmul.bf16.gmra.mxu0 %v811
  %v837 = vpop.f32.mrf.mxu0
  %v838 = vadd.f32 0.0, %v837
  %v839 = vpop.f32.mrf.mxu0
  %v840 = vadd.f32 0.0, %v839
  %841 = vdwg.mxu0
  %s842 = scalar_lea.vmem %s1, 352
  %v843 = vld [vmem:[%s842] sm:$0xf]
  %v844 = vld [vmem:[%s842 + $0x4] sm:$0xf]
  %v845 = vld [vmem:[%s842 + $0x8] sm:$0xf]
  %v846 = vld [vmem:[%s842 + $0xc] sm:$0xf]
  %v847 = vld [vmem:[%s842 + $0x10] sm:$0xf]
  %v848 = vld [vmem:[%s842 + $0x14] sm:$0xf]
  %v849 = vld [vmem:[%s842 + $0x18] sm:$0xf]
  %v850 = vld [vmem:[%s842 + $0x1c] sm:$0xf]
  %v859 = vunpack.c.l.b16 %v843
  %v860 = vunpack.c.l.b16 %v844
  %v861 = vunpack.c.l.b16 %v845
  %v862 = vunpack.c.l.b16 %v846
  %v863 = vunpack.c.l.b16 %v847
  %v864 = vunpack.c.l.b16 %v848
  %v865 = vunpack.c.l.b16 %v849
  %v866 = vunpack.c.l.b16 %v850
  %v867 = vpack.c.b16 %v860, %v859
  %v868 = vpack.c.b16 %v862, %v861
  %v869 = vpack.c.b16 %v864, %v863
  %v870 = vpack.c.b16 %v866, %v865
  %v872 = vsel %vm100, %v867, 0
  %v875 = vsel %vm100, %v868, 0
  %v878 = vsel %vm100, %v869, 0
  %v881 = vsel %vm100, %v870, 0
  %883 = vmatpush.bf16.msra.mxu0 0
  %884 = vmatpush.bf16.msra.mxu0 0
  %885 = vmatpush.bf16.msra.mxu0 0
  %886 = vmatpush.bf16.msra.mxu0 0
  %887 = vmatpush.bf16.msra.mxu0 0
  %888 = vmatpush.bf16.msra.mxu0 0
  %889 = vmatpush.bf16.msra.mxu0 %v71
  %890 = vmatpush.bf16.msra.mxu0 %v70
  %891 = vmatmul.bf16.gmra.mxu0 %v872
  %v892 = vpop.f32.mrf.mxu0
  %v893 = vadd.f32 0.0, %v892
  %v894 = vpop.f32.mrf.mxu0
  %v895 = vadd.f32 0.0, %v894
  %896 = vmatmul.bf16.gmra.mxu0 %v875
  %v897 = vpop.f32.mrf.mxu0
  %v898 = vadd.f32 0.0, %v897
  %v899 = vpop.f32.mrf.mxu0
  %v900 = vadd.f32 0.0, %v899
  %901 = vmatmul.bf16.gmra.mxu0 %v878
  %v902 = vpop.f32.mrf.mxu0
  %v903 = vadd.f32 0.0, %v902
  %v904 = vpop.f32.mrf.mxu0
  %v905 = vadd.f32 0.0, %v904
  %906 = vmatmul.bf16.gmra.mxu0 %v881
  %v907 = vpop.f32.mrf.mxu0
  %v908 = vadd.f32 0.0, %v907
  %v909 = vpop.f32.mrf.mxu0
  %v910 = vadd.f32 0.0, %v909
  %911 = vdwg.mxu0
  %s912 = scalar_lea.vmem %s1, 384
  %v913 = vld [vmem:[%s912] sm:$0xf]
  %v914 = vld [vmem:[%s912 + $0x4] sm:$0xf]
  %v915 = vld [vmem:[%s912 + $0x8] sm:$0xf]
  %v916 = vld [vmem:[%s912 + $0xc] sm:$0xf]
  %v917 = vld [vmem:[%s912 + $0x10] sm:$0xf]
  %v918 = vld [vmem:[%s912 + $0x14] sm:$0xf]
  %v919 = vld [vmem:[%s912 + $0x18] sm:$0xf]
  %v920 = vld [vmem:[%s912 + $0x1c] sm:$0xf]
  %v929 = vunpack.c.l.b16 %v913
  %v930 = vunpack.c.l.b16 %v914
  %v931 = vunpack.c.l.b16 %v915
  %v932 = vunpack.c.l.b16 %v916
  %v933 = vunpack.c.l.b16 %v917
  %v934 = vunpack.c.l.b16 %v918
  %v935 = vunpack.c.l.b16 %v919
  %v936 = vunpack.c.l.b16 %v920
  %v937 = vpack.c.b16 %v930, %v929
  %v938 = vpack.c.b16 %v932, %v931
  %v939 = vpack.c.b16 %v934, %v933
  %v940 = vpack.c.b16 %v936, %v935
  %v942 = vsel %vm100, %v937, 0
  %v945 = vsel %vm100, %v938, 0
  %v948 = vsel %vm100, %v939, 0
  %v951 = vsel %vm100, %v940, 0
  %953 = vmatpush.bf16.msra.mxu0 0
  %954 = vmatpush.bf16.msra.mxu0 0
  %955 = vmatpush.bf16.msra.mxu0 0
  %956 = vmatpush.bf16.msra.mxu0 0
  %957 = vmatpush.bf16.msra.mxu0 0
  %958 = vmatpush.bf16.msra.mxu0 0
  %959 = vmatpush.bf16.msra.mxu0 %v71
  %960 = vmatpush.bf16.msra.mxu0 %v70
  %961 = vmatmul.bf16.gmra.mxu0 %v942
  %v962 = vpop.f32.mrf.mxu0
  %v963 = vadd.f32 0.0, %v962
  %v964 = vpop.f32.mrf.mxu0
  %v965 = vadd.f32 0.0, %v964
  %966 = vmatmul.bf16.gmra.mxu0 %v945
  %v967 = vpop.f32.mrf.mxu0
  %v968 = vadd.f32 0.0, %v967
  %v969 = vpop.f32.mrf.mxu0
  %v970 = vadd.f32 0.0, %v969
  %971 = vmatmul.bf16.gmra.mxu0 %v948
  %v972 = vpop.f32.mrf.mxu0
  %v973 = vadd.f32 0.0, %v972
  %v974 = vpop.f32.mrf.mxu0
  %v975 = vadd.f32 0.0, %v974
  %976 = vmatmul.bf16.gmra.mxu0 %v951
  %v977 = vpop.f32.mrf.mxu0
  %v978 = vadd.f32 0.0, %v977
  %v979 = vpop.f32.mrf.mxu0
  %v980 = vadd.f32 0.0, %v979
  %981 = vdwg.mxu0
  %s982 = scalar_lea.vmem %s1, 416
  %v983 = vld [vmem:[%s982] sm:$0xf]
  %v984 = vld [vmem:[%s982 + $0x4] sm:$0xf]
  %v985 = vld [vmem:[%s982 + $0x8] sm:$0xf]
  %v986 = vld [vmem:[%s982 + $0xc] sm:$0xf]
  %v987 = vld [vmem:[%s982 + $0x10] sm:$0xf]
  %v988 = vld [vmem:[%s982 + $0x14] sm:$0xf]
  %v989 = vld [vmem:[%s982 + $0x18] sm:$0xf]
  %v990 = vld [vmem:[%s982 + $0x1c] sm:$0xf]
  %v999 = vunpack.c.l.b16 %v983
  %v1000 = vunpack.c.l.b16 %v984
  %v1001 = vunpack.c.l.b16 %v985
  %v1002 = vunpack.c.l.b16 %v986
  %v1003 = vunpack.c.l.b16 %v987
  %v1004 = vunpack.c.l.b16 %v988
  %v1005 = vunpack.c.l.b16 %v989
  %v1006 = vunpack.c.l.b16 %v990
  %v1007 = vpack.c.b16 %v1000, %v999
  %v1008 = vpack.c.b16 %v1002, %v1001
  %v1009 = vpack.c.b16 %v1004, %v1003
  %v1010 = vpack.c.b16 %v1006, %v1005
  %v1012 = vsel %vm100, %v1007, 0
  %v1015 = vsel %vm100, %v1008, 0
  %v1018 = vsel %vm100, %v1009, 0
  %v1021 = vsel %vm100, %v1010, 0
  %1023 = vmatpush.bf16.msra.mxu0 0
  %1024 = vmatpush.bf16.msra.mxu0 0
  %1025 = vmatpush.bf16.msra.mxu0 0
  %1026 = vmatpush.bf16.msra.mxu0 0
  %1027 = vmatpush.bf16.msra.mxu0 0
  %1028 = vmatpush.bf16.msra.mxu0 0
  %1029 = vmatpush.bf16.msra.mxu0 %v71
  %1030 = vmatpush.bf16.msra.mxu0 %v70
  %1031 = vmatmul.bf16.gmra.mxu0 %v1012
  %v1032 = vpop.f32.mrf.mxu0
  %v1033 = vadd.f32 0.0, %v1032
  %v1034 = vpop.f32.mrf.mxu0
  %v1035 = vadd.f32 0.0, %v1034
  %1036 = vmatmul.bf16.gmra.mxu0 %v1015
  %v1037 = vpop.f32.mrf.mxu0
  %v1038 = vadd.f32 0.0, %v1037
  %v1039 = vpop.f32.mrf.mxu0
  %v1040 = vadd.f32 0.0, %v1039
  %1041 = vmatmul.bf16.gmra.mxu0 %v1018
  %v1042 = vpop.f32.mrf.mxu0
  %v1043 = vadd.f32 0.0, %v1042
  %v1044 = vpop.f32.mrf.mxu0
  %v1045 = vadd.f32 0.0, %v1044
  %1046 = vmatmul.bf16.gmra.mxu0 %v1021
  %v1047 = vpop.f32.mrf.mxu0
  %v1048 = vadd.f32 0.0, %v1047
  %v1049 = vpop.f32.mrf.mxu0
  %v1050 = vadd.f32 0.0, %v1049
  %1051 = vdwg.mxu0
  %s1052 = scalar_lea.vmem %s1, 448
  %v1053 = vld [vmem:[%s1052] sm:$0xf]
  %v1054 = vld [vmem:[%s1052 + $0x4] sm:$0xf]
  %v1055 = vld [vmem:[%s1052 + $0x8] sm:$0xf]
  %v1056 = vld [vmem:[%s1052 + $0xc] sm:$0xf]
  %v1057 = vld [vmem:[%s1052 + $0x10] sm:$0xf]
  %v1058 = vld [vmem:[%s1052 + $0x14] sm:$0xf]
  %v1059 = vld [vmem:[%s1052 + $0x18] sm:$0xf]
  %v1060 = vld [vmem:[%s1052 + $0x1c] sm:$0xf]
  %v1069 = vunpack.c.l.b16 %v1053
  %v1070 = vunpack.c.l.b16 %v1054
  %v1071 = vunpack.c.l.b16 %v1055
  %v1072 = vunpack.c.l.b16 %v1056
  %v1073 = vunpack.c.l.b16 %v1057
  %v1074 = vunpack.c.l.b16 %v1058
  %v1075 = vunpack.c.l.b16 %v1059
  %v1076 = vunpack.c.l.b16 %v1060
  %v1077 = vpack.c.b16 %v1070, %v1069
  %v1078 = vpack.c.b16 %v1072, %v1071
  %v1079 = vpack.c.b16 %v1074, %v1073
  %v1080 = vpack.c.b16 %v1076, %v1075
  %v1082 = vsel %vm100, %v1077, 0
  %v1085 = vsel %vm100, %v1078, 0
  %v1088 = vsel %vm100, %v1079, 0
  %v1091 = vsel %vm100, %v1080, 0
  %1093 = vmatpush.bf16.msra.mxu0 0
  %1094 = vmatpush.bf16.msra.mxu0 0
  %1095 = vmatpush.bf16.msra.mxu0 0
  %1096 = vmatpush.bf16.msra.mxu0 0
  %1097 = vmatpush.bf16.msra.mxu0 0
  %1098 = vmatpush.bf16.msra.mxu0 0
  %1099 = vmatpush.bf16.msra.mxu0 %v71
  %1100 = vmatpush.bf16.msra.mxu0 %v70
  %1101 = vmatmul.bf16.gmra.mxu0 %v1082
  %v1102 = vpop.f32.mrf.mxu0
  %v1103 = vadd.f32 0.0, %v1102
  %v1104 = vpop.f32.mrf.mxu0
  %v1105 = vadd.f32 0.0, %v1104
  %1106 = vmatmul.bf16.gmra.mxu0 %v1085
  %v1107 = vpop.f32.mrf.mxu0
  %v1108 = vadd.f32 0.0, %v1107
  %v1109 = vpop.f32.mrf.mxu0
  %v1110 = vadd.f32 0.0, %v1109
  %1111 = vmatmul.bf16.gmra.mxu0 %v1088
  %v1112 = vpop.f32.mrf.mxu0
  %v1113 = vadd.f32 0.0, %v1112
  %v1114 = vpop.f32.mrf.mxu0
  %v1115 = vadd.f32 0.0, %v1114
  %1116 = vmatmul.bf16.gmra.mxu0 %v1091
  %v1117 = vpop.f32.mrf.mxu0
  %v1118 = vadd.f32 0.0, %v1117
  %v1119 = vpop.f32.mrf.mxu0
  %v1120 = vadd.f32 0.0, %v1119
  %1121 = vdwg.mxu0
  %s1122 = scalar_lea.vmem %s1, 480
  %v1123 = vld [vmem:[%s1122] sm:$0xf]
  %v1124 = vld [vmem:[%s1122 + $0x4] sm:$0xf]
  %v1125 = vld [vmem:[%s1122 + $0x8] sm:$0xf]
  %v1126 = vld [vmem:[%s1122 + $0xc] sm:$0xf]
  %v1127 = vld [vmem:[%s1122 + $0x10] sm:$0xf]
  %v1128 = vld [vmem:[%s1122 + $0x14] sm:$0xf]
  %v1129 = vld [vmem:[%s1122 + $0x18] sm:$0xf]
  %v1130 = vld [vmem:[%s1122 + $0x1c] sm:$0xf]
  %v1139 = vunpack.c.l.b16 %v1123
  %v1140 = vunpack.c.l.b16 %v1124
  %v1141 = vunpack.c.l.b16 %v1125
  %v1142 = vunpack.c.l.b16 %v1126
  %v1143 = vunpack.c.l.b16 %v1127
  %v1144 = vunpack.c.l.b16 %v1128
  %v1145 = vunpack.c.l.b16 %v1129
  %v1146 = vunpack.c.l.b16 %v1130
  %v1147 = vpack.c.b16 %v1140, %v1139
  %v1148 = vpack.c.b16 %v1142, %v1141
  %v1149 = vpack.c.b16 %v1144, %v1143
  %v1150 = vpack.c.b16 %v1146, %v1145
  %v1152 = vsel %vm100, %v1147, 0
  %v1155 = vsel %vm100, %v1148, 0
  %v1158 = vsel %vm100, %v1149, 0
  %v1161 = vsel %vm100, %v1150, 0
  %1163 = vmatpush.bf16.msra.mxu0 0
  %1164 = vmatpush.bf16.msra.mxu0 0
  %1165 = vmatpush.bf16.msra.mxu0 0
  %1166 = vmatpush.bf16.msra.mxu0 0
  %1167 = vmatpush.bf16.msra.mxu0 0
  %1168 = vmatpush.bf16.msra.mxu0 0
  %1169 = vmatpush.bf16.msra.mxu0 %v71
  %1170 = vmatpush.bf16.msra.mxu0 %v70
  %1171 = vmatmul.bf16.gmra.mxu0 %v1152
  %v1172 = vpop.f32.mrf.mxu0
  %v1173 = vadd.f32 0.0, %v1172
  %v1174 = vpop.f32.mrf.mxu0
  %v1175 = vadd.f32 0.0, %v1174
  %1176 = vmatmul.bf16.gmra.mxu0 %v1155
  %v1177 = vpop.f32.mrf.mxu0
  %v1178 = vadd.f32 0.0, %v1177
  %v1179 = vpop.f32.mrf.mxu0
  %v1180 = vadd.f32 0.0, %v1179
  %1181 = vmatmul.bf16.gmra.mxu0 %v1158
  %v1182 = vpop.f32.mrf.mxu0
  %v1183 = vadd.f32 0.0, %v1182
  %v1184 = vpop.f32.mrf.mxu0
  %v1185 = vadd.f32 0.0, %v1184
  %1186 = vmatmul.bf16.gmra.mxu0 %v1161
  %v1187 = vpop.f32.mrf.mxu0
  %v1188 = vadd.f32 0.0, %v1187
  %v1189 = vpop.f32.mrf.mxu0
  %v1190 = vadd.f32 0.0, %v1189
  %1191 = vdwg.mxu0
  %v1192 = vmul.f32 %v123, %v123
  %v1193 = vmul.f32 %v125, %v125
  %v1194 = vmul.f32 %v128, %v128
  %v1195 = vmul.f32 %v130, %v130
  %v1196 = vmul.f32 %v133, %v133
  %v1197 = vmul.f32 %v135, %v135
  %v1198 = vmul.f32 %v138, %v138
  %v1199 = vmul.f32 %v140, %v140
  %v1200 = vadd.f32 %v123, %v193
  %v1201 = vadd.f32 %v125, %v195
  %v1202 = vadd.f32 %v128, %v198
  %v1203 = vadd.f32 %v130, %v200
  %v1204 = vadd.f32 %v133, %v203
  %v1205 = vadd.f32 %v135, %v205
  %v1206 = vadd.f32 %v138, %v208
  %v1207 = vadd.f32 %v140, %v210
  %v1208 = vmul.f32 %v193, %v193
  %v1209 = vmul.f32 %v195, %v195
  %v1210 = vmul.f32 %v198, %v198
  %v1211 = vmul.f32 %v200, %v200
  %v1212 = vmul.f32 %v203, %v203
  %v1213 = vmul.f32 %v205, %v205
  %v1214 = vmul.f32 %v208, %v208
  %v1215 = vmul.f32 %v210, %v210
  %v1216 = vadd.f32 %v1192, %v1208
  %v1217 = vadd.f32 %v1193, %v1209
  %v1218 = vadd.f32 %v1194, %v1210
  %v1219 = vadd.f32 %v1195, %v1211
  %v1220 = vadd.f32 %v1196, %v1212
  %v1221 = vadd.f32 %v1197, %v1213
  %v1222 = vadd.f32 %v1198, %v1214
  %v1223 = vadd.f32 %v1199, %v1215
  %v1224 = vadd.f32 %v1200, %v263
  %v1225 = vadd.f32 %v1201, %v265
  %v1226 = vadd.f32 %v1202, %v268
  %v1227 = vadd.f32 %v1203, %v270
  %v1228 = vadd.f32 %v1204, %v273
  %v1229 = vadd.f32 %v1205, %v275
  %v1230 = vadd.f32 %v1206, %v278
  %v1231 = vadd.f32 %v1207, %v280
  %v1232 = vmul.f32 %v263, %v263
  %v1233 = vmul.f32 %v265, %v265
  %v1234 = vmul.f32 %v268, %v268
  %v1235 = vmul.f32 %v270, %v270
  %v1236 = vmul.f32 %v273, %v273
  %v1237 = vmul.f32 %v275, %v275
  %v1238 = vmul.f32 %v278, %v278
  %v1239 = vmul.f32 %v280, %v280
  %v1240 = vadd.f32 %v1216, %v1232
  %v1241 = vadd.f32 %v1217, %v1233
  %v1242 = vadd.f32 %v1218, %v1234
  %v1243 = vadd.f32 %v1219, %v1235
  %v1244 = vadd.f32 %v1220, %v1236
  %v1245 = vadd.f32 %v1221, %v1237
  %v1246 = vadd.f32 %v1222, %v1238
  %v1247 = vadd.f32 %v1223, %v1239
  %v1248 = vadd.f32 %v1224, %v333
  %v1249 = vadd.f32 %v1225, %v335
  %v1250 = vadd.f32 %v1226, %v338
  %v1251 = vadd.f32 %v1227, %v340
  %v1252 = vadd.f32 %v1228, %v343
  %v1253 = vadd.f32 %v1229, %v345
  %v1254 = vadd.f32 %v1230, %v348
  %v1255 = vadd.f32 %v1231, %v350
  %v1256 = vmul.f32 %v333, %v333
  %v1257 = vmul.f32 %v335, %v335
  %v1258 = vmul.f32 %v338, %v338
  %v1259 = vmul.f32 %v340, %v340
  %v1260 = vmul.f32 %v343, %v343
  %v1261 = vmul.f32 %v345, %v345
  %v1262 = vmul.f32 %v348, %v348
  %v1263 = vmul.f32 %v350, %v350
  %v1264 = vadd.f32 %v1240, %v1256
  %v1265 = vadd.f32 %v1241, %v1257
  %v1266 = vadd.f32 %v1242, %v1258
  %v1267 = vadd.f32 %v1243, %v1259
  %v1268 = vadd.f32 %v1244, %v1260
  %v1269 = vadd.f32 %v1245, %v1261
  %v1270 = vadd.f32 %v1246, %v1262
  %v1271 = vadd.f32 %v1247, %v1263
  %v1272 = vadd.f32 %v1248, %v403
  %v1273 = vadd.f32 %v1249, %v405
  %v1274 = vadd.f32 %v1250, %v408
  %v1275 = vadd.f32 %v1251, %v410
  %v1276 = vadd.f32 %v1252, %v413
  %v1277 = vadd.f32 %v1253, %v415
  %v1278 = vadd.f32 %v1254, %v418
  %v1279 = vadd.f32 %v1255, %v420
  %v1280 = vmul.f32 %v403, %v403
  %v1281 = vmul.f32 %v405, %v405
  %v1282 = vmul.f32 %v408, %v408
  %v1283 = vmul.f32 %v410, %v410
  %v1284 = vmul.f32 %v413, %v413
  %v1285 = vmul.f32 %v415, %v415
  %v1286 = vmul.f32 %v418, %v418
  %v1287 = vmul.f32 %v420, %v420
  %v1288 = vadd.f32 %v1264, %v1280
  %v1289 = vadd.f32 %v1265, %v1281
  %v1290 = vadd.f32 %v1266, %v1282
  %v1291 = vadd.f32 %v1267, %v1283
  %v1292 = vadd.f32 %v1268, %v1284
  %v1293 = vadd.f32 %v1269, %v1285
  %v1294 = vadd.f32 %v1270, %v1286
  %v1295 = vadd.f32 %v1271, %v1287
  %v1296 = vadd.f32 %v1272, %v473
  %v1297 = vadd.f32 %v1273, %v475
  %v1298 = vadd.f32 %v1274, %v478
  %v1299 = vadd.f32 %v1275, %v480
  %v1300 = vadd.f32 %v1276, %v483
  %v1301 = vadd.f32 %v1277, %v485
  %v1302 = vadd.f32 %v1278, %v488
  %v1303 = vadd.f32 %v1279, %v490
  %v1304 = vmul.f32 %v473, %v473
  %v1305 = vmul.f32 %v475, %v475
  %v1306 = vmul.f32 %v478, %v478
  %v1307 = vmul.f32 %v480, %v480
  %v1308 = vmul.f32 %v483, %v483
  %v1309 = vmul.f32 %v485, %v485
  %v1310 = vmul.f32 %v488, %v488
  %v1311 = vmul.f32 %v490, %v490
  %v1312 = vadd.f32 %v1288, %v1304
  %v1313 = vadd.f32 %v1289, %v1305
  %v1314 = vadd.f32 %v1290, %v1306
  %v1315 = vadd.f32 %v1291, %v1307
  %v1316 = vadd.f32 %v1292, %v1308
  %v1317 = vadd.f32 %v1293, %v1309
  %v1318 = vadd.f32 %v1294, %v1310
  %v1319 = vadd.f32 %v1295, %v1311
  %v1320 = vadd.f32 %v1296, %v543
  %v1321 = vadd.f32 %v1297, %v545
  %v1322 = vadd.f32 %v1298, %v548
  %v1323 = vadd.f32 %v1299, %v550
  %v1324 = vadd.f32 %v1300, %v553
  %v1325 = vadd.f32 %v1301, %v555
  %v1326 = vadd.f32 %v1302, %v558
  %v1327 = vadd.f32 %v1303, %v560
  %v1328 = vmul.f32 %v543, %v543
  %v1329 = vmul.f32 %v545, %v545
  %v1330 = vmul.f32 %v548, %v548
  %v1331 = vmul.f32 %v550, %v550
  %v1332 = vmul.f32 %v553, %v553
  %v1333 = vmul.f32 %v555, %v555
  %v1334 = vmul.f32 %v558, %v558
  %v1335 = vmul.f32 %v560, %v560
  %v1336 = vadd.f32 %v1312, %v1328
  %v1337 = vadd.f32 %v1313, %v1329
  %v1338 = vadd.f32 %v1314, %v1330
  %v1339 = vadd.f32 %v1315, %v1331
  %v1340 = vadd.f32 %v1316, %v1332
  %v1341 = vadd.f32 %v1317, %v1333
  %v1342 = vadd.f32 %v1318, %v1334
  %v1343 = vadd.f32 %v1319, %v1335
  %v1344 = vadd.f32 %v1320, %v613
  %v1345 = vadd.f32 %v1321, %v615
  %v1346 = vadd.f32 %v1322, %v618
  %v1347 = vadd.f32 %v1323, %v620
  %v1348 = vadd.f32 %v1324, %v623
  %v1349 = vadd.f32 %v1325, %v625
  %v1350 = vadd.f32 %v1326, %v628
  %v1351 = vadd.f32 %v1327, %v630
  %v1352 = vmul.f32 %v613, %v613
  %v1353 = vmul.f32 %v615, %v615
  %v1354 = vmul.f32 %v618, %v618
  %v1355 = vmul.f32 %v620, %v620
  %v1356 = vmul.f32 %v623, %v623
  %v1357 = vmul.f32 %v625, %v625
  %v1358 = vmul.f32 %v628, %v628
  %v1359 = vmul.f32 %v630, %v630
  %v1360 = vadd.f32 %v1336, %v1352
  %v1361 = vadd.f32 %v1337, %v1353
  %v1362 = vadd.f32 %v1338, %v1354
  %v1363 = vadd.f32 %v1339, %v1355
  %v1364 = vadd.f32 %v1340, %v1356
  %v1365 = vadd.f32 %v1341, %v1357
  %v1366 = vadd.f32 %v1342, %v1358
  %v1367 = vadd.f32 %v1343, %v1359
  %v1368 = vadd.f32 %v1344, %v683
  %v1369 = vadd.f32 %v1345, %v685
  %v1370 = vadd.f32 %v1346, %v688
  %v1371 = vadd.f32 %v1347, %v690
  %v1372 = vadd.f32 %v1348, %v693
  %v1373 = vadd.f32 %v1349, %v695
  %v1374 = vadd.f32 %v1350, %v698
  %v1375 = vadd.f32 %v1351, %v700
  %v1376 = vmul.f32 %v683, %v683
  %v1377 = vmul.f32 %v685, %v685
  %v1378 = vmul.f32 %v688, %v688
  %v1379 = vmul.f32 %v690, %v690
  %v1380 = vmul.f32 %v693, %v693
  %v1381 = vmul.f32 %v695, %v695
  %v1382 = vmul.f32 %v698, %v698
  %v1383 = vmul.f32 %v700, %v700
  %v1384 = vadd.f32 %v1360, %v1376
  %v1385 = vadd.f32 %v1361, %v1377
  %v1386 = vadd.f32 %v1362, %v1378
  %v1387 = vadd.f32 %v1363, %v1379
  %v1388 = vadd.f32 %v1364, %v1380
  %v1389 = vadd.f32 %v1365, %v1381
  %v1390 = vadd.f32 %v1366, %v1382
  %v1391 = vadd.f32 %v1367, %v1383
  %v1392 = vadd.f32 %v1368, %v753
  %v1393 = vadd.f32 %v1369, %v755
  %v1394 = vadd.f32 %v1370, %v758
  %v1395 = vadd.f32 %v1371, %v760
  %v1396 = vadd.f32 %v1372, %v763
  %v1397 = vadd.f32 %v1373, %v765
  %v1398 = vadd.f32 %v1374, %v768
  %v1399 = vadd.f32 %v1375, %v770
  %v1400 = vmul.f32 %v753, %v753
  %v1401 = vmul.f32 %v755, %v755
  %v1402 = vmul.f32 %v758, %v758
  %v1403 = vmul.f32 %v760, %v760
  %v1404 = vmul.f32 %v763, %v763
  %v1405 = vmul.f32 %v765, %v765
  %v1406 = vmul.f32 %v768, %v768
  %v1407 = vmul.f32 %v770, %v770
  %v1408 = vadd.f32 %v1384, %v1400
  %v1409 = vadd.f32 %v1385, %v1401
  %v1410 = vadd.f32 %v1386, %v1402
  %v1411 = vadd.f32 %v1387, %v1403
  %v1412 = vadd.f32 %v1388, %v1404
  %v1413 = vadd.f32 %v1389, %v1405
  %v1414 = vadd.f32 %v1390, %v1406
  %v1415 = vadd.f32 %v1391, %v1407
  %v1416 = vadd.f32 %v1392, %v823
  %v1417 = vadd.f32 %v1393, %v825
  %v1418 = vadd.f32 %v1394, %v828
  %v1419 = vadd.f32 %v1395, %v830
  %v1420 = vadd.f32 %v1396, %v833
  %v1421 = vadd.f32 %v1397, %v835
  %v1422 = vadd.f32 %v1398, %v838
  %v1423 = vadd.f32 %v1399, %v840
  %v1424 = vmul.f32 %v823, %v823
  %v1425 = vmul.f32 %v825, %v825
  %v1426 = vmul.f32 %v828, %v828
  %v1427 = vmul.f32 %v830, %v830
  %v1428 = vmul.f32 %v833, %v833
  %v1429 = vmul.f32 %v835, %v835
  %v1430 = vmul.f32 %v838, %v838
  %v1431 = vmul.f32 %v840, %v840
  %v1432 = vadd.f32 %v1408, %v1424
  %v1433 = vadd.f32 %v1409, %v1425
  %v1434 = vadd.f32 %v1410, %v1426
  %v1435 = vadd.f32 %v1411, %v1427
  %v1436 = vadd.f32 %v1412, %v1428
  %v1437 = vadd.f32 %v1413, %v1429
  %v1438 = vadd.f32 %v1414, %v1430
  %v1439 = vadd.f32 %v1415, %v1431
  %v1440 = vadd.f32 %v1416, %v893
  %v1441 = vadd.f32 %v1417, %v895
  %v1442 = vadd.f32 %v1418, %v898
  %v1443 = vadd.f32 %v1419, %v900
  %v1444 = vadd.f32 %v1420, %v903
  %v1445 = vadd.f32 %v1421, %v905
  %v1446 = vadd.f32 %v1422, %v908
  %v1447 = vadd.f32 %v1423, %v910
  %v1448 = vmul.f32 %v893, %v893
  %v1449 = vmul.f32 %v895, %v895
  %v1450 = vmul.f32 %v898, %v898
  %v1451 = vmul.f32 %v900, %v900
  %v1452 = vmul.f32 %v903, %v903
  %v1453 = vmul.f32 %v905, %v905
  %v1454 = vmul.f32 %v908, %v908
  %v1455 = vmul.f32 %v910, %v910
  %v1456 = vadd.f32 %v1432, %v1448
  %v1457 = vadd.f32 %v1433, %v1449
  %v1458 = vadd.f32 %v1434, %v1450
  %v1459 = vadd.f32 %v1435, %v1451
  %v1460 = vadd.f32 %v1436, %v1452
  %v1461 = vadd.f32 %v1437, %v1453
  %v1462 = vadd.f32 %v1438, %v1454
  %v1463 = vadd.f32 %v1439, %v1455
  %v1464 = vadd.f32 %v1440, %v963
  %v1465 = vadd.f32 %v1441, %v965
  %v1466 = vadd.f32 %v1442, %v968
  %v1467 = vadd.f32 %v1443, %v970
  %v1468 = vadd.f32 %v1444, %v973
  %v1469 = vadd.f32 %v1445, %v975
  %v1470 = vadd.f32 %v1446, %v978
  %v1471 = vadd.f32 %v1447, %v980
  %v1472 = vmul.f32 %v963, %v963
  %v1473 = vmul.f32 %v965, %v965
  %v1474 = vmul.f32 %v968, %v968
  %v1475 = vmul.f32 %v970, %v970
  %v1476 = vmul.f32 %v973, %v973
  %v1477 = vmul.f32 %v975, %v975
  %v1478 = vmul.f32 %v978, %v978
  %v1479 = vmul.f32 %v980, %v980
  %v1480 = vadd.f32 %v1456, %v1472
  %v1481 = vadd.f32 %v1457, %v1473
  %v1482 = vadd.f32 %v1458, %v1474
  %v1483 = vadd.f32 %v1459, %v1475
  %v1484 = vadd.f32 %v1460, %v1476
  %v1485 = vadd.f32 %v1461, %v1477
  %v1486 = vadd.f32 %v1462, %v1478
  %v1487 = vadd.f32 %v1463, %v1479
  %v1488 = vadd.f32 %v1464, %v1033
  %v1489 = vadd.f32 %v1465, %v1035
  %v1490 = vadd.f32 %v1466, %v1038
  %v1491 = vadd.f32 %v1467, %v1040
  %v1492 = vadd.f32 %v1468, %v1043
  %v1493 = vadd.f32 %v1469, %v1045
  %v1494 = vadd.f32 %v1470, %v1048
  %v1495 = vadd.f32 %v1471, %v1050
  %v1496 = vmul.f32 %v1033, %v1033
  %v1497 = vmul.f32 %v1035, %v1035
  %v1498 = vmul.f32 %v1038, %v1038
  %v1499 = vmul.f32 %v1040, %v1040
  %v1500 = vmul.f32 %v1043, %v1043
  %v1501 = vmul.f32 %v1045, %v1045
  %v1502 = vmul.f32 %v1048, %v1048
  %v1503 = vmul.f32 %v1050, %v1050
  %v1504 = vadd.f32 %v1480, %v1496
  %v1505 = vadd.f32 %v1481, %v1497
  %v1506 = vadd.f32 %v1482, %v1498
  %v1507 = vadd.f32 %v1483, %v1499
  %v1508 = vadd.f32 %v1484, %v1500
  %v1509 = vadd.f32 %v1485, %v1501
  %v1510 = vadd.f32 %v1486, %v1502
  %v1511 = vadd.f32 %v1487, %v1503
  %v1512 = vadd.f32 %v1488, %v1103
  %v1513 = vadd.f32 %v1489, %v1105
  %v1514 = vadd.f32 %v1490, %v1108
  %v1515 = vadd.f32 %v1491, %v1110
  %v1516 = vadd.f32 %v1492, %v1113
  %v1517 = vadd.f32 %v1493, %v1115
  %v1518 = vadd.f32 %v1494, %v1118
  %v1519 = vadd.f32 %v1495, %v1120
  %v1520 = vmul.f32 %v1103, %v1103
  %v1521 = vmul.f32 %v1105, %v1105
  %v1522 = vmul.f32 %v1108, %v1108
  %v1523 = vmul.f32 %v1110, %v1110
  %v1524 = vmul.f32 %v1113, %v1113
  %v1525 = vmul.f32 %v1115, %v1115
  %v1526 = vmul.f32 %v1118, %v1118
  %v1527 = vmul.f32 %v1120, %v1120
  %v1528 = vadd.f32 %v1504, %v1520
  %v1529 = vadd.f32 %v1505, %v1521
  %v1530 = vadd.f32 %v1506, %v1522
  %v1531 = vadd.f32 %v1507, %v1523
  %v1532 = vadd.f32 %v1508, %v1524
  %v1533 = vadd.f32 %v1509, %v1525
  %v1534 = vadd.f32 %v1510, %v1526
  %v1535 = vadd.f32 %v1511, %v1527
  %v1536 = vadd.f32 %v1512, %v1173
  %v1537 = vadd.f32 %v1513, %v1175
  %v1538 = vadd.f32 %v1514, %v1178
  %v1539 = vadd.f32 %v1515, %v1180
  %v1540 = vadd.f32 %v1516, %v1183
  %v1541 = vadd.f32 %v1517, %v1185
  %v1542 = vadd.f32 %v1518, %v1188
  %v1543 = vadd.f32 %v1519, %v1190
  %v1544 = vmul.f32 %v1173, %v1173
  %v1545 = vmul.f32 %v1175, %v1175
  %v1546 = vmul.f32 %v1178, %v1178
  %v1547 = vmul.f32 %v1180, %v1180
  %v1548 = vmul.f32 %v1183, %v1183
  %v1549 = vmul.f32 %v1185, %v1185
  %v1550 = vmul.f32 %v1188, %v1188
  %v1551 = vmul.f32 %v1190, %v1190
  %v1552 = vadd.f32 %v1528, %v1544
  %v1553 = vadd.f32 %v1529, %v1545
  %v1554 = vadd.f32 %v1530, %v1546
  %v1555 = vadd.f32 %v1531, %v1547
  %v1556 = vadd.f32 %v1532, %v1548
  %v1557 = vadd.f32 %v1533, %v1549
  %v1558 = vadd.f32 %v1534, %v1550
  %v1559 = vadd.f32 %v1535, %v1551
  %v1560 = vmul.f32 %v1536, 0.0625
  %v1561 = vmul.f32 %v1537, 0.0625
  %v1562 = vmul.f32 %v1538, 0.0625
  %v1563 = vmul.f32 %v1539, 0.0625
  %v1564 = vmul.f32 %v1540, 0.0625
  %v1565 = vmul.f32 %v1541, 0.0625
  %v1566 = vmul.f32 %v1542, 0.0625
  %v1567 = vmul.f32 %v1543, 0.0625
  %v1568 = vmul.f32 %v1552, 0.0625
  %v1569 = vmul.f32 %v1553, 0.0625
  %v1570 = vmul.f32 %v1554, 0.0625
  %v1571 = vmul.f32 %v1555, 0.0625
  %v1572 = vmul.f32 %v1556, 0.0625
  %v1573 = vmul.f32 %v1557, 0.0625
  %v1574 = vmul.f32 %v1558, 0.0625
  %v1575 = vmul.f32 %v1559, 0.0625
  %v1576 = vmul.f32 %v1560, %v1560
  %v1577 = vmul.f32 %v1561, %v1561
  %v1578 = vmul.f32 %v1562, %v1562
  %v1579 = vmul.f32 %v1563, %v1563
  %v1580 = vmul.f32 %v1564, %v1564
  %v1581 = vmul.f32 %v1565, %v1565
  %v1582 = vmul.f32 %v1566, %v1566
  %v1583 = vmul.f32 %v1567, %v1567
  %v1584 = vsub.f32 %v1568, %v1576
  %v1585 = vsub.f32 %v1569, %v1577
  %v1586 = vsub.f32 %v1570, %v1578
  %v1587 = vsub.f32 %v1571, %v1579
  %v1588 = vsub.f32 %v1572, %v1580
  %v1589 = vsub.f32 %v1573, %v1581
  %v1590 = vsub.f32 %v1574, %v1582
  %v1591 = vsub.f32 %v1575, %v1583
  %v1592 = vadd.f32 %v1584, 1e-05
  %v1593 = vadd.f32 %v1585, 1e-05
  %v1594 = vadd.f32 %v1586, 1e-05
  %v1595 = vadd.f32 %v1587, 1e-05
  %v1596 = vadd.f32 %v1588, 1e-05
  %v1597 = vadd.f32 %v1589, 1e-05
  %v1598 = vadd.f32 %v1590, 1e-05
  %v1599 = vadd.f32 %v1591, 1e-05
  %v1600 = vrsqrt.pop %v1592
  %v1601 = vmul.f32 %v1600, %v1592
  %v1602 = vmul.f32 %v1601, %v1600
  %v1603 = vmul.f32 0.5, %v1602
  %v1604 = vsub.f32 1.5, %v1603
  %v1605 = vmul.f32 %v1600, %v1604
  %vm1606 = vweird.f32 %v1592
  %vm1607 = vweird.f32 %v1600
  %vm1608 = vmor %vm1606, %vm1607
  %v1609 = vsel %vm1608, %v1600, %v1605
  %v1610 = vrsqrt.pop %v1593
  %v1611 = vmul.f32 %v1610, %v1593
  %v1612 = vmul.f32 %v1611, %v1610
  %v1613 = vmul.f32 0.5, %v1612
  %v1614 = vsub.f32 1.5, %v1613
  %v1615 = vmul.f32 %v1610, %v1614
  %vm1616 = vweird.f32 %v1593
  %vm1617 = vweird.f32 %v1610
  %vm1618 = vmor %vm1616, %vm1617
  %v1619 = vsel %vm1618, %v1610, %v1615
  %v1620 = vrsqrt.pop %v1594
  %v1621 = vmul.f32 %v1620, %v1594
  %v1622 = vmul.f32 %v1621, %v1620
  %v1623 = vmul.f32 0.5, %v1622
  %v1624 = vsub.f32 1.5, %v1623
  %v1625 = vmul.f32 %v1620, %v1624
  %vm1626 = vweird.f32 %v1594
  %vm1627 = vweird.f32 %v1620
  %vm1628 = vmor %vm1626, %vm1627
  %v1629 = vsel %vm1628, %v1620, %v1625
  %v1630 = vrsqrt.pop %v1595
  %v1631 = vmul.f32 %v1630, %v1595
  %v1632 = vmul.f32 %v1631, %v1630
  %v1633 = vmul.f32 0.5, %v1632
  %v1634 = vsub.f32 1.5, %v1633
  %v1635 = vmul.f32 %v1630, %v1634
  %vm1636 = vweird.f32 %v1595
  %vm1637 = vweird.f32 %v1630
  %vm1638 = vmor %vm1636, %vm1637
  %v1639 = vsel %vm1638, %v1630, %v1635
  %v1640 = vrsqrt.pop %v1596
  %v1641 = vmul.f32 %v1640, %v1596
  %v1642 = vmul.f32 %v1641, %v1640
  %v1643 = vmul.f32 0.5, %v1642
  %v1644 = vsub.f32 1.5, %v1643
  %v1645 = vmul.f32 %v1640, %v1644
  %vm1646 = vweird.f32 %v1596
  %vm1647 = vweird.f32 %v1640
  %vm1648 = vmor %vm1646, %vm1647
  %v1649 = vsel %vm1648, %v1640, %v1645
  %v1650 = vrsqrt.pop %v1597
  %v1651 = vmul.f32 %v1650, %v1597
  %v1652 = vmul.f32 %v1651, %v1650
  %v1653 = vmul.f32 0.5, %v1652
  %v1654 = vsub.f32 1.5, %v1653
  %v1655 = vmul.f32 %v1650, %v1654
  %vm1656 = vweird.f32 %v1597
  %vm1657 = vweird.f32 %v1650
  %vm1658 = vmor %vm1656, %vm1657
  %v1659 = vsel %vm1658, %v1650, %v1655
  %v1660 = vrsqrt.pop %v1598
  %v1661 = vmul.f32 %v1660, %v1598
  %v1662 = vmul.f32 %v1661, %v1660
  %v1663 = vmul.f32 0.5, %v1662
  %v1664 = vsub.f32 1.5, %v1663
  %v1665 = vmul.f32 %v1660, %v1664
  %vm1666 = vweird.f32 %v1598
  %vm1667 = vweird.f32 %v1660
  %vm1668 = vmor %vm1666, %vm1667
  %v1669 = vsel %vm1668, %v1660, %v1665
  %v1670 = vrsqrt.pop %v1599
  %v1671 = vmul.f32 %v1670, %v1599
  %v1672 = vmul.f32 %v1671, %v1670
  %v1673 = vmul.f32 0.5, %v1672
  %v1674 = vsub.f32 1.5, %v1673
  %v1675 = vmul.f32 %v1670, %v1674
  %vm1676 = vweird.f32 %v1599
  %vm1677 = vweird.f32 %v1670
  %vm1678 = vmor %vm1676, %vm1677
  %v1679 = vsel %vm1678, %v1670, %v1675
  %v1680 = vld [vmem:[%s2] sm:$0xff]
  %v1681 = vld [vmem:[%s2 + $0x8] sm:$0xff]
  %v1682 = vld [vmem:[%s2 + $0x10] sm:$0xff]
  %v1683 = vld [vmem:[%s2 + $0x18] sm:$0xff]
  %v1684 = vld [vmem:[%s2 + $0x20] sm:$0xff]
  %v1685 = vld [vmem:[%s2 + $0x28] sm:$0xff]
  %v1686 = vld [vmem:[%s2 + $0x30] sm:$0xff]
  %v1687 = vld [vmem:[%s2 + $0x38] sm:$0xff]
  %1689 = vset.pattern.permute.xlu0 0
  %1690 = vperm.xlu0 %1689, %v1680
  %v1691 = vpop.permute.xlu0 %1690
  %1694 = vset.pattern.permute.xlu0 0
  %1695 = vperm.xlu0 %1694, %v1681
  %v1696 = vpop.permute.xlu0 %1695
  %1699 = vset.pattern.permute.xlu0 0
  %1700 = vperm.xlu0 %1699, %v1682
  %v1701 = vpop.permute.xlu0 %1700
  %1704 = vset.pattern.permute.xlu0 0
  %1705 = vperm.xlu0 %1704, %v1683
  %v1706 = vpop.permute.xlu0 %1705
  %1709 = vset.pattern.permute.xlu0 0
  %1710 = vperm.xlu0 %1709, %v1684
  %v1711 = vpop.permute.xlu0 %1710
  %1714 = vset.pattern.permute.xlu0 0
  %1715 = vperm.xlu0 %1714, %v1685
  %v1716 = vpop.permute.xlu0 %1715
  %1719 = vset.pattern.permute.xlu0 0
  %1720 = vperm.xlu0 %1719, %v1686
  %v1721 = vpop.permute.xlu0 %1720
  %1724 = vset.pattern.permute.xlu0 0
  %1725 = vperm.xlu0 %1724, %v1687
  %v1726 = vpop.permute.xlu0 %1725
  %v1728 = vmul.f32 %v1609, %v1691
  %v1729 = vmul.f32 %v1619, %v1696
  %v1730 = vmul.f32 %v1629, %v1701
  %v1731 = vmul.f32 %v1639, %v1706
  %v1732 = vmul.f32 %v1649, %v1711
  %v1733 = vmul.f32 %v1659, %v1716
  %v1734 = vmul.f32 %v1669, %v1721
  %v1735 = vmul.f32 %v1679, %v1726
  %v1736 = vld [vmem:[%s3] sm:$0xff]
  %v1737 = vld [vmem:[%s3 + $0x8] sm:$0xff]
  %v1738 = vld [vmem:[%s3 + $0x10] sm:$0xff]
  %v1739 = vld [vmem:[%s3 + $0x18] sm:$0xff]
  %v1740 = vld [vmem:[%s3 + $0x20] sm:$0xff]
  %v1741 = vld [vmem:[%s3 + $0x28] sm:$0xff]
  %v1742 = vld [vmem:[%s3 + $0x30] sm:$0xff]
  %v1743 = vld [vmem:[%s3 + $0x38] sm:$0xff]
  %v1744 = vmul.f32 %v1560, %v1728
  %v1745 = vmul.f32 %v1561, %v1729
  %v1746 = vmul.f32 %v1562, %v1730
  %v1747 = vmul.f32 %v1563, %v1731
  %v1748 = vmul.f32 %v1564, %v1732
  %v1749 = vmul.f32 %v1565, %v1733
  %v1750 = vmul.f32 %v1566, %v1734
  %v1751 = vmul.f32 %v1567, %v1735
  %1753 = vset.pattern.permute.xlu0 0
  %1754 = vperm.xlu0 %1753, %v1736
  %v1755 = vpop.permute.xlu0 %1754
  %1758 = vset.pattern.permute.xlu0 0
  %1759 = vperm.xlu0 %1758, %v1737
  %v1760 = vpop.permute.xlu0 %1759
  %1763 = vset.pattern.permute.xlu0 0
  %1764 = vperm.xlu0 %1763, %v1738
  %v1765 = vpop.permute.xlu0 %1764
  %1768 = vset.pattern.permute.xlu0 0
  %1769 = vperm.xlu0 %1768, %v1739
  %v1770 = vpop.permute.xlu0 %1769
  %1773 = vset.pattern.permute.xlu0 0
  %1774 = vperm.xlu0 %1773, %v1740
  %v1775 = vpop.permute.xlu0 %1774
  %1778 = vset.pattern.permute.xlu0 0
  %1779 = vperm.xlu0 %1778, %v1741
  %v1780 = vpop.permute.xlu0 %1779
  %1783 = vset.pattern.permute.xlu0 0
  %1784 = vperm.xlu0 %1783, %v1742
  %v1785 = vpop.permute.xlu0 %1784
  %1788 = vset.pattern.permute.xlu0 0
  %1789 = vperm.xlu0 %1788, %v1743
  %v1790 = vpop.permute.xlu0 %1789
  %v1792 = vsub.f32 %v1755, %v1744
  %v1793 = vsub.f32 %v1760, %v1745
  %v1794 = vsub.f32 %v1765, %v1746
  %v1795 = vsub.f32 %v1770, %v1747
  %v1796 = vsub.f32 %v1775, %v1748
  %v1797 = vsub.f32 %v1780, %v1749
  %v1798 = vsub.f32 %v1785, %v1750
  %v1799 = vsub.f32 %v1790, %v1751
  %v1800 = vmul.f32 %v123, %v1728
  %v1801 = vmul.f32 %v125, %v1729
  %v1802 = vmul.f32 %v128, %v1730
  %v1803 = vmul.f32 %v130, %v1731
  %v1804 = vmul.f32 %v133, %v1732
  %v1805 = vmul.f32 %v135, %v1733
  %v1806 = vmul.f32 %v138, %v1734
  %v1807 = vmul.f32 %v140, %v1735
  %v1808 = vadd.f32 %v1800, %v1792
  %v1809 = vadd.f32 %v1801, %v1793
  %v1810 = vadd.f32 %v1802, %v1794
  %v1811 = vadd.f32 %v1803, %v1795
  %v1812 = vadd.f32 %v1804, %v1796
  %v1813 = vadd.f32 %v1805, %v1797
  %v1814 = vadd.f32 %v1806, %v1798
  %v1815 = vadd.f32 %v1807, %v1799
  %v1816 = vmax.f32 %v1808, 0.0
  %v1817 = vmax.f32 %v1809, 0.0
  %v1818 = vmax.f32 %v1810, 0.0
  %v1819 = vmax.f32 %v1811, 0.0
  %v1820 = vmax.f32 %v1812, 0.0
  %v1821 = vmax.f32 %v1813, 0.0
  %v1822 = vmax.f32 %v1814, 0.0
  %v1823 = vmax.f32 %v1815, 0.0
  %1832 = vrot.lane.b32.xlu0 %v1816, 7
  %v1833 = vpop.permute.xlu0 %1832
  %1834 = vrot.lane.b32.xlu0 %v1817, 7
  %v1835 = vpop.permute.xlu0 %1834
  %1836 = vrot.lane.b32.xlu0 %v1818, 7
  %v1837 = vpop.permute.xlu0 %1836
  %1838 = vrot.lane.b32.xlu0 %v1819, 7
  %v1839 = vpop.permute.xlu0 %1838
  %1840 = vrot.lane.b32.xlu0 %v1820, 7
  %v1841 = vpop.permute.xlu0 %1840
  %1842 = vrot.lane.b32.xlu0 %v1821, 7
  %v1843 = vpop.permute.xlu0 %1842
  %1844 = vrot.lane.b32.xlu0 %v1822, 7
  %v1845 = vpop.permute.xlu0 %1844
  %1846 = vrot.lane.b32.xlu0 %v1823, 7
  %v1847 = vpop.permute.xlu0 %1846
  %vm1856 = vcmask 64568
  %1857 = vst.msk [vmem:[#allocation2] sm:$0xff] %vm1856, %v1833
  %1858 = vst.msk [vmem:[#allocation2 + $0x8] sm:$0xff] %vm1856, %v1835
  %1859 = vst.msk [vmem:[#allocation2 + $0x10] sm:$0xff] %vm1856, %v1837
  %1860 = vst.msk [vmem:[#allocation2 + $0x18] sm:$0xff] %vm1856, %v1839
  %1861 = vst.msk [vmem:[#allocation2 + $0x20] sm:$0xff] %vm1856, %v1841
  %1862 = vst.msk [vmem:[#allocation2 + $0x28] sm:$0xff] %vm1856, %v1843
  %1863 = vst.msk [vmem:[#allocation2 + $0x30] sm:$0xff] %vm1856, %v1845
  %1864 = vst.msk [vmem:[#allocation2 + $0x38] sm:$0xff] %vm1856, %v1847
  %1865 = vrot.lane.b32.xlu0 %v1816, 44
  %v1866 = vpop.permute.xlu0 %1865
  %1867 = vrot.lane.b32.xlu0 %v1817, 44
  %v1868 = vpop.permute.xlu0 %1867
  %1869 = vrot.lane.b32.xlu0 %v1818, 44
  %v1870 = vpop.permute.xlu0 %1869
  %1871 = vrot.lane.b32.xlu0 %v1819, 44
  %v1872 = vpop.permute.xlu0 %1871
  %1873 = vrot.lane.b32.xlu0 %v1820, 44
  %v1874 = vpop.permute.xlu0 %1873
  %1875 = vrot.lane.b32.xlu0 %v1821, 44
  %v1876 = vpop.permute.xlu0 %1875
  %1877 = vrot.lane.b32.xlu0 %v1822, 44
  %v1878 = vpop.permute.xlu0 %1877
  %1879 = vrot.lane.b32.xlu0 %v1823, 44
  %v1880 = vpop.permute.xlu0 %1879
  %vm1889 = vcmask 376168
  %1890 = vst.msk [vmem:[#allocation2] sm:$0xff] %vm1889, %v1866
  %1891 = vst.msk [vmem:[#allocation2 + $0x8] sm:$0xff] %vm1889, %v1868
  %1892 = vst.msk [vmem:[#allocation2 + $0x10] sm:$0xff] %vm1889, %v1870
  %1893 = vst.msk [vmem:[#allocation2 + $0x18] sm:$0xff] %vm1889, %v1872
  %1894 = vst.msk [vmem:[#allocation2 + $0x20] sm:$0xff] %vm1889, %v1874
  %1895 = vst.msk [vmem:[#allocation2 + $0x28] sm:$0xff] %vm1889, %v1876
  %1896 = vst.msk [vmem:[#allocation2 + $0x30] sm:$0xff] %vm1889, %v1878
  %1897 = vst.msk [vmem:[#allocation2 + $0x38] sm:$0xff] %vm1889, %v1880
  %v1898 = vmul.f32 %v193, %v1728
  %v1899 = vmul.f32 %v195, %v1729
  %v1900 = vmul.f32 %v198, %v1730
  %v1901 = vmul.f32 %v200, %v1731
  %v1902 = vmul.f32 %v203, %v1732
  %v1903 = vmul.f32 %v205, %v1733
  %v1904 = vmul.f32 %v208, %v1734
  %v1905 = vmul.f32 %v210, %v1735
  %v1906 = vadd.f32 %v1898, %v1792
  %v1907 = vadd.f32 %v1899, %v1793
  %v1908 = vadd.f32 %v1900, %v1794
  %v1909 = vadd.f32 %v1901, %v1795
  %v1910 = vadd.f32 %v1902, %v1796
  %v1911 = vadd.f32 %v1903, %v1797
  %v1912 = vadd.f32 %v1904, %v1798
  %v1913 = vadd.f32 %v1905, %v1799
  %v1914 = vmax.f32 %v1906, 0.0
  %v1915 = vmax.f32 %v1907, 0.0
  %v1916 = vmax.f32 %v1908, 0.0
  %v1917 = vmax.f32 %v1909, 0.0
  %v1918 = vmax.f32 %v1910, 0.0
  %v1919 = vmax.f32 %v1911, 0.0
  %v1920 = vmax.f32 %v1912, 0.0
  %v1921 = vmax.f32 %v1913, 0.0
  %1930 = vrot.lane.b32.xlu0 %v1914, 8
  %v1931 = vpop.permute.xlu0 %1930
  %1932 = vrot.lane.b32.xlu0 %v1915, 8
  %v1933 = vpop.permute.xlu0 %1932
  %1934 = vrot.lane.b32.xlu0 %v1916, 8
  %v1935 = vpop.permute.xlu0 %1934
  %1936 = vrot.lane.b32.xlu0 %v1917, 8
  %v1937 = vpop.permute.xlu0 %1936
  %1938 = vrot.lane.b32.xlu0 %v1918, 8
  %v1939 = vpop.permute.xlu0 %1938
  %1940 = vrot.lane.b32.xlu0 %v1919, 8
  %v1941 = vpop.permute.xlu0 %1940
  %1942 = vrot.lane.b32.xlu0 %v1920, 8
  %v1943 = vpop.permute.xlu0 %1942
  %1944 = vrot.lane.b32.xlu0 %v1921, 8
  %v1945 = vpop.permute.xlu0 %1944
  %vm1954 = vcmask 72768
  %1955 = vst.msk [vmem:[#allocation2] sm:$0xff] %vm1954, %v1931
  %1956 = vst.msk [vmem:[#allocation2 + $0x8] sm:$0xff] %vm1954, %v1933
  %1957 = vst.msk [vmem:[#allocation2 + $0x10] sm:$0xff] %vm1954, %v1935
  %1958 = vst.msk [vmem:[#allocation2 + $0x18] sm:$0xff] %vm1954, %v1937
  %1959 = vst.msk [vmem:[#allocation2 + $0x20] sm:$0xff] %vm1954, %v1939
  %1960 = vst.msk [vmem:[#allocation2 + $0x28] sm:$0xff] %vm1954, %v1941
  %1961 = vst.msk [vmem:[#allocation2 + $0x30] sm:$0xff] %vm1954, %v1943
  %1962 = vst.msk [vmem:[#allocation2 + $0x38] sm:$0xff] %vm1954, %v1945
  %1963 = vrot.lane.b32.xlu0 %v1914, 45
  %v1964 = vpop.permute.xlu0 %1963
  %1965 = vrot.lane.b32.xlu0 %v1915, 45
  %v1966 = vpop.permute.xlu0 %1965
  %1967 = vrot.lane.b32.xlu0 %v1916, 45
  %v1968 = vpop.permute.xlu0 %1967
  %1969 = vrot.lane.b32.xlu0 %v1917, 45
  %v1970 = vpop.permute.xlu0 %1969
  %1971 = vrot.lane.b32.xlu0 %v1918, 45
  %v1972 = vpop.permute.xlu0 %1971
  %1973 = vrot.lane.b32.xlu0 %v1919, 45
  %v1974 = vpop.permute.xlu0 %1973
  %1975 = vrot.lane.b32.xlu0 %v1920, 45
  %v1976 = vpop.permute.xlu0 %1975
  %1977 = vrot.lane.b32.xlu0 %v1921, 45
  %v1978 = vpop.permute.xlu0 %1977
  %vm1987 = vcmask 384368
  %1988 = vst.msk [vmem:[#allocation2] sm:$0xff] %vm1987, %v1964
  %1989 = vst.msk [vmem:[#allocation2 + $0x8] sm:$0xff] %vm1987, %v1966
  %1990 = vst.msk [vmem:[#allocation2 + $0x10] sm:$0xff] %vm1987, %v1968
  %1991 = vst.msk [vmem:[#allocation2 + $0x18] sm:$0xff] %vm1987, %v1970
  %1992 = vst.msk [vmem:[#allocation2 + $0x20] sm:$0xff] %vm1987, %v1972
  %1993 = vst.msk [vmem:[#allocation2 + $0x28] sm:$0xff] %vm1987, %v1974
  %1994 = vst.msk [vmem:[#allocation2 + $0x30] sm:$0xff] %vm1987, %v1976
  %1995 = vst.msk [vmem:[#allocation2 + $0x38] sm:$0xff] %vm1987, %v1978
  %v1996 = vmul.f32 %v263, %v1728
  %v1997 = vmul.f32 %v265, %v1729
  %v1998 = vmul.f32 %v268, %v1730
  %v1999 = vmul.f32 %v270, %v1731
  %v2000 = vmul.f32 %v273, %v1732
  %v2001 = vmul.f32 %v275, %v1733
  %v2002 = vmul.f32 %v278, %v1734
  %v2003 = vmul.f32 %v280, %v1735
  %v2004 = vadd.f32 %v1996, %v1792
  %v2005 = vadd.f32 %v1997, %v1793
  %v2006 = vadd.f32 %v1998, %v1794
  %v2007 = vadd.f32 %v1999, %v1795
  %v2008 = vadd.f32 %v2000, %v1796
  %v2009 = vadd.f32 %v2001, %v1797
  %v2010 = vadd.f32 %v2002, %v1798
  %v2011 = vadd.f32 %v2003, %v1799
  %v2012 = vmax.f32 %v2004, 0.0
  %v2013 = vmax.f32 %v2005, 0.0
  %v2014 = vmax.f32 %v2006, 0.0
  %v2015 = vmax.f32 %v2007, 0.0
  %v2016 = vmax.f32 %v2008, 0.0
  %v2017 = vmax.f32 %v2009, 0.0
  %v2018 = vmax.f32 %v2010, 0.0
  %v2019 = vmax.f32 %v2011, 0.0
  %2028 = vrot.lane.b32.xlu0 %v2012, 9
  %v2029 = vpop.permute.xlu0 %2028
  %2030 = vrot.lane.b32.xlu0 %v2013, 9
  %v2031 = vpop.permute.xlu0 %2030
  %2032 = vrot.lane.b32.xlu0 %v2014, 9
  %v2033 = vpop.permute.xlu0 %2032
  %2034 = vrot.lane.b32.xlu0 %v2015, 9
  %v2035 = vpop.permute.xlu0 %2034
  %2036 = vrot.lane.b32.xlu0 %v2016, 9
  %v2037 = vpop.permute.xlu0 %2036
  %2038 = vrot.lane.b32.xlu0 %v2017, 9
  %v2039 = vpop.permute.xlu0 %2038
  %2040 = vrot.lane.b32.xlu0 %v2018, 9
  %v2041 = vpop.permute.xlu0 %2040
  %2042 = vrot.lane.b32.xlu0 %v2019, 9
  %v2043 = vpop.permute.xlu0 %2042
  %vm2052 = vcmask 80968
  %2053 = vst.msk [vmem:[#allocation2] sm:$0xff] %vm2052, %v2029
  %2054 = vst.msk [vmem:[#allocation2 + $0x8] sm:$0xff] %vm2052, %v2031
  %2055 = vst.msk [vmem:[#allocation2 + $0x10] sm:$0xff] %vm2052, %v2033
  %2056 = vst.msk [vmem:[#allocation2 + $0x18] sm:$0xff] %vm2052, %v2035
  %2057 = vst.msk [vmem:[#allocation2 + $0x20] sm:$0xff] %vm2052, %v2037
  %2058 = vst.msk [vmem:[#allocation2 + $0x28] sm:$0xff] %vm2052, %v2039
  %2059 = vst.msk [vmem:[#allocation2 + $0x30] sm:$0xff] %vm2052, %v2041
  %2060 = vst.msk [vmem:[#allocation2 + $0x38] sm:$0xff] %vm2052, %v2043
  %2061 = vrot.lane.b32.xlu0 %v2012, 46
  %v2062 = vpop.permute.xlu0 %2061
  %2063 = vrot.lane.b32.xlu0 %v2013, 46
  %v2064 = vpop.permute.xlu0 %2063
  %2065 = vrot.lane.b32.xlu0 %v2014, 46
  %v2066 = vpop.permute.xlu0 %2065
  %2067 = vrot.lane.b32.xlu0 %v2015, 46
  %v2068 = vpop.permute.xlu0 %2067
  %2069 = vrot.lane.b32.xlu0 %v2016, 46
  %v2070 = vpop.permute.xlu0 %2069
  %2071 = vrot.lane.b32.xlu0 %v2017, 46
  %v2072 = vpop.permute.xlu0 %2071
  %2073 = vrot.lane.b32.xlu0 %v2018, 46
  %v2074 = vpop.permute.xlu0 %2073
  %2075 = vrot.lane.b32.xlu0 %v2019, 46
  %v2076 = vpop.permute.xlu0 %2075
  %vm2085 = vcmask 392568
  %2086 = vst.msk [vmem:[#allocation2] sm:$0xff] %vm2085, %v2062
  %2087 = vst.msk [vmem:[#allocation2 + $0x8] sm:$0xff] %vm2085, %v2064
  %2088 = vst.msk [vmem:[#allocation2 + $0x10] sm:$0xff] %vm2085, %v2066
  %2089 = vst.msk [vmem:[#allocation2 + $0x18] sm:$0xff] %vm2085, %v2068
  %2090 = vst.msk [vmem:[#allocation2 + $0x20] sm:$0xff] %vm2085, %v2070
  %2091 = vst.msk [vmem:[#allocation2 + $0x28] sm:$0xff] %vm2085, %v2072
  %2092 = vst.msk [vmem:[#allocation2 + $0x30] sm:$0xff] %vm2085, %v2074
  %2093 = vst.msk [vmem:[#allocation2 + $0x38] sm:$0xff] %vm2085, %v2076
  %v2094 = vmul.f32 %v333, %v1728
  %v2095 = vmul.f32 %v335, %v1729
  %v2096 = vmul.f32 %v338, %v1730
  %v2097 = vmul.f32 %v340, %v1731
  %v2098 = vmul.f32 %v343, %v1732
  %v2099 = vmul.f32 %v345, %v1733
  %v2100 = vmul.f32 %v348, %v1734
  %v2101 = vmul.f32 %v350, %v1735
  %v2102 = vadd.f32 %v2094, %v1792
  %v2103 = vadd.f32 %v2095, %v1793
  %v2104 = vadd.f32 %v2096, %v1794
  %v2105 = vadd.f32 %v2097, %v1795
  %v2106 = vadd.f32 %v2098, %v1796
  %v2107 = vadd.f32 %v2099, %v1797
  %v2108 = vadd.f32 %v2100, %v1798
  %v2109 = vadd.f32 %v2101, %v1799
  %v2110 = vmax.f32 %v2102, 0.0
  %v2111 = vmax.f32 %v2103, 0.0
  %v2112 = vmax.f32 %v2104, 0.0
  %v2113 = vmax.f32 %v2105, 0.0
  %v2114 = vmax.f32 %v2106, 0.0
  %v2115 = vmax.f32 %v2107, 0.0
  %v2116 = vmax.f32 %v2108, 0.0
  %v2117 = vmax.f32 %v2109, 0.0
  %2126 = vrot.lane.b32.xlu0 %v2110, 10
  %v2127 = vpop.permute.xlu0 %2126
  %2128 = vrot.lane.b32.xlu0 %v2111, 10
  %v2129 = vpop.permute.xlu0 %2128
  %2130 = vrot.lane.b32.xlu0 %v2112, 10
  %v2131 = vpop.permute.xlu0 %2130
  %2132 = vrot.lane.b32.xlu0 %v2113, 10
  %v2133 = vpop.permute.xlu0 %2132
  %2134 = vrot.lane.b32.xlu0 %v2114, 10
  %v2135 = vpop.permute.xlu0 %2134
  %2136 = vrot.lane.b32.xlu0 %v2115, 10
  %v2137 = vpop.permute.xlu0 %2136
  %2138 = vrot.lane.b32.xlu0 %v2116, 10
  %v2139 = vpop.permute.xlu0 %2138
  %2140 = vrot.lane.b32.xlu0 %v2117, 10
  %v2141 = vpop.permute.xlu0 %2140
  %vm2150 = vcmask 89168
  %2151 = vst.msk [vmem:[#allocation2] sm:$0xff] %vm2150, %v2127
  %2152 = vst.msk [vmem:[#allocation2 + $0x8] sm:$0xff] %vm2150, %v2129
  %2153 = vst.msk [vmem:[#allocation2 + $0x10] sm:$0xff] %vm2150, %v2131
  %2154 = vst.msk [vmem:[#allocation2 + $0x18] sm:$0xff] %vm2150, %v2133
  %2155 = vst.msk [vmem:[#allocation2 + $0x20] sm:$0xff] %vm2150, %v2135
  %2156 = vst.msk [vmem:[#allocation2 + $0x28] sm:$0xff] %vm2150, %v2137
  %2157 = vst.msk [vmem:[#allocation2 + $0x30] sm:$0xff] %vm2150, %v2139
  %2158 = vst.msk [vmem:[#allocation2 + $0x38] sm:$0xff] %vm2150, %v2141
  %2159 = vrot.lane.b32.xlu0 %v2110, 47
  %v2160 = vpop.permute.xlu0 %2159
  %2161 = vrot.lane.b32.xlu0 %v2111, 47
  %v2162 = vpop.permute.xlu0 %2161
  %2163 = vrot.lane.b32.xlu0 %v2112, 47
  %v2164 = vpop.permute.xlu0 %2163
  %2165 = vrot.lane.b32.xlu0 %v2113, 47
  %v2166 = vpop.permute.xlu0 %2165
  %2167 = vrot.lane.b32.xlu0 %v2114, 47
  %v2168 = vpop.permute.xlu0 %2167
  %2169 = vrot.lane.b32.xlu0 %v2115, 47
  %v2170 = vpop.permute.xlu0 %2169
  %2171 = vrot.lane.b32.xlu0 %v2116, 47
  %v2172 = vpop.permute.xlu0 %2171
  %2173 = vrot.lane.b32.xlu0 %v2117, 47
  %v2174 = vpop.permute.xlu0 %2173
  %vm2183 = vcmask 400768
  %2184 = vst.msk [vmem:[#allocation2] sm:$0xff] %vm2183, %v2160
  %2185 = vst.msk [vmem:[#allocation2 + $0x8] sm:$0xff] %vm2183, %v2162
  %2186 = vst.msk [vmem:[#allocation2 + $0x10] sm:$0xff] %vm2183, %v2164
  %2187 = vst.msk [vmem:[#allocation2 + $0x18] sm:$0xff] %vm2183, %v2166
  %2188 = vst.msk [vmem:[#allocation2 + $0x20] sm:$0xff] %vm2183, %v2168
  %2189 = vst.msk [vmem:[#allocation2 + $0x28] sm:$0xff] %vm2183, %v2170
  %2190 = vst.msk [vmem:[#allocation2 + $0x30] sm:$0xff] %vm2183, %v2172
  %2191 = vst.msk [vmem:[#allocation2 + $0x38] sm:$0xff] %vm2183, %v2174
  %v2192 = vmul.f32 %v403, %v1728
  %v2193 = vmul.f32 %v405, %v1729
  %v2194 = vmul.f32 %v408, %v1730
  %v2195 = vmul.f32 %v410, %v1731
  %v2196 = vmul.f32 %v413, %v1732
  %v2197 = vmul.f32 %v415, %v1733
  %v2198 = vmul.f32 %v418, %v1734
  %v2199 = vmul.f32 %v420, %v1735
  %v2200 = vadd.f32 %v2192, %v1792
  %v2201 = vadd.f32 %v2193, %v1793
  %v2202 = vadd.f32 %v2194, %v1794
  %v2203 = vadd.f32 %v2195, %v1795
  %v2204 = vadd.f32 %v2196, %v1796
  %v2205 = vadd.f32 %v2197, %v1797
  %v2206 = vadd.f32 %v2198, %v1798
  %v2207 = vadd.f32 %v2199, %v1799
  %v2208 = vmax.f32 %v2200, 0.0
  %v2209 = vmax.f32 %v2201, 0.0
  %v2210 = vmax.f32 %v2202, 0.0
  %v2211 = vmax.f32 %v2203, 0.0
  %v2212 = vmax.f32 %v2204, 0.0
  %v2213 = vmax.f32 %v2205, 0.0
  %v2214 = vmax.f32 %v2206, 0.0
  %v2215 = vmax.f32 %v2207, 0.0
  %2224 = vrot.lane.b32.xlu0 %v2208, 13
  %v2225 = vpop.permute.xlu0 %2224
  %2226 = vrot.lane.b32.xlu0 %v2209, 13
  %v2227 = vpop.permute.xlu0 %2226
  %2228 = vrot.lane.b32.xlu0 %v2210, 13
  %v2229 = vpop.permute.xlu0 %2228
  %2230 = vrot.lane.b32.xlu0 %v2211, 13
  %v2231 = vpop.permute.xlu0 %2230
  %2232 = vrot.lane.b32.xlu0 %v2212, 13
  %v2233 = vpop.permute.xlu0 %2232
  %2234 = vrot.lane.b32.xlu0 %v2213, 13
  %v2235 = vpop.permute.xlu0 %2234
  %2236 = vrot.lane.b32.xlu0 %v2214, 13
  %v2237 = vpop.permute.xlu0 %2236
  %2238 = vrot.lane.b32.xlu0 %v2215, 13
  %v2239 = vpop.permute.xlu0 %2238
  %vm2248 = vcmask 113768
  %2249 = vst.msk [vmem:[#allocation2] sm:$0xff] %vm2248, %v2225
  %2250 = vst.msk [vmem:[#allocation2 + $0x8] sm:$0xff] %vm2248, %v2227
  %2251 = vst.msk [vmem:[#allocation2 + $0x10] sm:$0xff] %vm2248, %v2229
  %2252 = vst.msk [vmem:[#allocation2 + $0x18] sm:$0xff] %vm2248, %v2231
  %2253 = vst.msk [vmem:[#allocation2 + $0x20] sm:$0xff] %vm2248, %v2233
  %2254 = vst.msk [vmem:[#allocation2 + $0x28] sm:$0xff] %vm2248, %v2235
  %2255 = vst.msk [vmem:[#allocation2 + $0x30] sm:$0xff] %vm2248, %v2237
  %2256 = vst.msk [vmem:[#allocation2 + $0x38] sm:$0xff] %vm2248, %v2239
  %2257 = vrot.lane.b32.xlu0 %v2208, 50
  %v2258 = vpop.permute.xlu0 %2257
  %2259 = vrot.lane.b32.xlu0 %v2209, 50
  %v2260 = vpop.permute.xlu0 %2259
  %2261 = vrot.lane.b32.xlu0 %v2210, 50
  %v2262 = vpop.permute.xlu0 %2261
  %2263 = vrot.lane.b32.xlu0 %v2211, 50
  %v2264 = vpop.permute.xlu0 %2263
  %2265 = vrot.lane.b32.xlu0 %v2212, 50
  %v2266 = vpop.permute.xlu0 %2265
  %2267 = vrot.lane.b32.xlu0 %v2213, 50
  %v2268 = vpop.permute.xlu0 %2267
  %2269 = vrot.lane.b32.xlu0 %v2214, 50
  %v2270 = vpop.permute.xlu0 %2269
  %2271 = vrot.lane.b32.xlu0 %v2215, 50
  %v2272 = vpop.permute.xlu0 %2271
  %vm2281 = vcmask 425368
  %2282 = vst.msk [vmem:[#allocation2] sm:$0xff] %vm2281, %v2258
  %2283 = vst.msk [vmem:[#allocation2 + $0x8] sm:$0xff] %vm2281, %v2260
  %2284 = vst.msk [vmem:[#allocation2 + $0x10] sm:$0xff] %vm2281, %v2262
  %2285 = vst.msk [vmem:[#allocation2 + $0x18] sm:$0xff] %vm2281, %v2264
  %2286 = vst.msk [vmem:[#allocation2 + $0x20] sm:$0xff] %vm2281, %v2266
  %2287 = vst.msk [vmem:[#allocation2 + $0x28] sm:$0xff] %vm2281, %v2268
  %2288 = vst.msk [vmem:[#allocation2 + $0x30] sm:$0xff] %vm2281, %v2270
  %2289 = vst.msk [vmem:[#allocation2 + $0x38] sm:$0xff] %vm2281, %v2272
  %v2290 = vmul.f32 %v473, %v1728
  %v2291 = vmul.f32 %v475, %v1729
  %v2292 = vmul.f32 %v478, %v1730
  %v2293 = vmul.f32 %v480, %v1731
  %v2294 = vmul.f32 %v483, %v1732
  %v2295 = vmul.f32 %v485, %v1733
  %v2296 = vmul.f32 %v488, %v1734
  %v2297 = vmul.f32 %v490, %v1735
  %v2298 = vadd.f32 %v2290, %v1792
  %v2299 = vadd.f32 %v2291, %v1793
  %v2300 = vadd.f32 %v2292, %v1794
  %v2301 = vadd.f32 %v2293, %v1795
  %v2302 = vadd.f32 %v2294, %v1796
  %v2303 = vadd.f32 %v2295, %v1797
  %v2304 = vadd.f32 %v2296, %v1798
  %v2305 = vadd.f32 %v2297, %v1799
  %v2306 = vmax.f32 %v2298, 0.0
  %v2307 = vmax.f32 %v2299, 0.0
  %v2308 = vmax.f32 %v2300, 0.0
  %v2309 = vmax.f32 %v2301, 0.0
  %v2310 = vmax.f32 %v2302, 0.0
  %v2311 = vmax.f32 %v2303, 0.0
  %v2312 = vmax.f32 %v2304, 0.0
  %v2313 = vmax.f32 %v2305, 0.0
  %2322 = vrot.lane.b32.xlu0 %v2306, 14
  %v2323 = vpop.permute.xlu0 %2322
  %2324 = vrot.lane.b32.xlu0 %v2307, 14
  %v2325 = vpop.permute.xlu0 %2324
  %2326 = vrot.lane.b32.xlu0 %v2308, 14
  %v2327 = vpop.permute.xlu0 %2326
  %2328 = vrot.lane.b32.xlu0 %v2309, 14
  %v2329 = vpop.permute.xlu0 %2328
  %2330 = vrot.lane.b32.xlu0 %v2310, 14
  %v2331 = vpop.permute.xlu0 %2330
  %2332 = vrot.lane.b32.xlu0 %v2311, 14
  %v2333 = vpop.permute.xlu0 %2332
  %2334 = vrot.lane.b32.xlu0 %v2312, 14
  %v2335 = vpop.permute.xlu0 %2334
  %2336 = vrot.lane.b32.xlu0 %v2313, 14
  %v2337 = vpop.permute.xlu0 %2336
  %vm2346 = vcmask 121968
  %2347 = vst.msk [vmem:[#allocation2] sm:$0xff] %vm2346, %v2323
  %2348 = vst.msk [vmem:[#allocation2 + $0x8] sm:$0xff] %vm2346, %v2325
  %2349 = vst.msk [vmem:[#allocation2 + $0x10] sm:$0xff] %vm2346, %v2327
  %2350 = vst.msk [vmem:[#allocation2 + $0x18] sm:$0xff] %vm2346, %v2329
  %2351 = vst.msk [vmem:[#allocation2 + $0x20] sm:$0xff] %vm2346, %v2331
  %2352 = vst.msk [vmem:[#allocation2 + $0x28] sm:$0xff] %vm2346, %v2333
  %2353 = vst.msk [vmem:[#allocation2 + $0x30] sm:$0xff] %vm2346, %v2335
  %2354 = vst.msk [vmem:[#allocation2 + $0x38] sm:$0xff] %vm2346, %v2337
  %2355 = vrot.lane.b32.xlu0 %v2306, 51
  %v2356 = vpop.permute.xlu0 %2355
  %2357 = vrot.lane.b32.xlu0 %v2307, 51
  %v2358 = vpop.permute.xlu0 %2357
  %2359 = vrot.lane.b32.xlu0 %v2308, 51
  %v2360 = vpop.permute.xlu0 %2359
  %2361 = vrot.lane.b32.xlu0 %v2309, 51
  %v2362 = vpop.permute.xlu0 %2361
  %2363 = vrot.lane.b32.xlu0 %v2310, 51
  %v2364 = vpop.permute.xlu0 %2363
  %2365 = vrot.lane.b32.xlu0 %v2311, 51
  %v2366 = vpop.permute.xlu0 %2365
  %2367 = vrot.lane.b32.xlu0 %v2312, 51
  %v2368 = vpop.permute.xlu0 %2367
  %2369 = vrot.lane.b32.xlu0 %v2313, 51
  %v2370 = vpop.permute.xlu0 %2369
  %vm2379 = vcmask 433568
  %2380 = vst.msk [vmem:[#allocation2] sm:$0xff] %vm2379, %v2356
  %2381 = vst.msk [vmem:[#allocation2 + $0x8] sm:$0xff] %vm2379, %v2358
  %2382 = vst.msk [vmem:[#allocation2 + $0x10] sm:$0xff] %vm2379, %v2360
  %2383 = vst.msk [vmem:[#allocation2 + $0x18] sm:$0xff] %vm2379, %v2362
  %2384 = vst.msk [vmem:[#allocation2 + $0x20] sm:$0xff] %vm2379, %v2364
  %2385 = vst.msk [vmem:[#allocation2 + $0x28] sm:$0xff] %vm2379, %v2366
  %2386 = vst.msk [vmem:[#allocation2 + $0x30] sm:$0xff] %vm2379, %v2368
  %2387 = vst.msk [vmem:[#allocation2 + $0x38] sm:$0xff] %vm2379, %v2370
  %v2388 = vmul.f32 %v543, %v1728
  %v2389 = vmul.f32 %v545, %v1729
  %v2390 = vmul.f32 %v548, %v1730
  %v2391 = vmul.f32 %v550, %v1731
  %v2392 = vmul.f32 %v553, %v1732
  %v2393 = vmul.f32 %v555, %v1733
  %v2394 = vmul.f32 %v558, %v1734
  %v2395 = vmul.f32 %v560, %v1735
  %v2396 = vadd.f32 %v2388, %v1792
  %v2397 = vadd.f32 %v2389, %v1793
  %v2398 = vadd.f32 %v2390, %v1794
  %v2399 = vadd.f32 %v2391, %v1795
  %v2400 = vadd.f32 %v2392, %v1796
  %v2401 = vadd.f32 %v2393, %v1797
  %v2402 = vadd.f32 %v2394, %v1798
  %v2403 = vadd.f32 %v2395, %v1799
  %v2404 = vmax.f32 %v2396, 0.0
  %v2405 = vmax.f32 %v2397, 0.0
  %v2406 = vmax.f32 %v2398, 0.0
  %v2407 = vmax.f32 %v2399, 0.0
  %v2408 = vmax.f32 %v2400, 0.0
  %v2409 = vmax.f32 %v2401, 0.0
  %v2410 = vmax.f32 %v2402, 0.0
  %v2411 = vmax.f32 %v2403, 0.0
  %2420 = vrot.lane.b32.xlu0 %v2404, 15
  %v2421 = vpop.permute.xlu0 %2420
  %2422 = vrot.lane.b32.xlu0 %v2405, 15
  %v2423 = vpop.permute.xlu0 %2422
  %2424 = vrot.lane.b32.xlu0 %v2406, 15
  %v2425 = vpop.permute.xlu0 %2424
  %2426 = vrot.lane.b32.xlu0 %v2407, 15
  %v2427 = vpop.permute.xlu0 %2426
  %2428 = vrot.lane.b32.xlu0 %v2408, 15
  %v2429 = vpop.permute.xlu0 %2428
  %2430 = vrot.lane.b32.xlu0 %v2409, 15
  %v2431 = vpop.permute.xlu0 %2430
  %2432 = vrot.lane.b32.xlu0 %v2410, 15
  %v2433 = vpop.permute.xlu0 %2432
  %2434 = vrot.lane.b32.xlu0 %v2411, 15
  %v2435 = vpop.permute.xlu0 %2434
  %vm2444 = vcmask 130168
  %2445 = vst.msk [vmem:[#allocation2] sm:$0xff] %vm2444, %v2421
  %2446 = vst.msk [vmem:[#allocation2 + $0x8] sm:$0xff] %vm2444, %v2423
  %2447 = vst.msk [vmem:[#allocation2 + $0x10] sm:$0xff] %vm2444, %v2425
  %2448 = vst.msk [vmem:[#allocation2 + $0x18] sm:$0xff] %vm2444, %v2427
  %2449 = vst.msk [vmem:[#allocation2 + $0x20] sm:$0xff] %vm2444, %v2429
  %2450 = vst.msk [vmem:[#allocation2 + $0x28] sm:$0xff] %vm2444, %v2431
  %2451 = vst.msk [vmem:[#allocation2 + $0x30] sm:$0xff] %vm2444, %v2433
  %2452 = vst.msk [vmem:[#allocation2 + $0x38] sm:$0xff] %vm2444, %v2435
  %2453 = vrot.lane.b32.xlu0 %v2404, 52
  %v2454 = vpop.permute.xlu0 %2453
  %2455 = vrot.lane.b32.xlu0 %v2405, 52
  %v2456 = vpop.permute.xlu0 %2455
  %2457 = vrot.lane.b32.xlu0 %v2406, 52
  %v2458 = vpop.permute.xlu0 %2457
  %2459 = vrot.lane.b32.xlu0 %v2407, 52
  %v2460 = vpop.permute.xlu0 %2459
  %2461 = vrot.lane.b32.xlu0 %v2408, 52
  %v2462 = vpop.permute.xlu0 %2461
  %2463 = vrot.lane.b32.xlu0 %v2409, 52
  %v2464 = vpop.permute.xlu0 %2463
  %2465 = vrot.lane.b32.xlu0 %v2410, 52
  %v2466 = vpop.permute.xlu0 %2465
  %2467 = vrot.lane.b32.xlu0 %v2411, 52
  %v2468 = vpop.permute.xlu0 %2467
  %vm2477 = vcmask 441768
  %2478 = vst.msk [vmem:[#allocation2] sm:$0xff] %vm2477, %v2454
  %2479 = vst.msk [vmem:[#allocation2 + $0x8] sm:$0xff] %vm2477, %v2456
  %2480 = vst.msk [vmem:[#allocation2 + $0x10] sm:$0xff] %vm2477, %v2458
  %2481 = vst.msk [vmem:[#allocation2 + $0x18] sm:$0xff] %vm2477, %v2460
  %2482 = vst.msk [vmem:[#allocation2 + $0x20] sm:$0xff] %vm2477, %v2462
  %2483 = vst.msk [vmem:[#allocation2 + $0x28] sm:$0xff] %vm2477, %v2464
  %2484 = vst.msk [vmem:[#allocation2 + $0x30] sm:$0xff] %vm2477, %v2466
  %2485 = vst.msk [vmem:[#allocation2 + $0x38] sm:$0xff] %vm2477, %v2468
  %v2486 = vmul.f32 %v613, %v1728
  %v2487 = vmul.f32 %v615, %v1729
  %v2488 = vmul.f32 %v618, %v1730
  %v2489 = vmul.f32 %v620, %v1731
  %v2490 = vmul.f32 %v623, %v1732
  %v2491 = vmul.f32 %v625, %v1733
  %v2492 = vmul.f32 %v628, %v1734
  %v2493 = vmul.f32 %v630, %v1735
  %v2494 = vadd.f32 %v2486, %v1792
  %v2495 = vadd.f32 %v2487, %v1793
  %v2496 = vadd.f32 %v2488, %v1794
  %v2497 = vadd.f32 %v2489, %v1795
  %v2498 = vadd.f32 %v2490, %v1796
  %v2499 = vadd.f32 %v2491, %v1797
  %v2500 = vadd.f32 %v2492, %v1798
  %v2501 = vadd.f32 %v2493, %v1799
  %v2502 = vmax.f32 %v2494, 0.0
  %v2503 = vmax.f32 %v2495, 0.0
  %v2504 = vmax.f32 %v2496, 0.0
  %v2505 = vmax.f32 %v2497, 0.0
  %v2506 = vmax.f32 %v2498, 0.0
  %v2507 = vmax.f32 %v2499, 0.0
  %v2508 = vmax.f32 %v2500, 0.0
  %v2509 = vmax.f32 %v2501, 0.0
  %2518 = vrot.lane.b32.xlu0 %v2502, 16
  %v2519 = vpop.permute.xlu0 %2518
  %2520 = vrot.lane.b32.xlu0 %v2503, 16
  %v2521 = vpop.permute.xlu0 %2520
  %2522 = vrot.lane.b32.xlu0 %v2504, 16
  %v2523 = vpop.permute.xlu0 %2522
  %2524 = vrot.lane.b32.xlu0 %v2505, 16
  %v2525 = vpop.permute.xlu0 %2524
  %2526 = vrot.lane.b32.xlu0 %v2506, 16
  %v2527 = vpop.permute.xlu0 %2526
  %2528 = vrot.lane.b32.xlu0 %v2507, 16
  %v2529 = vpop.permute.xlu0 %2528
  %2530 = vrot.lane.b32.xlu0 %v2508, 16
  %v2531 = vpop.permute.xlu0 %2530
  %2532 = vrot.lane.b32.xlu0 %v2509, 16
  %v2533 = vpop.permute.xlu0 %2532
  %vm2542 = vcmask 138368
  %2543 = vst.msk [vmem:[#allocation2] sm:$0xff] %vm2542, %v2519
  %2544 = vst.msk [vmem:[#allocation2 + $0x8] sm:$0xff] %vm2542, %v2521
  %2545 = vst.msk [vmem:[#allocation2 + $0x10] sm:$0xff] %vm2542, %v2523
  %2546 = vst.msk [vmem:[#allocation2 + $0x18] sm:$0xff] %vm2542, %v2525
  %2547 = vst.msk [vmem:[#allocation2 + $0x20] sm:$0xff] %vm2542, %v2527
  %2548 = vst.msk [vmem:[#allocation2 + $0x28] sm:$0xff] %vm2542, %v2529
  %2549 = vst.msk [vmem:[#allocation2 + $0x30] sm:$0xff] %vm2542, %v2531
  %2550 = vst.msk [vmem:[#allocation2 + $0x38] sm:$0xff] %vm2542, %v2533
  %2551 = vrot.lane.b32.xlu0 %v2502, 53
  %v2552 = vpop.permute.xlu0 %2551
  %2553 = vrot.lane.b32.xlu0 %v2503, 53
  %v2554 = vpop.permute.xlu0 %2553
  %2555 = vrot.lane.b32.xlu0 %v2504, 53
  %v2556 = vpop.permute.xlu0 %2555
  %2557 = vrot.lane.b32.xlu0 %v2505, 53
  %v2558 = vpop.permute.xlu0 %2557
  %2559 = vrot.lane.b32.xlu0 %v2506, 53
  %v2560 = vpop.permute.xlu0 %2559
  %2561 = vrot.lane.b32.xlu0 %v2507, 53
  %v2562 = vpop.permute.xlu0 %2561
  %2563 = vrot.lane.b32.xlu0 %v2508, 53
  %v2564 = vpop.permute.xlu0 %2563
  %2565 = vrot.lane.b32.xlu0 %v2509, 53
  %v2566 = vpop.permute.xlu0 %2565
  %vm2575 = vcmask 449968
  %2576 = vst.msk [vmem:[#allocation2] sm:$0xff] %vm2575, %v2552
  %2577 = vst.msk [vmem:[#allocation2 + $0x8] sm:$0xff] %vm2575, %v2554
  %2578 = vst.msk [vmem:[#allocation2 + $0x10] sm:$0xff] %vm2575, %v2556
  %2579 = vst.msk [vmem:[#allocation2 + $0x18] sm:$0xff] %vm2575, %v2558
  %2580 = vst.msk [vmem:[#allocation2 + $0x20] sm:$0xff] %vm2575, %v2560
  %2581 = vst.msk [vmem:[#allocation2 + $0x28] sm:$0xff] %vm2575, %v2562
  %2582 = vst.msk [vmem:[#allocation2 + $0x30] sm:$0xff] %vm2575, %v2564
  %2583 = vst.msk [vmem:[#allocation2 + $0x38] sm:$0xff] %vm2575, %v2566
  %v2584 = vmul.f32 %v683, %v1728
  %v2585 = vmul.f32 %v685, %v1729
  %v2586 = vmul.f32 %v688, %v1730
  %v2587 = vmul.f32 %v690, %v1731
  %v2588 = vmul.f32 %v693, %v1732
  %v2589 = vmul.f32 %v695, %v1733
  %v2590 = vmul.f32 %v698, %v1734
  %v2591 = vmul.f32 %v700, %v1735
  %v2592 = vadd.f32 %v2584, %v1792
  %v2593 = vadd.f32 %v2585, %v1793
  %v2594 = vadd.f32 %v2586, %v1794
  %v2595 = vadd.f32 %v2587, %v1795
  %v2596 = vadd.f32 %v2588, %v1796
  %v2597 = vadd.f32 %v2589, %v1797
  %v2598 = vadd.f32 %v2590, %v1798
  %v2599 = vadd.f32 %v2591, %v1799
  %v2600 = vmax.f32 %v2592, 0.0
  %v2601 = vmax.f32 %v2593, 0.0
  %v2602 = vmax.f32 %v2594, 0.0
  %v2603 = vmax.f32 %v2595, 0.0
  %v2604 = vmax.f32 %v2596, 0.0
  %v2605 = vmax.f32 %v2597, 0.0
  %v2606 = vmax.f32 %v2598, 0.0
  %v2607 = vmax.f32 %v2599, 0.0
  %2616 = vrot.lane.b32.xlu0 %v2600, 19
  %v2617 = vpop.permute.xlu0 %2616
  %2618 = vrot.lane.b32.xlu0 %v2601, 19
  %v2619 = vpop.permute.xlu0 %2618
  %2620 = vrot.lane.b32.xlu0 %v2602, 19
  %v2621 = vpop.permute.xlu0 %2620
  %2622 = vrot.lane.b32.xlu0 %v2603, 19
  %v2623 = vpop.permute.xlu0 %2622
  %2624 = vrot.lane.b32.xlu0 %v2604, 19
  %v2625 = vpop.permute.xlu0 %2624
  %2626 = vrot.lane.b32.xlu0 %v2605, 19
  %v2627 = vpop.permute.xlu0 %2626
  %2628 = vrot.lane.b32.xlu0 %v2606, 19
  %v2629 = vpop.permute.xlu0 %2628
  %2630 = vrot.lane.b32.xlu0 %v2607, 19
  %v2631 = vpop.permute.xlu0 %2630
  %vm2640 = vcmask 162968
  %2641 = vst.msk [vmem:[#allocation2] sm:$0xff] %vm2640, %v2617
  %2642 = vst.msk [vmem:[#allocation2 + $0x8] sm:$0xff] %vm2640, %v2619
  %2643 = vst.msk [vmem:[#allocation2 + $0x10] sm:$0xff] %vm2640, %v2621
  %2644 = vst.msk [vmem:[#allocation2 + $0x18] sm:$0xff] %vm2640, %v2623
  %2645 = vst.msk [vmem:[#allocation2 + $0x20] sm:$0xff] %vm2640, %v2625
  %2646 = vst.msk [vmem:[#allocation2 + $0x28] sm:$0xff] %vm2640, %v2627
  %2647 = vst.msk [vmem:[#allocation2 + $0x30] sm:$0xff] %vm2640, %v2629
  %2648 = vst.msk [vmem:[#allocation2 + $0x38] sm:$0xff] %vm2640, %v2631
  %2649 = vrot.lane.b32.xlu0 %v2600, 56
  %v2650 = vpop.permute.xlu0 %2649
  %2651 = vrot.lane.b32.xlu0 %v2601, 56
  %v2652 = vpop.permute.xlu0 %2651
  %2653 = vrot.lane.b32.xlu0 %v2602, 56
  %v2654 = vpop.permute.xlu0 %2653
  %2655 = vrot.lane.b32.xlu0 %v2603, 56
  %v2656 = vpop.permute.xlu0 %2655
  %2657 = vrot.lane.b32.xlu0 %v2604, 56
  %v2658 = vpop.permute.xlu0 %2657
  %2659 = vrot.lane.b32.xlu0 %v2605, 56
  %v2660 = vpop.permute.xlu0 %2659
  %2661 = vrot.lane.b32.xlu0 %v2606, 56
  %v2662 = vpop.permute.xlu0 %2661
  %2663 = vrot.lane.b32.xlu0 %v2607, 56
  %v2664 = vpop.permute.xlu0 %2663
  %vm2673 = vcmask 474568
  %2674 = vst.msk [vmem:[#allocation2] sm:$0xff] %vm2673, %v2650
  %2675 = vst.msk [vmem:[#allocation2 + $0x8] sm:$0xff] %vm2673, %v2652
  %2676 = vst.msk [vmem:[#allocation2 + $0x10] sm:$0xff] %vm2673, %v2654
  %2677 = vst.msk [vmem:[#allocation2 + $0x18] sm:$0xff] %vm2673, %v2656
  %2678 = vst.msk [vmem:[#allocation2 + $0x20] sm:$0xff] %vm2673, %v2658
  %2679 = vst.msk [vmem:[#allocation2 + $0x28] sm:$0xff] %vm2673, %v2660
  %2680 = vst.msk [vmem:[#allocation2 + $0x30] sm:$0xff] %vm2673, %v2662
  %2681 = vst.msk [vmem:[#allocation2 + $0x38] sm:$0xff] %vm2673, %v2664
  %v2682 = vmul.f32 %v753, %v1728
  %v2683 = vmul.f32 %v755, %v1729
  %v2684 = vmul.f32 %v758, %v1730
  %v2685 = vmul.f32 %v760, %v1731
  %v2686 = vmul.f32 %v763, %v1732
  %v2687 = vmul.f32 %v765, %v1733
  %v2688 = vmul.f32 %v768, %v1734
  %v2689 = vmul.f32 %v770, %v1735
  %v2690 = vadd.f32 %v2682, %v1792
  %v2691 = vadd.f32 %v2683, %v1793
  %v2692 = vadd.f32 %v2684, %v1794
  %v2693 = vadd.f32 %v2685, %v1795
  %v2694 = vadd.f32 %v2686, %v1796
  %v2695 = vadd.f32 %v2687, %v1797
  %v2696 = vadd.f32 %v2688, %v1798
  %v2697 = vadd.f32 %v2689, %v1799
  %v2698 = vmax.f32 %v2690, 0.0
  %v2699 = vmax.f32 %v2691, 0.0
  %v2700 = vmax.f32 %v2692, 0.0
  %v2701 = vmax.f32 %v2693, 0.0
  %v2702 = vmax.f32 %v2694, 0.0
  %v2703 = vmax.f32 %v2695, 0.0
  %v2704 = vmax.f32 %v2696, 0.0
  %v2705 = vmax.f32 %v2697, 0.0
  %2714 = vrot.lane.b32.xlu0 %v2698, 20
  %v2715 = vpop.permute.xlu0 %2714
  %2716 = vrot.lane.b32.xlu0 %v2699, 20
  %v2717 = vpop.permute.xlu0 %2716
  %2718 = vrot.lane.b32.xlu0 %v2700, 20
  %v2719 = vpop.permute.xlu0 %2718
  %2720 = vrot.lane.b32.xlu0 %v2701, 20
  %v2721 = vpop.permute.xlu0 %2720
  %2722 = vrot.lane.b32.xlu0 %v2702, 20
  %v2723 = vpop.permute.xlu0 %2722
  %2724 = vrot.lane.b32.xlu0 %v2703, 20
  %v2725 = vpop.permute.xlu0 %2724
  %2726 = vrot.lane.b32.xlu0 %v2704, 20
  %v2727 = vpop.permute.xlu0 %2726
  %2728 = vrot.lane.b32.xlu0 %v2705, 20
  %v2729 = vpop.permute.xlu0 %2728
  %vm2738 = vcmask 171168
  %2739 = vst.msk [vmem:[#allocation2] sm:$0xff] %vm2738, %v2715
  %2740 = vst.msk [vmem:[#allocation2 + $0x8] sm:$0xff] %vm2738, %v2717
  %2741 = vst.msk [vmem:[#allocation2 + $0x10] sm:$0xff] %vm2738, %v2719
  %2742 = vst.msk [vmem:[#allocation2 + $0x18] sm:$0xff] %vm2738, %v2721
  %2743 = vst.msk [vmem:[#allocation2 + $0x20] sm:$0xff] %vm2738, %v2723
  %2744 = vst.msk [vmem:[#allocation2 + $0x28] sm:$0xff] %vm2738, %v2725
  %2745 = vst.msk [vmem:[#allocation2 + $0x30] sm:$0xff] %vm2738, %v2727
  %2746 = vst.msk [vmem:[#allocation2 + $0x38] sm:$0xff] %vm2738, %v2729
  %2747 = vrot.lane.b32.xlu0 %v2698, 57
  %v2748 = vpop.permute.xlu0 %2747
  %2749 = vrot.lane.b32.xlu0 %v2699, 57
  %v2750 = vpop.permute.xlu0 %2749
  %2751 = vrot.lane.b32.xlu0 %v2700, 57
  %v2752 = vpop.permute.xlu0 %2751
  %2753 = vrot.lane.b32.xlu0 %v2701, 57
  %v2754 = vpop.permute.xlu0 %2753
  %2755 = vrot.lane.b32.xlu0 %v2702, 57
  %v2756 = vpop.permute.xlu0 %2755
  %2757 = vrot.lane.b32.xlu0 %v2703, 57
  %v2758 = vpop.permute.xlu0 %2757
  %2759 = vrot.lane.b32.xlu0 %v2704, 57
  %v2760 = vpop.permute.xlu0 %2759
  %2761 = vrot.lane.b32.xlu0 %v2705, 57
  %v2762 = vpop.permute.xlu0 %2761
  %vm2771 = vcmask 482768
  %2772 = vst.msk [vmem:[#allocation2] sm:$0xff] %vm2771, %v2748
  %2773 = vst.msk [vmem:[#allocation2 + $0x8] sm:$0xff] %vm2771, %v2750
  %2774 = vst.msk [vmem:[#allocation2 + $0x10] sm:$0xff] %vm2771, %v2752
  %2775 = vst.msk [vmem:[#allocation2 + $0x18] sm:$0xff] %vm2771, %v2754
  %2776 = vst.msk [vmem:[#allocation2 + $0x20] sm:$0xff] %vm2771, %v2756
  %2777 = vst.msk [vmem:[#allocation2 + $0x28] sm:$0xff] %vm2771, %v2758
  %2778 = vst.msk [vmem:[#allocation2 + $0x30] sm:$0xff] %vm2771, %v2760
  %2779 = vst.msk [vmem:[#allocation2 + $0x38] sm:$0xff] %vm2771, %v2762
  %v2780 = vmul.f32 %v823, %v1728
  %v2781 = vmul.f32 %v825, %v1729
  %v2782 = vmul.f32 %v828, %v1730
  %v2783 = vmul.f32 %v830, %v1731
  %v2784 = vmul.f32 %v833, %v1732
  %v2785 = vmul.f32 %v835, %v1733
  %v2786 = vmul.f32 %v838, %v1734
  %v2787 = vmul.f32 %v840, %v1735
  %v2788 = vadd.f32 %v2780, %v1792
  %v2789 = vadd.f32 %v2781, %v1793
  %v2790 = vadd.f32 %v2782, %v1794
  %v2791 = vadd.f32 %v2783, %v1795
  %v2792 = vadd.f32 %v2784, %v1796
  %v2793 = vadd.f32 %v2785, %v1797
  %v2794 = vadd.f32 %v2786, %v1798
  %v2795 = vadd.f32 %v2787, %v1799
  %v2796 = vmax.f32 %v2788, 0.0
  %v2797 = vmax.f32 %v2789, 0.0
  %v2798 = vmax.f32 %v2790, 0.0
  %v2799 = vmax.f32 %v2791, 0.0
  %v2800 = vmax.f32 %v2792, 0.0
  %v2801 = vmax.f32 %v2793, 0.0
  %v2802 = vmax.f32 %v2794, 0.0
  %v2803 = vmax.f32 %v2795, 0.0
  %2812 = vrot.lane.b32.xlu0 %v2796, 21
  %v2813 = vpop.permute.xlu0 %2812
  %2814 = vrot.lane.b32.xlu0 %v2797, 21
  %v2815 = vpop.permute.xlu0 %2814
  %2816 = vrot.lane.b32.xlu0 %v2798, 21
  %v2817 = vpop.permute.xlu0 %2816
  %2818 = vrot.lane.b32.xlu0 %v2799, 21
  %v2819 = vpop.permute.xlu0 %2818
  %2820 = vrot.lane.b32.xlu0 %v2800, 21
  %v2821 = vpop.permute.xlu0 %2820
  %2822 = vrot.lane.b32.xlu0 %v2801, 21
  %v2823 = vpop.permute.xlu0 %2822
  %2824 = vrot.lane.b32.xlu0 %v2802, 21
  %v2825 = vpop.permute.xlu0 %2824
  %2826 = vrot.lane.b32.xlu0 %v2803, 21
  %v2827 = vpop.permute.xlu0 %2826
  %vm2836 = vcmask 179368
  %2837 = vst.msk [vmem:[#allocation2] sm:$0xff] %vm2836, %v2813
  %2838 = vst.msk [vmem:[#allocation2 + $0x8] sm:$0xff] %vm2836, %v2815
  %2839 = vst.msk [vmem:[#allocation2 + $0x10] sm:$0xff] %vm2836, %v2817
  %2840 = vst.msk [vmem:[#allocation2 + $0x18] sm:$0xff] %vm2836, %v2819
  %2841 = vst.msk [vmem:[#allocation2 + $0x20] sm:$0xff] %vm2836, %v2821
  %2842 = vst.msk [vmem:[#allocation2 + $0x28] sm:$0xff] %vm2836, %v2823
  %2843 = vst.msk [vmem:[#allocation2 + $0x30] sm:$0xff] %vm2836, %v2825
  %2844 = vst.msk [vmem:[#allocation2 + $0x38] sm:$0xff] %vm2836, %v2827
  %2845 = vrot.lane.b32.xlu0 %v2796, 58
  %v2846 = vpop.permute.xlu0 %2845
  %2847 = vrot.lane.b32.xlu0 %v2797, 58
  %v2848 = vpop.permute.xlu0 %2847
  %2849 = vrot.lane.b32.xlu0 %v2798, 58
  %v2850 = vpop.permute.xlu0 %2849
  %2851 = vrot.lane.b32.xlu0 %v2799, 58
  %v2852 = vpop.permute.xlu0 %2851
  %2853 = vrot.lane.b32.xlu0 %v2800, 58
  %v2854 = vpop.permute.xlu0 %2853
  %2855 = vrot.lane.b32.xlu0 %v2801, 58
  %v2856 = vpop.permute.xlu0 %2855
  %2857 = vrot.lane.b32.xlu0 %v2802, 58
  %v2858 = vpop.permute.xlu0 %2857
  %2859 = vrot.lane.b32.xlu0 %v2803, 58
  %v2860 = vpop.permute.xlu0 %2859
  %vm2869 = vcmask 490968
  %2870 = vst.msk [vmem:[#allocation2] sm:$0xff] %vm2869, %v2846
  %2871 = vst.msk [vmem:[#allocation2 + $0x8] sm:$0xff] %vm2869, %v2848
  %2872 = vst.msk [vmem:[#allocation2 + $0x10] sm:$0xff] %vm2869, %v2850
  %2873 = vst.msk [vmem:[#allocation2 + $0x18] sm:$0xff] %vm2869, %v2852
  %2874 = vst.msk [vmem:[#allocation2 + $0x20] sm:$0xff] %vm2869, %v2854
  %2875 = vst.msk [vmem:[#allocation2 + $0x28] sm:$0xff] %vm2869, %v2856
  %2876 = vst.msk [vmem:[#allocation2 + $0x30] sm:$0xff] %vm2869, %v2858
  %2877 = vst.msk [vmem:[#allocation2 + $0x38] sm:$0xff] %vm2869, %v2860
  %v2878 = vmul.f32 %v893, %v1728
  %v2879 = vmul.f32 %v895, %v1729
  %v2880 = vmul.f32 %v898, %v1730
  %v2881 = vmul.f32 %v900, %v1731
  %v2882 = vmul.f32 %v903, %v1732
  %v2883 = vmul.f32 %v905, %v1733
  %v2884 = vmul.f32 %v908, %v1734
  %v2885 = vmul.f32 %v910, %v1735
  %v2886 = vadd.f32 %v2878, %v1792
  %v2887 = vadd.f32 %v2879, %v1793
  %v2888 = vadd.f32 %v2880, %v1794
  %v2889 = vadd.f32 %v2881, %v1795
  %v2890 = vadd.f32 %v2882, %v1796
  %v2891 = vadd.f32 %v2883, %v1797
  %v2892 = vadd.f32 %v2884, %v1798
  %v2893 = vadd.f32 %v2885, %v1799
  %v2894 = vmax.f32 %v2886, 0.0
  %v2895 = vmax.f32 %v2887, 0.0
  %v2896 = vmax.f32 %v2888, 0.0
  %v2897 = vmax.f32 %v2889, 0.0
  %v2898 = vmax.f32 %v2890, 0.0
  %v2899 = vmax.f32 %v2891, 0.0
  %v2900 = vmax.f32 %v2892, 0.0
  %v2901 = vmax.f32 %v2893, 0.0
  %2910 = vrot.lane.b32.xlu0 %v2894, 22
  %v2911 = vpop.permute.xlu0 %2910
  %2912 = vrot.lane.b32.xlu0 %v2895, 22
  %v2913 = vpop.permute.xlu0 %2912
  %2914 = vrot.lane.b32.xlu0 %v2896, 22
  %v2915 = vpop.permute.xlu0 %2914
  %2916 = vrot.lane.b32.xlu0 %v2897, 22
  %v2917 = vpop.permute.xlu0 %2916
  %2918 = vrot.lane.b32.xlu0 %v2898, 22
  %v2919 = vpop.permute.xlu0 %2918
  %2920 = vrot.lane.b32.xlu0 %v2899, 22
  %v2921 = vpop.permute.xlu0 %2920
  %2922 = vrot.lane.b32.xlu0 %v2900, 22
  %v2923 = vpop.permute.xlu0 %2922
  %2924 = vrot.lane.b32.xlu0 %v2901, 22
  %v2925 = vpop.permute.xlu0 %2924
  %vm2934 = vcmask 187568
  %2935 = vst.msk [vmem:[#allocation2] sm:$0xff] %vm2934, %v2911
  %2936 = vst.msk [vmem:[#allocation2 + $0x8] sm:$0xff] %vm2934, %v2913
  %2937 = vst.msk [vmem:[#allocation2 + $0x10] sm:$0xff] %vm2934, %v2915
  %2938 = vst.msk [vmem:[#allocation2 + $0x18] sm:$0xff] %vm2934, %v2917
  %2939 = vst.msk [vmem:[#allocation2 + $0x20] sm:$0xff] %vm2934, %v2919
  %2940 = vst.msk [vmem:[#allocation2 + $0x28] sm:$0xff] %vm2934, %v2921
  %2941 = vst.msk [vmem:[#allocation2 + $0x30] sm:$0xff] %vm2934, %v2923
  %2942 = vst.msk [vmem:[#allocation2 + $0x38] sm:$0xff] %vm2934, %v2925
  %2943 = vrot.lane.b32.xlu0 %v2894, 59
  %v2944 = vpop.permute.xlu0 %2943
  %2945 = vrot.lane.b32.xlu0 %v2895, 59
  %v2946 = vpop.permute.xlu0 %2945
  %2947 = vrot.lane.b32.xlu0 %v2896, 59
  %v2948 = vpop.permute.xlu0 %2947
  %2949 = vrot.lane.b32.xlu0 %v2897, 59
  %v2950 = vpop.permute.xlu0 %2949
  %2951 = vrot.lane.b32.xlu0 %v2898, 59
  %v2952 = vpop.permute.xlu0 %2951
  %2953 = vrot.lane.b32.xlu0 %v2899, 59
  %v2954 = vpop.permute.xlu0 %2953
  %2955 = vrot.lane.b32.xlu0 %v2900, 59
  %v2956 = vpop.permute.xlu0 %2955
  %2957 = vrot.lane.b32.xlu0 %v2901, 59
  %v2958 = vpop.permute.xlu0 %2957
  %vm2967 = vcmask 499168
  %2968 = vst.msk [vmem:[#allocation2] sm:$0xff] %vm2967, %v2944
  %2969 = vst.msk [vmem:[#allocation2 + $0x8] sm:$0xff] %vm2967, %v2946
  %2970 = vst.msk [vmem:[#allocation2 + $0x10] sm:$0xff] %vm2967, %v2948
  %2971 = vst.msk [vmem:[#allocation2 + $0x18] sm:$0xff] %vm2967, %v2950
  %2972 = vst.msk [vmem:[#allocation2 + $0x20] sm:$0xff] %vm2967, %v2952
  %2973 = vst.msk [vmem:[#allocation2 + $0x28] sm:$0xff] %vm2967, %v2954
  %2974 = vst.msk [vmem:[#allocation2 + $0x30] sm:$0xff] %vm2967, %v2956
  %2975 = vst.msk [vmem:[#allocation2 + $0x38] sm:$0xff] %vm2967, %v2958
  %v2976 = vmul.f32 %v963, %v1728
  %v2977 = vmul.f32 %v965, %v1729
  %v2978 = vmul.f32 %v968, %v1730
  %v2979 = vmul.f32 %v970, %v1731
  %v2980 = vmul.f32 %v973, %v1732
  %v2981 = vmul.f32 %v975, %v1733
  %v2982 = vmul.f32 %v978, %v1734
  %v2983 = vmul.f32 %v980, %v1735
  %v2984 = vadd.f32 %v2976, %v1792
  %v2985 = vadd.f32 %v2977, %v1793
  %v2986 = vadd.f32 %v2978, %v1794
  %v2987 = vadd.f32 %v2979, %v1795
  %v2988 = vadd.f32 %v2980, %v1796
  %v2989 = vadd.f32 %v2981, %v1797
  %v2990 = vadd.f32 %v2982, %v1798
  %v2991 = vadd.f32 %v2983, %v1799
  %v2992 = vmax.f32 %v2984, 0.0
  %v2993 = vmax.f32 %v2985, 0.0
  %v2994 = vmax.f32 %v2986, 0.0
  %v2995 = vmax.f32 %v2987, 0.0
  %v2996 = vmax.f32 %v2988, 0.0
  %v2997 = vmax.f32 %v2989, 0.0
  %v2998 = vmax.f32 %v2990, 0.0
  %v2999 = vmax.f32 %v2991, 0.0
  %3008 = vrot.lane.b32.xlu0 %v2992, 25
  %v3009 = vpop.permute.xlu0 %3008
  %3010 = vrot.lane.b32.xlu0 %v2993, 25
  %v3011 = vpop.permute.xlu0 %3010
  %3012 = vrot.lane.b32.xlu0 %v2994, 25
  %v3013 = vpop.permute.xlu0 %3012
  %3014 = vrot.lane.b32.xlu0 %v2995, 25
  %v3015 = vpop.permute.xlu0 %3014
  %3016 = vrot.lane.b32.xlu0 %v2996, 25
  %v3017 = vpop.permute.xlu0 %3016
  %3018 = vrot.lane.b32.xlu0 %v2997, 25
  %v3019 = vpop.permute.xlu0 %3018
  %3020 = vrot.lane.b32.xlu0 %v2998, 25
  %v3021 = vpop.permute.xlu0 %3020
  %3022 = vrot.lane.b32.xlu0 %v2999, 25
  %v3023 = vpop.permute.xlu0 %3022
  %vm3032 = vcmask 212168
  %3033 = vst.msk [vmem:[#allocation2] sm:$0xff] %vm3032, %v3009
  %3034 = vst.msk [vmem:[#allocation2 + $0x8] sm:$0xff] %vm3032, %v3011
  %3035 = vst.msk [vmem:[#allocation2 + $0x10] sm:$0xff] %vm3032, %v3013
  %3036 = vst.msk [vmem:[#allocation2 + $0x18] sm:$0xff] %vm3032, %v3015
  %3037 = vst.msk [vmem:[#allocation2 + $0x20] sm:$0xff] %vm3032, %v3017
  %3038 = vst.msk [vmem:[#allocation2 + $0x28] sm:$0xff] %vm3032, %v3019
  %3039 = vst.msk [vmem:[#allocation2 + $0x30] sm:$0xff] %vm3032, %v3021
  %3040 = vst.msk [vmem:[#allocation2 + $0x38] sm:$0xff] %vm3032, %v3023
  %3041 = vrot.lane.b32.xlu0 %v2992, 62
  %v3042 = vpop.permute.xlu0 %3041
  %3043 = vrot.lane.b32.xlu0 %v2993, 62
  %v3044 = vpop.permute.xlu0 %3043
  %3045 = vrot.lane.b32.xlu0 %v2994, 62
  %v3046 = vpop.permute.xlu0 %3045
  %3047 = vrot.lane.b32.xlu0 %v2995, 62
  %v3048 = vpop.permute.xlu0 %3047
  %3049 = vrot.lane.b32.xlu0 %v2996, 62
  %v3050 = vpop.permute.xlu0 %3049
  %3051 = vrot.lane.b32.xlu0 %v2997, 62
  %v3052 = vpop.permute.xlu0 %3051
  %3053 = vrot.lane.b32.xlu0 %v2998, 62
  %v3054 = vpop.permute.xlu0 %3053
  %3055 = vrot.lane.b32.xlu0 %v2999, 62
  %v3056 = vpop.permute.xlu0 %3055
  %vm3065 = vcmask 523768
  %3066 = vst.msk [vmem:[#allocation2] sm:$0xff] %vm3065, %v3042
  %3067 = vst.msk [vmem:[#allocation2 + $0x8] sm:$0xff] %vm3065, %v3044
  %3068 = vst.msk [vmem:[#allocation2 + $0x10] sm:$0xff] %vm3065, %v3046
  %3069 = vst.msk [vmem:[#allocation2 + $0x18] sm:$0xff] %vm3065, %v3048
  %3070 = vst.msk [vmem:[#allocation2 + $0x20] sm:$0xff] %vm3065, %v3050
  %3071 = vst.msk [vmem:[#allocation2 + $0x28] sm:$0xff] %vm3065, %v3052
  %3072 = vst.msk [vmem:[#allocation2 + $0x30] sm:$0xff] %vm3065, %v3054
  %3073 = vst.msk [vmem:[#allocation2 + $0x38] sm:$0xff] %vm3065, %v3056
  %v3074 = vmul.f32 %v1033, %v1728
  %v3075 = vmul.f32 %v1035, %v1729
  %v3076 = vmul.f32 %v1038, %v1730
  %v3077 = vmul.f32 %v1040, %v1731
  %v3078 = vmul.f32 %v1043, %v1732
  %v3079 = vmul.f32 %v1045, %v1733
  %v3080 = vmul.f32 %v1048, %v1734
  %v3081 = vmul.f32 %v1050, %v1735
  %v3082 = vadd.f32 %v3074, %v1792
  %v3083 = vadd.f32 %v3075, %v1793
  %v3084 = vadd.f32 %v3076, %v1794
  %v3085 = vadd.f32 %v3077, %v1795
  %v3086 = vadd.f32 %v3078, %v1796
  %v3087 = vadd.f32 %v3079, %v1797
  %v3088 = vadd.f32 %v3080, %v1798
  %v3089 = vadd.f32 %v3081, %v1799
  %v3090 = vmax.f32 %v3082, 0.0
  %v3091 = vmax.f32 %v3083, 0.0
  %v3092 = vmax.f32 %v3084, 0.0
  %v3093 = vmax.f32 %v3085, 0.0
  %v3094 = vmax.f32 %v3086, 0.0
  %v3095 = vmax.f32 %v3087, 0.0
  %v3096 = vmax.f32 %v3088, 0.0
  %v3097 = vmax.f32 %v3089, 0.0
  %3106 = vrot.lane.b32.xlu0 %v3090, 26
  %v3107 = vpop.permute.xlu0 %3106
  %3108 = vrot.lane.b32.xlu0 %v3091, 26
  %v3109 = vpop.permute.xlu0 %3108
  %3110 = vrot.lane.b32.xlu0 %v3092, 26
  %v3111 = vpop.permute.xlu0 %3110
  %3112 = vrot.lane.b32.xlu0 %v3093, 26
  %v3113 = vpop.permute.xlu0 %3112
  %3114 = vrot.lane.b32.xlu0 %v3094, 26
  %v3115 = vpop.permute.xlu0 %3114
  %3116 = vrot.lane.b32.xlu0 %v3095, 26
  %v3117 = vpop.permute.xlu0 %3116
  %3118 = vrot.lane.b32.xlu0 %v3096, 26
  %v3119 = vpop.permute.xlu0 %3118
  %3120 = vrot.lane.b32.xlu0 %v3097, 26
  %v3121 = vpop.permute.xlu0 %3120
  %vm3130 = vcmask 220368
  %3131 = vst.msk [vmem:[#allocation2] sm:$0xff] %vm3130, %v3107
  %3132 = vst.msk [vmem:[#allocation2 + $0x8] sm:$0xff] %vm3130, %v3109
  %3133 = vst.msk [vmem:[#allocation2 + $0x10] sm:$0xff] %vm3130, %v3111
  %3134 = vst.msk [vmem:[#allocation2 + $0x18] sm:$0xff] %vm3130, %v3113
  %3135 = vst.msk [vmem:[#allocation2 + $0x20] sm:$0xff] %vm3130, %v3115
  %3136 = vst.msk [vmem:[#allocation2 + $0x28] sm:$0xff] %vm3130, %v3117
  %3137 = vst.msk [vmem:[#allocation2 + $0x30] sm:$0xff] %vm3130, %v3119
  %3138 = vst.msk [vmem:[#allocation2 + $0x38] sm:$0xff] %vm3130, %v3121
  %3139 = vrot.lane.b32.xlu0 %v3090, 63
  %v3140 = vpop.permute.xlu0 %3139
  %3141 = vrot.lane.b32.xlu0 %v3091, 63
  %v3142 = vpop.permute.xlu0 %3141
  %3143 = vrot.lane.b32.xlu0 %v3092, 63
  %v3144 = vpop.permute.xlu0 %3143
  %3145 = vrot.lane.b32.xlu0 %v3093, 63
  %v3146 = vpop.permute.xlu0 %3145
  %3147 = vrot.lane.b32.xlu0 %v3094, 63
  %v3148 = vpop.permute.xlu0 %3147
  %3149 = vrot.lane.b32.xlu0 %v3095, 63
  %v3150 = vpop.permute.xlu0 %3149
  %3151 = vrot.lane.b32.xlu0 %v3096, 63
  %v3152 = vpop.permute.xlu0 %3151
  %3153 = vrot.lane.b32.xlu0 %v3097, 63
  %v3154 = vpop.permute.xlu0 %3153
  %vm3163 = vcmask 531968
  %3164 = vst.msk [vmem:[#allocation2] sm:$0xff] %vm3163, %v3140
  %3165 = vst.msk [vmem:[#allocation2 + $0x8] sm:$0xff] %vm3163, %v3142
  %3166 = vst.msk [vmem:[#allocation2 + $0x10] sm:$0xff] %vm3163, %v3144
  %3167 = vst.msk [vmem:[#allocation2 + $0x18] sm:$0xff] %vm3163, %v3146
  %3168 = vst.msk [vmem:[#allocation2 + $0x20] sm:$0xff] %vm3163, %v3148
  %3169 = vst.msk [vmem:[#allocation2 + $0x28] sm:$0xff] %vm3163, %v3150
  %3170 = vst.msk [vmem:[#allocation2 + $0x30] sm:$0xff] %vm3163, %v3152
  %3171 = vst.msk [vmem:[#allocation2 + $0x38] sm:$0xff] %vm3163, %v3154
  %v3172 = vmul.f32 %v1103, %v1728
  %v3173 = vmul.f32 %v1105, %v1729
  %v3174 = vmul.f32 %v1108, %v1730
  %v3175 = vmul.f32 %v1110, %v1731
  %v3176 = vmul.f32 %v1113, %v1732
  %v3177 = vmul.f32 %v1115, %v1733
  %v3178 = vmul.f32 %v1118, %v1734
  %v3179 = vmul.f32 %v1120, %v1735
  %v3180 = vadd.f32 %v3172, %v1792
  %v3181 = vadd.f32 %v3173, %v1793
  %v3182 = vadd.f32 %v3174, %v1794
  %v3183 = vadd.f32 %v3175, %v1795
  %v3184 = vadd.f32 %v3176, %v1796
  %v3185 = vadd.f32 %v3177, %v1797
  %v3186 = vadd.f32 %v3178, %v1798
  %v3187 = vadd.f32 %v3179, %v1799
  %v3188 = vmax.f32 %v3180, 0.0
  %v3189 = vmax.f32 %v3181, 0.0
  %v3190 = vmax.f32 %v3182, 0.0
  %v3191 = vmax.f32 %v3183, 0.0
  %v3192 = vmax.f32 %v3184, 0.0
  %v3193 = vmax.f32 %v3185, 0.0
  %v3194 = vmax.f32 %v3186, 0.0
  %v3195 = vmax.f32 %v3187, 0.0
  %3204 = vrot.lane.b32.xlu0 %v3188, 27
  %v3205 = vpop.permute.xlu0 %3204
  %3206 = vrot.lane.b32.xlu0 %v3189, 27
  %v3207 = vpop.permute.xlu0 %3206
  %3208 = vrot.lane.b32.xlu0 %v3190, 27
  %v3209 = vpop.permute.xlu0 %3208
  %3210 = vrot.lane.b32.xlu0 %v3191, 27
  %v3211 = vpop.permute.xlu0 %3210
  %3212 = vrot.lane.b32.xlu0 %v3192, 27
  %v3213 = vpop.permute.xlu0 %3212
  %3214 = vrot.lane.b32.xlu0 %v3193, 27
  %v3215 = vpop.permute.xlu0 %3214
  %3216 = vrot.lane.b32.xlu0 %v3194, 27
  %v3217 = vpop.permute.xlu0 %3216
  %3218 = vrot.lane.b32.xlu0 %v3195, 27
  %v3219 = vpop.permute.xlu0 %3218
  %vm3228 = vcmask 228568
  %3229 = vst.msk [vmem:[#allocation2] sm:$0xff] %vm3228, %v3205
  %3230 = vst.msk [vmem:[#allocation2 + $0x8] sm:$0xff] %vm3228, %v3207
  %3231 = vst.msk [vmem:[#allocation2 + $0x10] sm:$0xff] %vm3228, %v3209
  %3232 = vst.msk [vmem:[#allocation2 + $0x18] sm:$0xff] %vm3228, %v3211
  %3233 = vst.msk [vmem:[#allocation2 + $0x20] sm:$0xff] %vm3228, %v3213
  %3234 = vst.msk [vmem:[#allocation2 + $0x28] sm:$0xff] %vm3228, %v3215
  %3235 = vst.msk [vmem:[#allocation2 + $0x30] sm:$0xff] %vm3228, %v3217
  %3236 = vst.msk [vmem:[#allocation2 + $0x38] sm:$0xff] %vm3228, %v3219
  %3237 = vrot.lane.b32.xlu0 %v3188, 64
  %v3238 = vpop.permute.xlu0 %3237
  %3239 = vrot.lane.b32.xlu0 %v3189, 64
  %v3240 = vpop.permute.xlu0 %3239
  %3241 = vrot.lane.b32.xlu0 %v3190, 64
  %v3242 = vpop.permute.xlu0 %3241
  %3243 = vrot.lane.b32.xlu0 %v3191, 64
  %v3244 = vpop.permute.xlu0 %3243
  %3245 = vrot.lane.b32.xlu0 %v3192, 64
  %v3246 = vpop.permute.xlu0 %3245
  %3247 = vrot.lane.b32.xlu0 %v3193, 64
  %v3248 = vpop.permute.xlu0 %3247
  %3249 = vrot.lane.b32.xlu0 %v3194, 64
  %v3250 = vpop.permute.xlu0 %3249
  %3251 = vrot.lane.b32.xlu0 %v3195, 64
  %v3252 = vpop.permute.xlu0 %3251
  %vm3261 = vcmask 540168
  %3262 = vst.msk [vmem:[#allocation2] sm:$0xff] %vm3261, %v3238
  %3263 = vst.msk [vmem:[#allocation2 + $0x8] sm:$0xff] %vm3261, %v3240
  %3264 = vst.msk [vmem:[#allocation2 + $0x10] sm:$0xff] %vm3261, %v3242
  %3265 = vst.msk [vmem:[#allocation2 + $0x18] sm:$0xff] %vm3261, %v3244
  %3266 = vst.msk [vmem:[#allocation2 + $0x20] sm:$0xff] %vm3261, %v3246
  %3267 = vst.msk [vmem:[#allocation2 + $0x28] sm:$0xff] %vm3261, %v3248
  %3268 = vst.msk [vmem:[#allocation2 + $0x30] sm:$0xff] %vm3261, %v3250
  %3269 = vst.msk [vmem:[#allocation2 + $0x38] sm:$0xff] %vm3261, %v3252
  %v3270 = vmul.f32 %v1173, %v1728
  %v3271 = vmul.f32 %v1175, %v1729
  %v3272 = vmul.f32 %v1178, %v1730
  %v3273 = vmul.f32 %v1180, %v1731
  %v3274 = vmul.f32 %v1183, %v1732
  %v3275 = vmul.f32 %v1185, %v1733
  %v3276 = vmul.f32 %v1188, %v1734
  %v3277 = vmul.f32 %v1190, %v1735
  %v3278 = vadd.f32 %v3270, %v1792
  %v3279 = vadd.f32 %v3271, %v1793
  %v3280 = vadd.f32 %v3272, %v1794
  %v3281 = vadd.f32 %v3273, %v1795
  %v3282 = vadd.f32 %v3274, %v1796
  %v3283 = vadd.f32 %v3275, %v1797
  %v3284 = vadd.f32 %v3276, %v1798
  %v3285 = vadd.f32 %v3277, %v1799
  %v3286 = vmax.f32 %v3278, 0.0
  %v3287 = vmax.f32 %v3279, 0.0
  %v3288 = vmax.f32 %v3280, 0.0
  %v3289 = vmax.f32 %v3281, 0.0
  %v3290 = vmax.f32 %v3282, 0.0
  %v3291 = vmax.f32 %v3283, 0.0
  %v3292 = vmax.f32 %v3284, 0.0
  %v3293 = vmax.f32 %v3285, 0.0
  %3302 = vrot.lane.b32.xlu0 %v3286, 28
  %v3303 = vpop.permute.xlu0 %3302
  %3304 = vrot.lane.b32.xlu0 %v3287, 28
  %v3305 = vpop.permute.xlu0 %3304
  %3306 = vrot.lane.b32.xlu0 %v3288, 28
  %v3307 = vpop.permute.xlu0 %3306
  %3308 = vrot.lane.b32.xlu0 %v3289, 28
  %v3309 = vpop.permute.xlu0 %3308
  %3310 = vrot.lane.b32.xlu0 %v3290, 28
  %v3311 = vpop.permute.xlu0 %3310
  %3312 = vrot.lane.b32.xlu0 %v3291, 28
  %v3313 = vpop.permute.xlu0 %3312
  %3314 = vrot.lane.b32.xlu0 %v3292, 28
  %v3315 = vpop.permute.xlu0 %3314
  %3316 = vrot.lane.b32.xlu0 %v3293, 28
  %v3317 = vpop.permute.xlu0 %3316
  %vm3326 = vcmask 236768
  %3327 = vst.msk [vmem:[#allocation2] sm:$0xff] %vm3326, %v3303
  %3328 = vst.msk [vmem:[#allocation2 + $0x8] sm:$0xff] %vm3326, %v3305
  %3329 = vst.msk [vmem:[#allocation2 + $0x10] sm:$0xff] %vm3326, %v3307
  %3330 = vst.msk [vmem:[#allocation2 + $0x18] sm:$0xff] %vm3326, %v3309
  %3331 = vst.msk [vmem:[#allocation2 + $0x20] sm:$0xff] %vm3326, %v3311
  %3332 = vst.msk [vmem:[#allocation2 + $0x28] sm:$0xff] %vm3326, %v3313
  %3333 = vst.msk [vmem:[#allocation2 + $0x30] sm:$0xff] %vm3326, %v3315
  %3334 = vst.msk [vmem:[#allocation2 + $0x38] sm:$0xff] %vm3326, %v3317
  %3335 = vrot.lane.b32.xlu0 %v3286, 65
  %v3336 = vpop.permute.xlu0 %3335
  %3337 = vrot.lane.b32.xlu0 %v3287, 65
  %v3338 = vpop.permute.xlu0 %3337
  %3339 = vrot.lane.b32.xlu0 %v3288, 65
  %v3340 = vpop.permute.xlu0 %3339
  %3341 = vrot.lane.b32.xlu0 %v3289, 65
  %v3342 = vpop.permute.xlu0 %3341
  %3343 = vrot.lane.b32.xlu0 %v3290, 65
  %v3344 = vpop.permute.xlu0 %3343
  %3345 = vrot.lane.b32.xlu0 %v3291, 65
  %v3346 = vpop.permute.xlu0 %3345
  %3347 = vrot.lane.b32.xlu0 %v3292, 65
  %v3348 = vpop.permute.xlu0 %3347
  %3349 = vrot.lane.b32.xlu0 %v3293, 65
  %v3350 = vpop.permute.xlu0 %3349
  %vm3359 = vcmask 548368
  %3360 = vst.msk [vmem:[#allocation2] sm:$0xff] %vm3359, %v3336
  %3361 = vst.msk [vmem:[#allocation2 + $0x8] sm:$0xff] %vm3359, %v3338
  %3362 = vst.msk [vmem:[#allocation2 + $0x10] sm:$0xff] %vm3359, %v3340
  %3363 = vst.msk [vmem:[#allocation2 + $0x18] sm:$0xff] %vm3359, %v3342
  %3364 = vst.msk [vmem:[#allocation2 + $0x20] sm:$0xff] %vm3359, %v3344
  %3365 = vst.msk [vmem:[#allocation2 + $0x28] sm:$0xff] %vm3359, %v3346
  %3366 = vst.msk [vmem:[#allocation2 + $0x30] sm:$0xff] %vm3359, %v3348
  %3367 = vst.msk [vmem:[#allocation2 + $0x38] sm:$0xff] %vm3359, %v3350
  %v3368 = vld [vmem:[%s5] sm:$0xff]
  %v3369 = vld [vmem:[%s5 + $0x8] sm:$0xff]
  %v3370 = vld [vmem:[%s5 + $0x10] sm:$0xff]
  %v3371 = vld [vmem:[%s5 + $0x18] sm:$0xff]
  %v3372 = vld [vmem:[%s6] sm:$0xff]
  %v3373 = vld [vmem:[%s6 + $0x8] sm:$0xff]
  %v3374 = vld [vmem:[%s6 + $0x10] sm:$0xff]
  %v3375 = vld [vmem:[%s6 + $0x18] sm:$0xff]
  %v3376 = vld [vmem:[%s7] sm:$0xff]
  %v3377 = vld [vmem:[%s7 + $0x8] sm:$0xff]
  %v3378 = vld [vmem:[%s7 + $0x10] sm:$0xff]
  %v3379 = vld [vmem:[%s7 + $0x18] sm:$0xff]
  %v3380 = vld [vmem:[%s7 + $0x20] sm:$0xff]
  %v3381 = vld [vmem:[%s7 + $0x28] sm:$0xff]
  %v3382 = vld [vmem:[%s7 + $0x30] sm:$0xff]
  %v3383 = vld [vmem:[%s7 + $0x38] sm:$0x3f]
  %v3384 = vld [vmem:[%s8] sm:$0x3]
  %v3385 = vld [vmem:[#allocation2] sm:$0xff]
  %v3386 = vld [vmem:[#allocation2 + $0x8] sm:$0xff]
  %v3387 = vld [vmem:[#allocation2 + $0x10] sm:$0xff]
  %v3388 = vld [vmem:[#allocation2 + $0x18] sm:$0xff]
  %v3389 = vld [vmem:[#allocation2 + $0x20] sm:$0xff]
  %v3390 = vld [vmem:[#allocation2 + $0x28] sm:$0xff]
  %v3391 = vld [vmem:[#allocation2 + $0x30] sm:$0xff]
  %v3392 = vld [vmem:[#allocation2 + $0x38] sm:$0xff]
  %v3393 = vpack.c.bf16 %v3386, %v3385
  %v3394 = vpack.c.bf16 %v3388, %v3387
  %v3395 = vpack.c.bf16 %v3390, %v3389
  %v3396 = vpack.c.bf16 %v3392, %v3391
  %v3397 = vld [vmem:[%s4] sm:$0xf]
  %v3398 = vld [vmem:[%s4 + $0x4] sm:$0xf]
  %v3399 = vld [vmem:[%s4 + $0x8] sm:$0xf]
  %v3400 = vld [vmem:[%s4 + $0xc] sm:$0xf]
  %s3401 = scalar_lea.vmem %s4, 16
  %v3402 = vld [vmem:[%s3401] sm:$0xf]
  %v3403 = vld [vmem:[%s3401 + $0x4] sm:$0xf]
  %v3404 = vld [vmem:[%s3401 + $0x8] sm:$0xf]
  %v3405 = vld [vmem:[%s3401 + $0xc] sm:$0xf]
  %v3410 = vunpack.c.l.b16 %v3402
  %v3411 = vunpack.c.l.b16 %v3403
  %v3412 = vunpack.c.l.b16 %v3404
  %v3413 = vunpack.c.l.b16 %v3405
  %v3414 = vpack.c.b16 %v3411, %v3410
  %v3415 = vpack.c.b16 %v3413, %v3412
  %3420 = vrot.lane.b32.xlu0 %v3393, 127
  %v3421 = vpop.permute.xlu0 %3420
  %3422 = vrot.lane.b32.xlu0 %v3394, 127
  %v3423 = vpop.permute.xlu0 %3422
  %3424 = vrot.lane.b32.xlu0 %v3395, 127
  %v3425 = vpop.permute.xlu0 %3424
  %3426 = vrot.lane.b32.xlu0 %v3396, 127
  %v3427 = vpop.permute.xlu0 %3426
  %vm3432 = vcmask 523264
  %v3434 = vsel %vm3432, %v3414, 0
  %v3437 = vsel %vm3432, %v3415, 0
  %3439 = vmatpush.bf16.msra.mxu0 0
  %3440 = vmatpush.bf16.msra.mxu0 0
  %3441 = vmatpush.bf16.msra.mxu0 0
  %3442 = vmatpush.bf16.msra.mxu0 0
  %3443 = vmatpush.bf16.msra.mxu0 %v3427
  %3444 = vmatpush.bf16.msra.mxu0 %v3425
  %3445 = vmatpush.bf16.msra.mxu0 %v3423
  %3446 = vmatpush.bf16.msra.mxu0 %v3421
  %3447 = vmatmul.bf16.gmra.mxu0 %v3434
  %v3448 = vpop.f32.mrf.mxu0
  %v3449 = vadd.f32 0.0, %v3448
  %v3450 = vpop.f32.mrf.mxu0
  %v3451 = vadd.f32 0.0, %v3450
  %3452 = vmatmul.bf16.gmra.mxu0 %v3437
  %v3453 = vpop.f32.mrf.mxu0
  %v3454 = vadd.f32 0.0, %v3453
  %v3455 = vpop.f32.mrf.mxu0
  %v3456 = vadd.f32 0.0, %v3455
  %3457 = vdwg.mxu0
  %v3462 = vunpack.c.l.b16 %v3397
  %v3463 = vunpack.c.l.b16 %v3398
  %v3464 = vunpack.c.l.b16 %v3399
  %v3465 = vunpack.c.l.b16 %v3400
  %v3466 = vpack.c.b16 %v3463, %v3462
  %v3467 = vpack.c.b16 %v3465, %v3464
  %v3469 = vsel %vm3432, %v3466, 0
  %v3472 = vsel %vm3432, %v3467, 0
  %3474 = vmatpush.bf16.msra.mxu0 0
  %3475 = vmatpush.bf16.msra.mxu0 0
  %3476 = vmatpush.bf16.msra.mxu0 0
  %3477 = vmatpush.bf16.msra.mxu0 0
  %3478 = vmatpush.bf16.msra.mxu0 %v3396
  %3479 = vmatpush.bf16.msra.mxu0 %v3395
  %3480 = vmatpush.bf16.msra.mxu0 %v3394
  %3481 = vmatpush.bf16.msra.mxu0 %v3393
  %3482 = vmatmul.bf16.gmra.mxu0 %v3469
  %v3483 = vpop.f32.mrf.mxu0
  %v3484 = vadd.f32 %v3449, %v3483
  %v3485 = vpop.f32.mrf.mxu0
  %v3486 = vadd.f32 %v3451, %v3485
  %3487 = vmatmul.bf16.gmra.mxu0 %v3472
  %v3488 = vpop.f32.mrf.mxu0
  %v3489 = vadd.f32 %v3454, %v3488
  %v3490 = vpop.f32.mrf.mxu0
  %v3491 = vadd.f32 %v3456, %v3490
  %3492 = vdwg.mxu0
  %s3493 = scalar_lea.vmem %s4, 32
  %v3494 = vld [vmem:[%s3493] sm:$0xf]
  %v3495 = vld [vmem:[%s3493 + $0x4] sm:$0xf]
  %v3496 = vld [vmem:[%s3493 + $0x8] sm:$0xf]
  %v3497 = vld [vmem:[%s3493 + $0xc] sm:$0xf]
  %v3502 = vunpack.c.l.b16 %v3494
  %v3503 = vunpack.c.l.b16 %v3495
  %v3504 = vunpack.c.l.b16 %v3496
  %v3505 = vunpack.c.l.b16 %v3497
  %v3506 = vpack.c.b16 %v3503, %v3502
  %v3507 = vpack.c.b16 %v3505, %v3504
  %3508 = vrot.lane.b32.xlu0 %v3393, 122
  %v3509 = vpop.permute.xlu0 %3508
  %3510 = vrot.lane.b32.xlu0 %v3394, 122
  %v3511 = vpop.permute.xlu0 %3510
  %3512 = vrot.lane.b32.xlu0 %v3395, 122
  %v3513 = vpop.permute.xlu0 %3512
  %3514 = vrot.lane.b32.xlu0 %v3396, 122
  %v3515 = vpop.permute.xlu0 %3514
  %v3521 = vsel %vm3432, %v3506, 0
  %v3524 = vsel %vm3432, %v3507, 0
  %3526 = vmatpush.bf16.msra.mxu0 0
  %3527 = vmatpush.bf16.msra.mxu0 0
  %3528 = vmatpush.bf16.msra.mxu0 0
  %3529 = vmatpush.bf16.msra.mxu0 0
  %3530 = vmatpush.bf16.msra.mxu0 %v3515
  %3531 = vmatpush.bf16.msra.mxu0 %v3513
  %3532 = vmatpush.bf16.msra.mxu0 %v3511
  %3533 = vmatpush.bf16.msra.mxu0 %v3509
  %3534 = vmatmul.bf16.gmra.mxu0 %v3521
  %v3535 = vpop.f32.mrf.mxu0
  %v3536 = vadd.f32 0.0, %v3535
  %v3537 = vpop.f32.mrf.mxu0
  %v3538 = vadd.f32 0.0, %v3537
  %3539 = vmatmul.bf16.gmra.mxu0 %v3524
  %v3540 = vpop.f32.mrf.mxu0
  %v3541 = vadd.f32 0.0, %v3540
  %v3542 = vpop.f32.mrf.mxu0
  %v3543 = vadd.f32 0.0, %v3542
  %3544 = vdwg.mxu0
  %v3545 = vadd.f32 %v3484, %v3536
  %v3546 = vadd.f32 %v3486, %v3538
  %v3547 = vadd.f32 %v3489, %v3541
  %v3548 = vadd.f32 %v3491, %v3543
  %s3549 = scalar_lea.vmem %s4, 48
  %v3550 = vld [vmem:[%s3549] sm:$0xf]
  %v3551 = vld [vmem:[%s3549 + $0x4] sm:$0xf]
  %v3552 = vld [vmem:[%s3549 + $0x8] sm:$0xf]
  %v3553 = vld [vmem:[%s3549 + $0xc] sm:$0xf]
  %v3558 = vunpack.c.l.b16 %v3550
  %v3559 = vunpack.c.l.b16 %v3551
  %v3560 = vunpack.c.l.b16 %v3552
  %v3561 = vunpack.c.l.b16 %v3553
  %v3562 = vpack.c.b16 %v3559, %v3558
  %v3563 = vpack.c.b16 %v3561, %v3560
  %3564 = vrot.lane.b32.xlu0 %v3393, 121
  %v3565 = vpop.permute.xlu0 %3564
  %3566 = vrot.lane.b32.xlu0 %v3394, 121
  %v3567 = vpop.permute.xlu0 %3566
  %3568 = vrot.lane.b32.xlu0 %v3395, 121
  %v3569 = vpop.permute.xlu0 %3568
  %3570 = vrot.lane.b32.xlu0 %v3396, 121
  %v3571 = vpop.permute.xlu0 %3570
  %v3577 = vsel %vm3432, %v3562, 0
  %v3580 = vsel %vm3432, %v3563, 0
  %3582 = vmatpush.bf16.msra.mxu0 0
  %3583 = vmatpush.bf16.msra.mxu0 0
  %3584 = vmatpush.bf16.msra.mxu0 0
  %3585 = vmatpush.bf16.msra.mxu0 0
  %3586 = vmatpush.bf16.msra.mxu0 %v3571
  %3587 = vmatpush.bf16.msra.mxu0 %v3569
  %3588 = vmatpush.bf16.msra.mxu0 %v3567
  %3589 = vmatpush.bf16.msra.mxu0 %v3565
  %3590 = vmatmul.bf16.gmra.mxu0 %v3577
  %v3591 = vpop.f32.mrf.mxu0
  %v3592 = vadd.f32 0.0, %v3591
  %v3593 = vpop.f32.mrf.mxu0
  %v3594 = vadd.f32 0.0, %v3593
  %3595 = vmatmul.bf16.gmra.mxu0 %v3580
  %v3596 = vpop.f32.mrf.mxu0
  %v3597 = vadd.f32 0.0, %v3596
  %v3598 = vpop.f32.mrf.mxu0
  %v3599 = vadd.f32 0.0, %v3598
  %3600 = vdwg.mxu0
  %v3601 = vadd.f32 %v3545, %v3592
  %v3602 = vadd.f32 %v3546, %v3594
  %v3603 = vadd.f32 %v3547, %v3597
  %v3604 = vadd.f32 %v3548, %v3599
  %v3605 = vmul.f32 %v3601, %v3601
  %v3606 = vmul.f32 %v3602, %v3602
  %v3607 = vmul.f32 %v3603, %v3603
  %v3608 = vmul.f32 %v3604, %v3604
  %s3609 = scalar_lea.vmem %s4, 64
  %v3610 = vld [vmem:[%s3609] sm:$0xf]
  %v3611 = vld [vmem:[%s3609 + $0x4] sm:$0xf]
  %v3612 = vld [vmem:[%s3609 + $0x8] sm:$0xf]
  %v3613 = vld [vmem:[%s3609 + $0xc] sm:$0xf]
  %s3614 = scalar_lea.vmem %s4, 80
  %v3615 = vld [vmem:[%s3614] sm:$0xf]
  %v3616 = vld [vmem:[%s3614 + $0x4] sm:$0xf]
  %v3617 = vld [vmem:[%s3614 + $0x8] sm:$0xf]
  %v3618 = vld [vmem:[%s3614 + $0xc] sm:$0xf]
  %v3623 = vunpack.c.l.b16 %v3615
  %v3624 = vunpack.c.l.b16 %v3616
  %v3625 = vunpack.c.l.b16 %v3617
  %v3626 = vunpack.c.l.b16 %v3618
  %v3627 = vpack.c.b16 %v3624, %v3623
  %v3628 = vpack.c.b16 %v3626, %v3625
  %3629 = vrot.lane.b32.xlu0 %v3393, 126
  %v3630 = vpop.permute.xlu0 %3629
  %3631 = vrot.lane.b32.xlu0 %v3394, 126
  %v3632 = vpop.permute.xlu0 %3631
  %3633 = vrot.lane.b32.xlu0 %v3395, 126
  %v3634 = vpop.permute.xlu0 %3633
  %3635 = vrot.lane.b32.xlu0 %v3396, 126
  %v3636 = vpop.permute.xlu0 %3635
  %v3642 = vsel %vm3432, %v3627, 0
  %v3645 = vsel %vm3432, %v3628, 0
  %3647 = vmatpush.bf16.msra.mxu0 0
  %3648 = vmatpush.bf16.msra.mxu0 0
  %3649 = vmatpush.bf16.msra.mxu0 0
  %3650 = vmatpush.bf16.msra.mxu0 0
  %3651 = vmatpush.bf16.msra.mxu0 %v3636
  %3652 = vmatpush.bf16.msra.mxu0 %v3634
  %3653 = vmatpush.bf16.msra.mxu0 %v3632
  %3654 = vmatpush.bf16.msra.mxu0 %v3630
  %3655 = vmatmul.bf16.gmra.mxu0 %v3642
  %v3656 = vpop.f32.mrf.mxu0
  %v3657 = vadd.f32 0.0, %v3656
  %v3658 = vpop.f32.mrf.mxu0
  %v3659 = vadd.f32 0.0, %v3658
  %3660 = vmatmul.bf16.gmra.mxu0 %v3645
  %v3661 = vpop.f32.mrf.mxu0
  %v3662 = vadd.f32 0.0, %v3661
  %v3663 = vpop.f32.mrf.mxu0
  %v3664 = vadd.f32 0.0, %v3663
  %3665 = vdwg.mxu0
  %v3670 = vunpack.c.l.b16 %v3610
  %v3671 = vunpack.c.l.b16 %v3611
  %v3672 = vunpack.c.l.b16 %v3612
  %v3673 = vunpack.c.l.b16 %v3613
  %v3674 = vpack.c.b16 %v3671, %v3670
  %v3675 = vpack.c.b16 %v3673, %v3672
  %v3677 = vsel %vm3432, %v3674, 0
  %v3680 = vsel %vm3432, %v3675, 0
  %3682 = vmatpush.bf16.msra.mxu0 0
  %3683 = vmatpush.bf16.msra.mxu0 0
  %3684 = vmatpush.bf16.msra.mxu0 0
  %3685 = vmatpush.bf16.msra.mxu0 0
  %3686 = vmatpush.bf16.msra.mxu0 %v3427
  %3687 = vmatpush.bf16.msra.mxu0 %v3425
  %3688 = vmatpush.bf16.msra.mxu0 %v3423
  %3689 = vmatpush.bf16.msra.mxu0 %v3421
  %3690 = vmatmul.bf16.gmra.mxu0 %v3677
  %v3691 = vpop.f32.mrf.mxu0
  %v3692 = vadd.f32 %v3657, %v3691
  %v3693 = vpop.f32.mrf.mxu0
  %v3694 = vadd.f32 %v3659, %v3693
  %3695 = vmatmul.bf16.gmra.mxu0 %v3680
  %v3696 = vpop.f32.mrf.mxu0
  %v3697 = vadd.f32 %v3662, %v3696
  %v3698 = vpop.f32.mrf.mxu0
  %v3699 = vadd.f32 %v3664, %v3698
  %3700 = vdwg.mxu0
  %s3701 = scalar_lea.vmem %s4, 96
  %v3702 = vld [vmem:[%s3701] sm:$0xf]
  %v3703 = vld [vmem:[%s3701 + $0x4] sm:$0xf]
  %v3704 = vld [vmem:[%s3701 + $0x8] sm:$0xf]
  %v3705 = vld [vmem:[%s3701 + $0xc] sm:$0xf]
  %v3710 = vunpack.c.l.b16 %v3702
  %v3711 = vunpack.c.l.b16 %v3703
  %v3712 = vunpack.c.l.b16 %v3704
  %v3713 = vunpack.c.l.b16 %v3705
  %v3714 = vpack.c.b16 %v3711, %v3710
  %v3715 = vpack.c.b16 %v3713, %v3712
  %v3717 = vsel %vm3432, %v3714, 0
  %v3720 = vsel %vm3432, %v3715, 0
  %3722 = vmatpush.bf16.msra.mxu0 0
  %3723 = vmatpush.bf16.msra.mxu0 0
  %3724 = vmatpush.bf16.msra.mxu0 0
  %3725 = vmatpush.bf16.msra.mxu0 0
  %3726 = vmatpush.bf16.msra.mxu0 %v3571
  %3727 = vmatpush.bf16.msra.mxu0 %v3569
  %3728 = vmatpush.bf16.msra.mxu0 %v3567
  %3729 = vmatpush.bf16.msra.mxu0 %v3565
  %3730 = vmatmul.bf16.gmra.mxu0 %v3717
  %v3731 = vpop.f32.mrf.mxu0
  %v3732 = vadd.f32 0.0, %v3731
  %v3733 = vpop.f32.mrf.mxu0
  %v3734 = vadd.f32 0.0, %v3733
  %3735 = vmatmul.bf16.gmra.mxu0 %v3720
  %v3736 = vpop.f32.mrf.mxu0
  %v3737 = vadd.f32 0.0, %v3736
  %v3738 = vpop.f32.mrf.mxu0
  %v3739 = vadd.f32 0.0, %v3738
  %3740 = vdwg.mxu0
  %v3741 = vadd.f32 %v3692, %v3732
  %v3742 = vadd.f32 %v3694, %v3734
  %v3743 = vadd.f32 %v3697, %v3737
  %v3744 = vadd.f32 %v3699, %v3739
  %s3745 = scalar_lea.vmem %s4, 112
  %v3746 = vld [vmem:[%s3745] sm:$0xf]
  %v3747 = vld [vmem:[%s3745 + $0x4] sm:$0xf]
  %v3748 = vld [vmem:[%s3745 + $0x8] sm:$0xf]
  %v3749 = vld [vmem:[%s3745 + $0xc] sm:$0xf]
  %v3754 = vunpack.c.l.b16 %v3746
  %v3755 = vunpack.c.l.b16 %v3747
  %v3756 = vunpack.c.l.b16 %v3748
  %v3757 = vunpack.c.l.b16 %v3749
  %v3758 = vpack.c.b16 %v3755, %v3754
  %v3759 = vpack.c.b16 %v3757, %v3756
  %3760 = vrot.lane.b32.xlu0 %v3393, 120
  %v3761 = vpop.permute.xlu0 %3760
  %3762 = vrot.lane.b32.xlu0 %v3394, 120
  %v3763 = vpop.permute.xlu0 %3762
  %3764 = vrot.lane.b32.xlu0 %v3395, 120
  %v3765 = vpop.permute.xlu0 %3764
  %3766 = vrot.lane.b32.xlu0 %v3396, 120
  %v3767 = vpop.permute.xlu0 %3766
  %v3773 = vsel %vm3432, %v3758, 0
  %v3776 = vsel %vm3432, %v3759, 0
  %3778 = vmatpush.bf16.msra.mxu0 0
  %3779 = vmatpush.bf16.msra.mxu0 0
  %3780 = vmatpush.bf16.msra.mxu0 0
  %3781 = vmatpush.bf16.msra.mxu0 0
  %3782 = vmatpush.bf16.msra.mxu0 %v3767
  %3783 = vmatpush.bf16.msra.mxu0 %v3765
  %3784 = vmatpush.bf16.msra.mxu0 %v3763
  %3785 = vmatpush.bf16.msra.mxu0 %v3761
  %3786 = vmatmul.bf16.gmra.mxu0 %v3773
  %v3787 = vpop.f32.mrf.mxu0
  %v3788 = vadd.f32 0.0, %v3787
  %v3789 = vpop.f32.mrf.mxu0
  %v3790 = vadd.f32 0.0, %v3789
  %3791 = vmatmul.bf16.gmra.mxu0 %v3776
  %v3792 = vpop.f32.mrf.mxu0
  %v3793 = vadd.f32 0.0, %v3792
  %v3794 = vpop.f32.mrf.mxu0
  %v3795 = vadd.f32 0.0, %v3794
  %3796 = vdwg.mxu0
  %v3797 = vadd.f32 %v3741, %v3788
  %v3798 = vadd.f32 %v3742, %v3790
  %v3799 = vadd.f32 %v3743, %v3793
  %v3800 = vadd.f32 %v3744, %v3795
  %vm3801 = vcmask 506880
  %v3803 = vsel %vm3801, %v3797, 0
  %v3806 = vsel %vm3801, %v3798, 0
  %v3809 = vsel %vm3801, %v3799, 0
  %v3812 = vsel %vm3801, %v3800, 0
  %vm3814 = vcmask 1045504
  %v3816 = vsel %vm3814, %v3383, 0
  %3818 = vmatpush.msra.mxu0 0.0
  %3819 = vmatpush.msra.mxu0 0.0
  %3820 = vmatpush.msra.mxu0 0.0
  %3821 = vmatpush.msra.mxu0 0.0
  %3822 = vmatpush.msra.mxu0 0.0
  %3823 = vmatpush.msra.mxu0 0.0
  %3824 = vmatpush.msra.mxu0 0.0
  %3825 = vmatpush.msra.mxu0 0.0
  %3826 = vmatpush.msra.mxu0 %v3816
  %3827 = vmatpush.msra.mxu0 %v3382
  %3828 = vmatpush.msra.mxu0 %v3381
  %3829 = vmatpush.msra.mxu0 %v3380
  %3830 = vmatpush.msra.mxu0 %v3379
  %3831 = vmatpush.msra.mxu0 %v3378
  %3832 = vmatpush.msra.mxu0 %v3377
  %3833 = vmatpush.msra.mxu0 %v3376
  %3834 = vmatmul.f32.gmra.mxu0 %v3803
  %v3835 = vpop.f32.mrf.mxu0
  %v3836 = vadd.f32 0.0, %v3835
  %3837 = vmatmul.f32.gmra.mxu0 %v3806
  %v3838 = vpop.f32.mrf.mxu0
  %v3839 = vadd.f32 0.0, %v3838
  %3840 = vmatmul.f32.gmra.mxu0 %v3809
  %v3841 = vpop.f32.mrf.mxu0
  %v3842 = vadd.f32 0.0, %v3841
  %3843 = vmatmul.f32.gmra.mxu0 %v3812
  %v3844 = vpop.f32.mrf.mxu0
  %v3845 = vadd.f32 0.0, %v3844
  %3846 = vdwg.mxu0
  %v3847 = vmul.f32 %v3797, %v3797
  %v3848 = vmul.f32 %v3798, %v3798
  %v3849 = vmul.f32 %v3799, %v3799
  %v3850 = vmul.f32 %v3800, %v3800
  %v3852 = vsel %vm3801, %v3847, 0
  %v3855 = vsel %vm3801, %v3848, 0
  %v3858 = vsel %vm3801, %v3849, 0
  %v3861 = vsel %vm3801, %v3850, 0
  %3863 = vmatpush.msra.mxu0 0.0
  %3864 = vmatpush.msra.mxu0 0.0
  %3865 = vmatpush.msra.mxu0 0.0
  %3866 = vmatpush.msra.mxu0 0.0
  %3867 = vmatpush.msra.mxu0 0.0
  %3868 = vmatpush.msra.mxu0 0.0
  %3869 = vmatpush.msra.mxu0 0.0
  %3870 = vmatpush.msra.mxu0 0.0
  %3871 = vmatpush.msra.mxu0 %v3816
  %3872 = vmatpush.msra.mxu0 %v3382
  %3873 = vmatpush.msra.mxu0 %v3381
  %3874 = vmatpush.msra.mxu0 %v3380
  %3875 = vmatpush.msra.mxu0 %v3379
  %3876 = vmatpush.msra.mxu0 %v3378
  %3877 = vmatpush.msra.mxu0 %v3377
  %3878 = vmatpush.msra.mxu0 %v3376
  %3879 = vmatmul.f32.gmra.mxu0 %v3852
  %v3880 = vpop.f32.mrf.mxu0
  %v3881 = vadd.f32 0.0, %v3880
  %3882 = vmatmul.f32.gmra.mxu0 %v3855
  %v3883 = vpop.f32.mrf.mxu0
  %v3884 = vadd.f32 0.0, %v3883
  %3885 = vmatmul.f32.gmra.mxu0 %v3858
  %v3886 = vpop.f32.mrf.mxu0
  %v3887 = vadd.f32 0.0, %v3886
  %3888 = vmatmul.f32.gmra.mxu0 %v3861
  %v3889 = vpop.f32.mrf.mxu0
  %v3890 = vadd.f32 0.0, %v3889
  %3891 = vdwg.mxu0
  %v3893 = vsel %vm3801, %v3601, 0
  %v3896 = vsel %vm3801, %v3602, 0
  %v3899 = vsel %vm3801, %v3603, 0
  %v3902 = vsel %vm3801, %v3604, 0
  %3904 = vmatpush.msra.mxu0 0.0
  %3905 = vmatpush.msra.mxu0 0.0
  %3906 = vmatpush.msra.mxu0 0.0
  %3907 = vmatpush.msra.mxu0 0.0
  %3908 = vmatpush.msra.mxu0 0.0
  %3909 = vmatpush.msra.mxu0 0.0
  %3910 = vmatpush.msra.mxu0 0.0
  %3911 = vmatpush.msra.mxu0 0.0
  %3912 = vmatpush.msra.mxu0 %v3816
  %3913 = vmatpush.msra.mxu0 %v3382
  %3914 = vmatpush.msra.mxu0 %v3381
  %3915 = vmatpush.msra.mxu0 %v3380
  %3916 = vmatpush.msra.mxu0 %v3379
  %3917 = vmatpush.msra.mxu0 %v3378
  %3918 = vmatpush.msra.mxu0 %v3377
  %3919 = vmatpush.msra.mxu0 %v3376
  %3920 = vmatmul.f32.gmra.mxu0 %v3893
  %v3921 = vpop.f32.mrf.mxu0
  %v3922 = vadd.f32 %v3836, %v3921
  %3923 = vmatmul.f32.gmra.mxu0 %v3896
  %v3924 = vpop.f32.mrf.mxu0
  %v3925 = vadd.f32 %v3839, %v3924
  %3926 = vmatmul.f32.gmra.mxu0 %v3899
  %v3927 = vpop.f32.mrf.mxu0
  %v3928 = vadd.f32 %v3842, %v3927
  %3929 = vmatmul.f32.gmra.mxu0 %v3902
  %v3930 = vpop.f32.mrf.mxu0
  %v3931 = vadd.f32 %v3845, %v3930
  %3932 = vdwg.mxu0
  %v3934 = vsel %vm3801, %v3605, 0
  %v3937 = vsel %vm3801, %v3606, 0
  %v3940 = vsel %vm3801, %v3607, 0
  %v3943 = vsel %vm3801, %v3608, 0
  %3945 = vmatpush.msra.mxu0 0.0
  %3946 = vmatpush.msra.mxu0 0.0
  %3947 = vmatpush.msra.mxu0 0.0
  %3948 = vmatpush.msra.mxu0 0.0
  %3949 = vmatpush.msra.mxu0 0.0
  %3950 = vmatpush.msra.mxu0 0.0
  %3951 = vmatpush.msra.mxu0 0.0
  %3952 = vmatpush.msra.mxu0 0.0
  %3953 = vmatpush.msra.mxu0 %v3816
  %3954 = vmatpush.msra.mxu0 %v3382
  %3955 = vmatpush.msra.mxu0 %v3381
  %3956 = vmatpush.msra.mxu0 %v3380
  %3957 = vmatpush.msra.mxu0 %v3379
  %3958 = vmatpush.msra.mxu0 %v3378
  %3959 = vmatpush.msra.mxu0 %v3377
  %3960 = vmatpush.msra.mxu0 %v3376
  %3961 = vmatmul.f32.gmra.mxu0 %v3934
  %v3962 = vpop.f32.mrf.mxu0
  %v3963 = vadd.f32 %v3881, %v3962
  %3964 = vmatmul.f32.gmra.mxu0 %v3937
  %v3965 = vpop.f32.mrf.mxu0
  %v3966 = vadd.f32 %v3884, %v3965
  %3967 = vmatmul.f32.gmra.mxu0 %v3940
  %v3968 = vpop.f32.mrf.mxu0
  %v3969 = vadd.f32 %v3887, %v3968
  %3970 = vmatmul.f32.gmra.mxu0 %v3943
  %v3971 = vpop.f32.mrf.mxu0
  %v3972 = vadd.f32 %v3890, %v3971
  %3973 = vdwg.mxu0
  %s3974 = scalar_lea.vmem %s4, 128
  %v3975 = vld [vmem:[%s3974] sm:$0xf]
  %v3976 = vld [vmem:[%s3974 + $0x4] sm:$0xf]
  %v3977 = vld [vmem:[%s3974 + $0x8] sm:$0xf]
  %v3978 = vld [vmem:[%s3974 + $0xc] sm:$0xf]
  %s3979 = scalar_lea.vmem %s4, 144
  %v3980 = vld [vmem:[%s3979] sm:$0xf]
  %v3981 = vld [vmem:[%s3979 + $0x4] sm:$0xf]
  %v3982 = vld [vmem:[%s3979 + $0x8] sm:$0xf]
  %v3983 = vld [vmem:[%s3979 + $0xc] sm:$0xf]
  %v3988 = vunpack.c.l.b16 %v3980
  %v3989 = vunpack.c.l.b16 %v3981
  %v3990 = vunpack.c.l.b16 %v3982
  %v3991 = vunpack.c.l.b16 %v3983
  %v3992 = vpack.c.b16 %v3989, %v3988
  %v3993 = vpack.c.b16 %v3991, %v3990
  %v3995 = vsel %vm3432, %v3992, 0
  %v3998 = vsel %vm3432, %v3993, 0
  %4000 = vmatpush.bf16.msra.mxu0 0
  %4001 = vmatpush.bf16.msra.mxu0 0
  %4002 = vmatpush.bf16.msra.mxu0 0
  %4003 = vmatpush.bf16.msra.mxu0 0
  %4004 = vmatpush.bf16.msra.mxu0 %v3571
  %4005 = vmatpush.bf16.msra.mxu0 %v3569
  %4006 = vmatpush.bf16.msra.mxu0 %v3567
  %4007 = vmatpush.bf16.msra.mxu0 %v3565
  %4008 = vmatmul.bf16.gmra.mxu0 %v3995
  %v4009 = vpop.f32.mrf.mxu0
  %v4010 = vadd.f32 0.0, %v4009
  %v4011 = vpop.f32.mrf.mxu0
  %v4012 = vadd.f32 0.0, %v4011
  %4013 = vmatmul.bf16.gmra.mxu0 %v3998
  %v4014 = vpop.f32.mrf.mxu0
  %v4015 = vadd.f32 0.0, %v4014
  %v4016 = vpop.f32.mrf.mxu0
  %v4017 = vadd.f32 0.0, %v4016
  %4018 = vdwg.mxu0
  %v4023 = vunpack.c.l.b16 %v3975
  %v4024 = vunpack.c.l.b16 %v3976
  %v4025 = vunpack.c.l.b16 %v3977
  %v4026 = vunpack.c.l.b16 %v3978
  %v4027 = vpack.c.b16 %v4024, %v4023
  %v4028 = vpack.c.b16 %v4026, %v4025
  %v4030 = vsel %vm3432, %v4027, 0
  %v4033 = vsel %vm3432, %v4028, 0
  %4035 = vmatpush.bf16.msra.mxu0 0
  %4036 = vmatpush.bf16.msra.mxu0 0
  %4037 = vmatpush.bf16.msra.mxu0 0
  %4038 = vmatpush.bf16.msra.mxu0 0
  %4039 = vmatpush.bf16.msra.mxu0 %v3515
  %4040 = vmatpush.bf16.msra.mxu0 %v3513
  %4041 = vmatpush.bf16.msra.mxu0 %v3511
  %4042 = vmatpush.bf16.msra.mxu0 %v3509
  %4043 = vmatmul.bf16.gmra.mxu0 %v4030
  %v4044 = vpop.f32.mrf.mxu0
  %v4045 = vadd.f32 %v4010, %v4044
  %v4046 = vpop.f32.mrf.mxu0
  %v4047 = vadd.f32 %v4012, %v4046
  %4048 = vmatmul.bf16.gmra.mxu0 %v4033
  %v4049 = vpop.f32.mrf.mxu0
  %v4050 = vadd.f32 %v4015, %v4049
  %v4051 = vpop.f32.mrf.mxu0
  %v4052 = vadd.f32 %v4017, %v4051
  %4053 = vdwg.mxu0
  %s4054 = scalar_lea.vmem %s4, 160
  %v4055 = vld [vmem:[%s4054] sm:$0xf]
  %v4056 = vld [vmem:[%s4054 + $0x4] sm:$0xf]
  %v4057 = vld [vmem:[%s4054 + $0x8] sm:$0xf]
  %v4058 = vld [vmem:[%s4054 + $0xc] sm:$0xf]
  %v4063 = vunpack.c.l.b16 %v4055
  %v4064 = vunpack.c.l.b16 %v4056
  %v4065 = vunpack.c.l.b16 %v4057
  %v4066 = vunpack.c.l.b16 %v4058
  %v4067 = vpack.c.b16 %v4064, %v4063
  %v4068 = vpack.c.b16 %v4066, %v4065
  %4069 = vrot.lane.b32.xlu0 %v3393, 116
  %v4070 = vpop.permute.xlu0 %4069
  %4071 = vrot.lane.b32.xlu0 %v3394, 116
  %v4072 = vpop.permute.xlu0 %4071
  %4073 = vrot.lane.b32.xlu0 %v3395, 116
  %v4074 = vpop.permute.xlu0 %4073
  %4075 = vrot.lane.b32.xlu0 %v3396, 116
  %v4076 = vpop.permute.xlu0 %4075
  %v4082 = vsel %vm3432, %v4067, 0
  %v4085 = vsel %vm3432, %v4068, 0
  %4087 = vmatpush.bf16.msra.mxu0 0
  %4088 = vmatpush.bf16.msra.mxu0 0
  %4089 = vmatpush.bf16.msra.mxu0 0
  %4090 = vmatpush.bf16.msra.mxu0 0
  %4091 = vmatpush.bf16.msra.mxu0 %v4076
  %4092 = vmatpush.bf16.msra.mxu0 %v4074
  %4093 = vmatpush.bf16.msra.mxu0 %v4072
  %4094 = vmatpush.bf16.msra.mxu0 %v4070
  %4095 = vmatmul.bf16.gmra.mxu0 %v4082
  %v4096 = vpop.f32.mrf.mxu0
  %v4097 = vadd.f32 0.0, %v4096
  %v4098 = vpop.f32.mrf.mxu0
  %v4099 = vadd.f32 0.0, %v4098
  %4100 = vmatmul.bf16.gmra.mxu0 %v4085
  %v4101 = vpop.f32.mrf.mxu0
  %v4102 = vadd.f32 0.0, %v4101
  %v4103 = vpop.f32.mrf.mxu0
  %v4104 = vadd.f32 0.0, %v4103
  %4105 = vdwg.mxu0
  %v4106 = vadd.f32 %v4045, %v4097
  %v4107 = vadd.f32 %v4047, %v4099
  %v4108 = vadd.f32 %v4050, %v4102
  %v4109 = vadd.f32 %v4052, %v4104
  %s4110 = scalar_lea.vmem %s4, 176
  %v4111 = vld [vmem:[%s4110] sm:$0xf]
  %v4112 = vld [vmem:[%s4110 + $0x4] sm:$0xf]
  %v4113 = vld [vmem:[%s4110 + $0x8] sm:$0xf]
  %v4114 = vld [vmem:[%s4110 + $0xc] sm:$0xf]
  %v4119 = vunpack.c.l.b16 %v4111
  %v4120 = vunpack.c.l.b16 %v4112
  %v4121 = vunpack.c.l.b16 %v4113
  %v4122 = vunpack.c.l.b16 %v4114
  %v4123 = vpack.c.b16 %v4120, %v4119
  %v4124 = vpack.c.b16 %v4122, %v4121
  %4125 = vrot.lane.b32.xlu0 %v3393, 115
  %v4126 = vpop.permute.xlu0 %4125
  %4127 = vrot.lane.b32.xlu0 %v3394, 115
  %v4128 = vpop.permute.xlu0 %4127
  %4129 = vrot.lane.b32.xlu0 %v3395, 115
  %v4130 = vpop.permute.xlu0 %4129
  %4131 = vrot.lane.b32.xlu0 %v3396, 115
  %v4132 = vpop.permute.xlu0 %4131
  %v4138 = vsel %vm3432, %v4123, 0
  %v4141 = vsel %vm3432, %v4124, 0
  %4143 = vmatpush.bf16.msra.mxu0 0
  %4144 = vmatpush.bf16.msra.mxu0 0
  %4145 = vmatpush.bf16.msra.mxu0 0
  %4146 = vmatpush.bf16.msra.mxu0 0
  %4147 = vmatpush.bf16.msra.mxu0 %v4132
  %4148 = vmatpush.bf16.msra.mxu0 %v4130
  %4149 = vmatpush.bf16.msra.mxu0 %v4128
  %4150 = vmatpush.bf16.msra.mxu0 %v4126
  %4151 = vmatmul.bf16.gmra.mxu0 %v4138
  %v4152 = vpop.f32.mrf.mxu0
  %v4153 = vadd.f32 0.0, %v4152
  %v4154 = vpop.f32.mrf.mxu0
  %v4155 = vadd.f32 0.0, %v4154
  %4156 = vmatmul.bf16.gmra.mxu0 %v4141
  %v4157 = vpop.f32.mrf.mxu0
  %v4158 = vadd.f32 0.0, %v4157
  %v4159 = vpop.f32.mrf.mxu0
  %v4160 = vadd.f32 0.0, %v4159
  %4161 = vdwg.mxu0
  %v4162 = vadd.f32 %v4106, %v4153
  %v4163 = vadd.f32 %v4107, %v4155
  %v4164 = vadd.f32 %v4108, %v4158
  %v4165 = vadd.f32 %v4109, %v4160
  %v4167 = vsel %vm3801, %v4162, 0
  %v4170 = vsel %vm3801, %v4163, 0
  %v4173 = vsel %vm3801, %v4164, 0
  %v4176 = vsel %vm3801, %v4165, 0
  %4178 = vmatpush.msra.mxu0 0.0
  %4179 = vmatpush.msra.mxu0 0.0
  %4180 = vmatpush.msra.mxu0 0.0
  %4181 = vmatpush.msra.mxu0 0.0
  %4182 = vmatpush.msra.mxu0 0.0
  %4183 = vmatpush.msra.mxu0 0.0
  %4184 = vmatpush.msra.mxu0 0.0
  %4185 = vmatpush.msra.mxu0 0.0
  %4186 = vmatpush.msra.mxu0 %v3816
  %4187 = vmatpush.msra.mxu0 %v3382
  %4188 = vmatpush.msra.mxu0 %v3381
  %4189 = vmatpush.msra.mxu0 %v3380
  %4190 = vmatpush.msra.mxu0 %v3379
  %4191 = vmatpush.msra.mxu0 %v3378
  %4192 = vmatpush.msra.mxu0 %v3377
  %4193 = vmatpush.msra.mxu0 %v3376
  %4194 = vmatmul.f32.gmra.mxu0 %v4167
  %v4195 = vpop.f32.mrf.mxu0
  %v4196 = vadd.f32 0.0, %v4195
  %4197 = vmatmul.f32.gmra.mxu0 %v4170
  %v4198 = vpop.f32.mrf.mxu0
  %v4199 = vadd.f32 0.0, %v4198
  %4200 = vmatmul.f32.gmra.mxu0 %v4173
  %v4201 = vpop.f32.mrf.mxu0
  %v4202 = vadd.f32 0.0, %v4201
  %4203 = vmatmul.f32.gmra.mxu0 %v4176
  %v4204 = vpop.f32.mrf.mxu0
  %v4205 = vadd.f32 0.0, %v4204
  %4206 = vdwg.mxu0
  %v4207 = vmul.f32 %v4162, %v4162
  %v4208 = vmul.f32 %v4163, %v4163
  %v4209 = vmul.f32 %v4164, %v4164
  %v4210 = vmul.f32 %v4165, %v4165
  %v4212 = vsel %vm3801, %v4207, 0
  %v4215 = vsel %vm3801, %v4208, 0
  %v4218 = vsel %vm3801, %v4209, 0
  %v4221 = vsel %vm3801, %v4210, 0
  %4223 = vmatpush.msra.mxu0 0.0
  %4224 = vmatpush.msra.mxu0 0.0
  %4225 = vmatpush.msra.mxu0 0.0
  %4226 = vmatpush.msra.mxu0 0.0
  %4227 = vmatpush.msra.mxu0 0.0
  %4228 = vmatpush.msra.mxu0 0.0
  %4229 = vmatpush.msra.mxu0 0.0
  %4230 = vmatpush.msra.mxu0 0.0
  %4231 = vmatpush.msra.mxu0 %v3816
  %4232 = vmatpush.msra.mxu0 %v3382
  %4233 = vmatpush.msra.mxu0 %v3381
  %4234 = vmatpush.msra.mxu0 %v3380
  %4235 = vmatpush.msra.mxu0 %v3379
  %4236 = vmatpush.msra.mxu0 %v3378
  %4237 = vmatpush.msra.mxu0 %v3377
  %4238 = vmatpush.msra.mxu0 %v3376
  %4239 = vmatmul.f32.gmra.mxu0 %v4212
  %v4240 = vpop.f32.mrf.mxu0
  %v4241 = vadd.f32 0.0, %v4240
  %4242 = vmatmul.f32.gmra.mxu0 %v4215
  %v4243 = vpop.f32.mrf.mxu0
  %v4244 = vadd.f32 0.0, %v4243
  %4245 = vmatmul.f32.gmra.mxu0 %v4218
  %v4246 = vpop.f32.mrf.mxu0
  %v4247 = vadd.f32 0.0, %v4246
  %4248 = vmatmul.f32.gmra.mxu0 %v4221
  %v4249 = vpop.f32.mrf.mxu0
  %v4250 = vadd.f32 0.0, %v4249
  %4251 = vdwg.mxu0
  %v4252 = vadd.f32 %v3922, %v4196
  %v4253 = vadd.f32 %v3925, %v4199
  %v4254 = vadd.f32 %v3928, %v4202
  %v4255 = vadd.f32 %v3931, %v4205
  %v4256 = vadd.f32 %v3963, %v4241
  %v4257 = vadd.f32 %v3966, %v4244
  %v4258 = vadd.f32 %v3969, %v4247
  %v4259 = vadd.f32 %v3972, %v4250
  %s4260 = scalar_lea.vmem %s4, 192
  %v4261 = vld [vmem:[%s4260] sm:$0xf]
  %v4262 = vld [vmem:[%s4260 + $0x4] sm:$0xf]
  %v4263 = vld [vmem:[%s4260 + $0x8] sm:$0xf]
  %v4264 = vld [vmem:[%s4260 + $0xc] sm:$0xf]
  %s4265 = scalar_lea.vmem %s4, 208
  %v4266 = vld [vmem:[%s4265] sm:$0xf]
  %v4267 = vld [vmem:[%s4265 + $0x4] sm:$0xf]
  %v4268 = vld [vmem:[%s4265 + $0x8] sm:$0xf]
  %v4269 = vld [vmem:[%s4265 + $0xc] sm:$0xf]
  %v4274 = vunpack.c.l.b16 %v4266
  %v4275 = vunpack.c.l.b16 %v4267
  %v4276 = vunpack.c.l.b16 %v4268
  %v4277 = vunpack.c.l.b16 %v4269
  %v4278 = vpack.c.b16 %v4275, %v4274
  %v4279 = vpack.c.b16 %v4277, %v4276
  %v4281 = vsel %vm3432, %v4278, 0
  %v4284 = vsel %vm3432, %v4279, 0
  %4286 = vmatpush.bf16.msra.mxu0 0
  %4287 = vmatpush.bf16.msra.mxu0 0
  %4288 = vmatpush.bf16.msra.mxu0 0
  %4289 = vmatpush.bf16.msra.mxu0 0
  %4290 = vmatpush.bf16.msra.mxu0 %v3767
  %4291 = vmatpush.bf16.msra.mxu0 %v3765
  %4292 = vmatpush.bf16.msra.mxu0 %v3763
  %4293 = vmatpush.bf16.msra.mxu0 %v3761
  %4294 = vmatmul.bf16.gmra.mxu0 %v4281
  %v4295 = vpop.f32.mrf.mxu0
  %v4296 = vadd.f32 0.0, %v4295
  %v4297 = vpop.f32.mrf.mxu0
  %v4298 = vadd.f32 0.0, %v4297
  %4299 = vmatmul.bf16.gmra.mxu0 %v4284
  %v4300 = vpop.f32.mrf.mxu0
  %v4301 = vadd.f32 0.0, %v4300
  %v4302 = vpop.f32.mrf.mxu0
  %v4303 = vadd.f32 0.0, %v4302
  %4304 = vdwg.mxu0
  %v4309 = vunpack.c.l.b16 %v4261
  %v4310 = vunpack.c.l.b16 %v4262
  %v4311 = vunpack.c.l.b16 %v4263
  %v4312 = vunpack.c.l.b16 %v4264
  %v4313 = vpack.c.b16 %v4310, %v4309
  %v4314 = vpack.c.b16 %v4312, %v4311
  %v4316 = vsel %vm3432, %v4313, 0
  %v4319 = vsel %vm3432, %v4314, 0
  %4321 = vmatpush.bf16.msra.mxu0 0
  %4322 = vmatpush.bf16.msra.mxu0 0
  %4323 = vmatpush.bf16.msra.mxu0 0
  %4324 = vmatpush.bf16.msra.mxu0 0
  %4325 = vmatpush.bf16.msra.mxu0 %v3571
  %4326 = vmatpush.bf16.msra.mxu0 %v3569
  %4327 = vmatpush.bf16.msra.mxu0 %v3567
  %4328 = vmatpush.bf16.msra.mxu0 %v3565
  %4329 = vmatmul.bf16.gmra.mxu0 %v4316
  %v4330 = vpop.f32.mrf.mxu0
  %v4331 = vadd.f32 %v4296, %v4330
  %v4332 = vpop.f32.mrf.mxu0
  %v4333 = vadd.f32 %v4298, %v4332
  %4334 = vmatmul.bf16.gmra.mxu0 %v4319
  %v4335 = vpop.f32.mrf.mxu0
  %v4336 = vadd.f32 %v4301, %v4335
  %v4337 = vpop.f32.mrf.mxu0
  %v4338 = vadd.f32 %v4303, %v4337
  %4339 = vdwg.mxu0
  %s4340 = scalar_lea.vmem %s4, 224
  %v4341 = vld [vmem:[%s4340] sm:$0xf]
  %v4342 = vld [vmem:[%s4340 + $0x4] sm:$0xf]
  %v4343 = vld [vmem:[%s4340 + $0x8] sm:$0xf]
  %v4344 = vld [vmem:[%s4340 + $0xc] sm:$0xf]
  %v4349 = vunpack.c.l.b16 %v4341
  %v4350 = vunpack.c.l.b16 %v4342
  %v4351 = vunpack.c.l.b16 %v4343
  %v4352 = vunpack.c.l.b16 %v4344
  %v4353 = vpack.c.b16 %v4350, %v4349
  %v4354 = vpack.c.b16 %v4352, %v4351
  %v4356 = vsel %vm3432, %v4353, 0
  %v4359 = vsel %vm3432, %v4354, 0
  %4361 = vmatpush.bf16.msra.mxu0 0
  %4362 = vmatpush.bf16.msra.mxu0 0
  %4363 = vmatpush.bf16.msra.mxu0 0
  %4364 = vmatpush.bf16.msra.mxu0 0
  %4365 = vmatpush.bf16.msra.mxu0 %v4132
  %4366 = vmatpush.bf16.msra.mxu0 %v4130
  %4367 = vmatpush.bf16.msra.mxu0 %v4128
  %4368 = vmatpush.bf16.msra.mxu0 %v4126
  %4369 = vmatmul.bf16.gmra.mxu0 %v4356
  %v4370 = vpop.f32.mrf.mxu0
  %v4371 = vadd.f32 0.0, %v4370
  %v4372 = vpop.f32.mrf.mxu0
  %v4373 = vadd.f32 0.0, %v4372
  %4374 = vmatmul.bf16.gmra.mxu0 %v4359
  %v4375 = vpop.f32.mrf.mxu0
  %v4376 = vadd.f32 0.0, %v4375
  %v4377 = vpop.f32.mrf.mxu0
  %v4378 = vadd.f32 0.0, %v4377
  %4379 = vdwg.mxu0
  %v4380 = vadd.f32 %v4331, %v4371
  %v4381 = vadd.f32 %v4333, %v4373
  %v4382 = vadd.f32 %v4336, %v4376
  %v4383 = vadd.f32 %v4338, %v4378
  %s4384 = scalar_lea.vmem %s4, 240
  %v4385 = vld [vmem:[%s4384] sm:$0xf]
  %v4386 = vld [vmem:[%s4384 + $0x4] sm:$0xf]
  %v4387 = vld [vmem:[%s4384 + $0x8] sm:$0xf]
  %v4388 = vld [vmem:[%s4384 + $0xc] sm:$0xf]
  %v4393 = vunpack.c.l.b16 %v4385
  %v4394 = vunpack.c.l.b16 %v4386
  %v4395 = vunpack.c.l.b16 %v4387
  %v4396 = vunpack.c.l.b16 %v4388
  %v4397 = vpack.c.b16 %v4394, %v4393
  %v4398 = vpack.c.b16 %v4396, %v4395
  %4399 = vrot.lane.b32.xlu0 %v3393, 114
  %v4400 = vpop.permute.xlu0 %4399
  %4401 = vrot.lane.b32.xlu0 %v3394, 114
  %v4402 = vpop.permute.xlu0 %4401
  %4403 = vrot.lane.b32.xlu0 %v3395, 114
  %v4404 = vpop.permute.xlu0 %4403
  %4405 = vrot.lane.b32.xlu0 %v3396, 114
  %v4406 = vpop.permute.xlu0 %4405
  %v4412 = vsel %vm3432, %v4397, 0
  %v4415 = vsel %vm3432, %v4398, 0
  %4417 = vmatpush.bf16.msra.mxu0 0
  %4418 = vmatpush.bf16.msra.mxu0 0
  %4419 = vmatpush.bf16.msra.mxu0 0
  %4420 = vmatpush.bf16.msra.mxu0 0
  %4421 = vmatpush.bf16.msra.mxu0 %v4406
  %4422 = vmatpush.bf16.msra.mxu0 %v4404
  %4423 = vmatpush.bf16.msra.mxu0 %v4402
  %4424 = vmatpush.bf16.msra.mxu0 %v4400
  %4425 = vmatmul.bf16.gmra.mxu0 %v4412
  %v4426 = vpop.f32.mrf.mxu0
  %v4427 = vadd.f32 0.0, %v4426
  %v4428 = vpop.f32.mrf.mxu0
  %v4429 = vadd.f32 0.0, %v4428
  %4430 = vmatmul.bf16.gmra.mxu0 %v4415
  %v4431 = vpop.f32.mrf.mxu0
  %v4432 = vadd.f32 0.0, %v4431
  %v4433 = vpop.f32.mrf.mxu0
  %v4434 = vadd.f32 0.0, %v4433
  %4435 = vdwg.mxu0
  %v4436 = vadd.f32 %v4380, %v4427
  %v4437 = vadd.f32 %v4381, %v4429
  %v4438 = vadd.f32 %v4382, %v4432
  %v4439 = vadd.f32 %v4383, %v4434
  %v4441 = vsel %vm3801, %v4436, 0
  %v4444 = vsel %vm3801, %v4437, 0
  %v4447 = vsel %vm3801, %v4438, 0
  %v4450 = vsel %vm3801, %v4439, 0
  %4452 = vmatpush.msra.mxu0 0.0
  %4453 = vmatpush.msra.mxu0 0.0
  %4454 = vmatpush.msra.mxu0 0.0
  %4455 = vmatpush.msra.mxu0 0.0
  %4456 = vmatpush.msra.mxu0 0.0
  %4457 = vmatpush.msra.mxu0 0.0
  %4458 = vmatpush.msra.mxu0 0.0
  %4459 = vmatpush.msra.mxu0 0.0
  %4460 = vmatpush.msra.mxu0 %v3816
  %4461 = vmatpush.msra.mxu0 %v3382
  %4462 = vmatpush.msra.mxu0 %v3381
  %4463 = vmatpush.msra.mxu0 %v3380
  %4464 = vmatpush.msra.mxu0 %v3379
  %4465 = vmatpush.msra.mxu0 %v3378
  %4466 = vmatpush.msra.mxu0 %v3377
  %4467 = vmatpush.msra.mxu0 %v3376
  %4468 = vmatmul.f32.gmra.mxu0 %v4441
  %v4469 = vpop.f32.mrf.mxu0
  %v4470 = vadd.f32 0.0, %v4469
  %4471 = vmatmul.f32.gmra.mxu0 %v4444
  %v4472 = vpop.f32.mrf.mxu0
  %v4473 = vadd.f32 0.0, %v4472
  %4474 = vmatmul.f32.gmra.mxu0 %v4447
  %v4475 = vpop.f32.mrf.mxu0
  %v4476 = vadd.f32 0.0, %v4475
  %4477 = vmatmul.f32.gmra.mxu0 %v4450
  %v4478 = vpop.f32.mrf.mxu0
  %v4479 = vadd.f32 0.0, %v4478
  %4480 = vdwg.mxu0
  %v4481 = vmul.f32 %v4436, %v4436
  %v4482 = vmul.f32 %v4437, %v4437
  %v4483 = vmul.f32 %v4438, %v4438
  %v4484 = vmul.f32 %v4439, %v4439
  %v4486 = vsel %vm3801, %v4481, 0
  %v4489 = vsel %vm3801, %v4482, 0
  %v4492 = vsel %vm3801, %v4483, 0
  %v4495 = vsel %vm3801, %v4484, 0
  %4497 = vmatpush.msra.mxu0 0.0
  %4498 = vmatpush.msra.mxu0 0.0
  %4499 = vmatpush.msra.mxu0 0.0
  %4500 = vmatpush.msra.mxu0 0.0
  %4501 = vmatpush.msra.mxu0 0.0
  %4502 = vmatpush.msra.mxu0 0.0
  %4503 = vmatpush.msra.mxu0 0.0
  %4504 = vmatpush.msra.mxu0 0.0
  %4505 = vmatpush.msra.mxu0 %v3816
  %4506 = vmatpush.msra.mxu0 %v3382
  %4507 = vmatpush.msra.mxu0 %v3381
  %4508 = vmatpush.msra.mxu0 %v3380
  %4509 = vmatpush.msra.mxu0 %v3379
  %4510 = vmatpush.msra.mxu0 %v3378
  %4511 = vmatpush.msra.mxu0 %v3377
  %4512 = vmatpush.msra.mxu0 %v3376
  %4513 = vmatmul.f32.gmra.mxu0 %v4486
  %v4514 = vpop.f32.mrf.mxu0
  %v4515 = vadd.f32 0.0, %v4514
  %4516 = vmatmul.f32.gmra.mxu0 %v4489
  %v4517 = vpop.f32.mrf.mxu0
  %v4518 = vadd.f32 0.0, %v4517
  %4519 = vmatmul.f32.gmra.mxu0 %v4492
  %v4520 = vpop.f32.mrf.mxu0
  %v4521 = vadd.f32 0.0, %v4520
  %4522 = vmatmul.f32.gmra.mxu0 %v4495
  %v4523 = vpop.f32.mrf.mxu0
  %v4524 = vadd.f32 0.0, %v4523
  %4525 = vdwg.mxu0
  %v4526 = vadd.f32 %v4252, %v4470
  %v4527 = vadd.f32 %v4253, %v4473
  %v4528 = vadd.f32 %v4254, %v4476
  %v4529 = vadd.f32 %v4255, %v4479
  %v4530 = vadd.f32 %v4256, %v4515
  %v4531 = vadd.f32 %v4257, %v4518
  %v4532 = vadd.f32 %v4258, %v4521
  %v4533 = vadd.f32 %v4259, %v4524
  %v4534 = vmul.f32 %v4526, 0.015625
  %v4535 = vmul.f32 %v4527, 0.015625
  %v4536 = vmul.f32 %v4528, 0.015625
  %v4537 = vmul.f32 %v4529, 0.015625
  %v4538 = vmul.f32 %v4530, 0.015625
  %v4539 = vmul.f32 %v4531, 0.015625
  %v4540 = vmul.f32 %v4532, 0.015625
  %v4541 = vmul.f32 %v4533, 0.015625
  %v4542 = vmul.f32 %v4534, %v4534
  %v4543 = vmul.f32 %v4535, %v4535
  %v4544 = vmul.f32 %v4536, %v4536
  %v4545 = vmul.f32 %v4537, %v4537
  %v4546 = vsub.f32 %v4538, %v4542
  %v4547 = vsub.f32 %v4539, %v4543
  %v4548 = vsub.f32 %v4540, %v4544
  %v4549 = vsub.f32 %v4541, %v4545
  %v4550 = vadd.f32 %v4546, 1e-05
  %v4551 = vadd.f32 %v4547, 1e-05
  %v4552 = vadd.f32 %v4548, 1e-05
  %v4553 = vadd.f32 %v4549, 1e-05
  %v4554 = vrsqrt.pop %v4550
  %v4555 = vmul.f32 %v4554, %v4550
  %v4556 = vmul.f32 %v4555, %v4554
  %v4557 = vmul.f32 0.5, %v4556
  %v4558 = vsub.f32 1.5, %v4557
  %v4559 = vmul.f32 %v4554, %v4558
  %vm4560 = vweird.f32 %v4550
  %vm4561 = vweird.f32 %v4554
  %vm4562 = vmor %vm4560, %vm4561
  %v4563 = vsel %vm4562, %v4554, %v4559
  %v4564 = vrsqrt.pop %v4551
  %v4565 = vmul.f32 %v4564, %v4551
  %v4566 = vmul.f32 %v4565, %v4564
  %v4567 = vmul.f32 0.5, %v4566
  %v4568 = vsub.f32 1.5, %v4567
  %v4569 = vmul.f32 %v4564, %v4568
  %vm4570 = vweird.f32 %v4551
  %vm4571 = vweird.f32 %v4564
  %vm4572 = vmor %vm4570, %vm4571
  %v4573 = vsel %vm4572, %v4564, %v4569
  %v4574 = vrsqrt.pop %v4552
  %v4575 = vmul.f32 %v4574, %v4552
  %v4576 = vmul.f32 %v4575, %v4574
  %v4577 = vmul.f32 0.5, %v4576
  %v4578 = vsub.f32 1.5, %v4577
  %v4579 = vmul.f32 %v4574, %v4578
  %vm4580 = vweird.f32 %v4552
  %vm4581 = vweird.f32 %v4574
  %vm4582 = vmor %vm4580, %vm4581
  %v4583 = vsel %vm4582, %v4574, %v4579
  %v4584 = vrsqrt.pop %v4553
  %v4585 = vmul.f32 %v4584, %v4553
  %v4586 = vmul.f32 %v4585, %v4584
  %v4587 = vmul.f32 0.5, %v4586
  %v4588 = vsub.f32 1.5, %v4587
  %v4589 = vmul.f32 %v4584, %v4588
  %vm4590 = vweird.f32 %v4553
  %vm4591 = vweird.f32 %v4584
  %vm4592 = vmor %vm4590, %vm4591
  %v4593 = vsel %vm4592, %v4584, %v4589
  %4595 = vset.pattern.permute.xlu0 0
  %4596 = vperm.xlu0 %4595, %v3368
  %v4597 = vpop.permute.xlu0 %4596
  %4600 = vset.pattern.permute.xlu0 0
  %4601 = vperm.xlu0 %4600, %v3369
  %v4602 = vpop.permute.xlu0 %4601
  %4605 = vset.pattern.permute.xlu0 0
  %4606 = vperm.xlu0 %4605, %v3370
  %v4607 = vpop.permute.xlu0 %4606
  %4610 = vset.pattern.permute.xlu0 0
  %4611 = vperm.xlu0 %4610, %v3371
  %v4612 = vpop.permute.xlu0 %4611
  %v4614 = vmul.f32 %v4563, %v4597
  %v4615 = vmul.f32 %v4573, %v4602
  %v4616 = vmul.f32 %v4583, %v4607
  %v4617 = vmul.f32 %v4593, %v4612
  %v4618 = vmul.f32 %v4534, %v4614
  %v4619 = vmul.f32 %v4535, %v4615
  %v4620 = vmul.f32 %v4536, %v4616
  %v4621 = vmul.f32 %v4537, %v4617
  %4623 = vset.pattern.permute.xlu0 0
  %4624 = vperm.xlu0 %4623, %v3372
  %v4625 = vpop.permute.xlu0 %4624
  %4628 = vset.pattern.permute.xlu0 0
  %4629 = vperm.xlu0 %4628, %v3373
  %v4630 = vpop.permute.xlu0 %4629
  %4633 = vset.pattern.permute.xlu0 0
  %4634 = vperm.xlu0 %4633, %v3374
  %v4635 = vpop.permute.xlu0 %4634
  %4638 = vset.pattern.permute.xlu0 0
  %4639 = vperm.xlu0 %4638, %v3375
  %v4640 = vpop.permute.xlu0 %4639
  %v4642 = vsub.f32 %v4625, %v4618
  %v4643 = vsub.f32 %v4630, %v4619
  %v4644 = vsub.f32 %v4635, %v4620
  %v4645 = vsub.f32 %v4640, %v4621
  %vm4646 = vcmask 15360
  %v4648 = vsel %vm4646, %v4614, 0
  %v4651 = vsel %vm4646, %v4615, 0
  %v4654 = vsel %vm4646, %v4616, 0
  %v4657 = vsel %vm4646, %v4617, 0
  %vm4659 = vcmask 1041408
  %v4661 = vsel %vm4659, %v3384, 0
  %4663 = vmatpush.msra.mxu0 0.0
  %4664 = vmatpush.msra.mxu0 0.0
  %4665 = vmatpush.msra.mxu0 0.0
  %4666 = vmatpush.msra.mxu0 0.0
  %4667 = vmatpush.msra.mxu0 0.0
  %4668 = vmatpush.msra.mxu0 0.0
  %4669 = vmatpush.msra.mxu0 0.0
  %4670 = vmatpush.msra.mxu0 0.0
  %4671 = vmatpush.msra.mxu0 0.0
  %4672 = vmatpush.msra.mxu0 0.0
  %4673 = vmatpush.msra.mxu0 0.0
  %4674 = vmatpush.msra.mxu0 0.0
  %4675 = vmatpush.msra.mxu0 0.0
  %4676 = vmatpush.msra.mxu0 0.0
  %4677 = vmatpush.msra.mxu0 0.0
  %4678 = vmatpush.msra.mxu0 %v4661
  %4679 = vmatmul.f32.gmra.mxu0 %v4648
  %v4680 = vpop.f32.mrf.mxu0
  %v4681 = vadd.f32 0.0, %v4680
  %4682 = vmatmul.f32.gmra.mxu0 %v4651
  %v4683 = vpop.f32.mrf.mxu0
  %v4684 = vadd.f32 0.0, %v4683
  %4685 = vmatmul.f32.gmra.mxu0 %v4654
  %v4686 = vpop.f32.mrf.mxu0
  %v4687 = vadd.f32 0.0, %v4686
  %4688 = vmatmul.f32.gmra.mxu0 %v4657
  %v4689 = vpop.f32.mrf.mxu0
  %v4690 = vadd.f32 0.0, %v4689
  %4691 = vdwg.mxu0
  %v4693 = vsel %vm4646, %v4642, 0
  %v4696 = vsel %vm4646, %v4643, 0
  %v4699 = vsel %vm4646, %v4644, 0
  %v4702 = vsel %vm4646, %v4645, 0
  %4704 = vmatpush.msra.mxu0 0.0
  %4705 = vmatpush.msra.mxu0 0.0
  %4706 = vmatpush.msra.mxu0 0.0
  %4707 = vmatpush.msra.mxu0 0.0
  %4708 = vmatpush.msra.mxu0 0.0
  %4709 = vmatpush.msra.mxu0 0.0
  %4710 = vmatpush.msra.mxu0 0.0
  %4711 = vmatpush.msra.mxu0 0.0
  %4712 = vmatpush.msra.mxu0 0.0
  %4713 = vmatpush.msra.mxu0 0.0
  %4714 = vmatpush.msra.mxu0 0.0
  %4715 = vmatpush.msra.mxu0 0.0
  %4716 = vmatpush.msra.mxu0 0.0
  %4717 = vmatpush.msra.mxu0 0.0
  %4718 = vmatpush.msra.mxu0 0.0
  %4719 = vmatpush.msra.mxu0 %v4661
  %4720 = vmatmul.f32.gmra.mxu0 %v4693
  %v4721 = vpop.f32.mrf.mxu0
  %v4722 = vadd.f32 0.0, %v4721
  %4723 = vmatmul.f32.gmra.mxu0 %v4696
  %v4724 = vpop.f32.mrf.mxu0
  %v4725 = vadd.f32 0.0, %v4724
  %4726 = vmatmul.f32.gmra.mxu0 %v4699
  %v4727 = vpop.f32.mrf.mxu0
  %v4728 = vadd.f32 0.0, %v4727
  %4729 = vmatmul.f32.gmra.mxu0 %v4702
  %v4730 = vpop.f32.mrf.mxu0
  %v4731 = vadd.f32 0.0, %v4730
  %4732 = vdwg.mxu0
  %v4733 = vmul.f32 %v3601, %v4681
  %v4734 = vmul.f32 %v3602, %v4684
  %v4735 = vmul.f32 %v3603, %v4687
  %v4736 = vmul.f32 %v3604, %v4690
  %v4737 = vadd.f32 %v4733, %v4722
  %v4738 = vadd.f32 %v4734, %v4725
  %v4739 = vadd.f32 %v4735, %v4728
  %v4740 = vadd.f32 %v4736, %v4731
  %v4741 = vmax.f32 %v4737, 0.0
  %v4742 = vmax.f32 %v4738, 0.0
  %v4743 = vmax.f32 %v4739, 0.0
  %v4744 = vmax.f32 %v4740, 0.0
  %v4745 = vpack.c.bf16 %v4742, %v4741
  %v4746 = vpack.c.bf16 %v4744, %v4743
  %v4747 = vld [vmem:[%s9] sm:$0xff]
  %v4748 = vld [vmem:[%s9 + $0x8] sm:$0xff]
  %v4749 = vld [vmem:[%s9 + $0x10] sm:$0xff]
  %v4750 = vld [vmem:[%s9 + $0x18] sm:$0xff]
  %v4751 = vld [vmem:[%s9 + $0x20] sm:$0xff]
  %v4752 = vld [vmem:[%s9 + $0x28] sm:$0xff]
  %v4753 = vld [vmem:[%s9 + $0x30] sm:$0xff]
  %v4754 = vld [vmem:[%s9 + $0x38] sm:$0x77]
  %v4755 = vmul.f32 %v3797, %v4681
  %v4756 = vmul.f32 %v3798, %v4684
  %v4757 = vmul.f32 %v3799, %v4687
  %v4758 = vmul.f32 %v3800, %v4690
  %v4759 = vadd.f32 %v4755, %v4722
  %v4760 = vadd.f32 %v4756, %v4725
  %v4761 = vadd.f32 %v4757, %v4728
  %v4762 = vadd.f32 %v4758, %v4731
  %v4763 = vmax.f32 %v4759, 0.0
  %v4764 = vmax.f32 %v4760, 0.0
  %v4765 = vmax.f32 %v4761, 0.0
  %v4766 = vmax.f32 %v4762, 0.0
  %v4767 = vpack.c.bf16 %v4764, %v4763
  %v4768 = vpack.c.bf16 %v4766, %v4765
  %s4769 = scalar_lea.vmem %s9, 64
  %v4770 = vld [vmem:[%s4769] sm:$0xff]
  %v4771 = vld [vmem:[%s4769 + $0x8] sm:$0xff]
  %v4772 = vld [vmem:[%s4769 + $0x10] sm:$0xff]
  %v4773 = vld [vmem:[%s4769 + $0x18] sm:$0xff]
  %v4774 = vld [vmem:[%s4769 + $0x20] sm:$0xff]
  %v4775 = vld [vmem:[%s4769 + $0x28] sm:$0xff]
  %v4776 = vld [vmem:[%s4769 + $0x30] sm:$0xff]
  %v4777 = vld [vmem:[%s4769 + $0x38] sm:$0x77]
  %v4786 = vunpack.c.l.b16 %v4770
  %v4787 = vunpack.c.h.b16 %v4770
  %v4788 = vunpack.c.l.b16 %v4771
  %v4789 = vunpack.c.h.b16 %v4771
  %v4790 = vunpack.c.l.b16 %v4772
  %v4791 = vunpack.c.h.b16 %v4772
  %v4792 = vunpack.c.l.b16 %v4773
  %v4793 = vunpack.c.h.b16 %v4773
  %v4794 = vunpack.c.l.b16 %v4774
  %v4795 = vunpack.c.h.b16 %v4774
  %v4796 = vunpack.c.l.b16 %v4775
  %v4797 = vunpack.c.h.b16 %v4775
  %v4798 = vunpack.c.l.b16 %v4776
  %v4799 = vunpack.c.h.b16 %v4776
  %v4800 = vunpack.c.l.b16 %v4777
  %v4801 = vunpack.c.h.b16 %v4777
  %v4802 = vpack.c.b16 %v4788, %v4786
  %v4803 = vpack.c.b16 %v4789, %v4787
  %v4804 = vpack.c.b16 %v4792, %v4790
  %v4805 = vpack.c.b16 %v4793, %v4791
  %v4806 = vpack.c.b16 %v4796, %v4794
  %v4807 = vpack.c.b16 %v4797, %v4795
  %v4808 = vpack.c.b16 %v4800, %v4798
  %v4809 = vpack.c.b16 %v4801, %v4799
  %v4817 = vsel %vm3801, %v4767, 0
  %v4820 = vsel %vm3801, %v4768, 0
  %vm4822 = vcmask 1046528
  %v4824 = vsel %vm4822, %v4808, 0
  %v4827 = vsel %vm4822, %v4809, 0
  %4829 = vmatpush.bf16.msra.mxu0 0
  %4830 = vmatpush.bf16.msra.mxu0 0
  %4831 = vmatpush.bf16.msra.mxu0 0
  %4832 = vmatpush.bf16.msra.mxu0 0
  %4833 = vmatpush.bf16.msra.mxu0 %v4824
  %4834 = vmatpush.bf16.msra.mxu0 %v4806
  %4835 = vmatpush.bf16.msra.mxu0 %v4804
  %4836 = vmatpush.bf16.msra.mxu0 %v4802
  %4837 = vmatmul.bf16.gmra.mxu0 %v4817
  %v4838 = vpop.f32.mrf.mxu0
  %v4839 = vadd.f32 0.0, %v4838
  %v4840 = vpop.f32.mrf.mxu0
  %v4841 = vadd.f32 0.0, %v4840
  %4842 = vmatmul.bf16.gmra.mxu0 %v4820
  %v4843 = vpop.f32.mrf.mxu0
  %v4844 = vadd.f32 0.0, %v4843
  %v4845 = vpop.f32.mrf.mxu0
  %v4846 = vadd.f32 0.0, %v4845
  %4847 = vdwg.mxu0
  %4848 = vmatpush.bf16.msra.mxu0 0
  %4849 = vmatpush.bf16.msra.mxu0 0
  %4850 = vmatpush.bf16.msra.mxu0 0
  %4851 = vmatpush.bf16.msra.mxu0 0
  %4852 = vmatpush.bf16.msra.mxu0 %v4827
  %4853 = vmatpush.bf16.msra.mxu0 %v4807
  %4854 = vmatpush.bf16.msra.mxu0 %v4805
  %4855 = vmatpush.bf16.msra.mxu0 %v4803
  %4856 = vmatmul.bf16.gmra.mxu0 %v4817
  %v4857 = vpop.f32.mrf.mxu0
  %v4858 = vadd.f32 0.0, %v4857
  %v4859 = vpop.f32.mrf.mxu0
  %v4860 = vadd.f32 0.0, %v4859
  %4861 = vmatmul.bf16.gmra.mxu0 %v4820
  %v4862 = vpop.f32.mrf.mxu0
  %v4863 = vadd.f32 0.0, %v4862
  %v4864 = vpop.f32.mrf.mxu0
  %v4865 = vadd.f32 0.0, %v4864
  %4866 = vdwg.mxu0
  %v4875 = vunpack.c.l.b16 %v4747
  %v4876 = vunpack.c.h.b16 %v4747
  %v4877 = vunpack.c.l.b16 %v4748
  %v4878 = vunpack.c.h.b16 %v4748
  %v4879 = vunpack.c.l.b16 %v4749
  %v4880 = vunpack.c.h.b16 %v4749
  %v4881 = vunpack.c.l.b16 %v4750
  %v4882 = vunpack.c.h.b16 %v4750
  %v4883 = vunpack.c.l.b16 %v4751
  %v4884 = vunpack.c.h.b16 %v4751
  %v4885 = vunpack.c.l.b16 %v4752
  %v4886 = vunpack.c.h.b16 %v4752
  %v4887 = vunpack.c.l.b16 %v4753
  %v4888 = vunpack.c.h.b16 %v4753
  %v4889 = vunpack.c.l.b16 %v4754
  %v4890 = vunpack.c.h.b16 %v4754
  %v4891 = vpack.c.b16 %v4877, %v4875
  %v4892 = vpack.c.b16 %v4878, %v4876
  %v4893 = vpack.c.b16 %v4881, %v4879
  %v4894 = vpack.c.b16 %v4882, %v4880
  %v4895 = vpack.c.b16 %v4885, %v4883
  %v4896 = vpack.c.b16 %v4886, %v4884
  %v4897 = vpack.c.b16 %v4889, %v4887
  %v4898 = vpack.c.b16 %v4890, %v4888
  %v4906 = vsel %vm3801, %v4745, 0
  %v4909 = vsel %vm3801, %v4746, 0
  %v4912 = vsel %vm4822, %v4897, 0
  %v4915 = vsel %vm4822, %v4898, 0
  %4917 = vmatpush.bf16.msra.mxu0 0
  %4918 = vmatpush.bf16.msra.mxu0 0
  %4919 = vmatpush.bf16.msra.mxu0 0
  %4920 = vmatpush.bf16.msra.mxu0 0
  %4921 = vmatpush.bf16.msra.mxu0 %v4912
  %4922 = vmatpush.bf16.msra.mxu0 %v4895
  %4923 = vmatpush.bf16.msra.mxu0 %v4893
  %4924 = vmatpush.bf16.msra.mxu0 %v4891
  %4925 = vmatmul.bf16.gmra.mxu0 %v4906
  %v4926 = vpop.f32.mrf.mxu0
  %v4927 = vadd.f32 %v4839, %v4926
  %v4928 = vpop.f32.mrf.mxu0
  %v4929 = vadd.f32 %v4841, %v4928
  %4930 = vmatmul.bf16.gmra.mxu0 %v4909
  %v4931 = vpop.f32.mrf.mxu0
  %v4932 = vadd.f32 %v4844, %v4931
  %v4933 = vpop.f32.mrf.mxu0
  %v4934 = vadd.f32 %v4846, %v4933
  %4935 = vdwg.mxu0
  %4936 = vmatpush.bf16.msra.mxu0 0
  %4937 = vmatpush.bf16.msra.mxu0 0
  %4938 = vmatpush.bf16.msra.mxu0 0
  %4939 = vmatpush.bf16.msra.mxu0 0
  %4940 = vmatpush.bf16.msra.mxu0 %v4915
  %4941 = vmatpush.bf16.msra.mxu0 %v4896
  %4942 = vmatpush.bf16.msra.mxu0 %v4894
  %4943 = vmatpush.bf16.msra.mxu0 %v4892
  %4944 = vmatmul.bf16.gmra.mxu0 %v4906
  %v4945 = vpop.f32.mrf.mxu0
  %v4946 = vadd.f32 %v4858, %v4945
  %v4947 = vpop.f32.mrf.mxu0
  %v4948 = vadd.f32 %v4860, %v4947
  %4949 = vmatmul.bf16.gmra.mxu0 %v4909
  %v4950 = vpop.f32.mrf.mxu0
  %v4951 = vadd.f32 %v4863, %v4950
  %v4952 = vpop.f32.mrf.mxu0
  %v4953 = vadd.f32 %v4865, %v4952
  %4954 = vdwg.mxu0
  %v4955 = vmul.f32 %v4162, %v4681
  %v4956 = vmul.f32 %v4163, %v4684
  %v4957 = vmul.f32 %v4164, %v4687
  %v4958 = vmul.f32 %v4165, %v4690
  %v4959 = vadd.f32 %v4955, %v4722
  %v4960 = vadd.f32 %v4956, %v4725
  %v4961 = vadd.f32 %v4957, %v4728
  %v4962 = vadd.f32 %v4958, %v4731
  %v4963 = vmax.f32 %v4959, 0.0
  %v4964 = vmax.f32 %v4960, 0.0
  %v4965 = vmax.f32 %v4961, 0.0
  %v4966 = vmax.f32 %v4962, 0.0
  %v4967 = vpack.c.bf16 %v4964, %v4963
  %v4968 = vpack.c.bf16 %v4966, %v4965
  %s4969 = scalar_lea.vmem %s9, 128
  %v4970 = vld [vmem:[%s4969] sm:$0xff]
  %v4971 = vld [vmem:[%s4969 + $0x8] sm:$0xff]
  %v4972 = vld [vmem:[%s4969 + $0x10] sm:$0xff]
  %v4973 = vld [vmem:[%s4969 + $0x18] sm:$0xff]
  %v4974 = vld [vmem:[%s4969 + $0x20] sm:$0xff]
  %v4975 = vld [vmem:[%s4969 + $0x28] sm:$0xff]
  %v4976 = vld [vmem:[%s4969 + $0x30] sm:$0xff]
  %v4977 = vld [vmem:[%s4969 + $0x38] sm:$0x77]
  %v4986 = vunpack.c.l.b16 %v4970
  %v4987 = vunpack.c.h.b16 %v4970
  %v4988 = vunpack.c.l.b16 %v4971
  %v4989 = vunpack.c.h.b16 %v4971
  %v4990 = vunpack.c.l.b16 %v4972
  %v4991 = vunpack.c.h.b16 %v4972
  %v4992 = vunpack.c.l.b16 %v4973
  %v4993 = vunpack.c.h.b16 %v4973
  %v4994 = vunpack.c.l.b16 %v4974
  %v4995 = vunpack.c.h.b16 %v4974
  %v4996 = vunpack.c.l.b16 %v4975
  %v4997 = vunpack.c.h.b16 %v4975
  %v4998 = vunpack.c.l.b16 %v4976
  %v4999 = vunpack.c.h.b16 %v4976
  %v5000 = vunpack.c.l.b16 %v4977
  %v5001 = vunpack.c.h.b16 %v4977
  %v5002 = vpack.c.b16 %v4988, %v4986
  %v5003 = vpack.c.b16 %v4989, %v4987
  %v5004 = vpack.c.b16 %v4992, %v4990
  %v5005 = vpack.c.b16 %v4993, %v4991
  %v5006 = vpack.c.b16 %v4996, %v4994
  %v5007 = vpack.c.b16 %v4997, %v4995
  %v5008 = vpack.c.b16 %v5000, %v4998
  %v5009 = vpack.c.b16 %v5001, %v4999
  %v5017 = vsel %vm3801, %v4967, 0
  %v5020 = vsel %vm3801, %v4968, 0
  %v5023 = vsel %vm4822, %v5008, 0
  %v5026 = vsel %vm4822, %v5009, 0
  %5028 = vmatpush.bf16.msra.mxu0 0
  %5029 = vmatpush.bf16.msra.mxu0 0
  %5030 = vmatpush.bf16.msra.mxu0 0
  %5031 = vmatpush.bf16.msra.mxu0 0
  %5032 = vmatpush.bf16.msra.mxu0 %v5023
  %5033 = vmatpush.bf16.msra.mxu0 %v5006
  %5034 = vmatpush.bf16.msra.mxu0 %v5004
  %5035 = vmatpush.bf16.msra.mxu0 %v5002
  %5036 = vmatmul.bf16.gmra.mxu0 %v5017
  %v5037 = vpop.f32.mrf.mxu0
  %v5038 = vadd.f32 0.0, %v5037
  %v5039 = vpop.f32.mrf.mxu0
  %v5040 = vadd.f32 0.0, %v5039
  %5041 = vmatmul.bf16.gmra.mxu0 %v5020
  %v5042 = vpop.f32.mrf.mxu0
  %v5043 = vadd.f32 0.0, %v5042
  %v5044 = vpop.f32.mrf.mxu0
  %v5045 = vadd.f32 0.0, %v5044
  %5046 = vdwg.mxu0
  %5047 = vmatpush.bf16.msra.mxu0 0
  %5048 = vmatpush.bf16.msra.mxu0 0
  %5049 = vmatpush.bf16.msra.mxu0 0
  %5050 = vmatpush.bf16.msra.mxu0 0
  %5051 = vmatpush.bf16.msra.mxu0 %v5026
  %5052 = vmatpush.bf16.msra.mxu0 %v5007
  %5053 = vmatpush.bf16.msra.mxu0 %v5005
  %5054 = vmatpush.bf16.msra.mxu0 %v5003
  %5055 = vmatmul.bf16.gmra.mxu0 %v5017
  %v5056 = vpop.f32.mrf.mxu0
  %v5057 = vadd.f32 0.0, %v5056
  %v5058 = vpop.f32.mrf.mxu0
  %v5059 = vadd.f32 0.0, %v5058
  %5060 = vmatmul.bf16.gmra.mxu0 %v5020
  %v5061 = vpop.f32.mrf.mxu0
  %v5062 = vadd.f32 0.0, %v5061
  %v5063 = vpop.f32.mrf.mxu0
  %v5064 = vadd.f32 0.0, %v5063
  %5065 = vdwg.mxu0
  %v5066 = vadd.f32 %v4927, %v5038
  %v5067 = vadd.f32 %v4946, %v5057
  %v5068 = vadd.f32 %v4929, %v5040
  %v5069 = vadd.f32 %v4948, %v5059
  %v5070 = vadd.f32 %v4932, %v5043
  %v5071 = vadd.f32 %v4951, %v5062
  %v5072 = vadd.f32 %v4934, %v5045
  %v5073 = vadd.f32 %v4953, %v5064
  %v5074 = vmul.f32 %v4436, %v4681
  %v5075 = vmul.f32 %v4437, %v4684
  %v5076 = vmul.f32 %v4438, %v4687
  %v5077 = vmul.f32 %v4439, %v4690
  %v5078 = vadd.f32 %v5074, %v4722
  %v5079 = vadd.f32 %v5075, %v4725
  %v5080 = vadd.f32 %v5076, %v4728
  %v5081 = vadd.f32 %v5077, %v4731
  %v5082 = vmax.f32 %v5078, 0.0
  %v5083 = vmax.f32 %v5079, 0.0
  %v5084 = vmax.f32 %v5080, 0.0
  %v5085 = vmax.f32 %v5081, 0.0
  %v5086 = vpack.c.bf16 %v5083, %v5082
  %v5087 = vpack.c.bf16 %v5085, %v5084
  %s5088 = scalar_lea.vmem %s9, 192
  %v5089 = vld [vmem:[%s5088] sm:$0xff]
  %v5090 = vld [vmem:[%s5088 + $0x8] sm:$0xff]
  %v5091 = vld [vmem:[%s5088 + $0x10] sm:$0xff]
  %v5092 = vld [vmem:[%s5088 + $0x18] sm:$0xff]
  %v5093 = vld [vmem:[%s5088 + $0x20] sm:$0xff]
  %v5094 = vld [vmem:[%s5088 + $0x28] sm:$0xff]
  %v5095 = vld [vmem:[%s5088 + $0x30] sm:$0xff]
  %v5096 = vld [vmem:[%s5088 + $0x38] sm:$0x77]
  %v5105 = vunpack.c.l.b16 %v5089
  %v5106 = vunpack.c.h.b16 %v5089
  %v5107 = vunpack.c.l.b16 %v5090
  %v5108 = vunpack.c.h.b16 %v5090
  %v5109 = vunpack.c.l.b16 %v5091
  %v5110 = vunpack.c.h.b16 %v5091
  %v5111 = vunpack.c.l.b16 %v5092
  %v5112 = vunpack.c.h.b16 %v5092
  %v5113 = vunpack.c.l.b16 %v5093
  %v5114 = vunpack.c.h.b16 %v5093
  %v5115 = vunpack.c.l.b16 %v5094
  %v5116 = vunpack.c.h.b16 %v5094
  %v5117 = vunpack.c.l.b16 %v5095
  %v5118 = vunpack.c.h.b16 %v5095
  %v5119 = vunpack.c.l.b16 %v5096
  %v5120 = vunpack.c.h.b16 %v5096
  %v5121 = vpack.c.b16 %v5107, %v5105
  %v5122 = vpack.c.b16 %v5108, %v5106
  %v5123 = vpack.c.b16 %v5111, %v5109
  %v5124 = vpack.c.b16 %v5112, %v5110
  %v5125 = vpack.c.b16 %v5115, %v5113
  %v5126 = vpack.c.b16 %v5116, %v5114
  %v5127 = vpack.c.b16 %v5119, %v5117
  %v5128 = vpack.c.b16 %v5120, %v5118
  %v5136 = vsel %vm3801, %v5086, 0
  %v5139 = vsel %vm3801, %v5087, 0
  %v5142 = vsel %vm4822, %v5127, 0
  %v5145 = vsel %vm4822, %v5128, 0
  %5147 = vmatpush.bf16.msra.mxu0 0
  %5148 = vmatpush.bf16.msra.mxu0 0
  %5149 = vmatpush.bf16.msra.mxu0 0
  %5150 = vmatpush.bf16.msra.mxu0 0
  %5151 = vmatpush.bf16.msra.mxu0 %v5142
  %5152 = vmatpush.bf16.msra.mxu0 %v5125
  %5153 = vmatpush.bf16.msra.mxu0 %v5123
  %5154 = vmatpush.bf16.msra.mxu0 %v5121
  %5155 = vmatmul.bf16.gmra.mxu0 %v5136
  %v5156 = vpop.f32.mrf.mxu0
  %v5157 = vadd.f32 0.0, %v5156
  %v5158 = vpop.f32.mrf.mxu0
  %v5159 = vadd.f32 0.0, %v5158
  %5160 = vmatmul.bf16.gmra.mxu0 %v5139
  %v5161 = vpop.f32.mrf.mxu0
  %v5162 = vadd.f32 0.0, %v5161
  %v5163 = vpop.f32.mrf.mxu0
  %v5164 = vadd.f32 0.0, %v5163
  %5165 = vdwg.mxu0
  %5166 = vmatpush.bf16.msra.mxu0 0
  %5167 = vmatpush.bf16.msra.mxu0 0
  %5168 = vmatpush.bf16.msra.mxu0 0
  %5169 = vmatpush.bf16.msra.mxu0 0
  %5170 = vmatpush.bf16.msra.mxu0 %v5145
  %5171 = vmatpush.bf16.msra.mxu0 %v5126
  %5172 = vmatpush.bf16.msra.mxu0 %v5124
  %5173 = vmatpush.bf16.msra.mxu0 %v5122
  %5174 = vmatmul.bf16.gmra.mxu0 %v5136
  %v5175 = vpop.f32.mrf.mxu0
  %v5176 = vadd.f32 0.0, %v5175
  %v5177 = vpop.f32.mrf.mxu0
  %v5178 = vadd.f32 0.0, %v5177
  %5179 = vmatmul.bf16.gmra.mxu0 %v5139
  %v5180 = vpop.f32.mrf.mxu0
  %v5181 = vadd.f32 0.0, %v5180
  %v5182 = vpop.f32.mrf.mxu0
  %v5183 = vadd.f32 0.0, %v5182
  %5184 = vdwg.mxu0
  %v5185 = vadd.f32 %v5066, %v5157
  %v5186 = vadd.f32 %v5067, %v5176
  %v5187 = vadd.f32 %v5068, %v5159
  %v5188 = vadd.f32 %v5069, %v5178
  %v5189 = vadd.f32 %v5070, %v5162
  %v5190 = vadd.f32 %v5071, %v5181
  %v5191 = vadd.f32 %v5072, %v5164
  %v5192 = vadd.f32 %v5073, %v5183
  %5193 = vst [vmem:[#allocation3] sm:$0xff] %v5185
  %5194 = vst.msk [vmem:[#allocation3 + $0x8] sm:$0xff] %vm57, %v5186
  %5195 = vst [vmem:[#allocation3 + $0x10] sm:$0xff] %v5187
  %5196 = vst.msk [vmem:[#allocation3 + $0x18] sm:$0xff] %vm57, %v5188
  %5197 = vst [vmem:[#allocation3 + $0x20] sm:$0xff] %v5189
  %5198 = vst.msk [vmem:[#allocation3 + $0x28] sm:$0xff] %vm57, %v5190
  %5199 = vst [vmem:[#allocation3 + $0x30] sm:$0xff] %v5191
  %5200 = vst.msk [vmem:[#allocation3 + $0x38] sm:$0xff] %vm57, %v5192
  %v5201 = vld [vmem:[%s11] sm:$0xff]
  %v5202 = vld [vmem:[%s11 + $0x8] sm:$0xff]
  %v5203 = vld [vmem:[%s12] sm:$0xff]
  %v5204 = vld [vmem:[%s12 + $0x8] sm:$0xff]
  %v5205 = vld [vmem:[%s13] sm:$0xff]
  %v5206 = vld [vmem:[%s13 + $0x8] sm:$0xff]
  %v5207 = vld [vmem:[%s13 + $0x10] sm:$0xff]
  %v5208 = vld [vmem:[%s13 + $0x18] sm:$0xff]
  %v5209 = vld [vmem:[%s13 + $0x20] sm:$0xff]
  %v5210 = vld [vmem:[%s13 + $0x28] sm:$0xff]
  %v5211 = vld [vmem:[%s13 + $0x30] sm:$0xff]
  %v5212 = vld [vmem:[%s13 + $0x38] sm:$0xff]
  %v5213 = vld [vmem:[%s13 + $0x40] sm:$0xff]
  %v5214 = vld [vmem:[%s13 + $0x48] sm:$0xff]
  %v5215 = vld [vmem:[%s13 + $0x50] sm:$0xff]
  %v5216 = vld [vmem:[%s13 + $0x58] sm:$0xff]
  %v5217 = vld [vmem:[%s13 + $0x60] sm:$0xff]
  %v5218 = vld [vmem:[%s13 + $0x68] sm:$0xff]
  %v5219 = vld [vmem:[%s13 + $0x70] sm:$0xff]
  %v5220 = vld [vmem:[%s13 + $0x78] sm:$0xff]
  %v5221 = vld [vmem:[%s13 + $0x80] sm:$0xff]
  %v5222 = vld [vmem:[%s13 + $0x88] sm:$0xff]
  %v5223 = vld [vmem:[%s13 + $0x90] sm:$0xff]
  %v5224 = vld [vmem:[%s13 + $0x98] sm:$0xff]
  %v5225 = vld [vmem:[%s13 + $0xa0] sm:$0xff]
  %v5226 = vld [vmem:[%s13 + $0xa8] sm:$0xff]
  %v5227 = vld [vmem:[%s13 + $0xb0] sm:$0x3f]
  %v5228 = vld [vmem:[%s14] sm:$0xf]
  %v5229 = vld [vmem:[#allocation3] sm:$0xff]
  %v5230 = vld [vmem:[#allocation3 + $0x8] sm:$0xff]
  %v5231 = vld [vmem:[#allocation3 + $0x10] sm:$0xff]
  %v5232 = vld [vmem:[#allocation3 + $0x18] sm:$0xff]
  %v5233 = vld [vmem:[#allocation3 + $0x20] sm:$0xff]
  %v5234 = vld [vmem:[#allocation3 + $0x28] sm:$0xff]
  %v5235 = vld [vmem:[#allocation3 + $0x30] sm:$0xff]
  %v5236 = vld [vmem:[#allocation3 + $0x38] sm:$0xff]
  %v5237 = vpack.c.bf16 %v5231, %v5229
  %v5238 = vpack.c.bf16 %v5232, %v5230
  %v5239 = vpack.c.bf16 %v5235, %v5233
  %v5240 = vpack.c.bf16 %v5236, %v5234
  %v5241 = vld [vmem:[%s10] sm:$0xf]
  %v5242 = vld [vmem:[%s10 + $0x4] sm:$0xf]
  %s5243 = scalar_lea.vmem %s10, 8
  %v5244 = vld [vmem:[%s5243] sm:$0xf]
  %v5245 = vld [vmem:[%s5243 + $0x4] sm:$0xf]
  %v5248 = vunpack.c.l.b16 %v5244
  %v5249 = vunpack.c.l.b16 %v5245
  %v5250 = vpack.c.b16 %v5249, %v5248
  %5255 = vrot.lane.b32.xlu0 %v5237, 127
  %v5256 = vpop.permute.xlu0 %5255
  %5257 = vrot.lane.b32.xlu0 %v5238, 127
  %v5258 = vpop.permute.xlu0 %5257
  %5259 = vrot.lane.b32.xlu0 %v5239, 127
  %v5260 = vpop.permute.xlu0 %5259
  %5261 = vrot.lane.b32.xlu0 %v5240, 127
  %v5262 = vpop.permute.xlu0 %5261
  %vm5263 = vcmask 1039360
  %v5264 = vsel %vm5263, %v5256, %v5258
  %v5265 = vsel %vm5263, %v5260, %v5262
  %v5271 = vsel %vm100, %v5250, 0
  %5273 = vmatpush.bf16.msra.mxu0 0
  %5274 = vmatpush.bf16.msra.mxu0 0
  %5275 = vmatpush.bf16.msra.mxu0 0
  %5276 = vmatpush.bf16.msra.mxu0 0
  %5277 = vmatpush.bf16.msra.mxu0 0
  %5278 = vmatpush.bf16.msra.mxu0 0
  %5279 = vmatpush.bf16.msra.mxu0 %v5265
  %5280 = vmatpush.bf16.msra.mxu0 %v5264
  %5281 = vmatmul.bf16.gmra.mxu0 %v5271
  %v5282 = vpop.f32.mrf.mxu0
  %v5283 = vadd.f32 0.0, %v5282
  %v5284 = vpop.f32.mrf.mxu0
  %v5285 = vadd.f32 0.0, %v5284
  %5286 = vdwg.mxu0
  %5287 = vmatpush.bf16.msra.mxu0 0
  %5288 = vmatpush.bf16.msra.mxu0 0
  %5289 = vmatpush.bf16.msra.mxu0 0
  %5290 = vmatpush.bf16.msra.mxu0 0
  %5291 = vmatpush.bf16.msra.mxu0 0
  %5292 = vmatpush.bf16.msra.mxu0 0
  %5293 = vmatpush.bf16.msra.mxu0 %v5262
  %5294 = vmatpush.bf16.msra.mxu0 %v5258
  %5295 = vmatmul.bf16.gmra.mxu0 %v5271
  %v5296 = vpop.f32.mrf.mxu0
  %v5297 = vadd.f32 0.0, %v5296
  %v5298 = vpop.f32.mrf.mxu0
  %v5299 = vadd.f32 0.0, %v5298
  %5300 = vdwg.mxu0
  %v5303 = vunpack.c.l.b16 %v5241
  %v5304 = vunpack.c.l.b16 %v5242
  %v5305 = vpack.c.b16 %v5304, %v5303
  %v5307 = vsel %vm100, %v5305, 0
  %5309 = vmatpush.bf16.msra.mxu0 0
  %5310 = vmatpush.bf16.msra.mxu0 0
  %5311 = vmatpush.bf16.msra.mxu0 0
  %5312 = vmatpush.bf16.msra.mxu0 0
  %5313 = vmatpush.bf16.msra.mxu0 0
  %5314 = vmatpush.bf16.msra.mxu0 0
  %5315 = vmatpush.bf16.msra.mxu0 %v5239
  %5316 = vmatpush.bf16.msra.mxu0 %v5237
  %5317 = vmatmul.bf16.gmra.mxu0 %v5307
  %v5318 = vpop.f32.mrf.mxu0
  %v5319 = vadd.f32 %v5283, %v5318
  %v5320 = vpop.f32.mrf.mxu0
  %v5321 = vadd.f32 %v5285, %v5320
  %5322 = vdwg.mxu0
  %5323 = vmatpush.bf16.msra.mxu0 0
  %5324 = vmatpush.bf16.msra.mxu0 0
  %5325 = vmatpush.bf16.msra.mxu0 0
  %5326 = vmatpush.bf16.msra.mxu0 0
  %5327 = vmatpush.bf16.msra.mxu0 0
  %5328 = vmatpush.bf16.msra.mxu0 0
  %5329 = vmatpush.bf16.msra.mxu0 %v5240
  %5330 = vmatpush.bf16.msra.mxu0 %v5238
  %5331 = vmatmul.bf16.gmra.mxu0 %v5307
  %v5332 = vpop.f32.mrf.mxu0
  %v5333 = vadd.f32 %v5297, %v5332
  %v5334 = vpop.f32.mrf.mxu0
  %v5335 = vadd.f32 %v5299, %v5334
  %5336 = vdwg.mxu0
  %s5337 = scalar_lea.vmem %s10, 16
  %v5338 = vld [vmem:[%s5337] sm:$0xf]
  %v5339 = vld [vmem:[%s5337 + $0x4] sm:$0xf]
  %v5342 = vunpack.c.l.b16 %v5338
  %v5343 = vunpack.c.l.b16 %v5339
  %v5344 = vpack.c.b16 %v5343, %v5342
  %5345 = vrot.lane.b32.xlu0 %v5237, 118
  %v5346 = vpop.permute.xlu0 %5345
  %5347 = vrot.lane.b32.xlu0 %v5238, 118
  %v5348 = vpop.permute.xlu0 %5347
  %5349 = vrot.lane.b32.xlu0 %v5239, 118
  %v5350 = vpop.permute.xlu0 %5349
  %5351 = vrot.lane.b32.xlu0 %v5240, 118
  %v5352 = vpop.permute.xlu0 %5351
  %vm5353 = vcmask 965632
  %v5354 = vsel %vm5353, %v5346, %v5348
  %v5355 = vsel %vm5353, %v5350, %v5352
  %v5361 = vsel %vm100, %v5344, 0
  %5363 = vmatpush.bf16.msra.mxu0 0
  %5364 = vmatpush.bf16.msra.mxu0 0
  %5365 = vmatpush.bf16.msra.mxu0 0
  %5366 = vmatpush.bf16.msra.mxu0 0
  %5367 = vmatpush.bf16.msra.mxu0 0
  %5368 = vmatpush.bf16.msra.mxu0 0
  %5369 = vmatpush.bf16.msra.mxu0 %v5355
  %5370 = vmatpush.bf16.msra.mxu0 %v5354
  %5371 = vmatmul.bf16.gmra.mxu0 %v5361
  %v5372 = vpop.f32.mrf.mxu0
  %v5373 = vadd.f32 0.0, %v5372
  %v5374 = vpop.f32.mrf.mxu0
  %v5375 = vadd.f32 0.0, %v5374
  %5376 = vdwg.mxu0
  %5377 = vmatpush.bf16.msra.mxu0 0
  %5378 = vmatpush.bf16.msra.mxu0 0
  %5379 = vmatpush.bf16.msra.mxu0 0
  %5380 = vmatpush.bf16.msra.mxu0 0
  %5381 = vmatpush.bf16.msra.mxu0 0
  %5382 = vmatpush.bf16.msra.mxu0 0
  %5383 = vmatpush.bf16.msra.mxu0 %v5352
  %5384 = vmatpush.bf16.msra.mxu0 %v5348
  %5385 = vmatmul.bf16.gmra.mxu0 %v5361
  %v5386 = vpop.f32.mrf.mxu0
  %v5387 = vadd.f32 0.0, %v5386
  %v5388 = vpop.f32.mrf.mxu0
  %v5389 = vadd.f32 0.0, %v5388
  %5390 = vdwg.mxu0
  %v5391 = vadd.f32 %v5319, %v5373
  %v5392 = vadd.f32 %v5333, %v5387
  %v5393 = vadd.f32 %v5321, %v5375
  %v5394 = vadd.f32 %v5335, %v5389
  %s5395 = scalar_lea.vmem %s10, 24
  %v5396 = vld [vmem:[%s5395] sm:$0xf]
  %v5397 = vld [vmem:[%s5395 + $0x4] sm:$0xf]
  %v5400 = vunpack.c.l.b16 %v5396
  %v5401 = vunpack.c.l.b16 %v5397
  %v5402 = vpack.c.b16 %v5401, %v5400
  %5403 = vrot.lane.b32.xlu0 %v5237, 117
  %v5404 = vpop.permute.xlu0 %5403
  %5405 = vrot.lane.b32.xlu0 %v5238, 117
  %v5406 = vpop.permute.xlu0 %5405
  %5407 = vrot.lane.b32.xlu0 %v5239, 117
  %v5408 = vpop.permute.xlu0 %5407
  %5409 = vrot.lane.b32.xlu0 %v5240, 117
  %v5410 = vpop.permute.xlu0 %5409
  %vm5411 = vcmask 957440
  %v5412 = vsel %vm5411, %v5404, %v5406
  %v5413 = vsel %vm5411, %v5408, %v5410
  %v5419 = vsel %vm100, %v5402, 0
  %5421 = vmatpush.bf16.msra.mxu0 0
  %5422 = vmatpush.bf16.msra.mxu0 0
  %5423 = vmatpush.bf16.msra.mxu0 0
  %5424 = vmatpush.bf16.msra.mxu0 0
  %5425 = vmatpush.bf16.msra.mxu0 0
  %5426 = vmatpush.bf16.msra.mxu0 0
  %5427 = vmatpush.bf16.msra.mxu0 %v5413
  %5428 = vmatpush.bf16.msra.mxu0 %v5412
  %5429 = vmatmul.bf16.gmra.mxu0 %v5419
  %v5430 = vpop.f32.mrf.mxu0
  %v5431 = vadd.f32 0.0, %v5430
  %v5432 = vpop.f32.mrf.mxu0
  %v5433 = vadd.f32 0.0, %v5432
  %5434 = vdwg.mxu0
  %5435 = vmatpush.bf16.msra.mxu0 0
  %5436 = vmatpush.bf16.msra.mxu0 0
  %5437 = vmatpush.bf16.msra.mxu0 0
  %5438 = vmatpush.bf16.msra.mxu0 0
  %5439 = vmatpush.bf16.msra.mxu0 0
  %5440 = vmatpush.bf16.msra.mxu0 0
  %5441 = vmatpush.bf16.msra.mxu0 %v5410
  %5442 = vmatpush.bf16.msra.mxu0 %v5406
  %5443 = vmatmul.bf16.gmra.mxu0 %v5419
  %v5444 = vpop.f32.mrf.mxu0
  %v5445 = vadd.f32 0.0, %v5444
  %v5446 = vpop.f32.mrf.mxu0
  %v5447 = vadd.f32 0.0, %v5446
  %5448 = vdwg.mxu0
  %v5449 = vadd.f32 %v5391, %v5431
  %v5450 = vadd.f32 %v5392, %v5445
  %v5451 = vadd.f32 %v5393, %v5433
  %v5452 = vadd.f32 %v5394, %v5447
  %v5453 = vmul.f32 %v5449, %v5449
  %v5454 = vmul.f32 %v5450, %v5450
  %v5455 = vmul.f32 %v5451, %v5451
  %v5456 = vmul.f32 %v5452, %v5452
  %s5457 = scalar_lea.vmem %s10, 32
  %v5458 = vld [vmem:[%s5457] sm:$0xf]
  %v5459 = vld [vmem:[%s5457 + $0x4] sm:$0xf]
  %s5460 = scalar_lea.vmem %s10, 40
  %v5461 = vld [vmem:[%s5460] sm:$0xf]
  %v5462 = vld [vmem:[%s5460 + $0x4] sm:$0xf]
  %v5465 = vunpack.c.l.b16 %v5461
  %v5466 = vunpack.c.l.b16 %v5462
  %v5467 = vpack.c.b16 %v5466, %v5465
  %5468 = vrot.lane.b32.xlu0 %v5237, 126
  %v5469 = vpop.permute.xlu0 %5468
  %5470 = vrot.lane.b32.xlu0 %v5238, 126
  %v5471 = vpop.permute.xlu0 %5470
  %5472 = vrot.lane.b32.xlu0 %v5239, 126
  %v5473 = vpop.permute.xlu0 %5472
  %5474 = vrot.lane.b32.xlu0 %v5240, 126
  %v5475 = vpop.permute.xlu0 %5474
  %vm5476 = vcmask 1031168
  %v5477 = vsel %vm5476, %v5469, %v5471
  %v5478 = vsel %vm5476, %v5473, %v5475
  %v5484 = vsel %vm100, %v5467, 0
  %5486 = vmatpush.bf16.msra.mxu0 0
  %5487 = vmatpush.bf16.msra.mxu0 0
  %5488 = vmatpush.bf16.msra.mxu0 0
  %5489 = vmatpush.bf16.msra.mxu0 0
  %5490 = vmatpush.bf16.msra.mxu0 0
  %5491 = vmatpush.bf16.msra.mxu0 0
  %5492 = vmatpush.bf16.msra.mxu0 %v5478
  %5493 = vmatpush.bf16.msra.mxu0 %v5477
  %5494 = vmatmul.bf16.gmra.mxu0 %v5484
  %v5495 = vpop.f32.mrf.mxu0
  %v5496 = vadd.f32 0.0, %v5495
  %v5497 = vpop.f32.mrf.mxu0
  %v5498 = vadd.f32 0.0, %v5497
  %5499 = vdwg.mxu0
  %5500 = vmatpush.bf16.msra.mxu0 0
  %5501 = vmatpush.bf16.msra.mxu0 0
  %5502 = vmatpush.bf16.msra.mxu0 0
  %5503 = vmatpush.bf16.msra.mxu0 0
  %5504 = vmatpush.bf16.msra.mxu0 0
  %5505 = vmatpush.bf16.msra.mxu0 0
  %5506 = vmatpush.bf16.msra.mxu0 %v5475
  %5507 = vmatpush.bf16.msra.mxu0 %v5471
  %5508 = vmatmul.bf16.gmra.mxu0 %v5484
  %v5509 = vpop.f32.mrf.mxu0
  %v5510 = vadd.f32 0.0, %v5509
  %v5511 = vpop.f32.mrf.mxu0
  %v5512 = vadd.f32 0.0, %v5511
  %5513 = vdwg.mxu0
  %v5516 = vunpack.c.l.b16 %v5458
  %v5517 = vunpack.c.l.b16 %v5459
  %v5518 = vpack.c.b16 %v5517, %v5516
  %v5520 = vsel %vm100, %v5518, 0
  %5522 = vmatpush.bf16.msra.mxu0 0
  %5523 = vmatpush.bf16.msra.mxu0 0
  %5524 = vmatpush.bf16.msra.mxu0 0
  %5525 = vmatpush.bf16.msra.mxu0 0
  %5526 = vmatpush.bf16.msra.mxu0 0
  %5527 = vmatpush.bf16.msra.mxu0 0
  %5528 = vmatpush.bf16.msra.mxu0 %v5265
  %5529 = vmatpush.bf16.msra.mxu0 %v5264
  %5530 = vmatmul.bf16.gmra.mxu0 %v5520
  %v5531 = vpop.f32.mrf.mxu0
  %v5532 = vadd.f32 %v5496, %v5531
  %v5533 = vpop.f32.mrf.mxu0
  %v5534 = vadd.f32 %v5498, %v5533
  %5535 = vdwg.mxu0
  %5536 = vmatpush.bf16.msra.mxu0 0
  %5537 = vmatpush.bf16.msra.mxu0 0
  %5538 = vmatpush.bf16.msra.mxu0 0
  %5539 = vmatpush.bf16.msra.mxu0 0
  %5540 = vmatpush.bf16.msra.mxu0 0
  %5541 = vmatpush.bf16.msra.mxu0 0
  %5542 = vmatpush.bf16.msra.mxu0 %v5262
  %5543 = vmatpush.bf16.msra.mxu0 %v5258
  %5544 = vmatmul.bf16.gmra.mxu0 %v5520
  %v5545 = vpop.f32.mrf.mxu0
  %v5546 = vadd.f32 %v5510, %v5545
  %v5547 = vpop.f32.mrf.mxu0
  %v5548 = vadd.f32 %v5512, %v5547
  %5549 = vdwg.mxu0
  %s5550 = scalar_lea.vmem %s10, 48
  %v5551 = vld [vmem:[%s5550] sm:$0xf]
  %v5552 = vld [vmem:[%s5550 + $0x4] sm:$0xf]
  %v5555 = vunpack.c.l.b16 %v5551
  %v5556 = vunpack.c.l.b16 %v5552
  %v5557 = vpack.c.b16 %v5556, %v5555
  %v5559 = vsel %vm100, %v5557, 0
  %5561 = vmatpush.bf16.msra.mxu0 0
  %5562 = vmatpush.bf16.msra.mxu0 0
  %5563 = vmatpush.bf16.msra.mxu0 0
  %5564 = vmatpush.bf16.msra.mxu0 0
  %5565 = vmatpush.bf16.msra.mxu0 0
  %5566 = vmatpush.bf16.msra.mxu0 0
  %5567 = vmatpush.bf16.msra.mxu0 %v5413
  %5568 = vmatpush.bf16.msra.mxu0 %v5412
  %5569 = vmatmul.bf16.gmra.mxu0 %v5559
  %v5570 = vpop.f32.mrf.mxu0
  %v5571 = vadd.f32 0.0, %v5570
  %v5572 = vpop.f32.mrf.mxu0
  %v5573 = vadd.f32 0.0, %v5572
  %5574 = vdwg.mxu0
  %5575 = vmatpush.bf16.msra.mxu0 0
  %5576 = vmatpush.bf16.msra.mxu0 0
  %5577 = vmatpush.bf16.msra.mxu0 0
  %5578 = vmatpush.bf16.msra.mxu0 0
  %5579 = vmatpush.bf16.msra.mxu0 0
  %5580 = vmatpush.bf16.msra.mxu0 0
  %5581 = vmatpush.bf16.msra.mxu0 %v5410
  %5582 = vmatpush.bf16.msra.mxu0 %v5406
  %5583 = vmatmul.bf16.gmra.mxu0 %v5559
  %v5584 = vpop.f32.mrf.mxu0
  %v5585 = vadd.f32 0.0, %v5584
  %v5586 = vpop.f32.mrf.mxu0
  %v5587 = vadd.f32 0.0, %v5586
  %5588 = vdwg.mxu0
  %v5589 = vadd.f32 %v5532, %v5571
  %v5590 = vadd.f32 %v5546, %v5585
  %v5591 = vadd.f32 %v5534, %v5573
  %v5592 = vadd.f32 %v5548, %v5587
  %s5593 = scalar_lea.vmem %s10, 56
  %v5594 = vld [vmem:[%s5593] sm:$0xf]
  %v5595 = vld [vmem:[%s5593 + $0x4] sm:$0xf]
  %v5598 = vunpack.c.l.b16 %v5594
  %v5599 = vunpack.c.l.b16 %v5595
  %v5600 = vpack.c.b16 %v5599, %v5598
  %5601 = vrot.lane.b32.xlu0 %v5237, 116
  %v5602 = vpop.permute.xlu0 %5601
  %5603 = vrot.lane.b32.xlu0 %v5238, 116
  %v5604 = vpop.permute.xlu0 %5603
  %5605 = vrot.lane.b32.xlu0 %v5239, 116
  %v5606 = vpop.permute.xlu0 %5605
  %5607 = vrot.lane.b32.xlu0 %v5240, 116
  %v5608 = vpop.permute.xlu0 %5607
  %vm5609 = vcmask 949248
  %v5610 = vsel %vm5609, %v5602, %v5604
  %v5611 = vsel %vm5609, %v5606, %v5608
  %v5617 = vsel %vm100, %v5600, 0
  %5619 = vmatpush.bf16.msra.mxu0 0
  %5620 = vmatpush.bf16.msra.mxu0 0
  %5621 = vmatpush.bf16.msra.mxu0 0
  %5622 = vmatpush.bf16.msra.mxu0 0
  %5623 = vmatpush.bf16.msra.mxu0 0
  %5624 = vmatpush.bf16.msra.mxu0 0
  %5625 = vmatpush.bf16.msra.mxu0 %v5611
  %5626 = vmatpush.bf16.msra.mxu0 %v5610
  %5627 = vmatmul.bf16.gmra.mxu0 %v5617
  %v5628 = vpop.f32.mrf.mxu0
  %v5629 = vadd.f32 0.0, %v5628
  %v5630 = vpop.f32.mrf.mxu0
  %v5631 = vadd.f32 0.0, %v5630
  %5632 = vdwg.mxu0
  %5633 = vmatpush.bf16.msra.mxu0 0
  %5634 = vmatpush.bf16.msra.mxu0 0
  %5635 = vmatpush.bf16.msra.mxu0 0
  %5636 = vmatpush.bf16.msra.mxu0 0
  %5637 = vmatpush.bf16.msra.mxu0 0
  %5638 = vmatpush.bf16.msra.mxu0 0
  %5639 = vmatpush.bf16.msra.mxu0 %v5608
  %5640 = vmatpush.bf16.msra.mxu0 %v5604
  %5641 = vmatmul.bf16.gmra.mxu0 %v5617
  %v5642 = vpop.f32.mrf.mxu0
  %v5643 = vadd.f32 0.0, %v5642
  %v5644 = vpop.f32.mrf.mxu0
  %v5645 = vadd.f32 0.0, %v5644
  %5646 = vdwg.mxu0
  %v5647 = vadd.f32 %v5589, %v5629
  %v5648 = vadd.f32 %v5590, %v5643
  %v5649 = vadd.f32 %v5591, %v5631
  %v5650 = vadd.f32 %v5592, %v5645
  %vm5651 = vcmask 441344
  %v5653 = vsel %vm5651, %v5648, 0
  %v5656 = vsel %vm5651, %v5650, 0
  %v5659 = vsel %vm3814, %v5227, 0
  %5661 = vmatpush.msra.mxu0 %v5220
  %5662 = vmatpush.msra.mxu0 %v5219
  %5663 = vmatpush.msra.mxu0 %v5218
  %5664 = vmatpush.msra.mxu0 %v5217
  %5665 = vmatpush.msra.mxu0 %v5216
  %5666 = vmatpush.msra.mxu0 %v5215
  %5667 = vmatpush.msra.mxu0 %v5214
  %5668 = vmatpush.msra.mxu0 %v5213
  %5669 = vmatpush.msra.mxu0 %v5212
  %5670 = vmatpush.msra.mxu0 %v5211
  %5671 = vmatpush.msra.mxu0 %v5210
  %5672 = vmatpush.msra.mxu0 %v5209
  %5673 = vmatpush.msra.mxu0 %v5208
  %5674 = vmatpush.msra.mxu0 %v5207
  %5675 = vmatpush.msra.mxu0 %v5206
  %5676 = vmatpush.msra.mxu0 %v5205
  %5677 = vmatmul.f32.gmra.mxu0 %v5647
  %v5678 = vpop.f32.mrf.mxu0
  %v5679 = vadd.f32 0.0, %v5678
  %5680 = vmatmul.f32.gmra.mxu0 %v5649
  %v5681 = vpop.f32.mrf.mxu0
  %v5682 = vadd.f32 0.0, %v5681
  %5683 = vdwg.mxu0
  %5684 = vmatpush.msra.mxu0 0.0
  %5685 = vmatpush.msra.mxu0 0.0
  %5686 = vmatpush.msra.mxu0 0.0
  %5687 = vmatpush.msra.mxu0 0.0
  %5688 = vmatpush.msra.mxu0 0.0
  %5689 = vmatpush.msra.mxu0 0.0
  %5690 = vmatpush.msra.mxu0 0.0
  %5691 = vmatpush.msra.mxu0 0.0
  %5692 = vmatpush.msra.mxu0 0.0
  %5693 = vmatpush.msra.mxu0 %v5659
  %5694 = vmatpush.msra.mxu0 %v5226
  %5695 = vmatpush.msra.mxu0 %v5225
  %5696 = vmatpush.msra.mxu0 %v5224
  %5697 = vmatpush.msra.mxu0 %v5223
  %5698 = vmatpush.msra.mxu0 %v5222
  %5699 = vmatpush.msra.mxu0 %v5221
  %5700 = vmatmul.f32.gmra.mxu0 %v5653
  %v5701 = vpop.f32.mrf.mxu0
  %v5702 = vadd.f32 %v5679, %v5701
  %5703 = vmatmul.f32.gmra.mxu0 %v5656
  %v5704 = vpop.f32.mrf.mxu0
  %v5705 = vadd.f32 %v5682, %v5704
  %5706 = vdwg.mxu0
  %v5707 = vmul.f32 %v5647, %v5647
  %v5708 = vmul.f32 %v5648, %v5648
  %v5709 = vmul.f32 %v5649, %v5649
  %v5710 = vmul.f32 %v5650, %v5650
  %v5712 = vsel %vm5651, %v5708, 0
  %v5715 = vsel %vm5651, %v5710, 0
  %5717 = vmatpush.msra.mxu0 %v5220
  %5718 = vmatpush.msra.mxu0 %v5219
  %5719 = vmatpush.msra.mxu0 %v5218
  %5720 = vmatpush.msra.mxu0 %v5217
  %5721 = vmatpush.msra.mxu0 %v5216
  %5722 = vmatpush.msra.mxu0 %v5215
  %5723 = vmatpush.msra.mxu0 %v5214
  %5724 = vmatpush.msra.mxu0 %v5213
  %5725 = vmatpush.msra.mxu0 %v5212
  %5726 = vmatpush.msra.mxu0 %v5211
  %5727 = vmatpush.msra.mxu0 %v5210
  %5728 = vmatpush.msra.mxu0 %v5209
  %5729 = vmatpush.msra.mxu0 %v5208
  %5730 = vmatpush.msra.mxu0 %v5207
  %5731 = vmatpush.msra.mxu0 %v5206
  %5732 = vmatpush.msra.mxu0 %v5205
  %5733 = vmatmul.f32.gmra.mxu0 %v5707
  %v5734 = vpop.f32.mrf.mxu0
  %v5735 = vadd.f32 0.0, %v5734
  %5736 = vmatmul.f32.gmra.mxu0 %v5709
  %v5737 = vpop.f32.mrf.mxu0
  %v5738 = vadd.f32 0.0, %v5737
  %5739 = vdwg.mxu0
  %5740 = vmatpush.msra.mxu0 0.0
  %5741 = vmatpush.msra.mxu0 0.0
  %5742 = vmatpush.msra.mxu0 0.0
  %5743 = vmatpush.msra.mxu0 0.0
  %5744 = vmatpush.msra.mxu0 0.0
  %5745 = vmatpush.msra.mxu0 0.0
  %5746 = vmatpush.msra.mxu0 0.0
  %5747 = vmatpush.msra.mxu0 0.0
  %5748 = vmatpush.msra.mxu0 0.0
  %5749 = vmatpush.msra.mxu0 %v5659
  %5750 = vmatpush.msra.mxu0 %v5226
  %5751 = vmatpush.msra.mxu0 %v5225
  %5752 = vmatpush.msra.mxu0 %v5224
  %5753 = vmatpush.msra.mxu0 %v5223
  %5754 = vmatpush.msra.mxu0 %v5222
  %5755 = vmatpush.msra.mxu0 %v5221
  %5756 = vmatmul.f32.gmra.mxu0 %v5712
  %v5757 = vpop.f32.mrf.mxu0
  %v5758 = vadd.f32 %v5735, %v5757
  %5759 = vmatmul.f32.gmra.mxu0 %v5715
  %v5760 = vpop.f32.mrf.mxu0
  %v5761 = vadd.f32 %v5738, %v5760
  %5762 = vdwg.mxu0
  %v5764 = vsel %vm5651, %v5450, 0
  %v5767 = vsel %vm5651, %v5452, 0
  %5769 = vmatpush.msra.mxu0 %v5220
  %5770 = vmatpush.msra.mxu0 %v5219
  %5771 = vmatpush.msra.mxu0 %v5218
  %5772 = vmatpush.msra.mxu0 %v5217
  %5773 = vmatpush.msra.mxu0 %v5216
  %5774 = vmatpush.msra.mxu0 %v5215
  %5775 = vmatpush.msra.mxu0 %v5214
  %5776 = vmatpush.msra.mxu0 %v5213
  %5777 = vmatpush.msra.mxu0 %v5212
  %5778 = vmatpush.msra.mxu0 %v5211
  %5779 = vmatpush.msra.mxu0 %v5210
  %5780 = vmatpush.msra.mxu0 %v5209
  %5781 = vmatpush.msra.mxu0 %v5208
  %5782 = vmatpush.msra.mxu0 %v5207
  %5783 = vmatpush.msra.mxu0 %v5206
  %5784 = vmatpush.msra.mxu0 %v5205
  %5785 = vmatmul.f32.gmra.mxu0 %v5449
  %v5786 = vpop.f32.mrf.mxu0
  %v5787 = vadd.f32 %v5702, %v5786
  %5788 = vmatmul.f32.gmra.mxu0 %v5451
  %v5789 = vpop.f32.mrf.mxu0
  %v5790 = vadd.f32 %v5705, %v5789
  %5791 = vdwg.mxu0
  %5792 = vmatpush.msra.mxu0 0.0
  %5793 = vmatpush.msra.mxu0 0.0
  %5794 = vmatpush.msra.mxu0 0.0
  %5795 = vmatpush.msra.mxu0 0.0
  %5796 = vmatpush.msra.mxu0 0.0
  %5797 = vmatpush.msra.mxu0 0.0
  %5798 = vmatpush.msra.mxu0 0.0
  %5799 = vmatpush.msra.mxu0 0.0
  %5800 = vmatpush.msra.mxu0 0.0
  %5801 = vmatpush.msra.mxu0 %v5659
  %5802 = vmatpush.msra.mxu0 %v5226
  %5803 = vmatpush.msra.mxu0 %v5225
  %5804 = vmatpush.msra.mxu0 %v5224
  %5805 = vmatpush.msra.mxu0 %v5223
  %5806 = vmatpush.msra.mxu0 %v5222
  %5807 = vmatpush.msra.mxu0 %v5221
  %5808 = vmatmul.f32.gmra.mxu0 %v5764
  %v5809 = vpop.f32.mrf.mxu0
  %v5810 = vadd.f32 %v5787, %v5809
  %5811 = vmatmul.f32.gmra.mxu0 %v5767
  %v5812 = vpop.f32.mrf.mxu0
  %v5813 = vadd.f32 %v5790, %v5812
  %5814 = vdwg.mxu0
  %v5816 = vsel %vm5651, %v5454, 0
  %v5819 = vsel %vm5651, %v5456, 0
  %5821 = vmatpush.msra.mxu0 %v5220
  %5822 = vmatpush.msra.mxu0 %v5219
  %5823 = vmatpush.msra.mxu0 %v5218
  %5824 = vmatpush.msra.mxu0 %v5217
  %5825 = vmatpush.msra.mxu0 %v5216
  %5826 = vmatpush.msra.mxu0 %v5215
  %5827 = vmatpush.msra.mxu0 %v5214
  %5828 = vmatpush.msra.mxu0 %v5213
  %5829 = vmatpush.msra.mxu0 %v5212
  %5830 = vmatpush.msra.mxu0 %v5211
  %5831 = vmatpush.msra.mxu0 %v5210
  %5832 = vmatpush.msra.mxu0 %v5209
  %5833 = vmatpush.msra.mxu0 %v5208
  %5834 = vmatpush.msra.mxu0 %v5207
  %5835 = vmatpush.msra.mxu0 %v5206
  %5836 = vmatpush.msra.mxu0 %v5205
  %5837 = vmatmul.f32.gmra.mxu0 %v5453
  %v5838 = vpop.f32.mrf.mxu0
  %v5839 = vadd.f32 %v5758, %v5838
  %5840 = vmatmul.f32.gmra.mxu0 %v5455
  %v5841 = vpop.f32.mrf.mxu0
  %v5842 = vadd.f32 %v5761, %v5841
  %5843 = vdwg.mxu0
  %5844 = vmatpush.msra.mxu0 0.0
  %5845 = vmatpush.msra.mxu0 0.0
  %5846 = vmatpush.msra.mxu0 0.0
  %5847 = vmatpush.msra.mxu0 0.0
  %5848 = vmatpush.msra.mxu0 0.0
  %5849 = vmatpush.msra.mxu0 0.0
  %5850 = vmatpush.msra.mxu0 0.0
  %5851 = vmatpush.msra.mxu0 0.0
  %5852 = vmatpush.msra.mxu0 0.0
  %5853 = vmatpush.msra.mxu0 %v5659
  %5854 = vmatpush.msra.mxu0 %v5226
  %5855 = vmatpush.msra.mxu0 %v5225
  %5856 = vmatpush.msra.mxu0 %v5224
  %5857 = vmatpush.msra.mxu0 %v5223
  %5858 = vmatpush.msra.mxu0 %v5222
  %5859 = vmatpush.msra.mxu0 %v5221
  %5860 = vmatmul.f32.gmra.mxu0 %v5816
  %v5861 = vpop.f32.mrf.mxu0
  %v5862 = vadd.f32 %v5839, %v5861
  %5863 = vmatmul.f32.gmra.mxu0 %v5819
  %v5864 = vpop.f32.mrf.mxu0
  %v5865 = vadd.f32 %v5842, %v5864
  %5866 = vdwg.mxu0
  %s5867 = scalar_lea.vmem %s10, 64
  %v5868 = vld [vmem:[%s5867] sm:$0xf]
  %v5869 = vld [vmem:[%s5867 + $0x4] sm:$0xf]
  %s5870 = scalar_lea.vmem %s10, 72
  %v5871 = vld [vmem:[%s5870] sm:$0xf]
  %v5872 = vld [vmem:[%s5870 + $0x4] sm:$0xf]
  %v5875 = vunpack.c.l.b16 %v5871
  %v5876 = vunpack.c.l.b16 %v5872
  %v5877 = vpack.c.b16 %v5876, %v5875
  %v5879 = vsel %vm100, %v5877, 0
  %5881 = vmatpush.bf16.msra.mxu0 0
  %5882 = vmatpush.bf16.msra.mxu0 0
  %5883 = vmatpush.bf16.msra.mxu0 0
  %5884 = vmatpush.bf16.msra.mxu0 0
  %5885 = vmatpush.bf16.msra.mxu0 0
  %5886 = vmatpush.bf16.msra.mxu0 0
  %5887 = vmatpush.bf16.msra.mxu0 %v5413
  %5888 = vmatpush.bf16.msra.mxu0 %v5412
  %5889 = vmatmul.bf16.gmra.mxu0 %v5879
  %v5890 = vpop.f32.mrf.mxu0
  %v5891 = vadd.f32 0.0, %v5890
  %v5892 = vpop.f32.mrf.mxu0
  %v5893 = vadd.f32 0.0, %v5892
  %5894 = vdwg.mxu0
  %5895 = vmatpush.bf16.msra.mxu0 0
  %5896 = vmatpush.bf16.msra.mxu0 0
  %5897 = vmatpush.bf16.msra.mxu0 0
  %5898 = vmatpush.bf16.msra.mxu0 0
  %5899 = vmatpush.bf16.msra.mxu0 0
  %5900 = vmatpush.bf16.msra.mxu0 0
  %5901 = vmatpush.bf16.msra.mxu0 %v5410
  %5902 = vmatpush.bf16.msra.mxu0 %v5406
  %5903 = vmatmul.bf16.gmra.mxu0 %v5879
  %v5904 = vpop.f32.mrf.mxu0
  %v5905 = vadd.f32 0.0, %v5904
  %v5906 = vpop.f32.mrf.mxu0
  %v5907 = vadd.f32 0.0, %v5906
  %5908 = vdwg.mxu0
  %v5911 = vunpack.c.l.b16 %v5868
  %v5912 = vunpack.c.l.b16 %v5869
  %v5913 = vpack.c.b16 %v5912, %v5911
  %v5915 = vsel %vm100, %v5913, 0
  %5917 = vmatpush.bf16.msra.mxu0 0
  %5918 = vmatpush.bf16.msra.mxu0 0
  %5919 = vmatpush.bf16.msra.mxu0 0
  %5920 = vmatpush.bf16.msra.mxu0 0
  %5921 = vmatpush.bf16.msra.mxu0 0
  %5922 = vmatpush.bf16.msra.mxu0 0
  %5923 = vmatpush.bf16.msra.mxu0 %v5355
  %5924 = vmatpush.bf16.msra.mxu0 %v5354
  %5925 = vmatmul.bf16.gmra.mxu0 %v5915
  %v5926 = vpop.f32.mrf.mxu0
  %v5927 = vadd.f32 %v5891, %v5926
  %v5928 = vpop.f32.mrf.mxu0
  %v5929 = vadd.f32 %v5893, %v5928
  %5930 = vdwg.mxu0
  %5931 = vmatpush.bf16.msra.mxu0 0
  %5932 = vmatpush.bf16.msra.mxu0 0
  %5933 = vmatpush.bf16.msra.mxu0 0
  %5934 = vmatpush.bf16.msra.mxu0 0
  %5935 = vmatpush.bf16.msra.mxu0 0
  %5936 = vmatpush.bf16.msra.mxu0 0
  %5937 = vmatpush.bf16.msra.mxu0 %v5352
  %5938 = vmatpush.bf16.msra.mxu0 %v5348
  %5939 = vmatmul.bf16.gmra.mxu0 %v5915
  %v5940 = vpop.f32.mrf.mxu0
  %v5941 = vadd.f32 %v5905, %v5940
  %v5942 = vpop.f32.mrf.mxu0
  %v5943 = vadd.f32 %v5907, %v5942
  %5944 = vdwg.mxu0
  %s5945 = scalar_lea.vmem %s10, 80
  %v5946 = vld [vmem:[%s5945] sm:$0xf]
  %v5947 = vld [vmem:[%s5945 + $0x4] sm:$0xf]
  %v5950 = vunpack.c.l.b16 %v5946
  %v5951 = vunpack.c.l.b16 %v5947
  %v5952 = vpack.c.b16 %v5951, %v5950
  %5953 = vrot.lane.b32.xlu0 %v5237, 108
  %v5954 = vpop.permute.xlu0 %5953
  %5955 = vrot.lane.b32.xlu0 %v5238, 108
  %v5956 = vpop.permute.xlu0 %5955
  %5957 = vrot.lane.b32.xlu0 %v5239, 108
  %v5958 = vpop.permute.xlu0 %5957
  %5959 = vrot.lane.b32.xlu0 %v5240, 108
  %v5960 = vpop.permute.xlu0 %5959
  %vm5961 = vcmask 883712
  %v5962 = vsel %vm5961, %v5954, %v5956
  %v5963 = vsel %vm5961, %v5958, %v5960
  %v5969 = vsel %vm100, %v5952, 0
  %5971 = vmatpush.bf16.msra.mxu0 0
  %5972 = vmatpush.bf16.msra.mxu0 0
  %5973 = vmatpush.bf16.msra.mxu0 0
  %5974 = vmatpush.bf16.msra.mxu0 0
  %5975 = vmatpush.bf16.msra.mxu0 0
  %5976 = vmatpush.bf16.msra.mxu0 0
  %5977 = vmatpush.bf16.msra.mxu0 %v5963
  %5978 = vmatpush.bf16.msra.mxu0 %v5962
  %5979 = vmatmul.bf16.gmra.mxu0 %v5969
  %v5980 = vpop.f32.mrf.mxu0
  %v5981 = vadd.f32 0.0, %v5980
  %v5982 = vpop.f32.mrf.mxu0
  %v5983 = vadd.f32 0.0, %v5982
  %5984 = vdwg.mxu0
  %5985 = vmatpush.bf16.msra.mxu0 0
  %5986 = vmatpush.bf16.msra.mxu0 0
  %5987 = vmatpush.bf16.msra.mxu0 0
  %5988 = vmatpush.bf16.msra.mxu0 0
  %5989 = vmatpush.bf16.msra.mxu0 0
  %5990 = vmatpush.bf16.msra.mxu0 0
  %5991 = vmatpush.bf16.msra.mxu0 %v5960
  %5992 = vmatpush.bf16.msra.mxu0 %v5956
  %5993 = vmatmul.bf16.gmra.mxu0 %v5969
  %v5994 = vpop.f32.mrf.mxu0
  %v5995 = vadd.f32 0.0, %v5994
  %v5996 = vpop.f32.mrf.mxu0
  %v5997 = vadd.f32 0.0, %v5996
  %5998 = vdwg.mxu0
  %v5999 = vadd.f32 %v5927, %v5981
  %v6000 = vadd.f32 %v5941, %v5995
  %v6001 = vadd.f32 %v5929, %v5983
  %v6002 = vadd.f32 %v5943, %v5997
  %s6003 = scalar_lea.vmem %s10, 88
  %v6004 = vld [vmem:[%s6003] sm:$0xf]
  %v6005 = vld [vmem:[%s6003 + $0x4] sm:$0xf]
  %v6008 = vunpack.c.l.b16 %v6004
  %v6009 = vunpack.c.l.b16 %v6005
  %v6010 = vpack.c.b16 %v6009, %v6008
  %6011 = vrot.lane.b32.xlu0 %v5237, 107
  %v6012 = vpop.permute.xlu0 %6011
  %6013 = vrot.lane.b32.xlu0 %v5238, 107
  %v6014 = vpop.permute.xlu0 %6013
  %6015 = vrot.lane.b32.xlu0 %v5239, 107
  %v6016 = vpop.permute.xlu0 %6015
  %6017 = vrot.lane.b32.xlu0 %v5240, 107
  %v6018 = vpop.permute.xlu0 %6017
  %vm6019 = vcmask 875520
  %v6020 = vsel %vm6019, %v6012, %v6014
  %v6021 = vsel %vm6019, %v6016, %v6018
  %v6027 = vsel %vm100, %v6010, 0
  %6029 = vmatpush.bf16.msra.mxu0 0
  %6030 = vmatpush.bf16.msra.mxu0 0
  %6031 = vmatpush.bf16.msra.mxu0 0
  %6032 = vmatpush.bf16.msra.mxu0 0
  %6033 = vmatpush.bf16.msra.mxu0 0
  %6034 = vmatpush.bf16.msra.mxu0 0
  %6035 = vmatpush.bf16.msra.mxu0 %v6021
  %6036 = vmatpush.bf16.msra.mxu0 %v6020
  %6037 = vmatmul.bf16.gmra.mxu0 %v6027
  %v6038 = vpop.f32.mrf.mxu0
  %v6039 = vadd.f32 0.0, %v6038
  %v6040 = vpop.f32.mrf.mxu0
  %v6041 = vadd.f32 0.0, %v6040
  %6042 = vdwg.mxu0
  %6043 = vmatpush.bf16.msra.mxu0 0
  %6044 = vmatpush.bf16.msra.mxu0 0
  %6045 = vmatpush.bf16.msra.mxu0 0
  %6046 = vmatpush.bf16.msra.mxu0 0
  %6047 = vmatpush.bf16.msra.mxu0 0
  %6048 = vmatpush.bf16.msra.mxu0 0
  %6049 = vmatpush.bf16.msra.mxu0 %v6018
  %6050 = vmatpush.bf16.msra.mxu0 %v6014
  %6051 = vmatmul.bf16.gmra.mxu0 %v6027
  %v6052 = vpop.f32.mrf.mxu0
  %v6053 = vadd.f32 0.0, %v6052
  %v6054 = vpop.f32.mrf.mxu0
  %v6055 = vadd.f32 0.0, %v6054
  %6056 = vdwg.mxu0
  %v6057 = vadd.f32 %v5999, %v6039
  %v6058 = vadd.f32 %v6000, %v6053
  %v6059 = vadd.f32 %v6001, %v6041
  %v6060 = vadd.f32 %v6002, %v6055
  %v6062 = vsel %vm5651, %v6058, 0
  %v6065 = vsel %vm5651, %v6060, 0
  %6067 = vmatpush.msra.mxu0 %v5220
  %6068 = vmatpush.msra.mxu0 %v5219
  %6069 = vmatpush.msra.mxu0 %v5218
  %6070 = vmatpush.msra.mxu0 %v5217
  %6071 = vmatpush.msra.mxu0 %v5216
  %6072 = vmatpush.msra.mxu0 %v5215
  %6073 = vmatpush.msra.mxu0 %v5214
  %6074 = vmatpush.msra.mxu0 %v5213
  %6075 = vmatpush.msra.mxu0 %v5212
  %6076 = vmatpush.msra.mxu0 %v5211
  %6077 = vmatpush.msra.mxu0 %v5210
  %6078 = vmatpush.msra.mxu0 %v5209
  %6079 = vmatpush.msra.mxu0 %v5208
  %6080 = vmatpush.msra.mxu0 %v5207
  %6081 = vmatpush.msra.mxu0 %v5206
  %6082 = vmatpush.msra.mxu0 %v5205
  %6083 = vmatmul.f32.gmra.mxu0 %v6057
  %v6084 = vpop.f32.mrf.mxu0
  %v6085 = vadd.f32 0.0, %v6084
  %6086 = vmatmul.f32.gmra.mxu0 %v6059
  %v6087 = vpop.f32.mrf.mxu0
  %v6088 = vadd.f32 0.0, %v6087
  %6089 = vdwg.mxu0
  %6090 = vmatpush.msra.mxu0 0.0
  %6091 = vmatpush.msra.mxu0 0.0
  %6092 = vmatpush.msra.mxu0 0.0
  %6093 = vmatpush.msra.mxu0 0.0
  %6094 = vmatpush.msra.mxu0 0.0
  %6095 = vmatpush.msra.mxu0 0.0
  %6096 = vmatpush.msra.mxu0 0.0
  %6097 = vmatpush.msra.mxu0 0.0
  %6098 = vmatpush.msra.mxu0 0.0
  %6099 = vmatpush.msra.mxu0 %v5659
  %6100 = vmatpush.msra.mxu0 %v5226
  %6101 = vmatpush.msra.mxu0 %v5225
  %6102 = vmatpush.msra.mxu0 %v5224
  %6103 = vmatpush.msra.mxu0 %v5223
  %6104 = vmatpush.msra.mxu0 %v5222
  %6105 = vmatpush.msra.mxu0 %v5221
  %6106 = vmatmul.f32.gmra.mxu0 %v6062
  %v6107 = vpop.f32.mrf.mxu0
  %v6108 = vadd.f32 %v6085, %v6107
  %6109 = vmatmul.f32.gmra.mxu0 %v6065
  %v6110 = vpop.f32.mrf.mxu0
  %v6111 = vadd.f32 %v6088, %v6110
  %6112 = vdwg.mxu0
  %v6113 = vmul.f32 %v6057, %v6057
  %v6114 = vmul.f32 %v6058, %v6058
  %v6115 = vmul.f32 %v6059, %v6059
  %v6116 = vmul.f32 %v6060, %v6060
  %v6118 = vsel %vm5651, %v6114, 0
  %v6121 = vsel %vm5651, %v6116, 0
  %6123 = vmatpush.msra.mxu0 %v5220
  %6124 = vmatpush.msra.mxu0 %v5219
  %6125 = vmatpush.msra.mxu0 %v5218
  %6126 = vmatpush.msra.mxu0 %v5217
  %6127 = vmatpush.msra.mxu0 %v5216
  %6128 = vmatpush.msra.mxu0 %v5215
  %6129 = vmatpush.msra.mxu0 %v5214
  %6130 = vmatpush.msra.mxu0 %v5213
  %6131 = vmatpush.msra.mxu0 %v5212
  %6132 = vmatpush.msra.mxu0 %v5211
  %6133 = vmatpush.msra.mxu0 %v5210
  %6134 = vmatpush.msra.mxu0 %v5209
  %6135 = vmatpush.msra.mxu0 %v5208
  %6136 = vmatpush.msra.mxu0 %v5207
  %6137 = vmatpush.msra.mxu0 %v5206
  %6138 = vmatpush.msra.mxu0 %v5205
  %6139 = vmatmul.f32.gmra.mxu0 %v6113
  %v6140 = vpop.f32.mrf.mxu0
  %v6141 = vadd.f32 0.0, %v6140
  %6142 = vmatmul.f32.gmra.mxu0 %v6115
  %v6143 = vpop.f32.mrf.mxu0
  %v6144 = vadd.f32 0.0, %v6143
  %6145 = vdwg.mxu0
  %6146 = vmatpush.msra.mxu0 0.0
  %6147 = vmatpush.msra.mxu0 0.0
  %6148 = vmatpush.msra.mxu0 0.0
  %6149 = vmatpush.msra.mxu0 0.0
  %6150 = vmatpush.msra.mxu0 0.0
  %6151 = vmatpush.msra.mxu0 0.0
  %6152 = vmatpush.msra.mxu0 0.0
  %6153 = vmatpush.msra.mxu0 0.0
  %6154 = vmatpush.msra.mxu0 0.0
  %6155 = vmatpush.msra.mxu0 %v5659
  %6156 = vmatpush.msra.mxu0 %v5226
  %6157 = vmatpush.msra.mxu0 %v5225
  %6158 = vmatpush.msra.mxu0 %v5224
  %6159 = vmatpush.msra.mxu0 %v5223
  %6160 = vmatpush.msra.mxu0 %v5222
  %6161 = vmatpush.msra.mxu0 %v5221
  %6162 = vmatmul.f32.gmra.mxu0 %v6118
  %v6163 = vpop.f32.mrf.mxu0
  %v6164 = vadd.f32 %v6141, %v6163
  %6165 = vmatmul.f32.gmra.mxu0 %v6121
  %v6166 = vpop.f32.mrf.mxu0
  %v6167 = vadd.f32 %v6144, %v6166
  %6168 = vdwg.mxu0
  %v6169 = vadd.f32 %v5810, %v6108
  %v6170 = vadd.f32 %v5813, %v6111
  %v6171 = vadd.f32 %v5862, %v6164
  %v6172 = vadd.f32 %v5865, %v6167
  %s6173 = scalar_lea.vmem %s10, 96
  %v6174 = vld [vmem:[%s6173] sm:$0xf]
  %v6175 = vld [vmem:[%s6173 + $0x4] sm:$0xf]
  %s6176 = scalar_lea.vmem %s10, 104
  %v6177 = vld [vmem:[%s6176] sm:$0xf]
  %v6178 = vld [vmem:[%s6176 + $0x4] sm:$0xf]
  %v6181 = vunpack.c.l.b16 %v6177
  %v6182 = vunpack.c.l.b16 %v6178
  %v6183 = vpack.c.b16 %v6182, %v6181
  %v6185 = vsel %vm100, %v6183, 0
  %6187 = vmatpush.bf16.msra.mxu0 0
  %6188 = vmatpush.bf16.msra.mxu0 0
  %6189 = vmatpush.bf16.msra.mxu0 0
  %6190 = vmatpush.bf16.msra.mxu0 0
  %6191 = vmatpush.bf16.msra.mxu0 0
  %6192 = vmatpush.bf16.msra.mxu0 0
  %6193 = vmatpush.bf16.msra.mxu0 %v5611
  %6194 = vmatpush.bf16.msra.mxu0 %v5610
  %6195 = vmatmul.bf16.gmra.mxu0 %v6185
  %v6196 = vpop.f32.mrf.mxu0
  %v6197 = vadd.f32 0.0, %v6196
  %v6198 = vpop.f32.mrf.mxu0
  %v6199 = vadd.f32 0.0, %v6198
  %6200 = vdwg.mxu0
  %6201 = vmatpush.bf16.msra.mxu0 0
  %6202 = vmatpush.bf16.msra.mxu0 0
  %6203 = vmatpush.bf16.msra.mxu0 0
  %6204 = vmatpush.bf16.msra.mxu0 0
  %6205 = vmatpush.bf16.msra.mxu0 0
  %6206 = vmatpush.bf16.msra.mxu0 0
  %6207 = vmatpush.bf16.msra.mxu0 %v5608
  %6208 = vmatpush.bf16.msra.mxu0 %v5604
  %6209 = vmatmul.bf16.gmra.mxu0 %v6185
  %v6210 = vpop.f32.mrf.mxu0
  %v6211 = vadd.f32 0.0, %v6210
  %v6212 = vpop.f32.mrf.mxu0
  %v6213 = vadd.f32 0.0, %v6212
  %6214 = vdwg.mxu0
  %v6217 = vunpack.c.l.b16 %v6174
  %v6218 = vunpack.c.l.b16 %v6175
  %v6219 = vpack.c.b16 %v6218, %v6217
  %v6221 = vsel %vm100, %v6219, 0
  %6223 = vmatpush.bf16.msra.mxu0 0
  %6224 = vmatpush.bf16.msra.mxu0 0
  %6225 = vmatpush.bf16.msra.mxu0 0
  %6226 = vmatpush.bf16.msra.mxu0 0
  %6227 = vmatpush.bf16.msra.mxu0 0
  %6228 = vmatpush.bf16.msra.mxu0 0
  %6229 = vmatpush.bf16.msra.mxu0 %v5413
  %6230 = vmatpush.bf16.msra.mxu0 %v5412
  %6231 = vmatmul.bf16.gmra.mxu0 %v6221
  %v6232 = vpop.f32.mrf.mxu0
  %v6233 = vadd.f32 %v6197, %v6232
  %v6234 = vpop.f32.mrf.mxu0
  %v6235 = vadd.f32 %v6199, %v6234
  %6236 = vdwg.mxu0
  %6237 = vmatpush.bf16.msra.mxu0 0
  %6238 = vmatpush.bf16.msra.mxu0 0
  %6239 = vmatpush.bf16.msra.mxu0 0
  %6240 = vmatpush.bf16.msra.mxu0 0
  %6241 = vmatpush.bf16.msra.mxu0 0
  %6242 = vmatpush.bf16.msra.mxu0 0
  %6243 = vmatpush.bf16.msra.mxu0 %v5410
  %6244 = vmatpush.bf16.msra.mxu0 %v5406
  %6245 = vmatmul.bf16.gmra.mxu0 %v6221
  %v6246 = vpop.f32.mrf.mxu0
  %v6247 = vadd.f32 %v6211, %v6246
  %v6248 = vpop.f32.mrf.mxu0
  %v6249 = vadd.f32 %v6213, %v6248
  %6250 = vdwg.mxu0
  %s6251 = scalar_lea.vmem %s10, 112
  %v6252 = vld [vmem:[%s6251] sm:$0xf]
  %v6253 = vld [vmem:[%s6251 + $0x4] sm:$0xf]
  %v6256 = vunpack.c.l.b16 %v6252
  %v6257 = vunpack.c.l.b16 %v6253
  %v6258 = vpack.c.b16 %v6257, %v6256
  %v6260 = vsel %vm100, %v6258, 0
  %6262 = vmatpush.bf16.msra.mxu0 0
  %6263 = vmatpush.bf16.msra.mxu0 0
  %6264 = vmatpush.bf16.msra.mxu0 0
  %6265 = vmatpush.bf16.msra.mxu0 0
  %6266 = vmatpush.bf16.msra.mxu0 0
  %6267 = vmatpush.bf16.msra.mxu0 0
  %6268 = vmatpush.bf16.msra.mxu0 %v6021
  %6269 = vmatpush.bf16.msra.mxu0 %v6020
  %6270 = vmatmul.bf16.gmra.mxu0 %v6260
  %v6271 = vpop.f32.mrf.mxu0
  %v6272 = vadd.f32 0.0, %v6271
  %v6273 = vpop.f32.mrf.mxu0
  %v6274 = vadd.f32 0.0, %v6273
  %6275 = vdwg.mxu0
  %6276 = vmatpush.bf16.msra.mxu0 0
  %6277 = vmatpush.bf16.msra.mxu0 0
  %6278 = vmatpush.bf16.msra.mxu0 0
  %6279 = vmatpush.bf16.msra.mxu0 0
  %6280 = vmatpush.bf16.msra.mxu0 0
  %6281 = vmatpush.bf16.msra.mxu0 0
  %6282 = vmatpush.bf16.msra.mxu0 %v6018
  %6283 = vmatpush.bf16.msra.mxu0 %v6014
  %6284 = vmatmul.bf16.gmra.mxu0 %v6260
  %v6285 = vpop.f32.mrf.mxu0
  %v6286 = vadd.f32 0.0, %v6285
  %v6287 = vpop.f32.mrf.mxu0
  %v6288 = vadd.f32 0.0, %v6287
  %6289 = vdwg.mxu0
  %v6290 = vadd.f32 %v6233, %v6272
  %v6291 = vadd.f32 %v6247, %v6286
  %v6292 = vadd.f32 %v6235, %v6274
  %v6293 = vadd.f32 %v6249, %v6288
  %s6294 = scalar_lea.vmem %s10, 120
  %v6295 = vld [vmem:[%s6294] sm:$0xf]
  %v6296 = vld [vmem:[%s6294 + $0x4] sm:$0xf]
  %v6299 = vunpack.c.l.b16 %v6295
  %v6300 = vunpack.c.l.b16 %v6296
  %v6301 = vpack.c.b16 %v6300, %v6299
  %6302 = vrot.lane.b32.xlu0 %v5237, 106
  %v6303 = vpop.permute.xlu0 %6302
  %6304 = vrot.lane.b32.xlu0 %v5238, 106
  %v6305 = vpop.permute.xlu0 %6304
  %6306 = vrot.lane.b32.xlu0 %v5239, 106
  %v6307 = vpop.permute.xlu0 %6306
  %6308 = vrot.lane.b32.xlu0 %v5240, 106
  %v6309 = vpop.permute.xlu0 %6308
  %vm6310 = vcmask 867328
  %v6311 = vsel %vm6310, %v6303, %v6305
  %v6312 = vsel %vm6310, %v6307, %v6309
  %v6318 = vsel %vm100, %v6301, 0
  %6320 = vmatpush.bf16.msra.mxu0 0
  %6321 = vmatpush.bf16.msra.mxu0 0
  %6322 = vmatpush.bf16.msra.mxu0 0
  %6323 = vmatpush.bf16.msra.mxu0 0
  %6324 = vmatpush.bf16.msra.mxu0 0
  %6325 = vmatpush.bf16.msra.mxu0 0
  %6326 = vmatpush.bf16.msra.mxu0 %v6312
  %6327 = vmatpush.bf16.msra.mxu0 %v6311
  %6328 = vmatmul.bf16.gmra.mxu0 %v6318
  %v6329 = vpop.f32.mrf.mxu0
  %v6330 = vadd.f32 0.0, %v6329
  %v6331 = vpop.f32.mrf.mxu0
  %v6332 = vadd.f32 0.0, %v6331
  %6333 = vdwg.mxu0
  %6334 = vmatpush.bf16.msra.mxu0 0
  %6335 = vmatpush.bf16.msra.mxu0 0
  %6336 = vmatpush.bf16.msra.mxu0 0
  %6337 = vmatpush.bf16.msra.mxu0 0
  %6338 = vmatpush.bf16.msra.mxu0 0
  %6339 = vmatpush.bf16.msra.mxu0 0
  %6340 = vmatpush.bf16.msra.mxu0 %v6309
  %6341 = vmatpush.bf16.msra.mxu0 %v6305
  %6342 = vmatmul.bf16.gmra.mxu0 %v6318
  %v6343 = vpop.f32.mrf.mxu0
  %v6344 = vadd.f32 0.0, %v6343
  %v6345 = vpop.f32.mrf.mxu0
  %v6346 = vadd.f32 0.0, %v6345
  %6347 = vdwg.mxu0
  %v6348 = vadd.f32 %v6290, %v6330
  %v6349 = vadd.f32 %v6291, %v6344
  %v6350 = vadd.f32 %v6292, %v6332
  %v6351 = vadd.f32 %v6293, %v6346
  %v6353 = vsel %vm5651, %v6349, 0
  %v6356 = vsel %vm5651, %v6351, 0
  %6358 = vmatpush.msra.mxu0 %v5220
  %6359 = vmatpush.msra.mxu0 %v5219
  %6360 = vmatpush.msra.mxu0 %v5218
  %6361 = vmatpush.msra.mxu0 %v5217
  %6362 = vmatpush.msra.mxu0 %v5216
  %6363 = vmatpush.msra.mxu0 %v5215
  %6364 = vmatpush.msra.mxu0 %v5214
  %6365 = vmatpush.msra.mxu0 %v5213
  %6366 = vmatpush.msra.mxu0 %v5212
  %6367 = vmatpush.msra.mxu0 %v5211
  %6368 = vmatpush.msra.mxu0 %v5210
  %6369 = vmatpush.msra.mxu0 %v5209
  %6370 = vmatpush.msra.mxu0 %v5208
  %6371 = vmatpush.msra.mxu0 %v5207
  %6372 = vmatpush.msra.mxu0 %v5206
  %6373 = vmatpush.msra.mxu0 %v5205
  %6374 = vmatmul.f32.gmra.mxu0 %v6348
  %v6375 = vpop.f32.mrf.mxu0
  %v6376 = vadd.f32 0.0, %v6375
  %6377 = vmatmul.f32.gmra.mxu0 %v6350
  %v6378 = vpop.f32.mrf.mxu0
  %v6379 = vadd.f32 0.0, %v6378
  %6380 = vdwg.mxu0
  %6381 = vmatpush.msra.mxu0 0.0
  %6382 = vmatpush.msra.mxu0 0.0
  %6383 = vmatpush.msra.mxu0 0.0
  %6384 = vmatpush.msra.mxu0 0.0
  %6385 = vmatpush.msra.mxu0 0.0
  %6386 = vmatpush.msra.mxu0 0.0
  %6387 = vmatpush.msra.mxu0 0.0
  %6388 = vmatpush.msra.mxu0 0.0
  %6389 = vmatpush.msra.mxu0 0.0
  %6390 = vmatpush.msra.mxu0 %v5659
  %6391 = vmatpush.msra.mxu0 %v5226
  %6392 = vmatpush.msra.mxu0 %v5225
  %6393 = vmatpush.msra.mxu0 %v5224
  %6394 = vmatpush.msra.mxu0 %v5223
  %6395 = vmatpush.msra.mxu0 %v5222
  %6396 = vmatpush.msra.mxu0 %v5221
  %6397 = vmatmul.f32.gmra.mxu0 %v6353
  %v6398 = vpop.f32.mrf.mxu0
  %v6399 = vadd.f32 %v6376, %v6398
  %6400 = vmatmul.f32.gmra.mxu0 %v6356
  %v6401 = vpop.f32.mrf.mxu0
  %v6402 = vadd.f32 %v6379, %v6401
  %6403 = vdwg.mxu0
  %v6404 = vmul.f32 %v6348, %v6348
  %v6405 = vmul.f32 %v6349, %v6349
  %v6406 = vmul.f32 %v6350, %v6350
  %v6407 = vmul.f32 %v6351, %v6351
  %v6409 = vsel %vm5651, %v6405, 0
  %v6412 = vsel %vm5651, %v6407, 0
  %6414 = vmatpush.msra.mxu0 %v5220
  %6415 = vmatpush.msra.mxu0 %v5219
  %6416 = vmatpush.msra.mxu0 %v5218
  %6417 = vmatpush.msra.mxu0 %v5217
  %6418 = vmatpush.msra.mxu0 %v5216
  %6419 = vmatpush.msra.mxu0 %v5215
  %6420 = vmatpush.msra.mxu0 %v5214
  %6421 = vmatpush.msra.mxu0 %v5213
  %6422 = vmatpush.msra.mxu0 %v5212
  %6423 = vmatpush.msra.mxu0 %v5211
  %6424 = vmatpush.msra.mxu0 %v5210
  %6425 = vmatpush.msra.mxu0 %v5209
  %6426 = vmatpush.msra.mxu0 %v5208
  %6427 = vmatpush.msra.mxu0 %v5207
  %6428 = vmatpush.msra.mxu0 %v5206
  %6429 = vmatpush.msra.mxu0 %v5205
  %6430 = vmatmul.f32.gmra.mxu0 %v6404
  %v6431 = vpop.f32.mrf.mxu0
  %v6432 = vadd.f32 0.0, %v6431
  %6433 = vmatmul.f32.gmra.mxu0 %v6406
  %v6434 = vpop.f32.mrf.mxu0
  %v6435 = vadd.f32 0.0, %v6434
  %6436 = vdwg.mxu0
  %6437 = vmatpush.msra.mxu0 0.0
  %6438 = vmatpush.msra.mxu0 0.0
  %6439 = vmatpush.msra.mxu0 0.0
  %6440 = vmatpush.msra.mxu0 0.0
  %6441 = vmatpush.msra.mxu0 0.0
  %6442 = vmatpush.msra.mxu0 0.0
  %6443 = vmatpush.msra.mxu0 0.0
  %6444 = vmatpush.msra.mxu0 0.0
  %6445 = vmatpush.msra.mxu0 0.0
  %6446 = vmatpush.msra.mxu0 %v5659
  %6447 = vmatpush.msra.mxu0 %v5226
  %6448 = vmatpush.msra.mxu0 %v5225
  %6449 = vmatpush.msra.mxu0 %v5224
  %6450 = vmatpush.msra.mxu0 %v5223
  %6451 = vmatpush.msra.mxu0 %v5222
  %6452 = vmatpush.msra.mxu0 %v5221
  %6453 = vmatmul.f32.gmra.mxu0 %v6409
  %v6454 = vpop.f32.mrf.mxu0
  %v6455 = vadd.f32 %v6432, %v6454
  %6456 = vmatmul.f32.gmra.mxu0 %v6412
  %v6457 = vpop.f32.mrf.mxu0
  %v6458 = vadd.f32 %v6435, %v6457
  %6459 = vdwg.mxu0
  %v6460 = vadd.f32 %v6169, %v6399
  %v6461 = vadd.f32 %v6170, %v6402
  %v6462 = vadd.f32 %v6171, %v6455
  %v6463 = vadd.f32 %v6172, %v6458
  %v6464 = vmul.f32 %v6460, 0.00390625
  %v6465 = vmul.f32 %v6461, 0.00390625
  %v6466 = vmul.f32 %v6462, 0.00390625
  %v6467 = vmul.f32 %v6463, 0.00390625
  %v6468 = vmul.f32 %v6464, %v6464
  %v6469 = vmul.f32 %v6465, %v6465
  %v6470 = vsub.f32 %v6466, %v6468
  %v6471 = vsub.f32 %v6467, %v6469
  %v6472 = vadd.f32 %v6470, 1e-05
  %v6473 = vadd.f32 %v6471, 1e-05
  %v6474 = vrsqrt.pop %v6472
  %v6475 = vmul.f32 %v6474, %v6472
  %v6476 = vmul.f32 %v6475, %v6474
  %v6477 = vmul.f32 0.5, %v6476
  %v6478 = vsub.f32 1.5, %v6477
  %v6479 = vmul.f32 %v6474, %v6478
  %vm6480 = vweird.f32 %v6472
  %vm6481 = vweird.f32 %v6474
  %vm6482 = vmor %vm6480, %vm6481
  %v6483 = vsel %vm6482, %v6474, %v6479
  %v6484 = vrsqrt.pop %v6473
  %v6485 = vmul.f32 %v6484, %v6473
  %v6486 = vmul.f32 %v6485, %v6484
  %v6487 = vmul.f32 0.5, %v6486
  %v6488 = vsub.f32 1.5, %v6487
  %v6489 = vmul.f32 %v6484, %v6488
  %vm6490 = vweird.f32 %v6473
  %vm6491 = vweird.f32 %v6484
  %vm6492 = vmor %vm6490, %vm6491
  %v6493 = vsel %vm6492, %v6484, %v6489
  %6495 = vset.pattern.permute.xlu0 0
  %6496 = vperm.xlu0 %6495, %v5201
  %v6497 = vpop.permute.xlu0 %6496
  %6500 = vset.pattern.permute.xlu0 0
  %6501 = vperm.xlu0 %6500, %v5202
  %v6502 = vpop.permute.xlu0 %6501
  %v6504 = vmul.f32 %v6483, %v6497
  %v6505 = vmul.f32 %v6493, %v6502
  %v6506 = vmul.f32 %v6464, %v6504
  %v6507 = vmul.f32 %v6465, %v6505
  %6509 = vset.pattern.permute.xlu0 0
  %6510 = vperm.xlu0 %6509, %v5203
  %v6511 = vpop.permute.xlu0 %6510
  %6514 = vset.pattern.permute.xlu0 0
  %6515 = vperm.xlu0 %6514, %v5204
  %v6516 = vpop.permute.xlu0 %6515
  %v6518 = vsub.f32 %v6511, %v6506
  %v6519 = vsub.f32 %v6516, %v6507
  %6521 = vst [vmem:[#allocation1] ss:$4 sm:$0xff] %v5228
  %v6522 = vld.sshfl [vmem:[#allocation1] sm:$0xff pattern:$0x73625140]
  %v6523 = vld.sshfl [vmem:[#allocation1 + $0x8] sm:$0xff pattern:$0x73625140]
  %v6525 = vsel %vm4646, %v6504, 0
  %v6528 = vsel %vm4646, %v6505, 0
  %v6530 = vsel %vm4659, %v6522, 0
  %v6532 = vsel %vm4659, %v6523, 0
  %6534 = vmatpush.msra.mxu0 0.0
  %6535 = vmatpush.msra.mxu0 0.0
  %6536 = vmatpush.msra.mxu0 0.0
  %6537 = vmatpush.msra.mxu0 0.0
  %6538 = vmatpush.msra.mxu0 0.0
  %6539 = vmatpush.msra.mxu0 0.0
  %6540 = vmatpush.msra.mxu0 0.0
  %6541 = vmatpush.msra.mxu0 0.0
  %6542 = vmatpush.msra.mxu0 0.0
  %6543 = vmatpush.msra.mxu0 0.0
  %6544 = vmatpush.msra.mxu0 0.0
  %6545 = vmatpush.msra.mxu0 0.0
  %6546 = vmatpush.msra.mxu0 0.0
  %6547 = vmatpush.msra.mxu0 0.0
  %6548 = vmatpush.msra.mxu0 0.0
  %6549 = vmatpush.msra.mxu0 %v6530
  %6550 = vmatmul.f32.gmra.mxu0 %v6525
  %v6551 = vpop.f32.mrf.mxu0
  %v6552 = vadd.f32 0.0, %v6551
  %6553 = vmatmul.f32.gmra.mxu0 %v6528
  %v6554 = vpop.f32.mrf.mxu0
  %v6555 = vadd.f32 0.0, %v6554
  %6556 = vdwg.mxu0
  %6557 = vmatpush.msra.mxu0 0.0
  %6558 = vmatpush.msra.mxu0 0.0
  %6559 = vmatpush.msra.mxu0 0.0
  %6560 = vmatpush.msra.mxu0 0.0
  %6561 = vmatpush.msra.mxu0 0.0
  %6562 = vmatpush.msra.mxu0 0.0
  %6563 = vmatpush.msra.mxu0 0.0
  %6564 = vmatpush.msra.mxu0 0.0
  %6565 = vmatpush.msra.mxu0 0.0
  %6566 = vmatpush.msra.mxu0 0.0
  %6567 = vmatpush.msra.mxu0 0.0
  %6568 = vmatpush.msra.mxu0 0.0
  %6569 = vmatpush.msra.mxu0 0.0
  %6570 = vmatpush.msra.mxu0 0.0
  %6571 = vmatpush.msra.mxu0 0.0
  %6572 = vmatpush.msra.mxu0 %v6532
  %6573 = vmatmul.f32.gmra.mxu0 %v6525
  %v6574 = vpop.f32.mrf.mxu0
  %v6575 = vadd.f32 0.0, %v6574
  %6576 = vmatmul.f32.gmra.mxu0 %v6528
  %v6577 = vpop.f32.mrf.mxu0
  %v6578 = vadd.f32 0.0, %v6577
  %6579 = vdwg.mxu0
  %6580 = vst [vmem:[#allocation1] ss:$4 sm:$0xff] %v5228
  %v6581 = vld.sshfl [vmem:[#allocation1] sm:$0xff pattern:$0x73625140]
  %v6582 = vld.sshfl [vmem:[#allocation1 + $0x8] sm:$0xff pattern:$0x73625140]
  %v6584 = vsel %vm4646, %v6518, 0
  %v6587 = vsel %vm4646, %v6519, 0
  %v6589 = vsel %vm4659, %v6581, 0
  %v6591 = vsel %vm4659, %v6582, 0
  %6593 = vmatpush.msra.mxu0 0.0
  %6594 = vmatpush.msra.mxu0 0.0
  %6595 = vmatpush.msra.mxu0 0.0
  %6596 = vmatpush.msra.mxu0 0.0
  %6597 = vmatpush.msra.mxu0 0.0
  %6598 = vmatpush.msra.mxu0 0.0
  %6599 = vmatpush.msra.mxu0 0.0
  %6600 = vmatpush.msra.mxu0 0.0
  %6601 = vmatpush.msra.mxu0 0.0
  %6602 = vmatpush.msra.mxu0 0.0
  %6603 = vmatpush.msra.mxu0 0.0
  %6604 = vmatpush.msra.mxu0 0.0
  %6605 = vmatpush.msra.mxu0 0.0
  %6606 = vmatpush.msra.mxu0 0.0
  %6607 = vmatpush.msra.mxu0 0.0
  %6608 = vmatpush.msra.mxu0 %v6589
  %6609 = vmatmul.f32.gmra.mxu0 %v6584
  %v6610 = vpop.f32.mrf.mxu0
  %v6611 = vadd.f32 0.0, %v6610
  %6612 = vmatmul.f32.gmra.mxu0 %v6587
  %v6613 = vpop.f32.mrf.mxu0
  %v6614 = vadd.f32 0.0, %v6613
  %6615 = vdwg.mxu0
  %6616 = vmatpush.msra.mxu0 0.0
  %6617 = vmatpush.msra.mxu0 0.0
  %6618 = vmatpush.msra.mxu0 0.0
  %6619 = vmatpush.msra.mxu0 0.0
  %6620 = vmatpush.msra.mxu0 0.0
  %6621 = vmatpush.msra.mxu0 0.0
  %6622 = vmatpush.msra.mxu0 0.0
  %6623 = vmatpush.msra.mxu0 0.0
  %6624 = vmatpush.msra.mxu0 0.0
  %6625 = vmatpush.msra.mxu0 0.0
  %6626 = vmatpush.msra.mxu0 0.0
  %6627 = vmatpush.msra.mxu0 0.0
  %6628 = vmatpush.msra.mxu0 0.0
  %6629 = vmatpush.msra.mxu0 0.0
  %6630 = vmatpush.msra.mxu0 0.0
  %6631 = vmatpush.msra.mxu0 %v6591
  %6632 = vmatmul.f32.gmra.mxu0 %v6584
  %v6633 = vpop.f32.mrf.mxu0
  %v6634 = vadd.f32 0.0, %v6633
  %6635 = vmatmul.f32.gmra.mxu0 %v6587
  %v6636 = vpop.f32.mrf.mxu0
  %v6637 = vadd.f32 0.0, %v6636
  %6638 = vdwg.mxu0
  %v6639 = vmul.f32 %v5449, %v6552
  %v6640 = vmul.f32 %v5450, %v6575
  %v6641 = vmul.f32 %v5451, %v6555
  %v6642 = vmul.f32 %v5452, %v6578
  %v6643 = vadd.f32 %v6639, %v6611
  %v6644 = vadd.f32 %v6640, %v6634
  %v6645 = vadd.f32 %v6641, %v6614
  %v6646 = vadd.f32 %v6642, %v6637
  %v6647 = vmax.f32 %v6643, 0.0
  %v6648 = vmax.f32 %v6644, 0.0
  %v6649 = vmax.f32 %v6645, 0.0
  %v6650 = vmax.f32 %v6646, 0.0
  %v6651 = vpack.c.bf16 %v6649, %v6647
  %v6652 = vpack.c.bf16 %v6650, %v6648
  %v6653 = vld [vmem:[%s15] sm:$0xff]
  %v6654 = vld [vmem:[%s15 + $0x8] sm:$0xff]
  %v6655 = vld [vmem:[%s15 + $0x10] sm:$0xff]
  %v6656 = vld [vmem:[%s15 + $0x18] sm:$0xff]
  %v6657 = vld [vmem:[%s15 + $0x20] sm:$0xff]
  %v6658 = vld [vmem:[%s15 + $0x28] sm:$0xff]
  %v6659 = vld [vmem:[%s15 + $0x30] sm:$0xff]
  %v6660 = vld [vmem:[%s15 + $0x38] sm:$0xff]
  %v6661 = vld [vmem:[%s15 + $0x40] sm:$0xff]
  %v6662 = vld [vmem:[%s15 + $0x48] sm:$0xff]
  %v6663 = vld [vmem:[%s15 + $0x50] sm:$0xff]
  %v6664 = vld [vmem:[%s15 + $0x58] sm:$0xff]
  %v6665 = vld [vmem:[%s15 + $0x60] sm:$0xff]
  %v6666 = vld [vmem:[%s15 + $0x68] sm:$0xff]
  %v6667 = vld [vmem:[%s15 + $0x70] sm:$0xff]
  %v6668 = vld [vmem:[%s15 + $0x78] sm:$0xff]
  %v6669 = vld [vmem:[%s15 + $0x80] sm:$0xff]
  %v6670 = vld [vmem:[%s15 + $0x88] sm:$0xff]
  %v6671 = vld [vmem:[%s15 + $0x90] sm:$0xff]
  %v6672 = vld [vmem:[%s15 + $0x98] sm:$0xff]
  %v6673 = vld [vmem:[%s15 + $0xa0] sm:$0xff]
  %v6674 = vld [vmem:[%s15 + $0xa8] sm:$0xff]
  %v6675 = vld [vmem:[%s15 + $0xb0] sm:$0xff]
  %v6676 = vld [vmem:[%s15 + $0xb8] sm:$0xff]
  %v6677 = vld [vmem:[%s15 + $0xc0] sm:$0xff]
  %v6678 = vld [vmem:[%s15 + $0xc8] sm:$0xff]
  %v6679 = vld [vmem:[%s15 + $0xd0] sm:$0xff]
  %v6680 = vld [vmem:[%s15 + $0xd8] sm:$0xff]
  %v6681 = vld [vmem:[%s15 + $0xe0] sm:$0xff]
  %v6682 = vld [vmem:[%s15 + $0xe8] sm:$0xff]
  %v6683 = vld [vmem:[%s15 + $0xf0] sm:$0xff]
  %v6684 = vld [vmem:[%s15 + $0xf8] sm:$0xff]
  %v6685 = vld [vmem:[%s15 + $0x100] sm:$0xff]
  %v6686 = vld [vmem:[%s15 + $0x108] sm:$0xff]
  %v6687 = vld [vmem:[%s15 + $0x110] sm:$0xff]
  %v6688 = vld [vmem:[%s15 + $0x118] sm:$0xff]
  %v6689 = vld [vmem:[%s15 + $0x120] sm:$0xff]
  %v6690 = vld [vmem:[%s15 + $0x128] sm:$0xff]
  %v6691 = vld [vmem:[%s15 + $0x130] sm:$0xff]
  %v6692 = vld [vmem:[%s15 + $0x138] sm:$0xff]
  %v6693 = vld [vmem:[%s15 + $0x140] sm:$0xff]
  %v6694 = vld [vmem:[%s15 + $0x148] sm:$0xff]
  %v6695 = vld [vmem:[%s15 + $0x150] sm:$0xff]
  %v6696 = vld [vmem:[%s15 + $0x158] sm:$0xff]
  %v6697 = vld [vmem:[%s15 + $0x160] sm:$0xff]
  %v6698 = vld [vmem:[%s15 + $0x168] sm:$0xff]
  %v6699 = vld [vmem:[%s15 + $0x170] sm:$0xff]
  %v6700 = vld [vmem:[%s15 + $0x178] sm:$0xff]
  %v6701 = vld [vmem:[%s15 + $0x180] sm:$0xff]
  %v6702 = vld [vmem:[%s15 + $0x188] sm:$0xff]
  %v6703 = vld [vmem:[%s15 + $0x190] sm:$0xff]
  %v6704 = vld [vmem:[%s15 + $0x198] sm:$0xff]
  %v6705 = vld [vmem:[%s15 + $0x1a0] sm:$0xff]
  %v6706 = vld [vmem:[%s15 + $0x1a8] sm:$0xff]
  %v6707 = vld [vmem:[%s15 + $0x1b0] sm:$0xff]
  %v6708 = vld [vmem:[%s15 + $0x1b8] sm:$0xff]
  %v6709 = vld [vmem:[%s15 + $0x1c0] sm:$0xff]
  %v6710 = vld [vmem:[%s15 + $0x1c8] sm:$0xff]
  %v6711 = vld [vmem:[%s15 + $0x1d0] sm:$0xff]
  %v6712 = vld [vmem:[%s15 + $0x1d8] sm:$0xff]
  %v6713 = vld [vmem:[%s15 + $0x1e0] sm:$0xff]
  %v6714 = vld [vmem:[%s15 + $0x1e8] sm:$0xff]
  %v6715 = vld [vmem:[%s15 + $0x1f0] sm:$0xff]
  %v6716 = vld [vmem:[%s15 + $0x1f8] sm:$0xff]
  %v6717 = vld [vmem:[%s15 + $0x200] sm:$0xff]
  %v6718 = vld [vmem:[%s15 + $0x208] sm:$0xff]
  %v6719 = vld [vmem:[%s15 + $0x210] sm:$0x77]
  %v6720 = vld [vmem:[%s15 + $0x218] sm:$0x77]
  %v6721 = vld [vmem:[%s15 + $0x220] sm:$0x77]
  %v6722 = vmul.f32 %v5647, %v6552
  %v6723 = vmul.f32 %v5648, %v6575
  %v6724 = vmul.f32 %v5649, %v6555
  %v6725 = vmul.f32 %v5650, %v6578
  %v6726 = vadd.f32 %v6722, %v6611
  %v6727 = vadd.f32 %v6723, %v6634
  %v6728 = vadd.f32 %v6724, %v6614
  %v6729 = vadd.f32 %v6725, %v6637
  %v6730 = vmax.f32 %v6726, 0.0
  %v6731 = vmax.f32 %v6727, 0.0
  %v6732 = vmax.f32 %v6728, 0.0
  %v6733 = vmax.f32 %v6729, 0.0
  %v6734 = vpack.c.bf16 %v6732, %v6730
  %v6735 = vpack.c.bf16 %v6733, %v6731
  %s6736 = scalar_lea.vmem %s15, 552
  %v6737 = vld [vmem:[%s6736] sm:$0xff]
  %v6738 = vld [vmem:[%s6736 + $0x8] sm:$0xff]
  %v6739 = vld [vmem:[%s6736 + $0x10] sm:$0xff]
  %v6740 = vld [vmem:[%s6736 + $0x18] sm:$0xff]
  %v6741 = vld [vmem:[%s6736 + $0x20] sm:$0xff]
  %v6742 = vld [vmem:[%s6736 + $0x28] sm:$0xff]
  %v6743 = vld [vmem:[%s6736 + $0x30] sm:$0xff]
  %v6744 = vld [vmem:[%s6736 + $0x38] sm:$0xff]
  %v6745 = vld [vmem:[%s6736 + $0x40] sm:$0xff]
  %v6746 = vld [vmem:[%s6736 + $0x48] sm:$0xff]
  %v6747 = vld [vmem:[%s6736 + $0x50] sm:$0xff]
  %v6748 = vld [vmem:[%s6736 + $0x58] sm:$0xff]
  %v6749 = vld [vmem:[%s6736 + $0x60] sm:$0xff]
  %v6750 = vld [vmem:[%s6736 + $0x68] sm:$0xff]
  %v6751 = vld [vmem:[%s6736 + $0x70] sm:$0xff]
  %v6752 = vld [vmem:[%s6736 + $0x78] sm:$0xff]
  %v6753 = vld [vmem:[%s6736 + $0x80] sm:$0xff]
  %v6754 = vld [vmem:[%s6736 + $0x88] sm:$0xff]
  %v6755 = vld [vmem:[%s6736 + $0x90] sm:$0xff]
  %v6756 = vld [vmem:[%s6736 + $0x98] sm:$0xff]
  %v6757 = vld [vmem:[%s6736 + $0xa0] sm:$0xff]
  %v6758 = vld [vmem:[%s6736 + $0xa8] sm:$0xff]
  %v6759 = vld [vmem:[%s6736 + $0xb0] sm:$0xff]
  %v6760 = vld [vmem:[%s6736 + $0xb8] sm:$0xff]
  %v6761 = vld [vmem:[%s6736 + $0xc0] sm:$0xff]
  %v6762 = vld [vmem:[%s6736 + $0xc8] sm:$0xff]
  %v6763 = vld [vmem:[%s6736 + $0xd0] sm:$0xff]
  %v6764 = vld [vmem:[%s6736 + $0xd8] sm:$0xff]
  %v6765 = vld [vmem:[%s6736 + $0xe0] sm:$0xff]
  %v6766 = vld [vmem:[%s6736 + $0xe8] sm:$0xff]
  %v6767 = vld [vmem:[%s6736 + $0xf0] sm:$0xff]
  %v6768 = vld [vmem:[%s6736 + $0xf8] sm:$0xff]
  %v6769 = vld [vmem:[%s6736 + $0x100] sm:$0xff]
  %v6770 = vld [vmem:[%s6736 + $0x108] sm:$0xff]
  %v6771 = vld [vmem:[%s6736 + $0x110] sm:$0xff]
  %v6772 = vld [vmem:[%s6736 + $0x118] sm:$0xff]
  %v6773 = vld [vmem:[%s6736 + $0x120] sm:$0xff]
  %v6774 = vld [vmem:[%s6736 + $0x128] sm:$0xff]
  %v6775 = vld [vmem:[%s6736 + $0x130] sm:$0xff]
  %v6776 = vld [vmem:[%s6736 + $0x138] sm:$0xff]
  %v6777 = vld [vmem:[%s6736 + $0x140] sm:$0xff]
  %v6778 = vld [vmem:[%s6736 + $0x148] sm:$0xff]
  %v6779 = vld [vmem:[%s6736 + $0x150] sm:$0xff]
  %v6780 = vld [vmem:[%s6736 + $0x158] sm:$0xff]
  %v6781 = vld [vmem:[%s6736 + $0x160] sm:$0xff]
  %v6782 = vld [vmem:[%s6736 + $0x168] sm:$0xff]
  %v6783 = vld [vmem:[%s6736 + $0x170] sm:$0xff]
  %v6784 = vld [vmem:[%s6736 + $0x178] sm:$0xff]
  %v6785 = vld [vmem:[%s6736 + $0x180] sm:$0xff]
  %v6786 = vld [vmem:[%s6736 + $0x188] sm:$0xff]
  %v6787 = vld [vmem:[%s6736 + $0x190] sm:$0xff]
  %v6788 = vld [vmem:[%s6736 + $0x198] sm:$0xff]
  %v6789 = vld [vmem:[%s6736 + $0x1a0] sm:$0xff]
  %v6790 = vld [vmem:[%s6736 + $0x1a8] sm:$0xff]
  %v6791 = vld [vmem:[%s6736 + $0x1b0] sm:$0xff]
  %v6792 = vld [vmem:[%s6736 + $0x1b8] sm:$0xff]
  %v6793 = vld [vmem:[%s6736 + $0x1c0] sm:$0xff]
  %v6794 = vld [vmem:[%s6736 + $0x1c8] sm:$0xff]
  %v6795 = vld [vmem:[%s6736 + $0x1d0] sm:$0xff]
  %v6796 = vld [vmem:[%s6736 + $0x1d8] sm:$0xff]
  %v6797 = vld [vmem:[%s6736 + $0x1e0] sm:$0xff]
  %v6798 = vld [vmem:[%s6736 + $0x1e8] sm:$0xff]
  %v6799 = vld [vmem:[%s6736 + $0x1f0] sm:$0xff]
  %v6800 = vld [vmem:[%s6736 + $0x1f8] sm:$0xff]
  %v6801 = vld [vmem:[%s6736 + $0x200] sm:$0xff]
  %v6802 = vld [vmem:[%s6736 + $0x208] sm:$0xff]
  %v6803 = vld [vmem:[%s6736 + $0x210] sm:$0x77]
  %v6804 = vld [vmem:[%s6736 + $0x218] sm:$0x77]
  %v6805 = vld [vmem:[%s6736 + $0x220] sm:$0x77]
  %v6875 = vunpack.c.l.b16 %v6737
  %v6876 = vunpack.c.h.b16 %v6737
  %v6877 = vunpack.c.l.b16 %v6738
  %v6878 = vunpack.c.h.b16 %v6738
  %v6879 = vunpack.c.l.b16 %v6739
  %v6880 = vunpack.c.h.b16 %v6739
  %v6881 = vunpack.c.l.b16 %v6740
  %v6882 = vunpack.c.h.b16 %v6740
  %v6883 = vunpack.c.l.b16 %v6741
  %v6884 = vunpack.c.h.b16 %v6741
  %v6885 = vunpack.c.l.b16 %v6742
  %v6886 = vunpack.c.h.b16 %v6742
  %v6887 = vunpack.c.l.b16 %v6743
  %v6888 = vunpack.c.h.b16 %v6743
  %v6889 = vunpack.c.l.b16 %v6744
  %v6890 = vunpack.c.h.b16 %v6744
  %v6891 = vunpack.c.l.b16 %v6745
  %v6892 = vunpack.c.h.b16 %v6745
  %v6893 = vunpack.c.l.b16 %v6746
  %v6894 = vunpack.c.h.b16 %v6746
  %v6895 = vunpack.c.l.b16 %v6747
  %v6896 = vunpack.c.h.b16 %v6747
  %v6897 = vunpack.c.l.b16 %v6748
  %v6898 = vunpack.c.h.b16 %v6748
  %v6899 = vunpack.c.l.b16 %v6749
  %v6900 = vunpack.c.h.b16 %v6749
  %v6901 = vunpack.c.l.b16 %v6750
  %v6902 = vunpack.c.h.b16 %v6750
  %v6903 = vunpack.c.l.b16 %v6751
  %v6904 = vunpack.c.h.b16 %v6751
  %v6905 = vunpack.c.l.b16 %v6752
  %v6906 = vunpack.c.h.b16 %v6752
  %v6907 = vunpack.c.l.b16 %v6753
  %v6908 = vunpack.c.h.b16 %v6753
  %v6909 = vunpack.c.l.b16 %v6754
  %v6910 = vunpack.c.h.b16 %v6754
  %v6911 = vunpack.c.l.b16 %v6755
  %v6912 = vunpack.c.h.b16 %v6755
  %v6913 = vunpack.c.l.b16 %v6756
  %v6914 = vunpack.c.h.b16 %v6756
  %v6915 = vunpack.c.l.b16 %v6757
  %v6916 = vunpack.c.h.b16 %v6757
  %v6917 = vunpack.c.l.b16 %v6758
  %v6918 = vunpack.c.h.b16 %v6758
  %v6919 = vunpack.c.l.b16 %v6759
  %v6920 = vunpack.c.h.b16 %v6759
  %v6921 = vunpack.c.l.b16 %v6760
  %v6922 = vunpack.c.h.b16 %v6760
  %v6923 = vunpack.c.l.b16 %v6761
  %v6924 = vunpack.c.h.b16 %v6761
  %v6925 = vunpack.c.l.b16 %v6762
  %v6926 = vunpack.c.h.b16 %v6762
  %v6927 = vunpack.c.l.b16 %v6763
  %v6928 = vunpack.c.h.b16 %v6763
  %v6929 = vunpack.c.l.b16 %v6764
  %v6930 = vunpack.c.h.b16 %v6764
  %v6931 = vunpack.c.l.b16 %v6765
  %v6932 = vunpack.c.h.b16 %v6765
  %v6933 = vunpack.c.l.b16 %v6766
  %v6934 = vunpack.c.h.b16 %v6766
  %v6935 = vunpack.c.l.b16 %v6767
  %v6936 = vunpack.c.h.b16 %v6767
  %v6937 = vunpack.c.l.b16 %v6768
  %v6938 = vunpack.c.h.b16 %v6768
  %v6939 = vunpack.c.l.b16 %v6769
  %v6940 = vunpack.c.h.b16 %v6769
  %v6941 = vunpack.c.l.b16 %v6770
  %v6942 = vunpack.c.h.b16 %v6770
  %v6943 = vunpack.c.l.b16 %v6771
  %v6944 = vunpack.c.h.b16 %v6771
  %v6945 = vunpack.c.l.b16 %v6772
  %v6946 = vunpack.c.h.b16 %v6772
  %v6947 = vunpack.c.l.b16 %v6773
  %v6948 = vunpack.c.h.b16 %v6773
  %v6949 = vunpack.c.l.b16 %v6774
  %v6950 = vunpack.c.h.b16 %v6774
  %v6951 = vunpack.c.l.b16 %v6775
  %v6952 = vunpack.c.h.b16 %v6775
  %v6953 = vunpack.c.l.b16 %v6776
  %v6954 = vunpack.c.h.b16 %v6776
  %v6955 = vunpack.c.l.b16 %v6777
  %v6956 = vunpack.c.h.b16 %v6777
  %v6957 = vunpack.c.l.b16 %v6778
  %v6958 = vunpack.c.h.b16 %v6778
  %v6959 = vunpack.c.l.b16 %v6779
  %v6960 = vunpack.c.h.b16 %v6779
  %v6961 = vunpack.c.l.b16 %v6780
  %v6962 = vunpack.c.h.b16 %v6780
  %v6963 = vunpack.c.l.b16 %v6781
  %v6964 = vunpack.c.h.b16 %v6781
  %v6965 = vunpack.c.l.b16 %v6782
  %v6966 = vunpack.c.h.b16 %v6782
  %v6967 = vunpack.c.l.b16 %v6783
  %v6968 = vunpack.c.h.b16 %v6783
  %v6969 = vunpack.c.l.b16 %v6784
  %v6970 = vunpack.c.h.b16 %v6784
  %v6971 = vunpack.c.l.b16 %v6785
  %v6972 = vunpack.c.h.b16 %v6785
  %v6973 = vunpack.c.l.b16 %v6786
  %v6974 = vunpack.c.h.b16 %v6786
  %v6975 = vunpack.c.l.b16 %v6787
  %v6976 = vunpack.c.h.b16 %v6787
  %v6977 = vunpack.c.l.b16 %v6788
  %v6978 = vunpack.c.h.b16 %v6788
  %v6979 = vunpack.c.l.b16 %v6789
  %v6980 = vunpack.c.h.b16 %v6789
  %v6981 = vunpack.c.l.b16 %v6790
  %v6982 = vunpack.c.h.b16 %v6790
  %v6983 = vunpack.c.l.b16 %v6791
  %v6984 = vunpack.c.h.b16 %v6791
  %v6985 = vunpack.c.l.b16 %v6792
  %v6986 = vunpack.c.h.b16 %v6792
  %v6987 = vunpack.c.l.b16 %v6793
  %v6988 = vunpack.c.h.b16 %v6793
  %v6989 = vunpack.c.l.b16 %v6794
  %v6990 = vunpack.c.h.b16 %v6794
  %v6991 = vunpack.c.l.b16 %v6795
  %v6992 = vunpack.c.h.b16 %v6795
  %v6993 = vunpack.c.l.b16 %v6796
  %v6994 = vunpack.c.h.b16 %v6796
  %v6995 = vunpack.c.l.b16 %v6797
  %v6996 = vunpack.c.h.b16 %v6797
  %v6997 = vunpack.c.l.b16 %v6798
  %v6998 = vunpack.c.h.b16 %v6798
  %v6999 = vunpack.c.l.b16 %v6799
  %v7000 = vunpack.c.h.b16 %v6799
  %v7001 = vunpack.c.l.b16 %v6800
  %v7002 = vunpack.c.h.b16 %v6800
  %v7003 = vunpack.c.l.b16 %v6801
  %v7004 = vunpack.c.h.b16 %v6801
  %v7005 = vunpack.c.l.b16 %v6802
  %v7006 = vunpack.c.h.b16 %v6802
  %v7007 = vunpack.c.l.b16 %v6803
  %v7008 = vunpack.c.h.b16 %v6803
  %v7009 = vunpack.c.l.b16 %v6804
  %v7010 = vunpack.c.h.b16 %v6804
  %v7011 = vunpack.c.l.b16 %v6805
  %v7012 = vunpack.c.h.b16 %v6805
  %v7013 = vpack.c.b16 %v6881, %v6875
  %v7014 = vpack.c.b16 %v6882, %v6876
  %v7015 = vpack.c.b16 %v6883, %v6877
  %v7016 = vpack.c.b16 %v6884, %v6878
  %v7017 = vpack.c.b16 %v6885, %v6879
  %v7018 = vpack.c.b16 %v6886, %v6880
  %v7019 = vpack.c.b16 %v6893, %v6887
  %v7020 = vpack.c.b16 %v6894, %v6888
  %v7021 = vpack.c.b16 %v6895, %v6889
  %v7022 = vpack.c.b16 %v6896, %v6890
  %v7023 = vpack.c.b16 %v6897, %v6891
  %v7024 = vpack.c.b16 %v6898, %v6892
  %v7025 = vpack.c.b16 %v6905, %v6899
  %v7026 = vpack.c.b16 %v6906, %v6900
  %v7027 = vpack.c.b16 %v6907, %v6901
  %v7028 = vpack.c.b16 %v6908, %v6902
  %v7029 = vpack.c.b16 %v6909, %v6903
  %v7030 = vpack.c.b16 %v6910, %v6904
  %v7031 = vpack.c.b16 %v6917, %v6911
  %v7032 = vpack.c.b16 %v6918, %v6912
  %v7033 = vpack.c.b16 %v6919, %v6913
  %v7034 = vpack.c.b16 %v6920, %v6914
  %v7035 = vpack.c.b16 %v6921, %v6915
  %v7036 = vpack.c.b16 %v6922, %v6916
  %v7037 = vpack.c.b16 %v6929, %v6923
  %v7038 = vpack.c.b16 %v6930, %v6924
  %v7039 = vpack.c.b16 %v6931, %v6925
  %v7040 = vpack.c.b16 %v6932, %v6926
  %v7041 = vpack.c.b16 %v6933, %v6927
  %v7042 = vpack.c.b16 %v6934, %v6928
  %v7043 = vpack.c.b16 %v6941, %v6935
  %v7044 = vpack.c.b16 %v6942, %v6936
  %v7045 = vpack.c.b16 %v6943, %v6937
  %v7046 = vpack.c.b16 %v6944, %v6938
  %v7047 = vpack.c.b16 %v6945, %v6939
  %v7048 = vpack.c.b16 %v6946, %v6940
  %v7049 = vpack.c.b16 %v6953, %v6947
  %v7050 = vpack.c.b16 %v6954, %v6948
  %v7051 = vpack.c.b16 %v6955, %v6949
  %v7052 = vpack.c.b16 %v6956, %v6950
  %v7053 = vpack.c.b16 %v6957, %v6951
  %v7054 = vpack.c.b16 %v6958, %v6952
  %v7055 = vpack.c.b16 %v6965, %v6959
  %v7056 = vpack.c.b16 %v6966, %v6960
  %v7057 = vpack.c.b16 %v6967, %v6961
  %v7058 = vpack.c.b16 %v6968, %v6962
  %v7059 = vpack.c.b16 %v6969, %v6963
  %v7060 = vpack.c.b16 %v6970, %v6964
  %v7061 = vpack.c.b16 %v6977, %v6971
  %v7062 = vpack.c.b16 %v6978, %v6972
  %v7063 = vpack.c.b16 %v6979, %v6973
  %v7064 = vpack.c.b16 %v6980, %v6974
  %v7065 = vpack.c.b16 %v6981, %v6975
  %v7066 = vpack.c.b16 %v6982, %v6976
  %v7067 = vpack.c.b16 %v6989, %v6983
  %v7068 = vpack.c.b16 %v6990, %v6984
  %v7069 = vpack.c.b16 %v6991, %v6985
  %v7070 = vpack.c.b16 %v6992, %v6986
  %v7071 = vpack.c.b16 %v6993, %v6987
  %v7072 = vpack.c.b16 %v6994, %v6988
  %v7073 = vpack.c.b16 %v7001, %v6995
  %v7074 = vpack.c.b16 %v7002, %v6996
  %v7075 = vpack.c.b16 %v7003, %v6997
  %v7076 = vpack.c.b16 %v7004, %v6998
  %v7077 = vpack.c.b16 %v7005, %v6999
  %v7078 = vpack.c.b16 %v7006, %v7000
  %v7079 = vpack.c.b16 %v7007, %v7007
  %v7080 = vpack.c.b16 %v7008, %v7008
  %v7081 = vpack.c.b16 %v7009, %v7009
  %v7082 = vpack.c.b16 %v7010, %v7010
  %v7083 = vpack.c.b16 %v7011, %v7011
  %v7084 = vpack.c.b16 %v7012, %v7012
  %v7152 = vsel %vm5651, %v6735, 0
  %vm7154 = vcmask 1042432
  %v7156 = vsel %vm7154, %v7079, 0
  %v7159 = vsel %vm7154, %v7080, 0
  %v7162 = vsel %vm7154, %v7081, 0
  %v7165 = vsel %vm7154, %v7082, 0
  %v7168 = vsel %vm7154, %v7083, 0
  %v7171 = vsel %vm7154, %v7084, 0
  %7173 = vmatpush.bf16.msra.mxu0 %v7055
  %7174 = vmatpush.bf16.msra.mxu0 %v7049
  %7175 = vmatpush.bf16.msra.mxu0 %v7043
  %7176 = vmatpush.bf16.msra.mxu0 %v7037
  %7177 = vmatpush.bf16.msra.mxu0 %v7031
  %7178 = vmatpush.bf16.msra.mxu0 %v7025
  %7179 = vmatpush.bf16.msra.mxu0 %v7019
  %7180 = vmatpush.bf16.msra.mxu0 %v7013
  %7181 = vmatmul.bf16.gmra.mxu0 %v6734
  %v7182 = vpop.f32.mrf.mxu0
  %v7183 = vadd.f32 0.0, %v7182
  %v7184 = vpop.f32.mrf.mxu0
  %v7185 = vadd.f32 0.0, %v7184
  %7186 = vdwg.mxu0
  %7187 = vmatpush.bf16.msra.mxu0 0
  %7188 = vmatpush.bf16.msra.mxu0 0
  %7189 = vmatpush.bf16.msra.mxu0 0
  %7190 = vmatpush.bf16.msra.mxu0 0
  %7191 = vmatpush.bf16.msra.mxu0 %v7156
  %7192 = vmatpush.bf16.msra.mxu0 %v7073
  %7193 = vmatpush.bf16.msra.mxu0 %v7067
  %7194 = vmatpush.bf16.msra.mxu0 %v7061
  %7195 = vmatmul.bf16.gmra.mxu0 %v7152
  %v7196 = vpop.f32.mrf.mxu0
  %v7197 = vadd.f32 %v7183, %v7196
  %v7198 = vpop.f32.mrf.mxu0
  %v7199 = vadd.f32 %v7185, %v7198
  %7200 = vdwg.mxu0
  %7201 = vmatpush.bf16.msra.mxu0 %v7056
  %7202 = vmatpush.bf16.msra.mxu0 %v7050
  %7203 = vmatpush.bf16.msra.mxu0 %v7044
  %7204 = vmatpush.bf16.msra.mxu0 %v7038
  %7205 = vmatpush.bf16.msra.mxu0 %v7032
  %7206 = vmatpush.bf16.msra.mxu0 %v7026
  %7207 = vmatpush.bf16.msra.mxu0 %v7020
  %7208 = vmatpush.bf16.msra.mxu0 %v7014
  %7209 = vmatmul.bf16.gmra.mxu0 %v6734
  %v7210 = vpop.f32.mrf.mxu0
  %v7211 = vadd.f32 0.0, %v7210
  %v7212 = vpop.f32.mrf.mxu0
  %v7213 = vadd.f32 0.0, %v7212
  %7214 = vdwg.mxu0
  %7215 = vmatpush.bf16.msra.mxu0 0
  %7216 = vmatpush.bf16.msra.mxu0 0
  %7217 = vmatpush.bf16.msra.mxu0 0
  %7218 = vmatpush.bf16.msra.mxu0 0
  %7219 = vmatpush.bf16.msra.mxu0 %v7159
  %7220 = vmatpush.bf16.msra.mxu0 %v7074
  %7221 = vmatpush.bf16.msra.mxu0 %v7068
  %7222 = vmatpush.bf16.msra.mxu0 %v7062
  %7223 = vmatmul.bf16.gmra.mxu0 %v7152
  %v7224 = vpop.f32.mrf.mxu0
  %v7225 = vadd.f32 %v7211, %v7224
  %v7226 = vpop.f32.mrf.mxu0
  %v7227 = vadd.f32 %v7213, %v7226
  %7228 = vdwg.mxu0
  %7229 = vmatpush.bf16.msra.mxu0 %v7057
  %7230 = vmatpush.bf16.msra.mxu0 %v7051
  %7231 = vmatpush.bf16.msra.mxu0 %v7045
  %7232 = vmatpush.bf16.msra.mxu0 %v7039
  %7233 = vmatpush.bf16.msra.mxu0 %v7033
  %7234 = vmatpush.bf16.msra.mxu0 %v7027
  %7235 = vmatpush.bf16.msra.mxu0 %v7021
  %7236 = vmatpush.bf16.msra.mxu0 %v7015
  %7237 = vmatmul.bf16.gmra.mxu0 %v6734
  %v7238 = vpop.f32.mrf.mxu0
  %v7239 = vadd.f32 0.0, %v7238
  %v7240 = vpop.f32.mrf.mxu0
  %v7241 = vadd.f32 0.0, %v7240
  %7242 = vdwg.mxu0
  %7243 = vmatpush.bf16.msra.mxu0 0
  %7244 = vmatpush.bf16.msra.mxu0 0
  %7245 = vmatpush.bf16.msra.mxu0 0
  %7246 = vmatpush.bf16.msra.mxu0 0
  %7247 = vmatpush.bf16.msra.mxu0 %v7162
  %7248 = vmatpush.bf16.msra.mxu0 %v7075
  %7249 = vmatpush.bf16.msra.mxu0 %v7069
  %7250 = vmatpush.bf16.msra.mxu0 %v7063
  %7251 = vmatmul.bf16.gmra.mxu0 %v7152
  %v7252 = vpop.f32.mrf.mxu0
  %v7253 = vadd.f32 %v7239, %v7252
  %v7254 = vpop.f32.mrf.mxu0
  %v7255 = vadd.f32 %v7241, %v7254
  %7256 = vdwg.mxu0
  %7257 = vmatpush.bf16.msra.mxu0 %v7058
  %7258 = vmatpush.bf16.msra.mxu0 %v7052
  %7259 = vmatpush.bf16.msra.mxu0 %v7046
  %7260 = vmatpush.bf16.msra.mxu0 %v7040
  %7261 = vmatpush.bf16.msra.mxu0 %v7034
  %7262 = vmatpush.bf16.msra.mxu0 %v7028
  %7263 = vmatpush.bf16.msra.mxu0 %v7022
  %7264 = vmatpush.bf16.msra.mxu0 %v7016
  %7265 = vmatmul.bf16.gmra.mxu0 %v6734
  %v7266 = vpop.f32.mrf.mxu0
  %v7267 = vadd.f32 0.0, %v7266
  %v7268 = vpop.f32.mrf.mxu0
  %v7269 = vadd.f32 0.0, %v7268
  %7270 = vdwg.mxu0
  %7271 = vmatpush.bf16.msra.mxu0 0
  %7272 = vmatpush.bf16.msra.mxu0 0
  %7273 = vmatpush.bf16.msra.mxu0 0
  %7274 = vmatpush.bf16.msra.mxu0 0
  %7275 = vmatpush.bf16.msra.mxu0 %v7165
  %7276 = vmatpush.bf16.msra.mxu0 %v7076
  %7277 = vmatpush.bf16.msra.mxu0 %v7070
  %7278 = vmatpush.bf16.msra.mxu0 %v7064
  %7279 = vmatmul.bf16.gmra.mxu0 %v7152
  %v7280 = vpop.f32.mrf.mxu0
  %v7281 = vadd.f32 %v7267, %v7280
  %v7282 = vpop.f32.mrf.mxu0
  %v7283 = vadd.f32 %v7269, %v7282
  %7284 = vdwg.mxu0
  %7285 = vmatpush.bf16.msra.mxu0 %v7059
  %7286 = vmatpush.bf16.msra.mxu0 %v7053
  %7287 = vmatpush.bf16.msra.mxu0 %v7047
  %7288 = vmatpush.bf16.msra.mxu0 %v7041
  %7289 = vmatpush.bf16.msra.mxu0 %v7035
  %7290 = vmatpush.bf16.msra.mxu0 %v7029
  %7291 = vmatpush.bf16.msra.mxu0 %v7023
  %7292 = vmatpush.bf16.msra.mxu0 %v7017
  %7293 = vmatmul.bf16.gmra.mxu0 %v6734
  %v7294 = vpop.f32.mrf.mxu0
  %v7295 = vadd.f32 0.0, %v7294
  %v7296 = vpop.f32.mrf.mxu0
  %v7297 = vadd.f32 0.0, %v7296
  %7298 = vdwg.mxu0
  %7299 = vmatpush.bf16.msra.mxu0 0
  %7300 = vmatpush.bf16.msra.mxu0 0
  %7301 = vmatpush.bf16.msra.mxu0 0
  %7302 = vmatpush.bf16.msra.mxu0 0
  %7303 = vmatpush.bf16.msra.mxu0 %v7168
  %7304 = vmatpush.bf16.msra.mxu0 %v7077
  %7305 = vmatpush.bf16.msra.mxu0 %v7071
  %7306 = vmatpush.bf16.msra.mxu0 %v7065
  %7307 = vmatmul.bf16.gmra.mxu0 %v7152
  %v7308 = vpop.f32.mrf.mxu0
  %v7309 = vadd.f32 %v7295, %v7308
  %v7310 = vpop.f32.mrf.mxu0
  %v7311 = vadd.f32 %v7297, %v7310
  %7312 = vdwg.mxu0
  %7313 = vmatpush.bf16.msra.mxu0 %v7060
  %7314 = vmatpush.bf16.msra.mxu0 %v7054
  %7315 = vmatpush.bf16.msra.mxu0 %v7048
  %7316 = vmatpush.bf16.msra.mxu0 %v7042
  %7317 = vmatpush.bf16.msra.mxu0 %v7036
  %7318 = vmatpush.bf16.msra.mxu0 %v7030
  %7319 = vmatpush.bf16.msra.mxu0 %v7024
  %7320 = vmatpush.bf16.msra.mxu0 %v7018
  %7321 = vmatmul.bf16.gmra.mxu0 %v6734
  %v7322 = vpop.f32.mrf.mxu0
  %v7323 = vadd.f32 0.0, %v7322
  %v7324 = vpop.f32.mrf.mxu0
  %v7325 = vadd.f32 0.0, %v7324
  %7326 = vdwg.mxu0
  %7327 = vmatpush.bf16.msra.mxu0 0
  %7328 = vmatpush.bf16.msra.mxu0 0
  %7329 = vmatpush.bf16.msra.mxu0 0
  %7330 = vmatpush.bf16.msra.mxu0 0
  %7331 = vmatpush.bf16.msra.mxu0 %v7171
  %7332 = vmatpush.bf16.msra.mxu0 %v7078
  %7333 = vmatpush.bf16.msra.mxu0 %v7072
  %7334 = vmatpush.bf16.msra.mxu0 %v7066
  %7335 = vmatmul.bf16.gmra.mxu0 %v7152
  %v7336 = vpop.f32.mrf.mxu0
  %v7337 = vadd.f32 %v7323, %v7336
  %v7338 = vpop.f32.mrf.mxu0
  %v7339 = vadd.f32 %v7325, %v7338
  %7340 = vdwg.mxu0
  %v7410 = vunpack.c.l.b16 %v6653
  %v7411 = vunpack.c.h.b16 %v6653
  %v7412 = vunpack.c.l.b16 %v6654
  %v7413 = vunpack.c.h.b16 %v6654
  %v7414 = vunpack.c.l.b16 %v6655
  %v7415 = vunpack.c.h.b16 %v6655
  %v7416 = vunpack.c.l.b16 %v6656
  %v7417 = vunpack.c.h.b16 %v6656
  %v7418 = vunpack.c.l.b16 %v6657
  %v7419 = vunpack.c.h.b16 %v6657
  %v7420 = vunpack.c.l.b16 %v6658
  %v7421 = vunpack.c.h.b16 %v6658
  %v7422 = vunpack.c.l.b16 %v6659
  %v7423 = vunpack.c.h.b16 %v6659
  %v7424 = vunpack.c.l.b16 %v6660
  %v7425 = vunpack.c.h.b16 %v6660
  %v7426 = vunpack.c.l.b16 %v6661
  %v7427 = vunpack.c.h.b16 %v6661
  %v7428 = vunpack.c.l.b16 %v6662
  %v7429 = vunpack.c.h.b16 %v6662
  %v7430 = vunpack.c.l.b16 %v6663
  %v7431 = vunpack.c.h.b16 %v6663
  %v7432 = vunpack.c.l.b16 %v6664
  %v7433 = vunpack.c.h.b16 %v6664
  %v7434 = vunpack.c.l.b16 %v6665
  %v7435 = vunpack.c.h.b16 %v6665
  %v7436 = vunpack.c.l.b16 %v6666
  %v7437 = vunpack.c.h.b16 %v6666
  %v7438 = vunpack.c.l.b16 %v6667
  %v7439 = vunpack.c.h.b16 %v6667
  %v7440 = vunpack.c.l.b16 %v6668
  %v7441 = vunpack.c.h.b16 %v6668
  %v7442 = vunpack.c.l.b16 %v6669
  %v7443 = vunpack.c.h.b16 %v6669
  %v7444 = vunpack.c.l.b16 %v6670
  %v7445 = vunpack.c.h.b16 %v6670
  %v7446 = vunpack.c.l.b16 %v6671
  %v7447 = vunpack.c.h.b16 %v6671
  %v7448 = vunpack.c.l.b16 %v6672
  %v7449 = vunpack.c.h.b16 %v6672
  %v7450 = vunpack.c.l.b16 %v6673
  %v7451 = vunpack.c.h.b16 %v6673
  %v7452 = vunpack.c.l.b16 %v6674
  %v7453 = vunpack.c.h.b16 %v6674
  %v7454 = vunpack.c.l.b16 %v6675
  %v7455 = vunpack.c.h.b16 %v6675
  %v7456 = vunpack.c.l.b16 %v6676
  %v7457 = vunpack.c.h.b16 %v6676
  %v7458 = vunpack.c.l.b16 %v6677
  %v7459 = vunpack.c.h.b16 %v6677
  %v7460 = vunpack.c.l.b16 %v6678
  %v7461 = vunpack.c.h.b16 %v6678
  %v7462 = vunpack.c.l.b16 %v6679
  %v7463 = vunpack.c.h.b16 %v6679
  %v7464 = vunpack.c.l.b16 %v6680
  %v7465 = vunpack.c.h.b16 %v6680
  %v7466 = vunpack.c.l.b16 %v6681
  %v7467 = vunpack.c.h.b16 %v6681
  %v7468 = vunpack.c.l.b16 %v6682
  %v7469 = vunpack.c.h.b16 %v6682
  %v7470 = vunpack.c.l.b16 %v6683
  %v7471 = vunpack.c.h.b16 %v6683
  %v7472 = vunpack.c.l.b16 %v6684
  %v7473 = vunpack.c.h.b16 %v6684
  %v7474 = vunpack.c.l.b16 %v6685
  %v7475 = vunpack.c.h.b16 %v6685
  %v7476 = vunpack.c.l.b16 %v6686
  %v7477 = vunpack.c.h.b16 %v6686
  %v7478 = vunpack.c.l.b16 %v6687
  %v7479 = vunpack.c.h.b16 %v6687
  %v7480 = vunpack.c.l.b16 %v6688
  %v7481 = vunpack.c.h.b16 %v6688
  %v7482 = vunpack.c.l.b16 %v6689
  %v7483 = vunpack.c.h.b16 %v6689
  %v7484 = vunpack.c.l.b16 %v6690
  %v7485 = vunpack.c.h.b16 %v6690
  %v7486 = vunpack.c.l.b16 %v6691
  %v7487 = vunpack.c.h.b16 %v6691
  %v7488 = vunpack.c.l.b16 %v6692
  %v7489 = vunpack.c.h.b16 %v6692
  %v7490 = vunpack.c.l.b16 %v6693
  %v7491 = vunpack.c.h.b16 %v6693
  %v7492 = vunpack.c.l.b16 %v6694
  %v7493 = vunpack.c.h.b16 %v6694
  %v7494 = vunpack.c.l.b16 %v6695
  %v7495 = vunpack.c.h.b16 %v6695
  %v7496 = vunpack.c.l.b16 %v6696
  %v7497 = vunpack.c.h.b16 %v6696
  %v7498 = vunpack.c.l.b16 %v6697
  %v7499 = vunpack.c.h.b16 %v6697
  %v7500 = vunpack.c.l.b16 %v6698
  %v7501 = vunpack.c.h.b16 %v6698
  %v7502 = vunpack.c.l.b16 %v6699
  %v7503 = vunpack.c.h.b16 %v6699
  %v7504 = vunpack.c.l.b16 %v6700
  %v7505 = vunpack.c.h.b16 %v6700
  %v7506 = vunpack.c.l.b16 %v6701
  %v7507 = vunpack.c.h.b16 %v6701
  %v7508 = vunpack.c.l.b16 %v6702
  %v7509 = vunpack.c.h.b16 %v6702
  %v7510 = vunpack.c.l.b16 %v6703
  %v7511 = vunpack.c.h.b16 %v6703
  %v7512 = vunpack.c.l.b16 %v6704
  %v7513 = vunpack.c.h.b16 %v6704
  %v7514 = vunpack.c.l.b16 %v6705
  %v7515 = vunpack.c.h.b16 %v6705
  %v7516 = vunpack.c.l.b16 %v6706
  %v7517 = vunpack.c.h.b16 %v6706
  %v7518 = vunpack.c.l.b16 %v6707
  %v7519 = vunpack.c.h.b16 %v6707
  %v7520 = vunpack.c.l.b16 %v6708
  %v7521 = vunpack.c.h.b16 %v6708
  %v7522 = vunpack.c.l.b16 %v6709
  %v7523 = vunpack.c.h.b16 %v6709
  %v7524 = vunpack.c.l.b16 %v6710
  %v7525 = vunpack.c.h.b16 %v6710
  %v7526 = vunpack.c.l.b16 %v6711
  %v7527 = vunpack.c.h.b16 %v6711
  %v7528 = vunpack.c.l.b16 %v6712
  %v7529 = vunpack.c.h.b16 %v6712
  %v7530 = vunpack.c.l.b16 %v6713
  %v7531 = vunpack.c.h.b16 %v6713
  %v7532 = vunpack.c.l.b16 %v6714
  %v7533 = vunpack.c.h.b16 %v6714
  %v7534 = vunpack.c.l.b16 %v6715
  %v7535 = vunpack.c.h.b16 %v6715
  %v7536 = vunpack.c.l.b16 %v6716
  %v7537 = vunpack.c.h.b16 %v6716
  %v7538 = vunpack.c.l.b16 %v6717
  %v7539 = vunpack.c.h.b16 %v6717
  %v7540 = vunpack.c.l.b16 %v6718
  %v7541 = vunpack.c.h.b16 %v6718
  %v7542 = vunpack.c.l.b16 %v6719
  %v7543 = vunpack.c.h.b16 %v6719
  %v7544 = vunpack.c.l.b16 %v6720
  %v7545 = vunpack.c.h.b16 %v6720
  %v7546 = vunpack.c.l.b16 %v6721
  %v7547 = vunpack.c.h.b16 %v6721
  %v7548 = vpack.c.b16 %v7416, %v7410
  %v7549 = vpack.c.b16 %v7417, %v7411
  %v7550 = vpack.c.b16 %v7418, %v7412
  %v7551 = vpack.c.b16 %v7419, %v7413
  %v7552 = vpack.c.b16 %v7420, %v7414
  %v7553 = vpack.c.b16 %v7421, %v7415
  %v7554 = vpack.c.b16 %v7428, %v7422
  %v7555 = vpack.c.b16 %v7429, %v7423
  %v7556 = vpack.c.b16 %v7430, %v7424
  %v7557 = vpack.c.b16 %v7431, %v7425
  %v7558 = vpack.c.b16 %v7432, %v7426
  %v7559 = vpack.c.b16 %v7433, %v7427
  %v7560 = vpack.c.b16 %v7440, %v7434
  %v7561 = vpack.c.b16 %v7441, %v7435
  %v7562 = vpack.c.b16 %v7442, %v7436
  %v7563 = vpack.c.b16 %v7443, %v7437
  %v7564 = vpack.c.b16 %v7444, %v7438
  %v7565 = vpack.c.b16 %v7445, %v7439
  %v7566 = vpack.c.b16 %v7452, %v7446
  %v7567 = vpack.c.b16 %v7453, %v7447
  %v7568 = vpack.c.b16 %v7454, %v7448
  %v7569 = vpack.c.b16 %v7455, %v7449
  %v7570 = vpack.c.b16 %v7456, %v7450
  %v7571 = vpack.c.b16 %v7457, %v7451
  %v7572 = vpack.c.b16 %v7464, %v7458
  %v7573 = vpack.c.b16 %v7465, %v7459
  %v7574 = vpack.c.b16 %v7466, %v7460
  %v7575 = vpack.c.b16 %v7467, %v7461
  %v7576 = vpack.c.b16 %v7468, %v7462
  %v7577 = vpack.c.b16 %v7469, %v7463
  %v7578 = vpack.c.b16 %v7476, %v7470
  %v7579 = vpack.c.b16 %v7477, %v7471
  %v7580 = vpack.c.b16 %v7478, %v7472
  %v7581 = vpack.c.b16 %v7479, %v7473
  %v7582 = vpack.c.b16 %v7480, %v7474
  %v7583 = vpack.c.b16 %v7481, %v7475
  %v7584 = vpack.c.b16 %v7488, %v7482
  %v7585 = vpack.c.b16 %v7489, %v7483
  %v7586 = vpack.c.b16 %v7490, %v7484
  %v7587 = vpack.c.b16 %v7491, %v7485
  %v7588 = vpack.c.b16 %v7492, %v7486
  %v7589 = vpack.c.b16 %v7493, %v7487
  %v7590 = vpack.c.b16 %v7500, %v7494
  %v7591 = vpack.c.b16 %v7501, %v7495
  %v7592 = vpack.c.b16 %v7502, %v7496
  %v7593 = vpack.c.b16 %v7503, %v7497
  %v7594 = vpack.c.b16 %v7504, %v7498
  %v7595 = vpack.c.b16 %v7505, %v7499
  %v7596 = vpack.c.b16 %v7512, %v7506
  %v7597 = vpack.c.b16 %v7513, %v7507
  %v7598 = vpack.c.b16 %v7514, %v7508
  %v7599 = vpack.c.b16 %v7515, %v7509
  %v7600 = vpack.c.b16 %v7516, %v7510
  %v7601 = vpack.c.b16 %v7517, %v7511
  %v7602 = vpack.c.b16 %v7524, %v7518
  %v7603 = vpack.c.b16 %v7525, %v7519
  %v7604 = vpack.c.b16 %v7526, %v7520
  %v7605 = vpack.c.b16 %v7527, %v7521
  %v7606 = vpack.c.b16 %v7528, %v7522
  %v7607 = vpack.c.b16 %v7529, %v7523
  %v7608 = vpack.c.b16 %v7536, %v7530
  %v7609 = vpack.c.b16 %v7537, %v7531
  %v7610 = vpack.c.b16 %v7538, %v7532
  %v7611 = vpack.c.b16 %v7539, %v7533
  %v7612 = vpack.c.b16 %v7540, %v7534
  %v7613 = vpack.c.b16 %v7541, %v7535
  %v7614 = vpack.c.b16 %v7542, %v7542
  %v7615 = vpack.c.b16 %v7543, %v7543
  %v7616 = vpack.c.b16 %v7544, %v7544
  %v7617 = vpack.c.b16 %v7545, %v7545
  %v7618 = vpack.c.b16 %v7546, %v7546
  %v7619 = vpack.c.b16 %v7547, %v7547
  %v7687 = vsel %vm5651, %v6652, 0
  %v7690 = vsel %vm7154, %v7614, 0
  %v7693 = vsel %vm7154, %v7615, 0
  %v7696 = vsel %vm7154, %v7616, 0
  %v7699 = vsel %vm7154, %v7617, 0
  %v7702 = vsel %vm7154, %v7618, 0
  %v7705 = vsel %vm7154, %v7619, 0
  %7707 = vmatpush.bf16.msra.mxu0 %v7590
  %7708 = vmatpush.bf16.msra.mxu0 %v7584
  %7709 = vmatpush.bf16.msra.mxu0 %v7578
  %7710 = vmatpush.bf16.msra.mxu0 %v7572
  %7711 = vmatpush.bf16.msra.mxu0 %v7566
  %7712 = vmatpush.bf16.msra.mxu0 %v7560
  %7713 = vmatpush.bf16.msra.mxu0 %v7554
  %7714 = vmatpush.bf16.msra.mxu0 %v7548
  %7715 = vmatmul.bf16.gmra.mxu0 %v6651
  %v7716 = vpop.f32.mrf.mxu0
  %v7717 = vadd.f32 %v7197, %v7716
  %v7718 = vpop.f32.mrf.mxu0
  %v7719 = vadd.f32 %v7199, %v7718
  %7720 = vdwg.mxu0
  %7721 = vmatpush.bf16.msra.mxu0 0
  %7722 = vmatpush.bf16.msra.mxu0 0
  %7723 = vmatpush.bf16.msra.mxu0 0
  %7724 = vmatpush.bf16.msra.mxu0 0
  %7725 = vmatpush.bf16.msra.mxu0 %v7690
  %7726 = vmatpush.bf16.msra.mxu0 %v7608
  %7727 = vmatpush.bf16.msra.mxu0 %v7602
  %7728 = vmatpush.bf16.msra.mxu0 %v7596
  %7729 = vmatmul.bf16.gmra.mxu0 %v7687
  %v7730 = vpop.f32.mrf.mxu0
  %v7731 = vadd.f32 %v7717, %v7730
  %v7732 = vpop.f32.mrf.mxu0
  %v7733 = vadd.f32 %v7719, %v7732
  %7734 = vdwg.mxu0
  %7735 = vmatpush.bf16.msra.mxu0 %v7591
  %7736 = vmatpush.bf16.msra.mxu0 %v7585
  %7737 = vmatpush.bf16.msra.mxu0 %v7579
  %7738 = vmatpush.bf16.msra.mxu0 %v7573
  %7739 = vmatpush.bf16.msra.mxu0 %v7567
  %7740 = vmatpush.bf16.msra.mxu0 %v7561
  %7741 = vmatpush.bf16.msra.mxu0 %v7555
  %7742 = vmatpush.bf16.msra.mxu0 %v7549
  %7743 = vmatmul.bf16.gmra.mxu0 %v6651
  %v7744 = vpop.f32.mrf.mxu0
  %v7745 = vadd.f32 %v7225, %v7744
  %v7746 = vpop.f32.mrf.mxu0
  %v7747 = vadd.f32 %v7227, %v7746
  %7748 = vdwg.mxu0
  %7749 = vmatpush.bf16.msra.mxu0 0
  %7750 = vmatpush.bf16.msra.mxu0 0
  %7751 = vmatpush.bf16.msra.mxu0 0
  %7752 = vmatpush.bf16.msra.mxu0 0
  %7753 = vmatpush.bf16.msra.mxu0 %v7693
  %7754 = vmatpush.bf16.msra.mxu0 %v7609
  %7755 = vmatpush.bf16.msra.mxu0 %v7603
  %7756 = vmatpush.bf16.msra.mxu0 %v7597
  %7757 = vmatmul.bf16.gmra.mxu0 %v7687
  %v7758 = vpop.f32.mrf.mxu0
  %v7759 = vadd.f32 %v7745, %v7758
  %v7760 = vpop.f32.mrf.mxu0
  %v7761 = vadd.f32 %v7747, %v7760
  %7762 = vdwg.mxu0
  %7763 = vmatpush.bf16.msra.mxu0 %v7592
  %7764 = vmatpush.bf16.msra.mxu0 %v7586
  %7765 = vmatpush.bf16.msra.mxu0 %v7580
  %7766 = vmatpush.bf16.msra.mxu0 %v7574
  %7767 = vmatpush.bf16.msra.mxu0 %v7568
  %7768 = vmatpush.bf16.msra.mxu0 %v7562
  %7769 = vmatpush.bf16.msra.mxu0 %v7556
  %7770 = vmatpush.bf16.msra.mxu0 %v7550
  %7771 = vmatmul.bf16.gmra.mxu0 %v6651
  %v7772 = vpop.f32.mrf.mxu0
  %v7773 = vadd.f32 %v7253, %v7772
  %v7774 = vpop.f32.mrf.mxu0
  %v7775 = vadd.f32 %v7255, %v7774
  %7776 = vdwg.mxu0
  %7777 = vmatpush.bf16.msra.mxu0 0
  %7778 = vmatpush.bf16.msra.mxu0 0
  %7779 = vmatpush.bf16.msra.mxu0 0
  %7780 = vmatpush.bf16.msra.mxu0 0
  %7781 = vmatpush.bf16.msra.mxu0 %v7696
  %7782 = vmatpush.bf16.msra.mxu0 %v7610
  %7783 = vmatpush.bf16.msra.mxu0 %v7604
  %7784 = vmatpush.bf16.msra.mxu0 %v7598
  %7785 = vmatmul.bf16.gmra.mxu0 %v7687
  %v7786 = vpop.f32.mrf.mxu0
  %v7787 = vadd.f32 %v7773, %v7786
  %v7788 = vpop.f32.mrf.mxu0
  %v7789 = vadd.f32 %v7775, %v7788
  %7790 = vdwg.mxu0
  %7791 = vmatpush.bf16.msra.mxu0 %v7593
  %7792 = vmatpush.bf16.msra.mxu0 %v7587
  %7793 = vmatpush.bf16.msra.mxu0 %v7581
  %7794 = vmatpush.bf16.msra.mxu0 %v7575
  %7795 = vmatpush.bf16.msra.mxu0 %v7569
  %7796 = vmatpush.bf16.msra.mxu0 %v7563
  %7797 = vmatpush.bf16.msra.mxu0 %v7557
  %7798 = vmatpush.bf16.msra.mxu0 %v7551
  %7799 = vmatmul.bf16.gmra.mxu0 %v6651
  %v7800 = vpop.f32.mrf.mxu0
  %v7801 = vadd.f32 %v7281, %v7800
  %v7802 = vpop.f32.mrf.mxu0
  %v7803 = vadd.f32 %v7283, %v7802
  %7804 = vdwg.mxu0
  %7805 = vmatpush.bf16.msra.mxu0 0
  %7806 = vmatpush.bf16.msra.mxu0 0
  %7807 = vmatpush.bf16.msra.mxu0 0
  %7808 = vmatpush.bf16.msra.mxu0 0
  %7809 = vmatpush.bf16.msra.mxu0 %v7699
  %7810 = vmatpush.bf16.msra.mxu0 %v7611
  %7811 = vmatpush.bf16.msra.mxu0 %v7605
  %7812 = vmatpush.bf16.msra.mxu0 %v7599
  %7813 = vmatmul.bf16.gmra.mxu0 %v7687
  %v7814 = vpop.f32.mrf.mxu0
  %v7815 = vadd.f32 %v7801, %v7814
  %v7816 = vpop.f32.mrf.mxu0
  %v7817 = vadd.f32 %v7803, %v7816
  %7818 = vdwg.mxu0
  %7819 = vmatpush.bf16.msra.mxu0 %v7594
  %7820 = vmatpush.bf16.msra.mxu0 %v7588
  %7821 = vmatpush.bf16.msra.mxu0 %v7582
  %7822 = vmatpush.bf16.msra.mxu0 %v7576
  %7823 = vmatpush.bf16.msra.mxu0 %v7570
  %7824 = vmatpush.bf16.msra.mxu0 %v7564
  %7825 = vmatpush.bf16.msra.mxu0 %v7558
  %7826 = vmatpush.bf16.msra.mxu0 %v7552
  %7827 = vmatmul.bf16.gmra.mxu0 %v6651
  %v7828 = vpop.f32.mrf.mxu0
  %v7829 = vadd.f32 %v7309, %v7828
  %v7830 = vpop.f32.mrf.mxu0
  %v7831 = vadd.f32 %v7311, %v7830
  %7832 = vdwg.mxu0
  %7833 = vmatpush.bf16.msra.mxu0 0
  %7834 = vmatpush.bf16.msra.mxu0 0
  %7835 = vmatpush.bf16.msra.mxu0 0
  %7836 = vmatpush.bf16.msra.mxu0 0
  %7837 = vmatpush.bf16.msra.mxu0 %v7702
  %7838 = vmatpush.bf16.msra.mxu0 %v7612
  %7839 = vmatpush.bf16.msra.mxu0 %v7606
  %7840 = vmatpush.bf16.msra.mxu0 %v7600
  %7841 = vmatmul.bf16.gmra.mxu0 %v7687
  %v7842 = vpop.f32.mrf.mxu0
  %v7843 = vadd.f32 %v7829, %v7842
  %v7844 = vpop.f32.mrf.mxu0
  %v7845 = vadd.f32 %v7831, %v7844
  %7846 = vdwg.mxu0
  %7847 = vmatpush.bf16.msra.mxu0 %v7595
  %7848 = vmatpush.bf16.msra.mxu0 %v7589
  %7849 = vmatpush.bf16.msra.mxu0 %v7583
  %7850 = vmatpush.bf16.msra.mxu0 %v7577
  %7851 = vmatpush.bf16.msra.mxu0 %v7571
  %7852 = vmatpush.bf16.msra.mxu0 %v7565
  %7853 = vmatpush.bf16.msra.mxu0 %v7559
  %7854 = vmatpush.bf16.msra.mxu0 %v7553
  %7855 = vmatmul.bf16.gmra.mxu0 %v6651
  %v7856 = vpop.f32.mrf.mxu0
  %v7857 = vadd.f32 %v7337, %v7856
  %v7858 = vpop.f32.mrf.mxu0
  %v7859 = vadd.f32 %v7339, %v7858
  %7860 = vdwg.mxu0
  %7861 = vmatpush.bf16.msra.mxu0 0
  %7862 = vmatpush.bf16.msra.mxu0 0
  %7863 = vmatpush.bf16.msra.mxu0 0
  %7864 = vmatpush.bf16.msra.mxu0 0
  %7865 = vmatpush.bf16.msra.mxu0 %v7705
  %7866 = vmatpush.bf16.msra.mxu0 %v7613
  %7867 = vmatpush.bf16.msra.mxu0 %v7607
  %7868 = vmatpush.bf16.msra.mxu0 %v7601
  %7869 = vmatmul.bf16.gmra.mxu0 %v7687
  %v7870 = vpop.f32.mrf.mxu0
  %v7871 = vadd.f32 %v7857, %v7870
  %v7872 = vpop.f32.mrf.mxu0
  %v7873 = vadd.f32 %v7859, %v7872
  %7874 = vdwg.mxu0
  %v7875 = vmul.f32 %v6057, %v6552
  %v7876 = vmul.f32 %v6058, %v6575
  %v7877 = vmul.f32 %v6059, %v6555
  %v7878 = vmul.f32 %v6060, %v6578
  %v7879 = vadd.f32 %v7875, %v6611
  %v7880 = vadd.f32 %v7876, %v6634
  %v7881 = vadd.f32 %v7877, %v6614
  %v7882 = vadd.f32 %v7878, %v6637
  %v7883 = vmax.f32 %v7879, 0.0
  %v7884 = vmax.f32 %v7880, 0.0
  %v7885 = vmax.f32 %v7881, 0.0
  %v7886 = vmax.f32 %v7882, 0.0
  %v7887 = vpack.c.bf16 %v7885, %v7883
  %v7888 = vpack.c.bf16 %v7886, %v7884
  %s7889 = scalar_lea.vmem %s15, 1104
  %v7890 = vld [vmem:[%s7889] sm:$0xff]
  %v7891 = vld [vmem:[%s7889 + $0x8] sm:$0xff]
  %v7892 = vld [vmem:[%s7889 + $0x10] sm:$0xff]
  %v7893 = vld [vmem:[%s7889 + $0x18] sm:$0xff]
  %v7894 = vld [vmem:[%s7889 + $0x20] sm:$0xff]
  %v7895 = vld [vmem:[%s7889 + $0x28] sm:$0xff]
  %v7896 = vld [vmem:[%s7889 + $0x30] sm:$0xff]
  %v7897 = vld [vmem:[%s7889 + $0x38] sm:$0xff]
  %v7898 = vld [vmem:[%s7889 + $0x40] sm:$0xff]
  %v7899 = vld [vmem:[%s7889 + $0x48] sm:$0xff]
  %v7900 = vld [vmem:[%s7889 + $0x50] sm:$0xff]
  %v7901 = vld [vmem:[%s7889 + $0x58] sm:$0xff]
  %v7902 = vld [vmem:[%s7889 + $0x60] sm:$0xff]
  %v7903 = vld [vmem:[%s7889 + $0x68] sm:$0xff]
  %v7904 = vld [vmem:[%s7889 + $0x70] sm:$0xff]
  %v7905 = vld [vmem:[%s7889 + $0x78] sm:$0xff]
  %v7906 = vld [vmem:[%s7889 + $0x80] sm:$0xff]
  %v7907 = vld [vmem:[%s7889 + $0x88] sm:$0xff]
  %v7908 = vld [vmem:[%s7889 + $0x90] sm:$0xff]
  %v7909 = vld [vmem:[%s7889 + $0x98] sm:$0xff]
  %v7910 = vld [vmem:[%s7889 + $0xa0] sm:$0xff]
  %v7911 = vld [vmem:[%s7889 + $0xa8] sm:$0xff]
  %v7912 = vld [vmem:[%s7889 + $0xb0] sm:$0xff]
  %v7913 = vld [vmem:[%s7889 + $0xb8] sm:$0xff]
  %v7914 = vld [vmem:[%s7889 + $0xc0] sm:$0xff]
  %v7915 = vld [vmem:[%s7889 + $0xc8] sm:$0xff]
  %v7916 = vld [vmem:[%s7889 + $0xd0] sm:$0xff]
  %v7917 = vld [vmem:[%s7889 + $0xd8] sm:$0xff]
  %v7918 = vld [vmem:[%s7889 + $0xe0] sm:$0xff]
  %v7919 = vld [vmem:[%s7889 + $0xe8] sm:$0xff]
  %v7920 = vld [vmem:[%s7889 + $0xf0] sm:$0xff]
  %v7921 = vld [vmem:[%s7889 + $0xf8] sm:$0xff]
  %v7922 = vld [vmem:[%s7889 + $0x100] sm:$0xff]
  %v7923 = vld [vmem:[%s7889 + $0x108] sm:$0xff]
  %v7924 = vld [vmem:[%s7889 + $0x110] sm:$0xff]
  %v7925 = vld [vmem:[%s7889 + $0x118] sm:$0xff]
  %v7926 = vld [vmem:[%s7889 + $0x120] sm:$0xff]
  %v7927 = vld [vmem:[%s7889 + $0x128] sm:$0xff]
  %v7928 = vld [vmem:[%s7889 + $0x130] sm:$0xff]
  %v7929 = vld [vmem:[%s7889 + $0x138] sm:$0xff]
  %v7930 = vld [vmem:[%s7889 + $0x140] sm:$0xff]
  %v7931 = vld [vmem:[%s7889 + $0x148] sm:$0xff]
  %v7932 = vld [vmem:[%s7889 + $0x150] sm:$0xff]
  %v7933 = vld [vmem:[%s7889 + $0x158] sm:$0xff]
  %v7934 = vld [vmem:[%s7889 + $0x160] sm:$0xff]
  %v7935 = vld [vmem:[%s7889 + $0x168] sm:$0xff]
  %v7936 = vld [vmem:[%s7889 + $0x170] sm:$0xff]
  %v7937 = vld [vmem:[%s7889 + $0x178] sm:$0xff]
  %v7938 = vld [vmem:[%s7889 + $0x180] sm:$0xff]
  %v7939 = vld [vmem:[%s7889 + $0x188] sm:$0xff]
  %v7940 = vld [vmem:[%s7889 + $0x190] sm:$0xff]
  %v7941 = vld [vmem:[%s7889 + $0x198] sm:$0xff]
  %v7942 = vld [vmem:[%s7889 + $0x1a0] sm:$0xff]
  %v7943 = vld [vmem:[%s7889 + $0x1a8] sm:$0xff]
  %v7944 = vld [vmem:[%s7889 + $0x1b0] sm:$0xff]
  %v7945 = vld [vmem:[%s7889 + $0x1b8] sm:$0xff]
  %v7946 = vld [vmem:[%s7889 + $0x1c0] sm:$0xff]
  %v7947 = vld [vmem:[%s7889 + $0x1c8] sm:$0xff]
  %v7948 = vld [vmem:[%s7889 + $0x1d0] sm:$0xff]
  %v7949 = vld [vmem:[%s7889 + $0x1d8] sm:$0xff]
  %v7950 = vld [vmem:[%s7889 + $0x1e0] sm:$0xff]
  %v7951 = vld [vmem:[%s7889 + $0x1e8] sm:$0xff]
  %v7952 = vld [vmem:[%s7889 + $0x1f0] sm:$0xff]
  %v7953 = vld [vmem:[%s7889 + $0x1f8] sm:$0xff]
  %v7954 = vld [vmem:[%s7889 + $0x200] sm:$0xff]
  %v7955 = vld [vmem:[%s7889 + $0x208] sm:$0xff]
  %v7956 = vld [vmem:[%s7889 + $0x210] sm:$0x77]
  %v7957 = vld [vmem:[%s7889 + $0x218] sm:$0x77]
  %v7958 = vld [vmem:[%s7889 + $0x220] sm:$0x77]
  %v8028 = vunpack.c.l.b16 %v7890
  %v8029 = vunpack.c.h.b16 %v7890
  %v8030 = vunpack.c.l.b16 %v7891
  %v8031 = vunpack.c.h.b16 %v7891
  %v8032 = vunpack.c.l.b16 %v7892
  %v8033 = vunpack.c.h.b16 %v7892
  %v8034 = vunpack.c.l.b16 %v7893
  %v8035 = vunpack.c.h.b16 %v7893
  %v8036 = vunpack.c.l.b16 %v7894
  %v8037 = vunpack.c.h.b16 %v7894
  %v8038 = vunpack.c.l.b16 %v7895
  %v8039 = vunpack.c.h.b16 %v7895
  %v8040 = vunpack.c.l.b16 %v7896
  %v8041 = vunpack.c.h.b16 %v7896
  %v8042 = vunpack.c.l.b16 %v7897
  %v8043 = vunpack.c.h.b16 %v7897
  %v8044 = vunpack.c.l.b16 %v7898
  %v8045 = vunpack.c.h.b16 %v7898
  %v8046 = vunpack.c.l.b16 %v7899
  %v8047 = vunpack.c.h.b16 %v7899
  %v8048 = vunpack.c.l.b16 %v7900
  %v8049 = vunpack.c.h.b16 %v7900
  %v8050 = vunpack.c.l.b16 %v7901
  %v8051 = vunpack.c.h.b16 %v7901
  %v8052 = vunpack.c.l.b16 %v7902
  %v8053 = vunpack.c.h.b16 %v7902
  %v8054 = vunpack.c.l.b16 %v7903
  %v8055 = vunpack.c.h.b16 %v7903
  %v8056 = vunpack.c.l.b16 %v7904
  %v8057 = vunpack.c.h.b16 %v7904
  %v8058 = vunpack.c.l.b16 %v7905
  %v8059 = vunpack.c.h.b16 %v7905
  %v8060 = vunpack.c.l.b16 %v7906
  %v8061 = vunpack.c.h.b16 %v7906
  %v8062 = vunpack.c.l.b16 %v7907
  %v8063 = vunpack.c.h.b16 %v7907
  %v8064 = vunpack.c.l.b16 %v7908
  %v8065 = vunpack.c.h.b16 %v7908
  %v8066 = vunpack.c.l.b16 %v7909
  %v8067 = vunpack.c.h.b16 %v7909
  %v8068 = vunpack.c.l.b16 %v7910
  %v8069 = vunpack.c.h.b16 %v7910
  %v8070 = vunpack.c.l.b16 %v7911
  %v8071 = vunpack.c.h.b16 %v7911
  %v8072 = vunpack.c.l.b16 %v7912
  %v8073 = vunpack.c.h.b16 %v7912
  %v8074 = vunpack.c.l.b16 %v7913
  %v8075 = vunpack.c.h.b16 %v7913
  %v8076 = vunpack.c.l.b16 %v7914
  %v8077 = vunpack.c.h.b16 %v7914
  %v8078 = vunpack.c.l.b16 %v7915
  %v8079 = vunpack.c.h.b16 %v7915
  %v8080 = vunpack.c.l.b16 %v7916
  %v8081 = vunpack.c.h.b16 %v7916
  %v8082 = vunpack.c.l.b16 %v7917
  %v8083 = vunpack.c.h.b16 %v7917
  %v8084 = vunpack.c.l.b16 %v7918
  %v8085 = vunpack.c.h.b16 %v7918
  %v8086 = vunpack.c.l.b16 %v7919
  %v8087 = vunpack.c.h.b16 %v7919
  %v8088 = vunpack.c.l.b16 %v7920
  %v8089 = vunpack.c.h.b16 %v7920
  %v8090 = vunpack.c.l.b16 %v7921
  %v8091 = vunpack.c.h.b16 %v7921
  %v8092 = vunpack.c.l.b16 %v7922
  %v8093 = vunpack.c.h.b16 %v7922
  %v8094 = vunpack.c.l.b16 %v7923
  %v8095 = vunpack.c.h.b16 %v7923
  %v8096 = vunpack.c.l.b16 %v7924
  %v8097 = vunpack.c.h.b16 %v7924
  %v8098 = vunpack.c.l.b16 %v7925
  %v8099 = vunpack.c.h.b16 %v7925
  %v8100 = vunpack.c.l.b16 %v7926
  %v8101 = vunpack.c.h.b16 %v7926
  %v8102 = vunpack.c.l.b16 %v7927
  %v8103 = vunpack.c.h.b16 %v7927
  %v8104 = vunpack.c.l.b16 %v7928
  %v8105 = vunpack.c.h.b16 %v7928
  %v8106 = vunpack.c.l.b16 %v7929
  %v8107 = vunpack.c.h.b16 %v7929
  %v8108 = vunpack.c.l.b16 %v7930
  %v8109 = vunpack.c.h.b16 %v7930
  %v8110 = vunpack.c.l.b16 %v7931
  %v8111 = vunpack.c.h.b16 %v7931
  %v8112 = vunpack.c.l.b16 %v7932
  %v8113 = vunpack.c.h.b16 %v7932
  %v8114 = vunpack.c.l.b16 %v7933
  %v8115 = vunpack.c.h.b16 %v7933
  %v8116 = vunpack.c.l.b16 %v7934
  %v8117 = vunpack.c.h.b16 %v7934
  %v8118 = vunpack.c.l.b16 %v7935
  %v8119 = vunpack.c.h.b16 %v7935
  %v8120 = vunpack.c.l.b16 %v7936
  %v8121 = vunpack.c.h.b16 %v7936
  %v8122 = vunpack.c.l.b16 %v7937
  %v8123 = vunpack.c.h.b16 %v7937
  %v8124 = vunpack.c.l.b16 %v7938
  %v8125 = vunpack.c.h.b16 %v7938
  %v8126 = vunpack.c.l.b16 %v7939
  %v8127 = vunpack.c.h.b16 %v7939
  %v8128 = vunpack.c.l.b16 %v7940
  %v8129 = vunpack.c.h.b16 %v7940
  %v8130 = vunpack.c.l.b16 %v7941
  %v8131 = vunpack.c.h.b16 %v7941
  %v8132 = vunpack.c.l.b16 %v7942
  %v8133 = vunpack.c.h.b16 %v7942
  %v8134 = vunpack.c.l.b16 %v7943
  %v8135 = vunpack.c.h.b16 %v7943
  %v8136 = vunpack.c.l.b16 %v7944
  %v8137 = vunpack.c.h.b16 %v7944
  %v8138 = vunpack.c.l.b16 %v7945
  %v8139 = vunpack.c.h.b16 %v7945
  %v8140 = vunpack.c.l.b16 %v7946
  %v8141 = vunpack.c.h.b16 %v7946
  %v8142 = vunpack.c.l.b16 %v7947
  %v8143 = vunpack.c.h.b16 %v7947
  %v8144 = vunpack.c.l.b16 %v7948
  %v8145 = vunpack.c.h.b16 %v7948
  %v8146 = vunpack.c.l.b16 %v7949
  %v8147 = vunpack.c.h.b16 %v7949
  %v8148 = vunpack.c.l.b16 %v7950
  %v8149 = vunpack.c.h.b16 %v7950
  %v8150 = vunpack.c.l.b16 %v7951
  %v8151 = vunpack.c.h.b16 %v7951
  %v8152 = vunpack.c.l.b16 %v7952
  %v8153 = vunpack.c.h.b16 %v7952
  %v8154 = vunpack.c.l.b16 %v7953
  %v8155 = vunpack.c.h.b16 %v7953
  %v8156 = vunpack.c.l.b16 %v7954
  %v8157 = vunpack.c.h.b16 %v7954
  %v8158 = vunpack.c.l.b16 %v7955
  %v8159 = vunpack.c.h.b16 %v7955
  %v8160 = vunpack.c.l.b16 %v7956
  %v8161 = vunpack.c.h.b16 %v7956
  %v8162 = vunpack.c.l.b16 %v7957
  %v8163 = vunpack.c.h.b16 %v7957
  %v8164 = vunpack.c.l.b16 %v7958
  %v8165 = vunpack.c.h.b16 %v7958
  %v8166 = vpack.c.b16 %v8034, %v8028
  %v8167 = vpack.c.b16 %v8035, %v8029
  %v8168 = vpack.c.b16 %v8036, %v8030
  %v8169 = vpack.c.b16 %v8037, %v8031
  %v8170 = vpack.c.b16 %v8038, %v8032
  %v8171 = vpack.c.b16 %v8039, %v8033
  %v8172 = vpack.c.b16 %v8046, %v8040
  %v8173 = vpack.c.b16 %v8047, %v8041
  %v8174 = vpack.c.b16 %v8048, %v8042
  %v8175 = vpack.c.b16 %v8049, %v8043
  %v8176 = vpack.c.b16 %v8050, %v8044
  %v8177 = vpack.c.b16 %v8051, %v8045
  %v8178 = vpack.c.b16 %v8058, %v8052
  %v8179 = vpack.c.b16 %v8059, %v8053
  %v8180 = vpack.c.b16 %v8060, %v8054
  %v8181 = vpack.c.b16 %v8061, %v8055
  %v8182 = vpack.c.b16 %v8062, %v8056
  %v8183 = vpack.c.b16 %v8063, %v8057
  %v8184 = vpack.c.b16 %v8070, %v8064
  %v8185 = vpack.c.b16 %v8071, %v8065
  %v8186 = vpack.c.b16 %v8072, %v8066
  %v8187 = vpack.c.b16 %v8073, %v8067
  %v8188 = vpack.c.b16 %v8074, %v8068
  %v8189 = vpack.c.b16 %v8075, %v8069
  %v8190 = vpack.c.b16 %v8082, %v8076
  %v8191 = vpack.c.b16 %v8083, %v8077
  %v8192 = vpack.c.b16 %v8084, %v8078
  %v8193 = vpack.c.b16 %v8085, %v8079
  %v8194 = vpack.c.b16 %v8086, %v8080
  %v8195 = vpack.c.b16 %v8087, %v8081
  %v8196 = vpack.c.b16 %v8094, %v8088
  %v8197 = vpack.c.b16 %v8095, %v8089
  %v8198 = vpack.c.b16 %v8096, %v8090
  %v8199 = vpack.c.b16 %v8097, %v8091
  %v8200 = vpack.c.b16 %v8098, %v8092
  %v8201 = vpack.c.b16 %v8099, %v8093
  %v8202 = vpack.c.b16 %v8106, %v8100
  %v8203 = vpack.c.b16 %v8107, %v8101
  %v8204 = vpack.c.b16 %v8108, %v8102
  %v8205 = vpack.c.b16 %v8109, %v8103
  %v8206 = vpack.c.b16 %v8110, %v8104
  %v8207 = vpack.c.b16 %v8111, %v8105
  %v8208 = vpack.c.b16 %v8118, %v8112
  %v8209 = vpack.c.b16 %v8119, %v8113
  %v8210 = vpack.c.b16 %v8120, %v8114
  %v8211 = vpack.c.b16 %v8121, %v8115
  %v8212 = vpack.c.b16 %v8122, %v8116
  %v8213 = vpack.c.b16 %v8123, %v8117
  %v8214 = vpack.c.b16 %v8130, %v8124
  %v8215 = vpack.c.b16 %v8131, %v8125
  %v8216 = vpack.c.b16 %v8132, %v8126
  %v8217 = vpack.c.b16 %v8133, %v8127
  %v8218 = vpack.c.b16 %v8134, %v8128
  %v8219 = vpack.c.b16 %v8135, %v8129
  %v8220 = vpack.c.b16 %v8142, %v8136
  %v8221 = vpack.c.b16 %v8143, %v8137
  %v8222 = vpack.c.b16 %v8144, %v8138
  %v8223 = vpack.c.b16 %v8145, %v8139
  %v8224 = vpack.c.b16 %v8146, %v8140
  %v8225 = vpack.c.b16 %v8147, %v8141
  %v8226 = vpack.c.b16 %v8154, %v8148
  %v8227 = vpack.c.b16 %v8155, %v8149
  %v8228 = vpack.c.b16 %v8156, %v8150
  %v8229 = vpack.c.b16 %v8157, %v8151
  %v8230 = vpack.c.b16 %v8158, %v8152
  %v8231 = vpack.c.b16 %v8159, %v8153
  %v8232 = vpack.c.b16 %v8160, %v8160
  %v8233 = vpack.c.b16 %v8161, %v8161
  %v8234 = vpack.c.b16 %v8162, %v8162
  %v8235 = vpack.c.b16 %v8163, %v8163
  %v8236 = vpack.c.b16 %v8164, %v8164
  %v8237 = vpack.c.b16 %v8165, %v8165
  %v8305 = vsel %vm5651, %v7888, 0
  %v8308 = vsel %vm7154, %v8232, 0
  %v8311 = vsel %vm7154, %v8233, 0
  %v8314 = vsel %vm7154, %v8234, 0
  %v8317 = vsel %vm7154, %v8235, 0
  %v8320 = vsel %vm7154, %v8236, 0
  %v8323 = vsel %vm7154, %v8237, 0
  %8325 = vmatpush.bf16.msra.mxu0 %v8208
  %8326 = vmatpush.bf16.msra.mxu0 %v8202
  %8327 = vmatpush.bf16.msra.mxu0 %v8196
  %8328 = vmatpush.bf16.msra.mxu0 %v8190
  %8329 = vmatpush.bf16.msra.mxu0 %v8184
  %8330 = vmatpush.bf16.msra.mxu0 %v8178
  %8331 = vmatpush.bf16.msra.mxu0 %v8172
  %8332 = vmatpush.bf16.msra.mxu0 %v8166
  %8333 = vmatmul.bf16.gmra.mxu0 %v7887
  %v8334 = vpop.f32.mrf.mxu0
  %v8335 = vadd.f32 0.0, %v8334
  %v8336 = vpop.f32.mrf.mxu0
  %v8337 = vadd.f32 0.0, %v8336
  %8338 = vdwg.mxu0
  %8339 = vmatpush.bf16.msra.mxu0 0
  %8340 = vmatpush.bf16.msra.mxu0 0
  %8341 = vmatpush.bf16.msra.mxu0 0
  %8342 = vmatpush.bf16.msra.mxu0 0
  %8343 = vmatpush.bf16.msra.mxu0 %v8308
  %8344 = vmatpush.bf16.msra.mxu0 %v8226
  %8345 = vmatpush.bf16.msra.mxu0 %v8220
  %8346 = vmatpush.bf16.msra.mxu0 %v8214
  %8347 = vmatmul.bf16.gmra.mxu0 %v8305
  %v8348 = vpop.f32.mrf.mxu0
  %v8349 = vadd.f32 %v8335, %v8348
  %v8350 = vpop.f32.mrf.mxu0
  %v8351 = vadd.f32 %v8337, %v8350
  %8352 = vdwg.mxu0
  %8353 = vmatpush.bf16.msra.mxu0 %v8209
  %8354 = vmatpush.bf16.msra.mxu0 %v8203
  %8355 = vmatpush.bf16.msra.mxu0 %v8197
  %8356 = vmatpush.bf16.msra.mxu0 %v8191
  %8357 = vmatpush.bf16.msra.mxu0 %v8185
  %8358 = vmatpush.bf16.msra.mxu0 %v8179
  %8359 = vmatpush.bf16.msra.mxu0 %v8173
  %8360 = vmatpush.bf16.msra.mxu0 %v8167
  %8361 = vmatmul.bf16.gmra.mxu0 %v7887
  %v8362 = vpop.f32.mrf.mxu0
  %v8363 = vadd.f32 0.0, %v8362
  %v8364 = vpop.f32.mrf.mxu0
  %v8365 = vadd.f32 0.0, %v8364
  %8366 = vdwg.mxu0
  %8367 = vmatpush.bf16.msra.mxu0 0
  %8368 = vmatpush.bf16.msra.mxu0 0
  %8369 = vmatpush.bf16.msra.mxu0 0
  %8370 = vmatpush.bf16.msra.mxu0 0
  %8371 = vmatpush.bf16.msra.mxu0 %v8311
  %8372 = vmatpush.bf16.msra.mxu0 %v8227
  %8373 = vmatpush.bf16.msra.mxu0 %v8221
  %8374 = vmatpush.bf16.msra.mxu0 %v8215
  %8375 = vmatmul.bf16.gmra.mxu0 %v8305
  %v8376 = vpop.f32.mrf.mxu0
  %v8377 = vadd.f32 %v8363, %v8376
  %v8378 = vpop.f32.mrf.mxu0
  %v8379 = vadd.f32 %v8365, %v8378
  %8380 = vdwg.mxu0
  %8381 = vmatpush.bf16.msra.mxu0 %v8210
  %8382 = vmatpush.bf16.msra.mxu0 %v8204
  %8383 = vmatpush.bf16.msra.mxu0 %v8198
  %8384 = vmatpush.bf16.msra.mxu0 %v8192
  %8385 = vmatpush.bf16.msra.mxu0 %v8186
  %8386 = vmatpush.bf16.msra.mxu0 %v8180
  %8387 = vmatpush.bf16.msra.mxu0 %v8174
  %8388 = vmatpush.bf16.msra.mxu0 %v8168
  %8389 = vmatmul.bf16.gmra.mxu0 %v7887
  %v8390 = vpop.f32.mrf.mxu0
  %v8391 = vadd.f32 0.0, %v8390
  %v8392 = vpop.f32.mrf.mxu0
  %v8393 = vadd.f32 0.0, %v8392
  %8394 = vdwg.mxu0
  %8395 = vmatpush.bf16.msra.mxu0 0
  %8396 = vmatpush.bf16.msra.mxu0 0
  %8397 = vmatpush.bf16.msra.mxu0 0
  %8398 = vmatpush.bf16.msra.mxu0 0
  %8399 = vmatpush.bf16.msra.mxu0 %v8314
  %8400 = vmatpush.bf16.msra.mxu0 %v8228
  %8401 = vmatpush.bf16.msra.mxu0 %v8222
  %8402 = vmatpush.bf16.msra.mxu0 %v8216
  %8403 = vmatmul.bf16.gmra.mxu0 %v8305
  %v8404 = vpop.f32.mrf.mxu0
  %v8405 = vadd.f32 %v8391, %v8404
  %v8406 = vpop.f32.mrf.mxu0
  %v8407 = vadd.f32 %v8393, %v8406
  %8408 = vdwg.mxu0
  %8409 = vmatpush.bf16.msra.mxu0 %v8211
  %8410 = vmatpush.bf16.msra.mxu0 %v8205
  %8411 = vmatpush.bf16.msra.mxu0 %v8199
  %8412 = vmatpush.bf16.msra.mxu0 %v8193
  %8413 = vmatpush.bf16.msra.mxu0 %v8187
  %8414 = vmatpush.bf16.msra.mxu0 %v8181
  %8415 = vmatpush.bf16.msra.mxu0 %v8175
  %8416 = vmatpush.bf16.msra.mxu0 %v8169
  %8417 = vmatmul.bf16.gmra.mxu0 %v7887
  %v8418 = vpop.f32.mrf.mxu0
  %v8419 = vadd.f32 0.0, %v8418
  %v8420 = vpop.f32.mrf.mxu0
  %v8421 = vadd.f32 0.0, %v8420
  %8422 = vdwg.mxu0
  %8423 = vmatpush.bf16.msra.mxu0 0
  %8424 = vmatpush.bf16.msra.mxu0 0
  %8425 = vmatpush.bf16.msra.mxu0 0
  %8426 = vmatpush.bf16.msra.mxu0 0
  %8427 = vmatpush.bf16.msra.mxu0 %v8317
  %8428 = vmatpush.bf16.msra.mxu0 %v8229
  %8429 = vmatpush.bf16.msra.mxu0 %v8223
  %8430 = vmatpush.bf16.msra.mxu0 %v8217
  %8431 = vmatmul.bf16.gmra.mxu0 %v8305
  %v8432 = vpop.f32.mrf.mxu0
  %v8433 = vadd.f32 %v8419, %v8432
  %v8434 = vpop.f32.mrf.mxu0
  %v8435 = vadd.f32 %v8421, %v8434
  %8436 = vdwg.mxu0
  %8437 = vmatpush.bf16.msra.mxu0 %v8212
  %8438 = vmatpush.bf16.msra.mxu0 %v8206
  %8439 = vmatpush.bf16.msra.mxu0 %v8200
  %8440 = vmatpush.bf16.msra.mxu0 %v8194
  %8441 = vmatpush.bf16.msra.mxu0 %v8188
  %8442 = vmatpush.bf16.msra.mxu0 %v8182
  %8443 = vmatpush.bf16.msra.mxu0 %v8176
  %8444 = vmatpush.bf16.msra.mxu0 %v8170
  %8445 = vmatmul.bf16.gmra.mxu0 %v7887
  %v8446 = vpop.f32.mrf.mxu0
  %v8447 = vadd.f32 0.0, %v8446
  %v8448 = vpop.f32.mrf.mxu0
  %v8449 = vadd.f32 0.0, %v8448
  %8450 = vdwg.mxu0
  %8451 = vmatpush.bf16.msra.mxu0 0
  %8452 = vmatpush.bf16.msra.mxu0 0
  %8453 = vmatpush.bf16.msra.mxu0 0
  %8454 = vmatpush.bf16.msra.mxu0 0
  %8455 = vmatpush.bf16.msra.mxu0 %v8320
  %8456 = vmatpush.bf16.msra.mxu0 %v8230
  %8457 = vmatpush.bf16.msra.mxu0 %v8224
  %8458 = vmatpush.bf16.msra.mxu0 %v8218
  %8459 = vmatmul.bf16.gmra.mxu0 %v8305
  %v8460 = vpop.f32.mrf.mxu0
  %v8461 = vadd.f32 %v8447, %v8460
  %v8462 = vpop.f32.mrf.mxu0
  %v8463 = vadd.f32 %v8449, %v8462
  %8464 = vdwg.mxu0
  %8465 = vmatpush.bf16.msra.mxu0 %v8213
  %8466 = vmatpush.bf16.msra.mxu0 %v8207
  %8467 = vmatpush.bf16.msra.mxu0 %v8201
  %8468 = vmatpush.bf16.msra.mxu0 %v8195
  %8469 = vmatpush.bf16.msra.mxu0 %v8189
  %8470 = vmatpush.bf16.msra.mxu0 %v8183
  %8471 = vmatpush.bf16.msra.mxu0 %v8177
  %8472 = vmatpush.bf16.msra.mxu0 %v8171
  %8473 = vmatmul.bf16.gmra.mxu0 %v7887
  %v8474 = vpop.f32.mrf.mxu0
  %v8475 = vadd.f32 0.0, %v8474
  %v8476 = vpop.f32.mrf.mxu0
  %v8477 = vadd.f32 0.0, %v8476
  %8478 = vdwg.mxu0
  %8479 = vmatpush.bf16.msra.mxu0 0
  %8480 = vmatpush.bf16.msra.mxu0 0
  %8481 = vmatpush.bf16.msra.mxu0 0
  %8482 = vmatpush.bf16.msra.mxu0 0
  %8483 = vmatpush.bf16.msra.mxu0 %v8323
  %8484 = vmatpush.bf16.msra.mxu0 %v8231
  %8485 = vmatpush.bf16.msra.mxu0 %v8225
  %8486 = vmatpush.bf16.msra.mxu0 %v8219
  %8487 = vmatmul.bf16.gmra.mxu0 %v8305
  %v8488 = vpop.f32.mrf.mxu0
  %v8489 = vadd.f32 %v8475, %v8488
  %v8490 = vpop.f32.mrf.mxu0
  %v8491 = vadd.f32 %v8477, %v8490
  %8492 = vdwg.mxu0
  %v8493 = vadd.f32 %v7731, %v8349
  %v8494 = vadd.f32 %v7759, %v8377
  %v8495 = vadd.f32 %v7787, %v8405
  %v8496 = vadd.f32 %v7815, %v8433
  %v8497 = vadd.f32 %v7843, %v8461
  %v8498 = vadd.f32 %v7871, %v8489
  %v8499 = vadd.f32 %v7733, %v8351
  %v8500 = vadd.f32 %v7761, %v8379
  %v8501 = vadd.f32 %v7789, %v8407
  %v8502 = vadd.f32 %v7817, %v8435
  %v8503 = vadd.f32 %v7845, %v8463
  %v8504 = vadd.f32 %v7873, %v8491
  %v8505 = vmul.f32 %v6348, %v6552
  %v8506 = vmul.f32 %v6349, %v6575
  %v8507 = vmul.f32 %v6350, %v6555
  %v8508 = vmul.f32 %v6351, %v6578
  %v8509 = vadd.f32 %v8505, %v6611
  %v8510 = vadd.f32 %v8506, %v6634
  %v8511 = vadd.f32 %v8507, %v6614
  %v8512 = vadd.f32 %v8508, %v6637
  %v8513 = vmax.f32 %v8509, 0.0
  %v8514 = vmax.f32 %v8510, 0.0
  %v8515 = vmax.f32 %v8511, 0.0
  %v8516 = vmax.f32 %v8512, 0.0
  %v8517 = vpack.c.bf16 %v8515, %v8513
  %v8518 = vpack.c.bf16 %v8516, %v8514
  %s8519 = scalar_lea.vmem %s15, 1656
  %v8520 = vld [vmem:[%s8519] sm:$0xff]
  %v8521 = vld [vmem:[%s8519 + $0x8] sm:$0xff]
  %v8522 = vld [vmem:[%s8519 + $0x10] sm:$0xff]
  %v8523 = vld [vmem:[%s8519 + $0x18] sm:$0xff]
  %v8524 = vld [vmem:[%s8519 + $0x20] sm:$0xff]
  %v8525 = vld [vmem:[%s8519 + $0x28] sm:$0xff]
  %v8526 = vld [vmem:[%s8519 + $0x30] sm:$0xff]
  %v8527 = vld [vmem:[%s8519 + $0x38] sm:$0xff]
  %v8528 = vld [vmem:[%s8519 + $0x40] sm:$0xff]
  %v8529 = vld [vmem:[%s8519 + $0x48] sm:$0xff]
  %v8530 = vld [vmem:[%s8519 + $0x50] sm:$0xff]
  %v8531 = vld [vmem:[%s8519 + $0x58] sm:$0xff]
  %v8532 = vld [vmem:[%s8519 + $0x60] sm:$0xff]
  %v8533 = vld [vmem:[%s8519 + $0x68] sm:$0xff]
  %v8534 = vld [vmem:[%s8519 + $0x70] sm:$0xff]
  %v8535 = vld [vmem:[%s8519 + $0x78] sm:$0xff]
  %v8536 = vld [vmem:[%s8519 + $0x80] sm:$0xff]
  %v8537 = vld [vmem:[%s8519 + $0x88] sm:$0xff]
  %v8538 = vld [vmem:[%s8519 + $0x90] sm:$0xff]
  %v8539 = vld [vmem:[%s8519 + $0x98] sm:$0xff]
  %v8540 = vld [vmem:[%s8519 + $0xa0] sm:$0xff]
  %v8541 = vld [vmem:[%s8519 + $0xa8] sm:$0xff]
  %v8542 = vld [vmem:[%s8519 + $0xb0] sm:$0xff]
  %v8543 = vld [vmem:[%s8519 + $0xb8] sm:$0xff]
  %v8544 = vld [vmem:[%s8519 + $0xc0] sm:$0xff]
  %v8545 = vld [vmem:[%s8519 + $0xc8] sm:$0xff]
  %v8546 = vld [vmem:[%s8519 + $0xd0] sm:$0xff]
  %v8547 = vld [vmem:[%s8519 + $0xd8] sm:$0xff]
  %v8548 = vld [vmem:[%s8519 + $0xe0] sm:$0xff]
  %v8549 = vld [vmem:[%s8519 + $0xe8] sm:$0xff]
  %v8550 = vld [vmem:[%s8519 + $0xf0] sm:$0xff]
  %v8551 = vld [vmem:[%s8519 + $0xf8] sm:$0xff]
  %v8552 = vld [vmem:[%s8519 + $0x100] sm:$0xff]
  %v8553 = vld [vmem:[%s8519 + $0x108] sm:$0xff]
  %v8554 = vld [vmem:[%s8519 + $0x110] sm:$0xff]
  %v8555 = vld [vmem:[%s8519 + $0x118] sm:$0xff]
  %v8556 = vld [vmem:[%s8519 + $0x120] sm:$0xff]
  %v8557 = vld [vmem:[%s8519 + $0x128] sm:$0xff]
  %v8558 = vld [vmem:[%s8519 + $0x130] sm:$0xff]
  %v8559 = vld [vmem:[%s8519 + $0x138] sm:$0xff]
  %v8560 = vld [vmem:[%s8519 + $0x140] sm:$0xff]
  %v8561 = vld [vmem:[%s8519 + $0x148] sm:$0xff]
  %v8562 = vld [vmem:[%s8519 + $0x150] sm:$0xff]
  %v8563 = vld [vmem:[%s8519 + $0x158] sm:$0xff]
  %v8564 = vld [vmem:[%s8519 + $0x160] sm:$0xff]
  %v8565 = vld [vmem:[%s8519 + $0x168] sm:$0xff]
  %v8566 = vld [vmem:[%s8519 + $0x170] sm:$0xff]
  %v8567 = vld [vmem:[%s8519 + $0x178] sm:$0xff]
  %v8568 = vld [vmem:[%s8519 + $0x180] sm:$0xff]
  %v8569 = vld [vmem:[%s8519 + $0x188] sm:$0xff]
  %v8570 = vld [vmem:[%s8519 + $0x190] sm:$0xff]
  %v8571 = vld [vmem:[%s8519 + $0x198] sm:$0xff]
  %v8572 = vld [vmem:[%s8519 + $0x1a0] sm:$0xff]
  %v8573 = vld [vmem:[%s8519 + $0x1a8] sm:$0xff]
  %v8574 = vld [vmem:[%s8519 + $0x1b0] sm:$0xff]
  %v8575 = vld [vmem:[%s8519 + $0x1b8] sm:$0xff]
  %v8576 = vld [vmem:[%s8519 + $0x1c0] sm:$0xff]
  %v8577 = vld [vmem:[%s8519 + $0x1c8] sm:$0xff]
  %v8578 = vld [vmem:[%s8519 + $0x1d0] sm:$0xff]
  %v8579 = vld [vmem:[%s8519 + $0x1d8] sm:$0xff]
  %v8580 = vld [vmem:[%s8519 + $0x1e0] sm:$0xff]
  %v8581 = vld [vmem:[%s8519 + $0x1e8] sm:$0xff]
  %v8582 = vld [vmem:[%s8519 + $0x1f0] sm:$0xff]
  %v8583 = vld [vmem:[%s8519 + $0x1f8] sm:$0xff]
  %v8584 = vld [vmem:[%s8519 + $0x200] sm:$0xff]
  %v8585 = vld [vmem:[%s8519 + $0x208] sm:$0xff]
  %v8586 = vld [vmem:[%s8519 + $0x210] sm:$0x77]
  %v8587 = vld [vmem:[%s8519 + $0x218] sm:$0x77]
  %v8588 = vld [vmem:[%s8519 + $0x220] sm:$0x77]
  %v8658 = vunpack.c.l.b16 %v8520
  %v8659 = vunpack.c.h.b16 %v8520
  %v8660 = vunpack.c.l.b16 %v8521
  %v8661 = vunpack.c.h.b16 %v8521
  %v8662 = vunpack.c.l.b16 %v8522
  %v8663 = vunpack.c.h.b16 %v8522
  %v8664 = vunpack.c.l.b16 %v8523
  %v8665 = vunpack.c.h.b16 %v8523
  %v8666 = vunpack.c.l.b16 %v8524
  %v8667 = vunpack.c.h.b16 %v8524
  %v8668 = vunpack.c.l.b16 %v8525
  %v8669 = vunpack.c.h.b16 %v8525
  %v8670 = vunpack.c.l.b16 %v8526
  %v8671 = vunpack.c.h.b16 %v8526
  %v8672 = vunpack.c.l.b16 %v8527
  %v8673 = vunpack.c.h.b16 %v8527
  %v8674 = vunpack.c.l.b16 %v8528
  %v8675 = vunpack.c.h.b16 %v8528
  %v8676 = vunpack.c.l.b16 %v8529
  %v8677 = vunpack.c.h.b16 %v8529
  %v8678 = vunpack.c.l.b16 %v8530
  %v8679 = vunpack.c.h.b16 %v8530
  %v8680 = vunpack.c.l.b16 %v8531
  %v8681 = vunpack.c.h.b16 %v8531
  %v8682 = vunpack.c.l.b16 %v8532
  %v8683 = vunpack.c.h.b16 %v8532
  %v8684 = vunpack.c.l.b16 %v8533
  %v8685 = vunpack.c.h.b16 %v8533
  %v8686 = vunpack.c.l.b16 %v8534
  %v8687 = vunpack.c.h.b16 %v8534
  %v8688 = vunpack.c.l.b16 %v8535
  %v8689 = vunpack.c.h.b16 %v8535
  %v8690 = vunpack.c.l.b16 %v8536
  %v8691 = vunpack.c.h.b16 %v8536
  %v8692 = vunpack.c.l.b16 %v8537
  %v8693 = vunpack.c.h.b16 %v8537
  %v8694 = vunpack.c.l.b16 %v8538
  %v8695 = vunpack.c.h.b16 %v8538
  %v8696 = vunpack.c.l.b16 %v8539
  %v8697 = vunpack.c.h.b16 %v8539
  %v8698 = vunpack.c.l.b16 %v8540
  %v8699 = vunpack.c.h.b16 %v8540
  %v8700 = vunpack.c.l.b16 %v8541
  %v8701 = vunpack.c.h.b16 %v8541
  %v8702 = vunpack.c.l.b16 %v8542
  %v8703 = vunpack.c.h.b16 %v8542
  %v8704 = vunpack.c.l.b16 %v8543
  %v8705 = vunpack.c.h.b16 %v8543
  %v8706 = vunpack.c.l.b16 %v8544
  %v8707 = vunpack.c.h.b16 %v8544
  %v8708 = vunpack.c.l.b16 %v8545
  %v8709 = vunpack.c.h.b16 %v8545
  %v8710 = vunpack.c.l.b16 %v8546
  %v8711 = vunpack.c.h.b16 %v8546
  %v8712 = vunpack.c.l.b16 %v8547
  %v8713 = vunpack.c.h.b16 %v8547
  %v8714 = vunpack.c.l.b16 %v8548
  %v8715 = vunpack.c.h.b16 %v8548
  %v8716 = vunpack.c.l.b16 %v8549
  %v8717 = vunpack.c.h.b16 %v8549
  %v8718 = vunpack.c.l.b16 %v8550
  %v8719 = vunpack.c.h.b16 %v8550
  %v8720 = vunpack.c.l.b16 %v8551
  %v8721 = vunpack.c.h.b16 %v8551
  %v8722 = vunpack.c.l.b16 %v8552
  %v8723 = vunpack.c.h.b16 %v8552
  %v8724 = vunpack.c.l.b16 %v8553
  %v8725 = vunpack.c.h.b16 %v8553
  %v8726 = vunpack.c.l.b16 %v8554
  %v8727 = vunpack.c.h.b16 %v8554
  %v8728 = vunpack.c.l.b16 %v8555
  %v8729 = vunpack.c.h.b16 %v8555
  %v8730 = vunpack.c.l.b16 %v8556
  %v8731 = vunpack.c.h.b16 %v8556
  %v8732 = vunpack.c.l.b16 %v8557
  %v8733 = vunpack.c.h.b16 %v8557
  %v8734 = vunpack.c.l.b16 %v8558
  %v8735 = vunpack.c.h.b16 %v8558
  %v8736 = vunpack.c.l.b16 %v8559
  %v8737 = vunpack.c.h.b16 %v8559
  %v8738 = vunpack.c.l.b16 %v8560
  %v8739 = vunpack.c.h.b16 %v8560
  %v8740 = vunpack.c.l.b16 %v8561
  %v8741 = vunpack.c.h.b16 %v8561
  %v8742 = vunpack.c.l.b16 %v8562
  %v8743 = vunpack.c.h.b16 %v8562
  %v8744 = vunpack.c.l.b16 %v8563
  %v8745 = vunpack.c.h.b16 %v8563
  %v8746 = vunpack.c.l.b16 %v8564
  %v8747 = vunpack.c.h.b16 %v8564
  %v8748 = vunpack.c.l.b16 %v8565
  %v8749 = vunpack.c.h.b16 %v8565
  %v8750 = vunpack.c.l.b16 %v8566
  %v8751 = vunpack.c.h.b16 %v8566
  %v8752 = vunpack.c.l.b16 %v8567
  %v8753 = vunpack.c.h.b16 %v8567
  %v8754 = vunpack.c.l.b16 %v8568
  %v8755 = vunpack.c.h.b16 %v8568
  %v8756 = vunpack.c.l.b16 %v8569
  %v8757 = vunpack.c.h.b16 %v8569
  %v8758 = vunpack.c.l.b16 %v8570
  %v8759 = vunpack.c.h.b16 %v8570
  %v8760 = vunpack.c.l.b16 %v8571
  %v8761 = vunpack.c.h.b16 %v8571
  %v8762 = vunpack.c.l.b16 %v8572
  %v8763 = vunpack.c.h.b16 %v8572
  %v8764 = vunpack.c.l.b16 %v8573
  %v8765 = vunpack.c.h.b16 %v8573
  %v8766 = vunpack.c.l.b16 %v8574
  %v8767 = vunpack.c.h.b16 %v8574
  %v8768 = vunpack.c.l.b16 %v8575
  %v8769 = vunpack.c.h.b16 %v8575
  %v8770 = vunpack.c.l.b16 %v8576
  %v8771 = vunpack.c.h.b16 %v8576
  %v8772 = vunpack.c.l.b16 %v8577
  %v8773 = vunpack.c.h.b16 %v8577
  %v8774 = vunpack.c.l.b16 %v8578
  %v8775 = vunpack.c.h.b16 %v8578
  %v8776 = vunpack.c.l.b16 %v8579
  %v8777 = vunpack.c.h.b16 %v8579
  %v8778 = vunpack.c.l.b16 %v8580
  %v8779 = vunpack.c.h.b16 %v8580
  %v8780 = vunpack.c.l.b16 %v8581
  %v8781 = vunpack.c.h.b16 %v8581
  %v8782 = vunpack.c.l.b16 %v8582
  %v8783 = vunpack.c.h.b16 %v8582
  %v8784 = vunpack.c.l.b16 %v8583
  %v8785 = vunpack.c.h.b16 %v8583
  %v8786 = vunpack.c.l.b16 %v8584
  %v8787 = vunpack.c.h.b16 %v8584
  %v8788 = vunpack.c.l.b16 %v8585
  %v8789 = vunpack.c.h.b16 %v8585
  %v8790 = vunpack.c.l.b16 %v8586
  %v8791 = vunpack.c.h.b16 %v8586
  %v8792 = vunpack.c.l.b16 %v8587
  %v8793 = vunpack.c.h.b16 %v8587
  %v8794 = vunpack.c.l.b16 %v8588
  %v8795 = vunpack.c.h.b16 %v8588
  %v8796 = vpack.c.b16 %v8664, %v8658
  %v8797 = vpack.c.b16 %v8665, %v8659
  %v8798 = vpack.c.b16 %v8666, %v8660
  %v8799 = vpack.c.b16 %v8667, %v8661
  %v8800 = vpack.c.b16 %v8668, %v8662
  %v8801 = vpack.c.b16 %v8669, %v8663
  %v8802 = vpack.c.b16 %v8676, %v8670
  %v8803 = vpack.c.b16 %v8677, %v8671
  %v8804 = vpack.c.b16 %v8678, %v8672
  %v8805 = vpack.c.b16 %v8679, %v8673
  %v8806 = vpack.c.b16 %v8680, %v8674
  %v8807 = vpack.c.b16 %v8681, %v8675
  %v8808 = vpack.c.b16 %v8688, %v8682
  %v8809 = vpack.c.b16 %v8689, %v8683
  %v8810 = vpack.c.b16 %v8690, %v8684
  %v8811 = vpack.c.b16 %v8691, %v8685
  %v8812 = vpack.c.b16 %v8692, %v8686
  %v8813 = vpack.c.b16 %v8693, %v8687
  %v8814 = vpack.c.b16 %v8700, %v8694
  %v8815 = vpack.c.b16 %v8701, %v8695
  %v8816 = vpack.c.b16 %v8702, %v8696
  %v8817 = vpack.c.b16 %v8703, %v8697
  %v8818 = vpack.c.b16 %v8704, %v8698
  %v8819 = vpack.c.b16 %v8705, %v8699
  %v8820 = vpack.c.b16 %v8712, %v8706
  %v8821 = vpack.c.b16 %v8713, %v8707
  %v8822 = vpack.c.b16 %v8714, %v8708
  %v8823 = vpack.c.b16 %v8715, %v8709
  %v8824 = vpack.c.b16 %v8716, %v8710
  %v8825 = vpack.c.b16 %v8717, %v8711
  %v8826 = vpack.c.b16 %v8724, %v8718
  %v8827 = vpack.c.b16 %v8725, %v8719
  %v8828 = vpack.c.b16 %v8726, %v8720
  %v8829 = vpack.c.b16 %v8727, %v8721
  %v8830 = vpack.c.b16 %v8728, %v8722
  %v8831 = vpack.c.b16 %v8729, %v8723
  %v8832 = vpack.c.b16 %v8736, %v8730
  %v8833 = vpack.c.b16 %v8737, %v8731
  %v8834 = vpack.c.b16 %v8738, %v8732
  %v8835 = vpack.c.b16 %v8739, %v8733
  %v8836 = vpack.c.b16 %v8740, %v8734
  %v8837 = vpack.c.b16 %v8741, %v8735
  %v8838 = vpack.c.b16 %v8748, %v8742
  %v8839 = vpack.c.b16 %v8749, %v8743
  %v8840 = vpack.c.b16 %v8750, %v8744
  %v8841 = vpack.c.b16 %v8751, %v8745
  %v8842 = vpack.c.b16 %v8752, %v8746
  %v8843 = vpack.c.b16 %v8753, %v8747
  %v8844 = vpack.c.b16 %v8760, %v8754
  %v8845 = vpack.c.b16 %v8761, %v8755
  %v8846 = vpack.c.b16 %v8762, %v8756
  %v8847 = vpack.c.b16 %v8763, %v8757
  %v8848 = vpack.c.b16 %v8764, %v8758
  %v8849 = vpack.c.b16 %v8765, %v8759
  %v8850 = vpack.c.b16 %v8772, %v8766
  %v8851 = vpack.c.b16 %v8773, %v8767
  %v8852 = vpack.c.b16 %v8774, %v8768
  %v8853 = vpack.c.b16 %v8775, %v8769
  %v8854 = vpack.c.b16 %v8776, %v8770
  %v8855 = vpack.c.b16 %v8777, %v8771
  %v8856 = vpack.c.b16 %v8784, %v8778
  %v8857 = vpack.c.b16 %v8785, %v8779
  %v8858 = vpack.c.b16 %v8786, %v8780
  %v8859 = vpack.c.b16 %v8787, %v8781
  %v8860 = vpack.c.b16 %v8788, %v8782
  %v8861 = vpack.c.b16 %v8789, %v8783
  %v8862 = vpack.c.b16 %v8790, %v8790
  %v8863 = vpack.c.b16 %v8791, %v8791
  %v8864 = vpack.c.b16 %v8792, %v8792
  %v8865 = vpack.c.b16 %v8793, %v8793
  %v8866 = vpack.c.b16 %v8794, %v8794
  %v8867 = vpack.c.b16 %v8795, %v8795
  %v8935 = vsel %vm5651, %v8518, 0
  %v8938 = vsel %vm7154, %v8862, 0
  %v8941 = vsel %vm7154, %v8863, 0
  %v8944 = vsel %vm7154, %v8864, 0
  %v8947 = vsel %vm7154, %v8865, 0
  %v8950 = vsel %vm7154, %v8866, 0
  %v8953 = vsel %vm7154, %v8867, 0
  %8955 = vmatpush.bf16.msra.mxu0 %v8838
  %8956 = vmatpush.bf16.msra.mxu0 %v8832
  %8957 = vmatpush.bf16.msra.mxu0 %v8826
  %8958 = vmatpush.bf16.msra.mxu0 %v8820
  %8959 = vmatpush.bf16.msra.mxu0 %v8814
  %8960 = vmatpush.bf16.msra.mxu0 %v8808
  %8961 = vmatpush.bf16.msra.mxu0 %v8802
  %8962 = vmatpush.bf16.msra.mxu0 %v8796
  %8963 = vmatmul.bf16.gmra.mxu0 %v8517
  %v8964 = vpop.f32.mrf.mxu0
  %v8965 = vadd.f32 0.0, %v8964
  %v8966 = vpop.f32.mrf.mxu0
  %v8967 = vadd.f32 0.0, %v8966
  %8968 = vdwg.mxu0
  %8969 = vmatpush.bf16.msra.mxu0 0
  %8970 = vmatpush.bf16.msra.mxu0 0
  %8971 = vmatpush.bf16.msra.mxu0 0
  %8972 = vmatpush.bf16.msra.mxu0 0
  %8973 = vmatpush.bf16.msra.mxu0 %v8938
  %8974 = vmatpush.bf16.msra.mxu0 %v8856
  %8975 = vmatpush.bf16.msra.mxu0 %v8850
  %8976 = vmatpush.bf16.msra.mxu0 %v8844
  %8977 = vmatmul.bf16.gmra.mxu0 %v8935
  %v8978 = vpop.f32.mrf.mxu0
  %v8979 = vadd.f32 %v8965, %v8978
  %v8980 = vpop.f32.mrf.mxu0
  %v8981 = vadd.f32 %v8967, %v8980
  %8982 = vdwg.mxu0
  %8983 = vmatpush.bf16.msra.mxu0 %v8839
  %8984 = vmatpush.bf16.msra.mxu0 %v8833
  %8985 = vmatpush.bf16.msra.mxu0 %v8827
  %8986 = vmatpush.bf16.msra.mxu0 %v8821
  %8987 = vmatpush.bf16.msra.mxu0 %v8815
  %8988 = vmatpush.bf16.msra.mxu0 %v8809
  %8989 = vmatpush.bf16.msra.mxu0 %v8803
  %8990 = vmatpush.bf16.msra.mxu0 %v8797
  %8991 = vmatmul.bf16.gmra.mxu0 %v8517
  %v8992 = vpop.f32.mrf.mxu0
  %v8993 = vadd.f32 0.0, %v8992
  %v8994 = vpop.f32.mrf.mxu0
  %v8995 = vadd.f32 0.0, %v8994
  %8996 = vdwg.mxu0
  %8997 = vmatpush.bf16.msra.mxu0 0
  %8998 = vmatpush.bf16.msra.mxu0 0
  %8999 = vmatpush.bf16.msra.mxu0 0
  %9000 = vmatpush.bf16.msra.mxu0 0
  %9001 = vmatpush.bf16.msra.mxu0 %v8941
  %9002 = vmatpush.bf16.msra.mxu0 %v8857
  %9003 = vmatpush.bf16.msra.mxu0 %v8851
  %9004 = vmatpush.bf16.msra.mxu0 %v8845
  %9005 = vmatmul.bf16.gmra.mxu0 %v8935
  %v9006 = vpop.f32.mrf.mxu0
  %v9007 = vadd.f32 %v8993, %v9006
  %v9008 = vpop.f32.mrf.mxu0
  %v9009 = vadd.f32 %v8995, %v9008
  %9010 = vdwg.mxu0
  %9011 = vmatpush.bf16.msra.mxu0 %v8840
  %9012 = vmatpush.bf16.msra.mxu0 %v8834
  %9013 = vmatpush.bf16.msra.mxu0 %v8828
  %9014 = vmatpush.bf16.msra.mxu0 %v8822
  %9015 = vmatpush.bf16.msra.mxu0 %v8816
  %9016 = vmatpush.bf16.msra.mxu0 %v8810
  %9017 = vmatpush.bf16.msra.mxu0 %v8804
  %9018 = vmatpush.bf16.msra.mxu0 %v8798
  %9019 = vmatmul.bf16.gmra.mxu0 %v8517
  %v9020 = vpop.f32.mrf.mxu0
  %v9021 = vadd.f32 0.0, %v9020
  %v9022 = vpop.f32.mrf.mxu0
  %v9023 = vadd.f32 0.0, %v9022
  %9024 = vdwg.mxu0
  %9025 = vmatpush.bf16.msra.mxu0 0
  %9026 = vmatpush.bf16.msra.mxu0 0
  %9027 = vmatpush.bf16.msra.mxu0 0
  %9028 = vmatpush.bf16.msra.mxu0 0
  %9029 = vmatpush.bf16.msra.mxu0 %v8944
  %9030 = vmatpush.bf16.msra.mxu0 %v8858
  %9031 = vmatpush.bf16.msra.mxu0 %v8852
  %9032 = vmatpush.bf16.msra.mxu0 %v8846
  %9033 = vmatmul.bf16.gmra.mxu0 %v8935
  %v9034 = vpop.f32.mrf.mxu0
  %v9035 = vadd.f32 %v9021, %v9034
  %v9036 = vpop.f32.mrf.mxu0
  %v9037 = vadd.f32 %v9023, %v9036
  %9038 = vdwg.mxu0
  %9039 = vmatpush.bf16.msra.mxu0 %v8841
  %9040 = vmatpush.bf16.msra.mxu0 %v8835
  %9041 = vmatpush.bf16.msra.mxu0 %v8829
  %9042 = vmatpush.bf16.msra.mxu0 %v8823
  %9043 = vmatpush.bf16.msra.mxu0 %v8817
  %9044 = vmatpush.bf16.msra.mxu0 %v8811
  %9045 = vmatpush.bf16.msra.mxu0 %v8805
  %9046 = vmatpush.bf16.msra.mxu0 %v8799
  %9047 = vmatmul.bf16.gmra.mxu0 %v8517
  %v9048 = vpop.f32.mrf.mxu0
  %v9049 = vadd.f32 0.0, %v9048
  %v9050 = vpop.f32.mrf.mxu0
  %v9051 = vadd.f32 0.0, %v9050
  %9052 = vdwg.mxu0
  %9053 = vmatpush.bf16.msra.mxu0 0
  %9054 = vmatpush.bf16.msra.mxu0 0
  %9055 = vmatpush.bf16.msra.mxu0 0
  %9056 = vmatpush.bf16.msra.mxu0 0
  %9057 = vmatpush.bf16.msra.mxu0 %v8947
  %9058 = vmatpush.bf16.msra.mxu0 %v8859
  %9059 = vmatpush.bf16.msra.mxu0 %v8853
  %9060 = vmatpush.bf16.msra.mxu0 %v8847
  %9061 = vmatmul.bf16.gmra.mxu0 %v8935
  %v9062 = vpop.f32.mrf.mxu0
  %v9063 = vadd.f32 %v9049, %v9062
  %v9064 = vpop.f32.mrf.mxu0
  %v9065 = vadd.f32 %v9051, %v9064
  %9066 = vdwg.mxu0
  %9067 = vmatpush.bf16.msra.mxu0 %v8842
  %9068 = vmatpush.bf16.msra.mxu0 %v8836
  %9069 = vmatpush.bf16.msra.mxu0 %v8830
  %9070 = vmatpush.bf16.msra.mxu0 %v8824
  %9071 = vmatpush.bf16.msra.mxu0 %v8818
  %9072 = vmatpush.bf16.msra.mxu0 %v8812
  %9073 = vmatpush.bf16.msra.mxu0 %v8806
  %9074 = vmatpush.bf16.msra.mxu0 %v8800
  %9075 = vmatmul.bf16.gmra.mxu0 %v8517
  %v9076 = vpop.f32.mrf.mxu0
  %v9077 = vadd.f32 0.0, %v9076
  %v9078 = vpop.f32.mrf.mxu0
  %v9079 = vadd.f32 0.0, %v9078
  %9080 = vdwg.mxu0
  %9081 = vmatpush.bf16.msra.mxu0 0
  %9082 = vmatpush.bf16.msra.mxu0 0
  %9083 = vmatpush.bf16.msra.mxu0 0
  %9084 = vmatpush.bf16.msra.mxu0 0
  %9085 = vmatpush.bf16.msra.mxu0 %v8950
  %9086 = vmatpush.bf16.msra.mxu0 %v8860
  %9087 = vmatpush.bf16.msra.mxu0 %v8854
  %9088 = vmatpush.bf16.msra.mxu0 %v8848
  %9089 = vmatmul.bf16.gmra.mxu0 %v8935
  %v9090 = vpop.f32.mrf.mxu0
  %v9091 = vadd.f32 %v9077, %v9090
  %v9092 = vpop.f32.mrf.mxu0
  %v9093 = vadd.f32 %v9079, %v9092
  %9094 = vdwg.mxu0
  %9095 = vmatpush.bf16.msra.mxu0 %v8843
  %9096 = vmatpush.bf16.msra.mxu0 %v8837
  %9097 = vmatpush.bf16.msra.mxu0 %v8831
  %9098 = vmatpush.bf16.msra.mxu0 %v8825
  %9099 = vmatpush.bf16.msra.mxu0 %v8819
  %9100 = vmatpush.bf16.msra.mxu0 %v8813
  %9101 = vmatpush.bf16.msra.mxu0 %v8807
  %9102 = vmatpush.bf16.msra.mxu0 %v8801
  %9103 = vmatmul.bf16.gmra.mxu0 %v8517
  %v9104 = vpop.f32.mrf.mxu0
  %v9105 = vadd.f32 0.0, %v9104
  %v9106 = vpop.f32.mrf.mxu0
  %v9107 = vadd.f32 0.0, %v9106
  %9108 = vdwg.mxu0
  %9109 = vmatpush.bf16.msra.mxu0 0
  %9110 = vmatpush.bf16.msra.mxu0 0
  %9111 = vmatpush.bf16.msra.mxu0 0
  %9112 = vmatpush.bf16.msra.mxu0 0
  %9113 = vmatpush.bf16.msra.mxu0 %v8953
  %9114 = vmatpush.bf16.msra.mxu0 %v8861
  %9115 = vmatpush.bf16.msra.mxu0 %v8855
  %9116 = vmatpush.bf16.msra.mxu0 %v8849
  %9117 = vmatmul.bf16.gmra.mxu0 %v8935
  %v9118 = vpop.f32.mrf.mxu0
  %v9119 = vadd.f32 %v9105, %v9118
  %v9120 = vpop.f32.mrf.mxu0
  %v9121 = vadd.f32 %v9107, %v9120
  %9122 = vdwg.mxu0
  %v9123 = vadd.f32 %v8493, %v8979
  %v9124 = vadd.f32 %v8494, %v9007
  %v9125 = vadd.f32 %v8495, %v9035
  %v9126 = vadd.f32 %v8496, %v9063
  %v9127 = vadd.f32 %v8497, %v9091
  %v9128 = vadd.f32 %v8498, %v9119
  %v9129 = vadd.f32 %v8499, %v8981
  %v9130 = vadd.f32 %v8500, %v9009
  %v9131 = vadd.f32 %v8501, %v9037
  %v9132 = vadd.f32 %v8502, %v9065
  %v9133 = vadd.f32 %v8503, %v9093
  %v9134 = vadd.f32 %v8504, %v9121
  %9135 = vst [vmem:[#allocation4] sm:$0xff] %v9123
  %9136 = vst [vmem:[#allocation4 + $0x8] sm:$0xff] %v9124
  %9137 = vst [vmem:[#allocation4 + $0x10] sm:$0xff] %v9125
  %9138 = vst [vmem:[#allocation4 + $0x18] sm:$0xff] %v9126
  %9139 = vst [vmem:[#allocation4 + $0x20] sm:$0xff] %v9127
  %vm9140 = vcmask 97280
  %9141 = vst.msk [vmem:[#allocation4 + $0x28] sm:$0xff] %vm9140, %v9128
  %9142 = vst [vmem:[#allocation4 + $0x30] sm:$0xff] %v9129
  %9143 = vst [vmem:[#allocation4 + $0x38] sm:$0xff] %v9130
  %9144 = vst [vmem:[#allocation4 + $0x40] sm:$0xff] %v9131
  %9145 = vst [vmem:[#allocation4 + $0x48] sm:$0xff] %v9132
  %9146 = vst [vmem:[#allocation4 + $0x50] sm:$0xff] %v9133
  %9147 = vst.msk [vmem:[#allocation4 + $0x58] sm:$0xff] %vm9140, %v9134
  %v9148 = vld [vmem:[#allocation4] sm:$0xff]
  %v9149 = vld [vmem:[#allocation4 + $0x8] sm:$0xff]
  %v9150 = vld [vmem:[#allocation4 + $0x10] sm:$0xff]
  %v9151 = vld [vmem:[#allocation4 + $0x18] sm:$0xff]
  %v9152 = vld [vmem:[#allocation4 + $0x20] sm:$0xff]
  %v9153 = vld [vmem:[#allocation4 + $0x30] sm:$0xff]
  %v9154 = vld [vmem:[#allocation4 + $0x38] sm:$0xff]
  %v9155 = vld [vmem:[#allocation4 + $0x40] sm:$0xff]
  %v9156 = vld [vmem:[#allocation4 + $0x48] sm:$0xff]
  %v9157 = vld [vmem:[#allocation4 + $0x50] sm:$0xff]
  %v9158 = vpack.c.bf16 %v9153, %v9148
  %v9159 = vpack.c.bf16 %v9154, %v9149
  %v9160 = vpack.c.bf16 %v9155, %v9150
  %v9161 = vpack.c.bf16 %v9156, %v9151
  %v9162 = vpack.c.bf16 %v9157, %v9152
  %v9163 = vld [vmem:[%s16] sm:$0x3]
  %s9164 = scalar_lea.vmem %s16, 2
  %v9165 = vld [vmem:[%s9164] sm:$0x3]
  %9171 = vrot.lane.b32.xlu0 %v9158, 127
  %v9172 = vpop.permute.xlu0 %9171
  %9173 = vrot.lane.b32.xlu0 %v9159, 127
  %v9174 = vpop.permute.xlu0 %9173
  %9175 = vrot.lane.b32.xlu0 %v9160, 127
  %v9176 = vpop.permute.xlu0 %9175
  %9177 = vrot.lane.b32.xlu0 %v9161, 127
  %v9178 = vpop.permute.xlu0 %9177
  %9179 = vrot.lane.b32.xlu0 %v9162, 127
  %v9180 = vpop.permute.xlu0 %9179
  %v9181 = vsel %vm5263, %v9172, %v9174
  %v9182 = vsel %vm5263, %v9174, %v9176
  %v9183 = vsel %vm5263, %v9176, %v9178
  %v9184 = vsel %vm5263, %v9178, %v9180
  %vm9190 = vcmask 130048
  %v9192 = vsel %vm9190, %v9165, 0
  %9194 = vmatpush.bf16.msra.mxu0 0
  %9195 = vmatpush.bf16.msra.mxu0 0
  %9196 = vmatpush.bf16.msra.mxu0 0
  %9197 = vmatpush.bf16.msra.mxu0 0
  %9198 = vmatpush.bf16.msra.mxu0 0
  %9199 = vmatpush.bf16.msra.mxu0 0
  %9200 = vmatpush.bf16.msra.mxu0 0
  %9201 = vmatpush.bf16.msra.mxu0 %v9181
  %9202 = vmatmul.bf16.gmra.mxu0 %v9192
  %v9203 = vpop.f32.mrf.mxu0
  %v9204 = vadd.f32 0.0, %v9203
  %v9205 = vpop.f32.mrf.mxu0
  %9206 = vdwg.mxu0
  %9207 = vmatpush.bf16.msra.mxu0 0
  %9208 = vmatpush.bf16.msra.mxu0 0
  %9209 = vmatpush.bf16.msra.mxu0 0
  %9210 = vmatpush.bf16.msra.mxu0 0
  %9211 = vmatpush.bf16.msra.mxu0 0
  %9212 = vmatpush.bf16.msra.mxu0 0
  %9213 = vmatpush.bf16.msra.mxu0 0
  %9214 = vmatpush.bf16.msra.mxu0 %v9182
  %9215 = vmatmul.bf16.gmra.mxu0 %v9192
  %v9216 = vpop.f32.mrf.mxu0
  %v9217 = vadd.f32 0.0, %v9216
  %v9218 = vpop.f32.mrf.mxu0
  %9219 = vdwg.mxu0
  %9220 = vmatpush.bf16.msra.mxu0 0
  %9221 = vmatpush.bf16.msra.mxu0 0
  %9222 = vmatpush.bf16.msra.mxu0 0
  %9223 = vmatpush.bf16.msra.mxu0 0
  %9224 = vmatpush.bf16.msra.mxu0 0
  %9225 = vmatpush.bf16.msra.mxu0 0
  %9226 = vmatpush.bf16.msra.mxu0 0
  %9227 = vmatpush.bf16.msra.mxu0 %v9183
  %9228 = vmatmul.bf16.gmra.mxu0 %v9192
  %v9229 = vpop.f32.mrf.mxu0
  %v9230 = vadd.f32 0.0, %v9229
  %v9231 = vpop.f32.mrf.mxu0
  %9232 = vdwg.mxu0
  %9233 = vmatpush.bf16.msra.mxu0 0
  %9234 = vmatpush.bf16.msra.mxu0 0
  %9235 = vmatpush.bf16.msra.mxu0 0
  %9236 = vmatpush.bf16.msra.mxu0 0
  %9237 = vmatpush.bf16.msra.mxu0 0
  %9238 = vmatpush.bf16.msra.mxu0 0
  %9239 = vmatpush.bf16.msra.mxu0 0
  %9240 = vmatpush.bf16.msra.mxu0 %v9184
  %9241 = vmatmul.bf16.gmra.mxu0 %v9192
  %v9242 = vpop.f32.mrf.mxu0
  %v9243 = vadd.f32 0.0, %v9242
  %v9244 = vpop.f32.mrf.mxu0
  %9245 = vdwg.mxu0
  %9246 = vmatpush.bf16.msra.mxu0 0
  %9247 = vmatpush.bf16.msra.mxu0 0
  %9248 = vmatpush.bf16.msra.mxu0 0
  %9249 = vmatpush.bf16.msra.mxu0 0
  %9250 = vmatpush.bf16.msra.mxu0 0
  %9251 = vmatpush.bf16.msra.mxu0 0
  %9252 = vmatpush.bf16.msra.mxu0 0
  %9253 = vmatpush.bf16.msra.mxu0 %v9180
  %9254 = vmatmul.bf16.gmra.mxu0 %v9192
  %v9255 = vpop.f32.mrf.mxu0
  %v9256 = vadd.f32 0.0, %v9255
  %v9257 = vpop.f32.mrf.mxu0
  %9258 = vdwg.mxu0
  %v9260 = vsel %vm9190, %v9163, 0
  %9262 = vmatpush.bf16.msra.mxu0 0
  %9263 = vmatpush.bf16.msra.mxu0 0
  %9264 = vmatpush.bf16.msra.mxu0 0
  %9265 = vmatpush.bf16.msra.mxu0 0
  %9266 = vmatpush.bf16.msra.mxu0 0
  %9267 = vmatpush.bf16.msra.mxu0 0
  %9268 = vmatpush.bf16.msra.mxu0 0
  %9269 = vmatpush.bf16.msra.mxu0 %v9158
  %9270 = vmatmul.bf16.gmra.mxu0 %v9260
  %v9271 = vpop.f32.mrf.mxu0
  %v9272 = vadd.f32 %v9204, %v9271
  %v9273 = vpop.f32.mrf.mxu0
  %9274 = vdwg.mxu0
  %9275 = vmatpush.bf16.msra.mxu0 0
  %9276 = vmatpush.bf16.msra.mxu0 0
  %9277 = vmatpush.bf16.msra.mxu0 0
  %9278 = vmatpush.bf16.msra.mxu0 0
  %9279 = vmatpush.bf16.msra.mxu0 0
  %9280 = vmatpush.bf16.msra.mxu0 0
  %9281 = vmatpush.bf16.msra.mxu0 0
  %9282 = vmatpush.bf16.msra.mxu0 %v9159
  %9283 = vmatmul.bf16.gmra.mxu0 %v9260
  %v9284 = vpop.f32.mrf.mxu0
  %v9285 = vadd.f32 %v9217, %v9284
  %v9286 = vpop.f32.mrf.mxu0
  %9287 = vdwg.mxu0
  %9288 = vmatpush.bf16.msra.mxu0 0
  %9289 = vmatpush.bf16.msra.mxu0 0
  %9290 = vmatpush.bf16.msra.mxu0 0
  %9291 = vmatpush.bf16.msra.mxu0 0
  %9292 = vmatpush.bf16.msra.mxu0 0
  %9293 = vmatpush.bf16.msra.mxu0 0
  %9294 = vmatpush.bf16.msra.mxu0 0
  %9295 = vmatpush.bf16.msra.mxu0 %v9160
  %9296 = vmatmul.bf16.gmra.mxu0 %v9260
  %v9297 = vpop.f32.mrf.mxu0
  %v9298 = vadd.f32 %v9230, %v9297
  %v9299 = vpop.f32.mrf.mxu0
  %9300 = vdwg.mxu0
  %9301 = vmatpush.bf16.msra.mxu0 0
  %9302 = vmatpush.bf16.msra.mxu0 0
  %9303 = vmatpush.bf16.msra.mxu0 0
  %9304 = vmatpush.bf16.msra.mxu0 0
  %9305 = vmatpush.bf16.msra.mxu0 0
  %9306 = vmatpush.bf16.msra.mxu0 0
  %9307 = vmatpush.bf16.msra.mxu0 0
  %9308 = vmatpush.bf16.msra.mxu0 %v9161
  %9309 = vmatmul.bf16.gmra.mxu0 %v9260
  %v9310 = vpop.f32.mrf.mxu0
  %v9311 = vadd.f32 %v9243, %v9310
  %v9312 = vpop.f32.mrf.mxu0
  %9313 = vdwg.mxu0
  %9314 = vmatpush.bf16.msra.mxu0 0
  %9315 = vmatpush.bf16.msra.mxu0 0
  %9316 = vmatpush.bf16.msra.mxu0 0
  %9317 = vmatpush.bf16.msra.mxu0 0
  %9318 = vmatpush.bf16.msra.mxu0 0
  %9319 = vmatpush.bf16.msra.mxu0 0
  %9320 = vmatpush.bf16.msra.mxu0 0
  %9321 = vmatpush.bf16.msra.mxu0 %v9162
  %9322 = vmatmul.bf16.gmra.mxu0 %v9260
  %v9323 = vpop.f32.mrf.mxu0
  %v9324 = vadd.f32 %v9256, %v9323
  %v9325 = vpop.f32.mrf.mxu0
  %9326 = vdwg.mxu0
  %s9327 = scalar_lea.vmem %s16, 4
  %v9328 = vld [vmem:[%s9327] sm:$0x3]
  %9329 = vrot.lane.b32.xlu0 %v9158, 110
  %v9330 = vpop.permute.xlu0 %9329
  %9331 = vrot.lane.b32.xlu0 %v9159, 110
  %v9332 = vpop.permute.xlu0 %9331
  %9333 = vrot.lane.b32.xlu0 %v9160, 110
  %v9334 = vpop.permute.xlu0 %9333
  %9335 = vrot.lane.b32.xlu0 %v9161, 110
  %v9336 = vpop.permute.xlu0 %9335
  %9337 = vrot.lane.b32.xlu0 %v9162, 110
  %v9338 = vpop.permute.xlu0 %9337
  %vm9339 = vcmask 900096
  %v9340 = vsel %vm9339, %v9330, %v9332
  %v9341 = vsel %vm9339, %v9332, %v9334
  %v9342 = vsel %vm9339, %v9334, %v9336
  %v9343 = vsel %vm9339, %v9336, %v9338
  %v9350 = vsel %vm9190, %v9328, 0
  %9352 = vmatpush.bf16.msra.mxu0 0
  %9353 = vmatpush.bf16.msra.mxu0 0
  %9354 = vmatpush.bf16.msra.mxu0 0
  %9355 = vmatpush.bf16.msra.mxu0 0
  %9356 = vmatpush.bf16.msra.mxu0 0
  %9357 = vmatpush.bf16.msra.mxu0 0
  %9358 = vmatpush.bf16.msra.mxu0 0
  %9359 = vmatpush.bf16.msra.mxu0 %v9340
  %9360 = vmatmul.bf16.gmra.mxu0 %v9350
  %v9361 = vpop.f32.mrf.mxu0
  %v9362 = vadd.f32 0.0, %v9361
  %v9363 = vpop.f32.mrf.mxu0
  %9364 = vdwg.mxu0
  %9365 = vmatpush.bf16.msra.mxu0 0
  %9366 = vmatpush.bf16.msra.mxu0 0
  %9367 = vmatpush.bf16.msra.mxu0 0
  %9368 = vmatpush.bf16.msra.mxu0 0
  %9369 = vmatpush.bf16.msra.mxu0 0
  %9370 = vmatpush.bf16.msra.mxu0 0
  %9371 = vmatpush.bf16.msra.mxu0 0
  %9372 = vmatpush.bf16.msra.mxu0 %v9341
  %9373 = vmatmul.bf16.gmra.mxu0 %v9350
  %v9374 = vpop.f32.mrf.mxu0
  %v9375 = vadd.f32 0.0, %v9374
  %v9376 = vpop.f32.mrf.mxu0
  %9377 = vdwg.mxu0
  %9378 = vmatpush.bf16.msra.mxu0 0
  %9379 = vmatpush.bf16.msra.mxu0 0
  %9380 = vmatpush.bf16.msra.mxu0 0
  %9381 = vmatpush.bf16.msra.mxu0 0
  %9382 = vmatpush.bf16.msra.mxu0 0
  %9383 = vmatpush.bf16.msra.mxu0 0
  %9384 = vmatpush.bf16.msra.mxu0 0
  %9385 = vmatpush.bf16.msra.mxu0 %v9342
  %9386 = vmatmul.bf16.gmra.mxu0 %v9350
  %v9387 = vpop.f32.mrf.mxu0
  %v9388 = vadd.f32 0.0, %v9387
  %v9389 = vpop.f32.mrf.mxu0
  %9390 = vdwg.mxu0
  %9391 = vmatpush.bf16.msra.mxu0 0
  %9392 = vmatpush.bf16.msra.mxu0 0
  %9393 = vmatpush.bf16.msra.mxu0 0
  %9394 = vmatpush.bf16.msra.mxu0 0
  %9395 = vmatpush.bf16.msra.mxu0 0
  %9396 = vmatpush.bf16.msra.mxu0 0
  %9397 = vmatpush.bf16.msra.mxu0 0
  %9398 = vmatpush.bf16.msra.mxu0 %v9343
  %9399 = vmatmul.bf16.gmra.mxu0 %v9350
  %v9400 = vpop.f32.mrf.mxu0
  %v9401 = vadd.f32 0.0, %v9400
  %v9402 = vpop.f32.mrf.mxu0
  %9403 = vdwg.mxu0
  %9404 = vmatpush.bf16.msra.mxu0 0
  %9405 = vmatpush.bf16.msra.mxu0 0
  %9406 = vmatpush.bf16.msra.mxu0 0
  %9407 = vmatpush.bf16.msra.mxu0 0
  %9408 = vmatpush.bf16.msra.mxu0 0
  %9409 = vmatpush.bf16.msra.mxu0 0
  %9410 = vmatpush.bf16.msra.mxu0 0
  %9411 = vmatpush.bf16.msra.mxu0 %v9338
  %9412 = vmatmul.bf16.gmra.mxu0 %v9350
  %v9413 = vpop.f32.mrf.mxu0
  %v9414 = vadd.f32 0.0, %v9413
  %v9415 = vpop.f32.mrf.mxu0
  %9416 = vdwg.mxu0
  %v9417 = vadd.f32 %v9272, %v9362
  %v9418 = vadd.f32 %v9285, %v9375
  %v9419 = vadd.f32 %v9298, %v9388
  %v9420 = vadd.f32 %v9311, %v9401
  %v9421 = vadd.f32 %v9324, %v9414
  %s9422 = scalar_lea.vmem %s16, 6
  %v9423 = vld [vmem:[%s9422] sm:$0x3]
  %9424 = vrot.lane.b32.xlu0 %v9158, 109
  %v9425 = vpop.permute.xlu0 %9424
  %9426 = vrot.lane.b32.xlu0 %v9159, 109
  %v9427 = vpop.permute.xlu0 %9426
  %9428 = vrot.lane.b32.xlu0 %v9160, 109
  %v9429 = vpop.permute.xlu0 %9428
  %9430 = vrot.lane.b32.xlu0 %v9161, 109
  %v9431 = vpop.permute.xlu0 %9430
  %9432 = vrot.lane.b32.xlu0 %v9162, 109
  %v9433 = vpop.permute.xlu0 %9432
  %vm9434 = vcmask 891904
  %v9435 = vsel %vm9434, %v9425, %v9427
  %v9436 = vsel %vm9434, %v9427, %v9429
  %v9437 = vsel %vm9434, %v9429, %v9431
  %v9438 = vsel %vm9434, %v9431, %v9433
  %v9445 = vsel %vm9190, %v9423, 0
  %9447 = vmatpush.bf16.msra.mxu0 0
  %9448 = vmatpush.bf16.msra.mxu0 0
  %9449 = vmatpush.bf16.msra.mxu0 0
  %9450 = vmatpush.bf16.msra.mxu0 0
  %9451 = vmatpush.bf16.msra.mxu0 0
  %9452 = vmatpush.bf16.msra.mxu0 0
  %9453 = vmatpush.bf16.msra.mxu0 0
  %9454 = vmatpush.bf16.msra.mxu0 %v9435
  %9455 = vmatmul.bf16.gmra.mxu0 %v9445
  %v9456 = vpop.f32.mrf.mxu0
  %v9457 = vadd.f32 0.0, %v9456
  %v9458 = vpop.f32.mrf.mxu0
  %9459 = vdwg.mxu0
  %9460 = vmatpush.bf16.msra.mxu0 0
  %9461 = vmatpush.bf16.msra.mxu0 0
  %9462 = vmatpush.bf16.msra.mxu0 0
  %9463 = vmatpush.bf16.msra.mxu0 0
  %9464 = vmatpush.bf16.msra.mxu0 0
  %9465 = vmatpush.bf16.msra.mxu0 0
  %9466 = vmatpush.bf16.msra.mxu0 0
  %9467 = vmatpush.bf16.msra.mxu0 %v9436
  %9468 = vmatmul.bf16.gmra.mxu0 %v9445
  %v9469 = vpop.f32.mrf.mxu0
  %v9470 = vadd.f32 0.0, %v9469
  %v9471 = vpop.f32.mrf.mxu0
  %9472 = vdwg.mxu0
  %9473 = vmatpush.bf16.msra.mxu0 0
  %9474 = vmatpush.bf16.msra.mxu0 0
  %9475 = vmatpush.bf16.msra.mxu0 0
  %9476 = vmatpush.bf16.msra.mxu0 0
  %9477 = vmatpush.bf16.msra.mxu0 0
  %9478 = vmatpush.bf16.msra.mxu0 0
  %9479 = vmatpush.bf16.msra.mxu0 0
  %9480 = vmatpush.bf16.msra.mxu0 %v9437
  %9481 = vmatmul.bf16.gmra.mxu0 %v9445
  %v9482 = vpop.f32.mrf.mxu0
  %v9483 = vadd.f32 0.0, %v9482
  %v9484 = vpop.f32.mrf.mxu0
  %9485 = vdwg.mxu0
  %9486 = vmatpush.bf16.msra.mxu0 0
  %9487 = vmatpush.bf16.msra.mxu0 0
  %9488 = vmatpush.bf16.msra.mxu0 0
  %9489 = vmatpush.bf16.msra.mxu0 0
  %9490 = vmatpush.bf16.msra.mxu0 0
  %9491 = vmatpush.bf16.msra.mxu0 0
  %9492 = vmatpush.bf16.msra.mxu0 0
  %9493 = vmatpush.bf16.msra.mxu0 %v9438
  %9494 = vmatmul.bf16.gmra.mxu0 %v9445
  %v9495 = vpop.f32.mrf.mxu0
  %v9496 = vadd.f32 0.0, %v9495
  %v9497 = vpop.f32.mrf.mxu0
  %9498 = vdwg.mxu0
  %9499 = vmatpush.bf16.msra.mxu0 0
  %9500 = vmatpush.bf16.msra.mxu0 0
  %9501 = vmatpush.bf16.msra.mxu0 0
  %9502 = vmatpush.bf16.msra.mxu0 0
  %9503 = vmatpush.bf16.msra.mxu0 0
  %9504 = vmatpush.bf16.msra.mxu0 0
  %9505 = vmatpush.bf16.msra.mxu0 0
  %9506 = vmatpush.bf16.msra.mxu0 %v9433
  %9507 = vmatmul.bf16.gmra.mxu0 %v9445
  %v9508 = vpop.f32.mrf.mxu0
  %v9509 = vadd.f32 0.0, %v9508
  %v9510 = vpop.f32.mrf.mxu0
  %9511 = vdwg.mxu0
  %v9512 = vadd.f32 %v9417, %v9457
  %v9513 = vadd.f32 %v9418, %v9470
  %v9514 = vadd.f32 %v9419, %v9483
  %v9515 = vadd.f32 %v9420, %v9496
  %v9516 = vadd.f32 %v9421, %v9509
  %v9517 = vtanh.pop %v9512
  %v9518 = vtanh.pop %v9513
  %v9519 = vtanh.pop %v9514
  %v9520 = vtanh.pop %v9515
  %v9521 = vtanh.pop %v9516
  %v9526 = vrot.slane %v9518, 4
  %v9527 = vrot.slane %v9520, 4
  %vm9528 = vcmask 1043456
  %v9529 = vsel %vm9528, %v9517, %v9526
  %v9530 = vsel %vm9528, %v9519, %v9527
  %9533 = vst [vmem:[%s17] sm:$0x77] %v9529
  %9534 = vst [vmem:[%s17 + $0x8] sm:$0x77] %v9530
  %vm9535 = vcmask 829440
  %9536 = vst.msk [vmem:[%s17 + $0x10] sm:$0x7] %vm9535, %v9521
  %v9537 = vld [vmem:[#allocation4] sm:$0xff]
  %v9538 = vld [vmem:[#allocation4 + $0x8] sm:$0xff]
  %v9539 = vld [vmem:[#allocation4 + $0x10] sm:$0xff]
  %v9540 = vld [vmem:[#allocation4 + $0x18] sm:$0xff]
  %v9541 = vld [vmem:[#allocation4 + $0x20] sm:$0xff]
  %v9542 = vld [vmem:[#allocation4 + $0x30] sm:$0xff]
  %v9543 = vld [vmem:[#allocation4 + $0x38] sm:$0xff]
  %v9544 = vld [vmem:[#allocation4 + $0x40] sm:$0xff]
  %v9545 = vld [vmem:[#allocation4 + $0x48] sm:$0xff]
  %v9546 = vld [vmem:[#allocation4 + $0x50] sm:$0xff]
  %v9547 = vpack.c.bf16 %v9542, %v9537
  %v9548 = vpack.c.bf16 %v9543, %v9538
  %v9549 = vpack.c.bf16 %v9544, %v9539
  %v9550 = vpack.c.bf16 %v9545, %v9540
  %v9551 = vpack.c.bf16 %v9546, %v9541
  %s9552 = scalar_lea.vmem %s16, 8
  %v9553 = vld [vmem:[%s9552] sm:$0x3]
  %s9554 = scalar_lea.vmem %s16, 10
  %v9555 = vld [vmem:[%s9554] sm:$0x3]
  %9561 = vrot.lane.b32.xlu0 %v9547, 126
  %v9562 = vpop.permute.xlu0 %9561
  %9563 = vrot.lane.b32.xlu0 %v9548, 126
  %v9564 = vpop.permute.xlu0 %9563
  %9565 = vrot.lane.b32.xlu0 %v9549, 126
  %v9566 = vpop.permute.xlu0 %9565
  %9567 = vrot.lane.b32.xlu0 %v9550, 126
  %v9568 = vpop.permute.xlu0 %9567
  %9569 = vrot.lane.b32.xlu0 %v9551, 126
  %v9570 = vpop.permute.xlu0 %9569
  %v9571 = vsel %vm5476, %v9562, %v9564
  %v9572 = vsel %vm5476, %v9564, %v9566
  %v9573 = vsel %vm5476, %v9566, %v9568
  %v9574 = vsel %vm5476, %v9568, %v9570
  %v9581 = vsel %vm9190, %v9555, 0
  %9583 = vmatpush.bf16.msra.mxu0 0
  %9584 = vmatpush.bf16.msra.mxu0 0
  %9585 = vmatpush.bf16.msra.mxu0 0
  %9586 = vmatpush.bf16.msra.mxu0 0
  %9587 = vmatpush.bf16.msra.mxu0 0
  %9588 = vmatpush.bf16.msra.mxu0 0
  %9589 = vmatpush.bf16.msra.mxu0 0
  %9590 = vmatpush.bf16.msra.mxu0 %v9571
  %9591 = vmatmul.bf16.gmra.mxu0 %v9581
  %v9592 = vpop.f32.mrf.mxu0
  %v9593 = vadd.f32 0.0, %v9592
  %v9594 = vpop.f32.mrf.mxu0
  %9595 = vdwg.mxu0
  %9596 = vmatpush.bf16.msra.mxu0 0
  %9597 = vmatpush.bf16.msra.mxu0 0
  %9598 = vmatpush.bf16.msra.mxu0 0
  %9599 = vmatpush.bf16.msra.mxu0 0
  %9600 = vmatpush.bf16.msra.mxu0 0
  %9601 = vmatpush.bf16.msra.mxu0 0
  %9602 = vmatpush.bf16.msra.mxu0 0
  %9603 = vmatpush.bf16.msra.mxu0 %v9572
  %9604 = vmatmul.bf16.gmra.mxu0 %v9581
  %v9605 = vpop.f32.mrf.mxu0
  %v9606 = vadd.f32 0.0, %v9605
  %v9607 = vpop.f32.mrf.mxu0
  %9608 = vdwg.mxu0
  %9609 = vmatpush.bf16.msra.mxu0 0
  %9610 = vmatpush.bf16.msra.mxu0 0
  %9611 = vmatpush.bf16.msra.mxu0 0
  %9612 = vmatpush.bf16.msra.mxu0 0
  %9613 = vmatpush.bf16.msra.mxu0 0
  %9614 = vmatpush.bf16.msra.mxu0 0
  %9615 = vmatpush.bf16.msra.mxu0 0
  %9616 = vmatpush.bf16.msra.mxu0 %v9573
  %9617 = vmatmul.bf16.gmra.mxu0 %v9581
  %v9618 = vpop.f32.mrf.mxu0
  %v9619 = vadd.f32 0.0, %v9618
  %v9620 = vpop.f32.mrf.mxu0
  %9621 = vdwg.mxu0
  %9622 = vmatpush.bf16.msra.mxu0 0
  %9623 = vmatpush.bf16.msra.mxu0 0
  %9624 = vmatpush.bf16.msra.mxu0 0
  %9625 = vmatpush.bf16.msra.mxu0 0
  %9626 = vmatpush.bf16.msra.mxu0 0
  %9627 = vmatpush.bf16.msra.mxu0 0
  %9628 = vmatpush.bf16.msra.mxu0 0
  %9629 = vmatpush.bf16.msra.mxu0 %v9574
  %9630 = vmatmul.bf16.gmra.mxu0 %v9581
  %v9631 = vpop.f32.mrf.mxu0
  %v9632 = vadd.f32 0.0, %v9631
  %v9633 = vpop.f32.mrf.mxu0
  %9634 = vdwg.mxu0
  %9635 = vmatpush.bf16.msra.mxu0 0
  %9636 = vmatpush.bf16.msra.mxu0 0
  %9637 = vmatpush.bf16.msra.mxu0 0
  %9638 = vmatpush.bf16.msra.mxu0 0
  %9639 = vmatpush.bf16.msra.mxu0 0
  %9640 = vmatpush.bf16.msra.mxu0 0
  %9641 = vmatpush.bf16.msra.mxu0 0
  %9642 = vmatpush.bf16.msra.mxu0 %v9570
  %9643 = vmatmul.bf16.gmra.mxu0 %v9581
  %v9644 = vpop.f32.mrf.mxu0
  %v9645 = vadd.f32 0.0, %v9644
  %v9646 = vpop.f32.mrf.mxu0
  %9647 = vdwg.mxu0
  %9648 = vrot.lane.b32.xlu0 %v9547, 127
  %v9649 = vpop.permute.xlu0 %9648
  %9650 = vrot.lane.b32.xlu0 %v9548, 127
  %v9651 = vpop.permute.xlu0 %9650
  %9652 = vrot.lane.b32.xlu0 %v9549, 127
  %v9653 = vpop.permute.xlu0 %9652
  %9654 = vrot.lane.b32.xlu0 %v9550, 127
  %v9655 = vpop.permute.xlu0 %9654
  %9656 = vrot.lane.b32.xlu0 %v9551, 127
  %v9657 = vpop.permute.xlu0 %9656
  %v9658 = vsel %vm5263, %v9649, %v9651
  %v9659 = vsel %vm5263, %v9651, %v9653
  %v9660 = vsel %vm5263, %v9653, %v9655
  %v9661 = vsel %vm5263, %v9655, %v9657
  %v9668 = vsel %vm9190, %v9553, 0
  %9670 = vmatpush.bf16.msra.mxu0 0
  %9671 = vmatpush.bf16.msra.mxu0 0
  %9672 = vmatpush.bf16.msra.mxu0 0
  %9673 = vmatpush.bf16.msra.mxu0 0
  %9674 = vmatpush.bf16.msra.mxu0 0
  %9675 = vmatpush.bf16.msra.mxu0 0
  %9676 = vmatpush.bf16.msra.mxu0 0
  %9677 = vmatpush.bf16.msra.mxu0 %v9658
  %9678 = vmatmul.bf16.gmra.mxu0 %v9668
  %v9679 = vpop.f32.mrf.mxu0
  %v9680 = vadd.f32 %v9593, %v9679
  %v9681 = vpop.f32.mrf.mxu0
  %9682 = vdwg.mxu0
  %9683 = vmatpush.bf16.msra.mxu0 0
  %9684 = vmatpush.bf16.msra.mxu0 0
  %9685 = vmatpush.bf16.msra.mxu0 0
  %9686 = vmatpush.bf16.msra.mxu0 0
  %9687 = vmatpush.bf16.msra.mxu0 0
  %9688 = vmatpush.bf16.msra.mxu0 0
  %9689 = vmatpush.bf16.msra.mxu0 0
  %9690 = vmatpush.bf16.msra.mxu0 %v9659
  %9691 = vmatmul.bf16.gmra.mxu0 %v9668
  %v9692 = vpop.f32.mrf.mxu0
  %v9693 = vadd.f32 %v9606, %v9692
  %v9694 = vpop.f32.mrf.mxu0
  %9695 = vdwg.mxu0
  %9696 = vmatpush.bf16.msra.mxu0 0
  %9697 = vmatpush.bf16.msra.mxu0 0
  %9698 = vmatpush.bf16.msra.mxu0 0
  %9699 = vmatpush.bf16.msra.mxu0 0
  %9700 = vmatpush.bf16.msra.mxu0 0
  %9701 = vmatpush.bf16.msra.mxu0 0
  %9702 = vmatpush.bf16.msra.mxu0 0
  %9703 = vmatpush.bf16.msra.mxu0 %v9660
  %9704 = vmatmul.bf16.gmra.mxu0 %v9668
  %v9705 = vpop.f32.mrf.mxu0
  %v9706 = vadd.f32 %v9619, %v9705
  %v9707 = vpop.f32.mrf.mxu0
  %9708 = vdwg.mxu0
  %9709 = vmatpush.bf16.msra.mxu0 0
  %9710 = vmatpush.bf16.msra.mxu0 0
  %9711 = vmatpush.bf16.msra.mxu0 0
  %9712 = vmatpush.bf16.msra.mxu0 0
  %9713 = vmatpush.bf16.msra.mxu0 0
  %9714 = vmatpush.bf16.msra.mxu0 0
  %9715 = vmatpush.bf16.msra.mxu0 0
  %9716 = vmatpush.bf16.msra.mxu0 %v9661
  %9717 = vmatmul.bf16.gmra.mxu0 %v9668
  %v9718 = vpop.f32.mrf.mxu0
  %v9719 = vadd.f32 %v9632, %v9718
  %v9720 = vpop.f32.mrf.mxu0
  %9721 = vdwg.mxu0
  %9722 = vmatpush.bf16.msra.mxu0 0
  %9723 = vmatpush.bf16.msra.mxu0 0
  %9724 = vmatpush.bf16.msra.mxu0 0
  %9725 = vmatpush.bf16.msra.mxu0 0
  %9726 = vmatpush.bf16.msra.mxu0 0
  %9727 = vmatpush.bf16.msra.mxu0 0
  %9728 = vmatpush.bf16.msra.mxu0 0
  %9729 = vmatpush.bf16.msra.mxu0 %v9657
  %9730 = vmatmul.bf16.gmra.mxu0 %v9668
  %v9731 = vpop.f32.mrf.mxu0
  %v9732 = vadd.f32 %v9645, %v9731
  %v9733 = vpop.f32.mrf.mxu0
  %9734 = vdwg.mxu0
  %s9735 = scalar_lea.vmem %s16, 12
  %v9736 = vld [vmem:[%s9735] sm:$0x3]
  %9737 = vrot.lane.b32.xlu0 %v9547, 109
  %v9738 = vpop.permute.xlu0 %9737
  %9739 = vrot.lane.b32.xlu0 %v9548, 109
  %v9740 = vpop.permute.xlu0 %9739
  %9741 = vrot.lane.b32.xlu0 %v9549, 109
  %v9742 = vpop.permute.xlu0 %9741
  %9743 = vrot.lane.b32.xlu0 %v9550, 109
  %v9744 = vpop.permute.xlu0 %9743
  %9745 = vrot.lane.b32.xlu0 %v9551, 109
  %v9746 = vpop.permute.xlu0 %9745
  %v9747 = vsel %vm9434, %v9738, %v9740
  %v9748 = vsel %vm9434, %v9740, %v9742
  %v9749 = vsel %vm9434, %v9742, %v9744
  %v9750 = vsel %vm9434, %v9744, %v9746
  %v9757 = vsel %vm9190, %v9736, 0
  %9759 = vmatpush.bf16.msra.mxu0 0
  %9760 = vmatpush.bf16.msra.mxu0 0
  %9761 = vmatpush.bf16.msra.mxu0 0
  %9762 = vmatpush.bf16.msra.mxu0 0
  %9763 = vmatpush.bf16.msra.mxu0 0
  %9764 = vmatpush.bf16.msra.mxu0 0
  %9765 = vmatpush.bf16.msra.mxu0 0
  %9766 = vmatpush.bf16.msra.mxu0 %v9747
  %9767 = vmatmul.bf16.gmra.mxu0 %v9757
  %v9768 = vpop.f32.mrf.mxu0
  %v9769 = vadd.f32 0.0, %v9768
  %v9770 = vpop.f32.mrf.mxu0
  %9771 = vdwg.mxu0
  %9772 = vmatpush.bf16.msra.mxu0 0
  %9773 = vmatpush.bf16.msra.mxu0 0
  %9774 = vmatpush.bf16.msra.mxu0 0
  %9775 = vmatpush.bf16.msra.mxu0 0
  %9776 = vmatpush.bf16.msra.mxu0 0
  %9777 = vmatpush.bf16.msra.mxu0 0
  %9778 = vmatpush.bf16.msra.mxu0 0
  %9779 = vmatpush.bf16.msra.mxu0 %v9748
  %9780 = vmatmul.bf16.gmra.mxu0 %v9757
  %v9781 = vpop.f32.mrf.mxu0
  %v9782 = vadd.f32 0.0, %v9781
  %v9783 = vpop.f32.mrf.mxu0
  %9784 = vdwg.mxu0
  %9785 = vmatpush.bf16.msra.mxu0 0
  %9786 = vmatpush.bf16.msra.mxu0 0
  %9787 = vmatpush.bf16.msra.mxu0 0
  %9788 = vmatpush.bf16.msra.mxu0 0
  %9789 = vmatpush.bf16.msra.mxu0 0
  %9790 = vmatpush.bf16.msra.mxu0 0
  %9791 = vmatpush.bf16.msra.mxu0 0
  %9792 = vmatpush.bf16.msra.mxu0 %v9749
  %9793 = vmatmul.bf16.gmra.mxu0 %v9757
  %v9794 = vpop.f32.mrf.mxu0
  %v9795 = vadd.f32 0.0, %v9794
  %v9796 = vpop.f32.mrf.mxu0
  %9797 = vdwg.mxu0
  %9798 = vmatpush.bf16.msra.mxu0 0
  %9799 = vmatpush.bf16.msra.mxu0 0
  %9800 = vmatpush.bf16.msra.mxu0 0
  %9801 = vmatpush.bf16.msra.mxu0 0
  %9802 = vmatpush.bf16.msra.mxu0 0
  %9803 = vmatpush.bf16.msra.mxu0 0
  %9804 = vmatpush.bf16.msra.mxu0 0
  %9805 = vmatpush.bf16.msra.mxu0 %v9750
  %9806 = vmatmul.bf16.gmra.mxu0 %v9757
  %v9807 = vpop.f32.mrf.mxu0
  %v9808 = vadd.f32 0.0, %v9807
  %v9809 = vpop.f32.mrf.mxu0
  %9810 = vdwg.mxu0
  %9811 = vmatpush.bf16.msra.mxu0 0
  %9812 = vmatpush.bf16.msra.mxu0 0
  %9813 = vmatpush.bf16.msra.mxu0 0
  %9814 = vmatpush.bf16.msra.mxu0 0
  %9815 = vmatpush.bf16.msra.mxu0 0
  %9816 = vmatpush.bf16.msra.mxu0 0
  %9817 = vmatpush.bf16.msra.mxu0 0
  %9818 = vmatpush.bf16.msra.mxu0 %v9746
  %9819 = vmatmul.bf16.gmra.mxu0 %v9757
  %v9820 = vpop.f32.mrf.mxu0
  %v9821 = vadd.f32 0.0, %v9820
  %v9822 = vpop.f32.mrf.mxu0
  %9823 = vdwg.mxu0
  %v9824 = vadd.f32 %v9680, %v9769
  %v9825 = vadd.f32 %v9693, %v9782
  %v9826 = vadd.f32 %v9706, %v9795
  %v9827 = vadd.f32 %v9719, %v9808
  %v9828 = vadd.f32 %v9732, %v9821
  %s9829 = scalar_lea.vmem %s16, 14
  %v9830 = vld [vmem:[%s9829] sm:$0x3]
  %9831 = vrot.lane.b32.xlu0 %v9547, 108
  %v9832 = vpop.permute.xlu0 %9831
  %9833 = vrot.lane.b32.xlu0 %v9548, 108
  %v9834 = vpop.permute.xlu0 %9833
  %9835 = vrot.lane.b32.xlu0 %v9549, 108
  %v9836 = vpop.permute.xlu0 %9835
  %9837 = vrot.lane.b32.xlu0 %v9550, 108
  %v9838 = vpop.permute.xlu0 %9837
  %9839 = vrot.lane.b32.xlu0 %v9551, 108
  %v9840 = vpop.permute.xlu0 %9839
  %v9841 = vsel %vm5961, %v9832, %v9834
  %v9842 = vsel %vm5961, %v9834, %v9836
  %v9843 = vsel %vm5961, %v9836, %v9838
  %v9844 = vsel %vm5961, %v9838, %v9840
  %v9851 = vsel %vm9190, %v9830, 0
  %9853 = vmatpush.bf16.msra.mxu0 0
  %9854 = vmatpush.bf16.msra.mxu0 0
  %9855 = vmatpush.bf16.msra.mxu0 0
  %9856 = vmatpush.bf16.msra.mxu0 0
  %9857 = vmatpush.bf16.msra.mxu0 0
  %9858 = vmatpush.bf16.msra.mxu0 0
  %9859 = vmatpush.bf16.msra.mxu0 0
  %9860 = vmatpush.bf16.msra.mxu0 %v9841
  %9861 = vmatmul.bf16.gmra.mxu0 %v9851
  %v9862 = vpop.f32.mrf.mxu0
  %v9863 = vadd.f32 0.0, %v9862
  %v9864 = vpop.f32.mrf.mxu0
  %9865 = vdwg.mxu0
  %9866 = vmatpush.bf16.msra.mxu0 0
  %9867 = vmatpush.bf16.msra.mxu0 0
  %9868 = vmatpush.bf16.msra.mxu0 0
  %9869 = vmatpush.bf16.msra.mxu0 0
  %9870 = vmatpush.bf16.msra.mxu0 0
  %9871 = vmatpush.bf16.msra.mxu0 0
  %9872 = vmatpush.bf16.msra.mxu0 0
  %9873 = vmatpush.bf16.msra.mxu0 %v9842
  %9874 = vmatmul.bf16.gmra.mxu0 %v9851
  %v9875 = vpop.f32.mrf.mxu0
  %v9876 = vadd.f32 0.0, %v9875
  %v9877 = vpop.f32.mrf.mxu0
  %9878 = vdwg.mxu0
  %9879 = vmatpush.bf16.msra.mxu0 0
  %9880 = vmatpush.bf16.msra.mxu0 0
  %9881 = vmatpush.bf16.msra.mxu0 0
  %9882 = vmatpush.bf16.msra.mxu0 0
  %9883 = vmatpush.bf16.msra.mxu0 0
  %9884 = vmatpush.bf16.msra.mxu0 0
  %9885 = vmatpush.bf16.msra.mxu0 0
  %9886 = vmatpush.bf16.msra.mxu0 %v9843
  %9887 = vmatmul.bf16.gmra.mxu0 %v9851
  %v9888 = vpop.f32.mrf.mxu0
  %v9889 = vadd.f32 0.0, %v9888
  %v9890 = vpop.f32.mrf.mxu0
  %9891 = vdwg.mxu0
  %9892 = vmatpush.bf16.msra.mxu0 0
  %9893 = vmatpush.bf16.msra.mxu0 0
  %9894 = vmatpush.bf16.msra.mxu0 0
  %9895 = vmatpush.bf16.msra.mxu0 0
  %9896 = vmatpush.bf16.msra.mxu0 0
  %9897 = vmatpush.bf16.msra.mxu0 0
  %9898 = vmatpush.bf16.msra.mxu0 0
  %9899 = vmatpush.bf16.msra.mxu0 %v9844
  %9900 = vmatmul.bf16.gmra.mxu0 %v9851
  %v9901 = vpop.f32.mrf.mxu0
  %v9902 = vadd.f32 0.0, %v9901
  %v9903 = vpop.f32.mrf.mxu0
  %9904 = vdwg.mxu0
  %9905 = vmatpush.bf16.msra.mxu0 0
  %9906 = vmatpush.bf16.msra.mxu0 0
  %9907 = vmatpush.bf16.msra.mxu0 0
  %9908 = vmatpush.bf16.msra.mxu0 0
  %9909 = vmatpush.bf16.msra.mxu0 0
  %9910 = vmatpush.bf16.msra.mxu0 0
  %9911 = vmatpush.bf16.msra.mxu0 0
  %9912 = vmatpush.bf16.msra.mxu0 %v9840
  %9913 = vmatmul.bf16.gmra.mxu0 %v9851
  %v9914 = vpop.f32.mrf.mxu0
  %v9915 = vadd.f32 0.0, %v9914
  %v9916 = vpop.f32.mrf.mxu0
  %9917 = vdwg.mxu0
  %v9918 = vadd.f32 %v9824, %v9863
  %v9919 = vadd.f32 %v9825, %v9876
  %v9920 = vadd.f32 %v9826, %v9889
  %v9921 = vadd.f32 %v9827, %v9902
  %v9922 = vadd.f32 %v9828, %v9915
  %v9923 = vtanh.pop %v9918
  %v9924 = vtanh.pop %v9919
  %v9925 = vtanh.pop %v9920
  %v9926 = vtanh.pop %v9921
  %v9927 = vtanh.pop %v9922
  %v9932 = vrot.slane %v9924, 4
  %v9933 = vrot.slane %v9926, 4
  %v9934 = vsel %vm9528, %v9923, %v9932
  %v9935 = vsel %vm9528, %v9925, %v9933
  %s9938 = scalar_lea.vmem %s17, 20
  %9939 = vst [vmem:[%s9938] sm:$0x77] %v9934
  %9940 = vst [vmem:[%s9938 + $0x8] sm:$0x77] %v9935
  %9941 = vst.msk [vmem:[%s9938 + $0x10] sm:$0x7] %vm9535, %v9927
  %v9942 = vld [vmem:[#allocation4] sm:$0xff]
  %v9943 = vld [vmem:[#allocation4 + $0x8] sm:$0xff]
  %v9944 = vld [vmem:[#allocation4 + $0x10] sm:$0xff]
  %v9945 = vld [vmem:[#allocation4 + $0x18] sm:$0xff]
  %v9946 = vld [vmem:[#allocation4 + $0x20] sm:$0xff]
  %v9947 = vld [vmem:[#allocation4 + $0x30] sm:$0xff]
  %v9948 = vld [vmem:[#allocation4 + $0x38] sm:$0xff]
  %v9949 = vld [vmem:[#allocation4 + $0x40] sm:$0xff]
  %v9950 = vld [vmem:[#allocation4 + $0x48] sm:$0xff]
  %v9951 = vld [vmem:[#allocation4 + $0x50] sm:$0xff]
  %v9952 = vpack.c.bf16 %v9947, %v9942
  %v9953 = vpack.c.bf16 %v9948, %v9943
  %v9954 = vpack.c.bf16 %v9949, %v9944
  %v9955 = vpack.c.bf16 %v9950, %v9945
  %v9956 = vpack.c.bf16 %v9951, %v9946
  %s9957 = scalar_lea.vmem %s16, 16
  %v9958 = vld [vmem:[%s9957] sm:$0x3]
  %s9959 = scalar_lea.vmem %s16, 18
  %v9960 = vld [vmem:[%s9959] sm:$0x3]
  %9966 = vrot.lane.b32.xlu0 %v9952, 109
  %v9967 = vpop.permute.xlu0 %9966
  %9968 = vrot.lane.b32.xlu0 %v9953, 109
  %v9969 = vpop.permute.xlu0 %9968
  %9970 = vrot.lane.b32.xlu0 %v9954, 109
  %v9971 = vpop.permute.xlu0 %9970
  %9972 = vrot.lane.b32.xlu0 %v9955, 109
  %v9973 = vpop.permute.xlu0 %9972
  %9974 = vrot.lane.b32.xlu0 %v9956, 109
  %v9975 = vpop.permute.xlu0 %9974
  %v9976 = vsel %vm9434, %v9967, %v9969
  %v9977 = vsel %vm9434, %v9969, %v9971
  %v9978 = vsel %vm9434, %v9971, %v9973
  %v9979 = vsel %vm9434, %v9973, %v9975
  %v9986 = vsel %vm9190, %v9960, 0
  %9988 = vmatpush.bf16.msra.mxu0 0
  %9989 = vmatpush.bf16.msra.mxu0 0
  %9990 = vmatpush.bf16.msra.mxu0 0
  %9991 = vmatpush.bf16.msra.mxu0 0
  %9992 = vmatpush.bf16.msra.mxu0 0
  %9993 = vmatpush.bf16.msra.mxu0 0
  %9994 = vmatpush.bf16.msra.mxu0 0
  %9995 = vmatpush.bf16.msra.mxu0 %v9976
  %9996 = vmatmul.bf16.gmra.mxu0 %v9986
  %v9997 = vpop.f32.mrf.mxu0
  %v9998 = vadd.f32 0.0, %v9997
  %v9999 = vpop.f32.mrf.mxu0
  %10000 = vdwg.mxu0
  %10001 = vmatpush.bf16.msra.mxu0 0
  %10002 = vmatpush.bf16.msra.mxu0 0
  %10003 = vmatpush.bf16.msra.mxu0 0
  %10004 = vmatpush.bf16.msra.mxu0 0
  %10005 = vmatpush.bf16.msra.mxu0 0
  %10006 = vmatpush.bf16.msra.mxu0 0
  %10007 = vmatpush.bf16.msra.mxu0 0
  %10008 = vmatpush.bf16.msra.mxu0 %v9977
  %10009 = vmatmul.bf16.gmra.mxu0 %v9986
  %v10010 = vpop.f32.mrf.mxu0
  %v10011 = vadd.f32 0.0, %v10010
  %v10012 = vpop.f32.mrf.mxu0
  %10013 = vdwg.mxu0
  %10014 = vmatpush.bf16.msra.mxu0 0
  %10015 = vmatpush.bf16.msra.mxu0 0
  %10016 = vmatpush.bf16.msra.mxu0 0
  %10017 = vmatpush.bf16.msra.mxu0 0
  %10018 = vmatpush.bf16.msra.mxu0 0
  %10019 = vmatpush.bf16.msra.mxu0 0
  %10020 = vmatpush.bf16.msra.mxu0 0
  %10021 = vmatpush.bf16.msra.mxu0 %v9978
  %10022 = vmatmul.bf16.gmra.mxu0 %v9986
  %v10023 = vpop.f32.mrf.mxu0
  %v10024 = vadd.f32 0.0, %v10023
  %v10025 = vpop.f32.mrf.mxu0
  %10026 = vdwg.mxu0
  %10027 = vmatpush.bf16.msra.mxu0 0
  %10028 = vmatpush.bf16.msra.mxu0 0
  %10029 = vmatpush.bf16.msra.mxu0 0
  %10030 = vmatpush.bf16.msra.mxu0 0
  %10031 = vmatpush.bf16.msra.mxu0 0
  %10032 = vmatpush.bf16.msra.mxu0 0
  %10033 = vmatpush.bf16.msra.mxu0 0
  %10034 = vmatpush.bf16.msra.mxu0 %v9979
  %10035 = vmatmul.bf16.gmra.mxu0 %v9986
  %v10036 = vpop.f32.mrf.mxu0
  %v10037 = vadd.f32 0.0, %v10036
  %v10038 = vpop.f32.mrf.mxu0
  %10039 = vdwg.mxu0
  %10040 = vmatpush.bf16.msra.mxu0 0
  %10041 = vmatpush.bf16.msra.mxu0 0
  %10042 = vmatpush.bf16.msra.mxu0 0
  %10043 = vmatpush.bf16.msra.mxu0 0
  %10044 = vmatpush.bf16.msra.mxu0 0
  %10045 = vmatpush.bf16.msra.mxu0 0
  %10046 = vmatpush.bf16.msra.mxu0 0
  %10047 = vmatpush.bf16.msra.mxu0 %v9975
  %10048 = vmatmul.bf16.gmra.mxu0 %v9986
  %v10049 = vpop.f32.mrf.mxu0
  %v10050 = vadd.f32 0.0, %v10049
  %v10051 = vpop.f32.mrf.mxu0
  %10052 = vdwg.mxu0
  %10053 = vrot.lane.b32.xlu0 %v9952, 110
  %v10054 = vpop.permute.xlu0 %10053
  %10055 = vrot.lane.b32.xlu0 %v9953, 110
  %v10056 = vpop.permute.xlu0 %10055
  %10057 = vrot.lane.b32.xlu0 %v9954, 110
  %v10058 = vpop.permute.xlu0 %10057
  %10059 = vrot.lane.b32.xlu0 %v9955, 110
  %v10060 = vpop.permute.xlu0 %10059
  %10061 = vrot.lane.b32.xlu0 %v9956, 110
  %v10062 = vpop.permute.xlu0 %10061
  %v10063 = vsel %vm9339, %v10054, %v10056
  %v10064 = vsel %vm9339, %v10056, %v10058
  %v10065 = vsel %vm9339, %v10058, %v10060
  %v10066 = vsel %vm9339, %v10060, %v10062
  %v10073 = vsel %vm9190, %v9958, 0
  %10075 = vmatpush.bf16.msra.mxu0 0
  %10076 = vmatpush.bf16.msra.mxu0 0
  %10077 = vmatpush.bf16.msra.mxu0 0
  %10078 = vmatpush.bf16.msra.mxu0 0
  %10079 = vmatpush.bf16.msra.mxu0 0
  %10080 = vmatpush.bf16.msra.mxu0 0
  %10081 = vmatpush.bf16.msra.mxu0 0
  %10082 = vmatpush.bf16.msra.mxu0 %v10063
  %10083 = vmatmul.bf16.gmra.mxu0 %v10073
  %v10084 = vpop.f32.mrf.mxu0
  %v10085 = vadd.f32 %v9998, %v10084
  %v10086 = vpop.f32.mrf.mxu0
  %10087 = vdwg.mxu0
  %10088 = vmatpush.bf16.msra.mxu0 0
  %10089 = vmatpush.bf16.msra.mxu0 0
  %10090 = vmatpush.bf16.msra.mxu0 0
  %10091 = vmatpush.bf16.msra.mxu0 0
  %10092 = vmatpush.bf16.msra.mxu0 0
  %10093 = vmatpush.bf16.msra.mxu0 0
  %10094 = vmatpush.bf16.msra.mxu0 0
  %10095 = vmatpush.bf16.msra.mxu0 %v10064
  %10096 = vmatmul.bf16.gmra.mxu0 %v10073
  %v10097 = vpop.f32.mrf.mxu0
  %v10098 = vadd.f32 %v10011, %v10097
  %v10099 = vpop.f32.mrf.mxu0
  %10100 = vdwg.mxu0
  %10101 = vmatpush.bf16.msra.mxu0 0
  %10102 = vmatpush.bf16.msra.mxu0 0
  %10103 = vmatpush.bf16.msra.mxu0 0
  %10104 = vmatpush.bf16.msra.mxu0 0
  %10105 = vmatpush.bf16.msra.mxu0 0
  %10106 = vmatpush.bf16.msra.mxu0 0
  %10107 = vmatpush.bf16.msra.mxu0 0
  %10108 = vmatpush.bf16.msra.mxu0 %v10065
  %10109 = vmatmul.bf16.gmra.mxu0 %v10073
  %v10110 = vpop.f32.mrf.mxu0
  %v10111 = vadd.f32 %v10024, %v10110
  %v10112 = vpop.f32.mrf.mxu0
  %10113 = vdwg.mxu0
  %10114 = vmatpush.bf16.msra.mxu0 0
  %10115 = vmatpush.bf16.msra.mxu0 0
  %10116 = vmatpush.bf16.msra.mxu0 0
  %10117 = vmatpush.bf16.msra.mxu0 0
  %10118 = vmatpush.bf16.msra.mxu0 0
  %10119 = vmatpush.bf16.msra.mxu0 0
  %10120 = vmatpush.bf16.msra.mxu0 0
  %10121 = vmatpush.bf16.msra.mxu0 %v10066
  %10122 = vmatmul.bf16.gmra.mxu0 %v10073
  %v10123 = vpop.f32.mrf.mxu0
  %v10124 = vadd.f32 %v10037, %v10123
  %v10125 = vpop.f32.mrf.mxu0
  %10126 = vdwg.mxu0
  %10127 = vmatpush.bf16.msra.mxu0 0
  %10128 = vmatpush.bf16.msra.mxu0 0
  %10129 = vmatpush.bf16.msra.mxu0 0
  %10130 = vmatpush.bf16.msra.mxu0 0
  %10131 = vmatpush.bf16.msra.mxu0 0
  %10132 = vmatpush.bf16.msra.mxu0 0
  %10133 = vmatpush.bf16.msra.mxu0 0
  %10134 = vmatpush.bf16.msra.mxu0 %v10062
  %10135 = vmatmul.bf16.gmra.mxu0 %v10073
  %v10136 = vpop.f32.mrf.mxu0
  %v10137 = vadd.f32 %v10050, %v10136
  %v10138 = vpop.f32.mrf.mxu0
  %10139 = vdwg.mxu0
  %v10140 = vld [vmem:[#allocation4] sm:$0xff]
  %v10141 = vld [vmem:[#allocation4 + $0x8] sm:$0xff]
  %v10142 = vld [vmem:[#allocation4 + $0x10] sm:$0xff]
  %v10143 = vld [vmem:[#allocation4 + $0x18] sm:$0xff]
  %v10144 = vld [vmem:[#allocation4 + $0x20] sm:$0xff]
  %v10145 = vld [vmem:[#allocation4 + $0x28] sm:$0xff]
  %v10146 = vld [vmem:[#allocation4 + $0x30] sm:$0xff]
  %v10147 = vld [vmem:[#allocation4 + $0x38] sm:$0xff]
  %v10148 = vld [vmem:[#allocation4 + $0x40] sm:$0xff]
  %v10149 = vld [vmem:[#allocation4 + $0x48] sm:$0xff]
  %v10150 = vld [vmem:[#allocation4 + $0x50] sm:$0xff]
  %v10151 = vld [vmem:[#allocation4 + $0x58] sm:$0xff]
  %v10152 = vpack.c.bf16 %v10146, %v10140
  %v10153 = vpack.c.bf16 %v10147, %v10141
  %v10154 = vpack.c.bf16 %v10148, %v10142
  %v10155 = vpack.c.bf16 %v10149, %v10143
  %v10156 = vpack.c.bf16 %v10150, %v10144
  %v10157 = vpack.c.bf16 %v10151, %v10145
  %s10158 = scalar_lea.vmem %s16, 20
  %v10159 = vld [vmem:[%s10158] sm:$0x3]
  %10166 = vrot.lane.b32.xlu0 %v10152, 92
  %v10167 = vpop.permute.xlu0 %10166
  %10168 = vrot.lane.b32.xlu0 %v10153, 92
  %v10169 = vpop.permute.xlu0 %10168
  %10170 = vrot.lane.b32.xlu0 %v10154, 92
  %v10171 = vpop.permute.xlu0 %10170
  %10172 = vrot.lane.b32.xlu0 %v10155, 92
  %v10173 = vpop.permute.xlu0 %10172
  %10174 = vrot.lane.b32.xlu0 %v10156, 92
  %v10175 = vpop.permute.xlu0 %10174
  %10176 = vrot.lane.b32.xlu0 %v10157, 92
  %v10177 = vpop.permute.xlu0 %10176
  %vm10178 = vcmask 752640
  %v10179 = vsel %vm10178, %v10167, %v10169
  %v10180 = vsel %vm10178, %v10169, %v10171
  %v10181 = vsel %vm10178, %v10171, %v10173
  %v10182 = vsel %vm10178, %v10173, %v10175
  %v10183 = vsel %vm10178, %v10175, %v10177
  %v10190 = vsel %vm9190, %v10159, 0
  %10192 = vmatpush.bf16.msra.mxu0 0
  %10193 = vmatpush.bf16.msra.mxu0 0
  %10194 = vmatpush.bf16.msra.mxu0 0
  %10195 = vmatpush.bf16.msra.mxu0 0
  %10196 = vmatpush.bf16.msra.mxu0 0
  %10197 = vmatpush.bf16.msra.mxu0 0
  %10198 = vmatpush.bf16.msra.mxu0 0
  %10199 = vmatpush.bf16.msra.mxu0 %v10179
  %10200 = vmatmul.bf16.gmra.mxu0 %v10190
  %v10201 = vpop.f32.mrf.mxu0
  %v10202 = vadd.f32 0.0, %v10201
  %v10203 = vpop.f32.mrf.mxu0
  %10204 = vdwg.mxu0
  %10205 = vmatpush.bf16.msra.mxu0 0
  %10206 = vmatpush.bf16.msra.mxu0 0
  %10207 = vmatpush.bf16.msra.mxu0 0
  %10208 = vmatpush.bf16.msra.mxu0 0
  %10209 = vmatpush.bf16.msra.mxu0 0
  %10210 = vmatpush.bf16.msra.mxu0 0
  %10211 = vmatpush.bf16.msra.mxu0 0
  %10212 = vmatpush.bf16.msra.mxu0 %v10180
  %10213 = vmatmul.bf16.gmra.mxu0 %v10190
  %v10214 = vpop.f32.mrf.mxu0
  %v10215 = vadd.f32 0.0, %v10214
  %v10216 = vpop.f32.mrf.mxu0
  %10217 = vdwg.mxu0
  %10218 = vmatpush.bf16.msra.mxu0 0
  %10219 = vmatpush.bf16.msra.mxu0 0
  %10220 = vmatpush.bf16.msra.mxu0 0
  %10221 = vmatpush.bf16.msra.mxu0 0
  %10222 = vmatpush.bf16.msra.mxu0 0
  %10223 = vmatpush.bf16.msra.mxu0 0
  %10224 = vmatpush.bf16.msra.mxu0 0
  %10225 = vmatpush.bf16.msra.mxu0 %v10181
  %10226 = vmatmul.bf16.gmra.mxu0 %v10190
  %v10227 = vpop.f32.mrf.mxu0
  %v10228 = vadd.f32 0.0, %v10227
  %v10229 = vpop.f32.mrf.mxu0
  %10230 = vdwg.mxu0
  %10231 = vmatpush.bf16.msra.mxu0 0
  %10232 = vmatpush.bf16.msra.mxu0 0
  %10233 = vmatpush.bf16.msra.mxu0 0
  %10234 = vmatpush.bf16.msra.mxu0 0
  %10235 = vmatpush.bf16.msra.mxu0 0
  %10236 = vmatpush.bf16.msra.mxu0 0
  %10237 = vmatpush.bf16.msra.mxu0 0
  %10238 = vmatpush.bf16.msra.mxu0 %v10182
  %10239 = vmatmul.bf16.gmra.mxu0 %v10190
  %v10240 = vpop.f32.mrf.mxu0
  %v10241 = vadd.f32 0.0, %v10240
  %v10242 = vpop.f32.mrf.mxu0
  %10243 = vdwg.mxu0
  %10244 = vmatpush.bf16.msra.mxu0 0
  %10245 = vmatpush.bf16.msra.mxu0 0
  %10246 = vmatpush.bf16.msra.mxu0 0
  %10247 = vmatpush.bf16.msra.mxu0 0
  %10248 = vmatpush.bf16.msra.mxu0 0
  %10249 = vmatpush.bf16.msra.mxu0 0
  %10250 = vmatpush.bf16.msra.mxu0 0
  %10251 = vmatpush.bf16.msra.mxu0 %v10183
  %10252 = vmatmul.bf16.gmra.mxu0 %v10190
  %v10253 = vpop.f32.mrf.mxu0
  %v10254 = vadd.f32 0.0, %v10253
  %v10255 = vpop.f32.mrf.mxu0
  %10256 = vdwg.mxu0
  %v10257 = vadd.f32 %v10085, %v10202
  %v10258 = vadd.f32 %v10098, %v10215
  %v10259 = vadd.f32 %v10111, %v10228
  %v10260 = vadd.f32 %v10124, %v10241
  %v10261 = vadd.f32 %v10137, %v10254
  %s10262 = scalar_lea.vmem %s16, 22
  %v10263 = vld [vmem:[%s10262] sm:$0x3]
  %10264 = vrot.lane.b32.xlu0 %v10152, 91
  %v10265 = vpop.permute.xlu0 %10264
  %10266 = vrot.lane.b32.xlu0 %v10153, 91
  %v10267 = vpop.permute.xlu0 %10266
  %10268 = vrot.lane.b32.xlu0 %v10154, 91
  %v10269 = vpop.permute.xlu0 %10268
  %10270 = vrot.lane.b32.xlu0 %v10155, 91
  %v10271 = vpop.permute.xlu0 %10270
  %10272 = vrot.lane.b32.xlu0 %v10156, 91
  %v10273 = vpop.permute.xlu0 %10272
  %10274 = vrot.lane.b32.xlu0 %v10157, 91
  %v10275 = vpop.permute.xlu0 %10274
  %vm10276 = vcmask 744448
  %v10277 = vsel %vm10276, %v10265, %v10267
  %v10278 = vsel %vm10276, %v10267, %v10269
  %v10279 = vsel %vm10276, %v10269, %v10271
  %v10280 = vsel %vm10276, %v10271, %v10273
  %v10281 = vsel %vm10276, %v10273, %v10275
  %v10288 = vsel %vm9190, %v10263, 0
  %10290 = vmatpush.bf16.msra.mxu0 0
  %10291 = vmatpush.bf16.msra.mxu0 0
  %10292 = vmatpush.bf16.msra.mxu0 0
  %10293 = vmatpush.bf16.msra.mxu0 0
  %10294 = vmatpush.bf16.msra.mxu0 0
  %10295 = vmatpush.bf16.msra.mxu0 0
  %10296 = vmatpush.bf16.msra.mxu0 0
  %10297 = vmatpush.bf16.msra.mxu0 %v10277
  %10298 = vmatmul.bf16.gmra.mxu0 %v10288
  %v10299 = vpop.f32.mrf.mxu0
  %v10300 = vadd.f32 0.0, %v10299
  %v10301 = vpop.f32.mrf.mxu0
  %10302 = vdwg.mxu0
  %10303 = vmatpush.bf16.msra.mxu0 0
  %10304 = vmatpush.bf16.msra.mxu0 0
  %10305 = vmatpush.bf16.msra.mxu0 0
  %10306 = vmatpush.bf16.msra.mxu0 0
  %10307 = vmatpush.bf16.msra.mxu0 0
  %10308 = vmatpush.bf16.msra.mxu0 0
  %10309 = vmatpush.bf16.msra.mxu0 0
  %10310 = vmatpush.bf16.msra.mxu0 %v10278
  %10311 = vmatmul.bf16.gmra.mxu0 %v10288
  %v10312 = vpop.f32.mrf.mxu0
  %v10313 = vadd.f32 0.0, %v10312
  %v10314 = vpop.f32.mrf.mxu0
  %10315 = vdwg.mxu0
  %10316 = vmatpush.bf16.msra.mxu0 0
  %10317 = vmatpush.bf16.msra.mxu0 0
  %10318 = vmatpush.bf16.msra.mxu0 0
  %10319 = vmatpush.bf16.msra.mxu0 0
  %10320 = vmatpush.bf16.msra.mxu0 0
  %10321 = vmatpush.bf16.msra.mxu0 0
  %10322 = vmatpush.bf16.msra.mxu0 0
  %10323 = vmatpush.bf16.msra.mxu0 %v10279
  %10324 = vmatmul.bf16.gmra.mxu0 %v10288
  %v10325 = vpop.f32.mrf.mxu0
  %v10326 = vadd.f32 0.0, %v10325
  %v10327 = vpop.f32.mrf.mxu0
  %10328 = vdwg.mxu0
  %10329 = vmatpush.bf16.msra.mxu0 0
  %10330 = vmatpush.bf16.msra.mxu0 0
  %10331 = vmatpush.bf16.msra.mxu0 0
  %10332 = vmatpush.bf16.msra.mxu0 0
  %10333 = vmatpush.bf16.msra.mxu0 0
  %10334 = vmatpush.bf16.msra.mxu0 0
  %10335 = vmatpush.bf16.msra.mxu0 0
  %10336 = vmatpush.bf16.msra.mxu0 %v10280
  %10337 = vmatmul.bf16.gmra.mxu0 %v10288
  %v10338 = vpop.f32.mrf.mxu0
  %v10339 = vadd.f32 0.0, %v10338
  %v10340 = vpop.f32.mrf.mxu0
  %10341 = vdwg.mxu0
  %10342 = vmatpush.bf16.msra.mxu0 0
  %10343 = vmatpush.bf16.msra.mxu0 0
  %10344 = vmatpush.bf16.msra.mxu0 0
  %10345 = vmatpush.bf16.msra.mxu0 0
  %10346 = vmatpush.bf16.msra.mxu0 0
  %10347 = vmatpush.bf16.msra.mxu0 0
  %10348 = vmatpush.bf16.msra.mxu0 0
  %10349 = vmatpush.bf16.msra.mxu0 %v10281
  %10350 = vmatmul.bf16.gmra.mxu0 %v10288
  %v10351 = vpop.f32.mrf.mxu0
  %v10352 = vadd.f32 0.0, %v10351
  %v10353 = vpop.f32.mrf.mxu0
  %10354 = vdwg.mxu0
  %v10355 = vadd.f32 %v10257, %v10300
  %v10356 = vadd.f32 %v10258, %v10313
  %v10357 = vadd.f32 %v10259, %v10326
  %v10358 = vadd.f32 %v10260, %v10339
  %v10359 = vadd.f32 %v10261, %v10352
  %v10360 = vtanh.pop %v10355
  %v10361 = vtanh.pop %v10356
  %v10362 = vtanh.pop %v10357
  %v10363 = vtanh.pop %v10358
  %v10364 = vtanh.pop %v10359
  %v10369 = vrot.slane %v10361, 4
  %v10370 = vrot.slane %v10363, 4
  %v10371 = vsel %vm9528, %v10360, %v10369
  %v10372 = vsel %vm9528, %v10362, %v10370
  %s10375 = scalar_lea.vmem %s17, 40
  %10376 = vst [vmem:[%s10375] sm:$0x77] %v10371
  %10377 = vst [vmem:[%s10375 + $0x8] sm:$0x77] %v10372
  %10378 = vst.msk [vmem:[%s10375 + $0x10] sm:$0x7] %vm9535, %v10364
  %v10379 = vld [vmem:[#allocation4] sm:$0xff]
  %v10380 = vld [vmem:[#allocation4 + $0x8] sm:$0xff]
  %v10381 = vld [vmem:[#allocation4 + $0x10] sm:$0xff]
  %v10382 = vld [vmem:[#allocation4 + $0x18] sm:$0xff]
  %v10383 = vld [vmem:[#allocation4 + $0x20] sm:$0xff]
  %v10384 = vld [vmem:[#allocation4 + $0x30] sm:$0xff]
  %v10385 = vld [vmem:[#allocation4 + $0x38] sm:$0xff]
  %v10386 = vld [vmem:[#allocation4 + $0x40] sm:$0xff]
  %v10387 = vld [vmem:[#allocation4 + $0x48] sm:$0xff]
  %v10388 = vld [vmem:[#allocation4 + $0x50] sm:$0xff]
  %v10389 = vpack.c.bf16 %v10384, %v10379
  %v10390 = vpack.c.bf16 %v10385, %v10380
  %v10391 = vpack.c.bf16 %v10386, %v10381
  %v10392 = vpack.c.bf16 %v10387, %v10382
  %v10393 = vpack.c.bf16 %v10388, %v10383
  %s10394 = scalar_lea.vmem %s16, 24
  %v10395 = vld [vmem:[%s10394] sm:$0x3]
  %s10396 = scalar_lea.vmem %s16, 26
  %v10397 = vld [vmem:[%s10396] sm:$0x3]
  %10403 = vrot.lane.b32.xlu0 %v10389, 108
  %v10404 = vpop.permute.xlu0 %10403
  %10405 = vrot.lane.b32.xlu0 %v10390, 108
  %v10406 = vpop.permute.xlu0 %10405
  %10407 = vrot.lane.b32.xlu0 %v10391, 108
  %v10408 = vpop.permute.xlu0 %10407
  %10409 = vrot.lane.b32.xlu0 %v10392, 108
  %v10410 = vpop.permute.xlu0 %10409
  %10411 = vrot.lane.b32.xlu0 %v10393, 108
  %v10412 = vpop.permute.xlu0 %10411
  %v10413 = vsel %vm5961, %v10404, %v10406
  %v10414 = vsel %vm5961, %v10406, %v10408
  %v10415 = vsel %vm5961, %v10408, %v10410
  %v10416 = vsel %vm5961, %v10410, %v10412
  %v10423 = vsel %vm9190, %v10397, 0
  %10425 = vmatpush.bf16.msra.mxu0 0
  %10426 = vmatpush.bf16.msra.mxu0 0
  %10427 = vmatpush.bf16.msra.mxu0 0
  %10428 = vmatpush.bf16.msra.mxu0 0
  %10429 = vmatpush.bf16.msra.mxu0 0
  %10430 = vmatpush.bf16.msra.mxu0 0
  %10431 = vmatpush.bf16.msra.mxu0 0
  %10432 = vmatpush.bf16.msra.mxu0 %v10413
  %10433 = vmatmul.bf16.gmra.mxu0 %v10423
  %v10434 = vpop.f32.mrf.mxu0
  %v10435 = vadd.f32 0.0, %v10434
  %v10436 = vpop.f32.mrf.mxu0
  %10437 = vdwg.mxu0
  %10438 = vmatpush.bf16.msra.mxu0 0
  %10439 = vmatpush.bf16.msra.mxu0 0
  %10440 = vmatpush.bf16.msra.mxu0 0
  %10441 = vmatpush.bf16.msra.mxu0 0
  %10442 = vmatpush.bf16.msra.mxu0 0
  %10443 = vmatpush.bf16.msra.mxu0 0
  %10444 = vmatpush.bf16.msra.mxu0 0
  %10445 = vmatpush.bf16.msra.mxu0 %v10414
  %10446 = vmatmul.bf16.gmra.mxu0 %v10423
  %v10447 = vpop.f32.mrf.mxu0
  %v10448 = vadd.f32 0.0, %v10447
  %v10449 = vpop.f32.mrf.mxu0
  %10450 = vdwg.mxu0
  %10451 = vmatpush.bf16.msra.mxu0 0
  %10452 = vmatpush.bf16.msra.mxu0 0
  %10453 = vmatpush.bf16.msra.mxu0 0
  %10454 = vmatpush.bf16.msra.mxu0 0
  %10455 = vmatpush.bf16.msra.mxu0 0
  %10456 = vmatpush.bf16.msra.mxu0 0
  %10457 = vmatpush.bf16.msra.mxu0 0
  %10458 = vmatpush.bf16.msra.mxu0 %v10415
  %10459 = vmatmul.bf16.gmra.mxu0 %v10423
  %v10460 = vpop.f32.mrf.mxu0
  %v10461 = vadd.f32 0.0, %v10460
  %v10462 = vpop.f32.mrf.mxu0
  %10463 = vdwg.mxu0
  %10464 = vmatpush.bf16.msra.mxu0 0
  %10465 = vmatpush.bf16.msra.mxu0 0
  %10466 = vmatpush.bf16.msra.mxu0 0
  %10467 = vmatpush.bf16.msra.mxu0 0
  %10468 = vmatpush.bf16.msra.mxu0 0
  %10469 = vmatpush.bf16.msra.mxu0 0
  %10470 = vmatpush.bf16.msra.mxu0 0
  %10471 = vmatpush.bf16.msra.mxu0 %v10416
  %10472 = vmatmul.bf16.gmra.mxu0 %v10423
  %v10473 = vpop.f32.mrf.mxu0
  %v10474 = vadd.f32 0.0, %v10473
  %v10475 = vpop.f32.mrf.mxu0
  %10476 = vdwg.mxu0
  %10477 = vmatpush.bf16.msra.mxu0 0
  %10478 = vmatpush.bf16.msra.mxu0 0
  %10479 = vmatpush.bf16.msra.mxu0 0
  %10480 = vmatpush.bf16.msra.mxu0 0
  %10481 = vmatpush.bf16.msra.mxu0 0
  %10482 = vmatpush.bf16.msra.mxu0 0
  %10483 = vmatpush.bf16.msra.mxu0 0
  %10484 = vmatpush.bf16.msra.mxu0 %v10412
  %10485 = vmatmul.bf16.gmra.mxu0 %v10423
  %v10486 = vpop.f32.mrf.mxu0
  %v10487 = vadd.f32 0.0, %v10486
  %v10488 = vpop.f32.mrf.mxu0
  %10489 = vdwg.mxu0
  %10490 = vrot.lane.b32.xlu0 %v10389, 109
  %v10491 = vpop.permute.xlu0 %10490
  %10492 = vrot.lane.b32.xlu0 %v10390, 109
  %v10493 = vpop.permute.xlu0 %10492
  %10494 = vrot.lane.b32.xlu0 %v10391, 109
  %v10495 = vpop.permute.xlu0 %10494
  %10496 = vrot.lane.b32.xlu0 %v10392, 109
  %v10497 = vpop.permute.xlu0 %10496
  %10498 = vrot.lane.b32.xlu0 %v10393, 109
  %v10499 = vpop.permute.xlu0 %10498
  %v10500 = vsel %vm9434, %v10491, %v10493
  %v10501 = vsel %vm9434, %v10493, %v10495
  %v10502 = vsel %vm9434, %v10495, %v10497
  %v10503 = vsel %vm9434, %v10497, %v10499
  %v10510 = vsel %vm9190, %v10395, 0
  %10512 = vmatpush.bf16.msra.mxu0 0
  %10513 = vmatpush.bf16.msra.mxu0 0
  %10514 = vmatpush.bf16.msra.mxu0 0
  %10515 = vmatpush.bf16.msra.mxu0 0
  %10516 = vmatpush.bf16.msra.mxu0 0
  %10517 = vmatpush.bf16.msra.mxu0 0
  %10518 = vmatpush.bf16.msra.mxu0 0
  %10519 = vmatpush.bf16.msra.mxu0 %v10500
  %10520 = vmatmul.bf16.gmra.mxu0 %v10510
  %v10521 = vpop.f32.mrf.mxu0
  %v10522 = vadd.f32 %v10435, %v10521
  %v10523 = vpop.f32.mrf.mxu0
  %10524 = vdwg.mxu0
  %10525 = vmatpush.bf16.msra.mxu0 0
  %10526 = vmatpush.bf16.msra.mxu0 0
  %10527 = vmatpush.bf16.msra.mxu0 0
  %10528 = vmatpush.bf16.msra.mxu0 0
  %10529 = vmatpush.bf16.msra.mxu0 0
  %10530 = vmatpush.bf16.msra.mxu0 0
  %10531 = vmatpush.bf16.msra.mxu0 0
  %10532 = vmatpush.bf16.msra.mxu0 %v10501
  %10533 = vmatmul.bf16.gmra.mxu0 %v10510
  %v10534 = vpop.f32.mrf.mxu0
  %v10535 = vadd.f32 %v10448, %v10534
  %v10536 = vpop.f32.mrf.mxu0
  %10537 = vdwg.mxu0
  %10538 = vmatpush.bf16.msra.mxu0 0
  %10539 = vmatpush.bf16.msra.mxu0 0
  %10540 = vmatpush.bf16.msra.mxu0 0
  %10541 = vmatpush.bf16.msra.mxu0 0
  %10542 = vmatpush.bf16.msra.mxu0 0
  %10543 = vmatpush.bf16.msra.mxu0 0
  %10544 = vmatpush.bf16.msra.mxu0 0
  %10545 = vmatpush.bf16.msra.mxu0 %v10502
  %10546 = vmatmul.bf16.gmra.mxu0 %v10510
  %v10547 = vpop.f32.mrf.mxu0
  %v10548 = vadd.f32 %v10461, %v10547
  %v10549 = vpop.f32.mrf.mxu0
  %10550 = vdwg.mxu0
  %10551 = vmatpush.bf16.msra.mxu0 0
  %10552 = vmatpush.bf16.msra.mxu0 0
  %10553 = vmatpush.bf16.msra.mxu0 0
  %10554 = vmatpush.bf16.msra.mxu0 0
  %10555 = vmatpush.bf16.msra.mxu0 0
  %10556 = vmatpush.bf16.msra.mxu0 0
  %10557 = vmatpush.bf16.msra.mxu0 0
  %10558 = vmatpush.bf16.msra.mxu0 %v10503
  %10559 = vmatmul.bf16.gmra.mxu0 %v10510
  %v10560 = vpop.f32.mrf.mxu0
  %v10561 = vadd.f32 %v10474, %v10560
  %v10562 = vpop.f32.mrf.mxu0
  %10563 = vdwg.mxu0
  %10564 = vmatpush.bf16.msra.mxu0 0
  %10565 = vmatpush.bf16.msra.mxu0 0
  %10566 = vmatpush.bf16.msra.mxu0 0
  %10567 = vmatpush.bf16.msra.mxu0 0
  %10568 = vmatpush.bf16.msra.mxu0 0
  %10569 = vmatpush.bf16.msra.mxu0 0
  %10570 = vmatpush.bf16.msra.mxu0 0
  %10571 = vmatpush.bf16.msra.mxu0 %v10499
  %10572 = vmatmul.bf16.gmra.mxu0 %v10510
  %v10573 = vpop.f32.mrf.mxu0
  %v10574 = vadd.f32 %v10487, %v10573
  %v10575 = vpop.f32.mrf.mxu0
  %10576 = vdwg.mxu0
  %v10577 = vld [vmem:[#allocation4] sm:$0xff]
  %v10578 = vld [vmem:[#allocation4 + $0x8] sm:$0xff]
  %v10579 = vld [vmem:[#allocation4 + $0x10] sm:$0xff]
  %v10580 = vld [vmem:[#allocation4 + $0x18] sm:$0xff]
  %v10581 = vld [vmem:[#allocation4 + $0x20] sm:$0xff]
  %v10582 = vld [vmem:[#allocation4 + $0x28] sm:$0xff]
  %v10583 = vld [vmem:[#allocation4 + $0x30] sm:$0xff]
  %v10584 = vld [vmem:[#allocation4 + $0x38] sm:$0xff]
  %v10585 = vld [vmem:[#allocation4 + $0x40] sm:$0xff]
  %v10586 = vld [vmem:[#allocation4 + $0x48] sm:$0xff]
  %v10587 = vld [vmem:[#allocation4 + $0x50] sm:$0xff]
  %v10588 = vld [vmem:[#allocation4 + $0x58] sm:$0xff]
  %v10589 = vpack.c.bf16 %v10583, %v10577
  %v10590 = vpack.c.bf16 %v10584, %v10578
  %v10591 = vpack.c.bf16 %v10585, %v10579
  %v10592 = vpack.c.bf16 %v10586, %v10580
  %v10593 = vpack.c.bf16 %v10587, %v10581
  %v10594 = vpack.c.bf16 %v10588, %v10582
  %s10595 = scalar_lea.vmem %s16, 28
  %v10596 = vld [vmem:[%s10595] sm:$0x3]
  %10603 = vrot.lane.b32.xlu0 %v10589, 91
  %v10604 = vpop.permute.xlu0 %10603
  %10605 = vrot.lane.b32.xlu0 %v10590, 91
  %v10606 = vpop.permute.xlu0 %10605
  %10607 = vrot.lane.b32.xlu0 %v10591, 91
  %v10608 = vpop.permute.xlu0 %10607
  %10609 = vrot.lane.b32.xlu0 %v10592, 91
  %v10610 = vpop.permute.xlu0 %10609
  %10611 = vrot.lane.b32.xlu0 %v10593, 91
  %v10612 = vpop.permute.xlu0 %10611
  %10613 = vrot.lane.b32.xlu0 %v10594, 91
  %v10614 = vpop.permute.xlu0 %10613
  %v10615 = vsel %vm10276, %v10604, %v10606
  %v10616 = vsel %vm10276, %v10606, %v10608
  %v10617 = vsel %vm10276, %v10608, %v10610
  %v10618 = vsel %vm10276, %v10610, %v10612
  %v10619 = vsel %vm10276, %v10612, %v10614
  %v10626 = vsel %vm9190, %v10596, 0
  %10628 = vmatpush.bf16.msra.mxu0 0
  %10629 = vmatpush.bf16.msra.mxu0 0
  %10630 = vmatpush.bf16.msra.mxu0 0
  %10631 = vmatpush.bf16.msra.mxu0 0
  %10632 = vmatpush.bf16.msra.mxu0 0
  %10633 = vmatpush.bf16.msra.mxu0 0
  %10634 = vmatpush.bf16.msra.mxu0 0
  %10635 = vmatpush.bf16.msra.mxu0 %v10615
  %10636 = vmatmul.bf16.gmra.mxu0 %v10626
  %v10637 = vpop.f32.mrf.mxu0
  %v10638 = vadd.f32 0.0, %v10637
  %v10639 = vpop.f32.mrf.mxu0
  %10640 = vdwg.mxu0
  %10641 = vmatpush.bf16.msra.mxu0 0
  %10642 = vmatpush.bf16.msra.mxu0 0
  %10643 = vmatpush.bf16.msra.mxu0 0
  %10644 = vmatpush.bf16.msra.mxu0 0
  %10645 = vmatpush.bf16.msra.mxu0 0
  %10646 = vmatpush.bf16.msra.mxu0 0
  %10647 = vmatpush.bf16.msra.mxu0 0
  %10648 = vmatpush.bf16.msra.mxu0 %v10616
  %10649 = vmatmul.bf16.gmra.mxu0 %v10626
  %v10650 = vpop.f32.mrf.mxu0
  %v10651 = vadd.f32 0.0, %v10650
  %v10652 = vpop.f32.mrf.mxu0
  %10653 = vdwg.mxu0
  %10654 = vmatpush.bf16.msra.mxu0 0
  %10655 = vmatpush.bf16.msra.mxu0 0
  %10656 = vmatpush.bf16.msra.mxu0 0
  %10657 = vmatpush.bf16.msra.mxu0 0
  %10658 = vmatpush.bf16.msra.mxu0 0
  %10659 = vmatpush.bf16.msra.mxu0 0
  %10660 = vmatpush.bf16.msra.mxu0 0
  %10661 = vmatpush.bf16.msra.mxu0 %v10617
  %10662 = vmatmul.bf16.gmra.mxu0 %v10626
  %v10663 = vpop.f32.mrf.mxu0
  %v10664 = vadd.f32 0.0, %v10663
  %v10665 = vpop.f32.mrf.mxu0
  %10666 = vdwg.mxu0
  %10667 = vmatpush.bf16.msra.mxu0 0
  %10668 = vmatpush.bf16.msra.mxu0 0
  %10669 = vmatpush.bf16.msra.mxu0 0
  %10670 = vmatpush.bf16.msra.mxu0 0
  %10671 = vmatpush.bf16.msra.mxu0 0
  %10672 = vmatpush.bf16.msra.mxu0 0
  %10673 = vmatpush.bf16.msra.mxu0 0
  %10674 = vmatpush.bf16.msra.mxu0 %v10618
  %10675 = vmatmul.bf16.gmra.mxu0 %v10626
  %v10676 = vpop.f32.mrf.mxu0
  %v10677 = vadd.f32 0.0, %v10676
  %v10678 = vpop.f32.mrf.mxu0
  %10679 = vdwg.mxu0
  %10680 = vmatpush.bf16.msra.mxu0 0
  %10681 = vmatpush.bf16.msra.mxu0 0
  %10682 = vmatpush.bf16.msra.mxu0 0
  %10683 = vmatpush.bf16.msra.mxu0 0
  %10684 = vmatpush.bf16.msra.mxu0 0
  %10685 = vmatpush.bf16.msra.mxu0 0
  %10686 = vmatpush.bf16.msra.mxu0 0
  %10687 = vmatpush.bf16.msra.mxu0 %v10619
  %10688 = vmatmul.bf16.gmra.mxu0 %v10626
  %v10689 = vpop.f32.mrf.mxu0
  %v10690 = vadd.f32 0.0, %v10689
  %v10691 = vpop.f32.mrf.mxu0
  %10692 = vdwg.mxu0
  %v10693 = vadd.f32 %v10522, %v10638
  %v10694 = vadd.f32 %v10535, %v10651
  %v10695 = vadd.f32 %v10548, %v10664
  %v10696 = vadd.f32 %v10561, %v10677
  %v10697 = vadd.f32 %v10574, %v10690
  %s10698 = scalar_lea.vmem %s16, 30
  %v10699 = vld [vmem:[%s10698] sm:$0x3]
  %10700 = vrot.lane.b32.xlu0 %v10589, 90
  %v10701 = vpop.permute.xlu0 %10700
  %10702 = vrot.lane.b32.xlu0 %v10590, 90
  %v10703 = vpop.permute.xlu0 %10702
  %10704 = vrot.lane.b32.xlu0 %v10591, 90
  %v10705 = vpop.permute.xlu0 %10704
  %10706 = vrot.lane.b32.xlu0 %v10592, 90
  %v10707 = vpop.permute.xlu0 %10706
  %10708 = vrot.lane.b32.xlu0 %v10593, 90
  %v10709 = vpop.permute.xlu0 %10708
  %10710 = vrot.lane.b32.xlu0 %v10594, 90
  %v10711 = vpop.permute.xlu0 %10710
  %vm10712 = vcmask 736256
  %v10713 = vsel %vm10712, %v10701, %v10703
  %v10714 = vsel %vm10712, %v10703, %v10705
  %v10715 = vsel %vm10712, %v10705, %v10707
  %v10716 = vsel %vm10712, %v10707, %v10709
  %v10717 = vsel %vm10712, %v10709, %v10711
  %v10724 = vsel %vm9190, %v10699, 0
  %10726 = vmatpush.bf16.msra.mxu0 0
  %10727 = vmatpush.bf16.msra.mxu0 0
  %10728 = vmatpush.bf16.msra.mxu0 0
  %10729 = vmatpush.bf16.msra.mxu0 0
  %10730 = vmatpush.bf16.msra.mxu0 0
  %10731 = vmatpush.bf16.msra.mxu0 0
  %10732 = vmatpush.bf16.msra.mxu0 0
  %10733 = vmatpush.bf16.msra.mxu0 %v10713
  %10734 = vmatmul.bf16.gmra.mxu0 %v10724
  %v10735 = vpop.f32.mrf.mxu0
  %v10736 = vadd.f32 0.0, %v10735
  %v10737 = vpop.f32.mrf.mxu0
  %10738 = vdwg.mxu0
  %10739 = vmatpush.bf16.msra.mxu0 0
  %10740 = vmatpush.bf16.msra.mxu0 0
  %10741 = vmatpush.bf16.msra.mxu0 0
  %10742 = vmatpush.bf16.msra.mxu0 0
  %10743 = vmatpush.bf16.msra.mxu0 0
  %10744 = vmatpush.bf16.msra.mxu0 0
  %10745 = vmatpush.bf16.msra.mxu0 0
  %10746 = vmatpush.bf16.msra.mxu0 %v10714
  %10747 = vmatmul.bf16.gmra.mxu0 %v10724
  %v10748 = vpop.f32.mrf.mxu0
  %v10749 = vadd.f32 0.0, %v10748
  %v10750 = vpop.f32.mrf.mxu0
  %10751 = vdwg.mxu0
  %10752 = vmatpush.bf16.msra.mxu0 0
  %10753 = vmatpush.bf16.msra.mxu0 0
  %10754 = vmatpush.bf16.msra.mxu0 0
  %10755 = vmatpush.bf16.msra.mxu0 0
  %10756 = vmatpush.bf16.msra.mxu0 0
  %10757 = vmatpush.bf16.msra.mxu0 0
  %10758 = vmatpush.bf16.msra.mxu0 0
  %10759 = vmatpush.bf16.msra.mxu0 %v10715
  %10760 = vmatmul.bf16.gmra.mxu0 %v10724
  %v10761 = vpop.f32.mrf.mxu0
  %v10762 = vadd.f32 0.0, %v10761
  %v10763 = vpop.f32.mrf.mxu0
  %10764 = vdwg.mxu0
  %10765 = vmatpush.bf16.msra.mxu0 0
  %10766 = vmatpush.bf16.msra.mxu0 0
  %10767 = vmatpush.bf16.msra.mxu0 0
  %10768 = vmatpush.bf16.msra.mxu0 0
  %10769 = vmatpush.bf16.msra.mxu0 0
  %10770 = vmatpush.bf16.msra.mxu0 0
  %10771 = vmatpush.bf16.msra.mxu0 0
  %10772 = vmatpush.bf16.msra.mxu0 %v10716
  %10773 = vmatmul.bf16.gmra.mxu0 %v10724
  %v10774 = vpop.f32.mrf.mxu0
  %v10775 = vadd.f32 0.0, %v10774
  %v10776 = vpop.f32.mrf.mxu0
  %10777 = vdwg.mxu0
  %10778 = vmatpush.bf16.msra.mxu0 0
  %10779 = vmatpush.bf16.msra.mxu0 0
  %10780 = vmatpush.bf16.msra.mxu0 0
  %10781 = vmatpush.bf16.msra.mxu0 0
  %10782 = vmatpush.bf16.msra.mxu0 0
  %10783 = vmatpush.bf16.msra.mxu0 0
  %10784 = vmatpush.bf16.msra.mxu0 0
  %10785 = vmatpush.bf16.msra.mxu0 %v10717
  %10786 = vmatmul.bf16.gmra.mxu0 %v10724
  %v10787 = vpop.f32.mrf.mxu0
  %v10788 = vadd.f32 0.0, %v10787
  %v10789 = vpop.f32.mrf.mxu0
  %10790 = vdwg.mxu0
  %v10791 = vadd.f32 %v10693, %v10736
  %v10792 = vadd.f32 %v10694, %v10749
  %v10793 = vadd.f32 %v10695, %v10762
  %v10794 = vadd.f32 %v10696, %v10775
  %v10795 = vadd.f32 %v10697, %v10788
  %v10796 = vtanh.pop %v10791
  %v10797 = vtanh.pop %v10792
  %v10798 = vtanh.pop %v10793
  %v10799 = vtanh.pop %v10794
  %v10800 = vtanh.pop %v10795
  %v10805 = vrot.slane %v10797, 4
  %v10806 = vrot.slane %v10799, 4
  %v10807 = vsel %vm9528, %v10796, %v10805
  %v10808 = vsel %vm9528, %v10798, %v10806
  %s10811 = scalar_lea.vmem %s17, 60
  %10812 = vst [vmem:[%s10811] sm:$0x77] %v10807
  %10813 = vst [vmem:[%s10811 + $0x8] sm:$0x77] %v10808
  %10814 = vst.msk [vmem:[%s10811 + $0x10] sm:$0x7] %vm9535, %v10800
  // Predicated region
  $region70: #{generator_forward.1} parent=0 // pred_check
    _
  $region71: #{generator_forward.1} parent=0 // pred_check_branch
    %10816 = sbr.rel (0) target = $region73
  $region72: #{generator_forward.1} parent=0 // pred_region
    _
  $region73: #{generator_forward.1} parent=0 // pred_fallthru
    _
  // Predicated region
  $region74: #{generator_forward.1} parent=0 // pred_check
    _
  $region75: #{generator_forward.1} parent=0 // pred_check_branch
    %10818 = sbr.rel (0) target = $region77
  $region76: #{generator_forward.1} parent=0 // pred_region
    _
  $region77: #{generator_forward.1} parent=0 // pred_fallthru
    _

</llo_original>
